<compile_context>
chip_gen: v5e
topology: v5e:2x2
jax: 0.10.0
libtpu: 0.0.40
codegen_flags: <defaults>
</compile_context>

<pallas_src>
import jax
import jax.numpy as jnp
import numpy as np
from jax.experimental import pallas as pl
from jax.experimental.pallas import tpu as pltpu

LANE = 128


# ---------------------------------------------------------------------------
# The fused Pallas kernel (everything hot: 4+4 conv-offset matmuls, pool max,
# bias, ReLU, and the 3 fc matmuls run here; nothing intermediate hits HBM).
# ---------------------------------------------------------------------------
def _fused_mnist_kernel(x_ref, m1_ref, b1_ref, m2_ref, b2_ref,
                        w1_ref, c1_ref, w2_ref, c2_ref, w3_ref, c3_ref,
                        o_ref):
    x = x_ref[...]                                                   # (TB, 784) bf16

    # conv1 + bias + ReLU + 2x2 maxpool  ==  relu(max over 4 pool offsets + b1)
    h = jnp.dot(x, m1_ref[0], preferred_element_type=jnp.float32)
    for off in range(1, 4):
        h = jnp.maximum(h, jnp.dot(x, m1_ref[off],
                                   preferred_element_type=jnp.float32))
    h = jnp.maximum(h + b1_ref[...], 0.0).astype(jnp.bfloat16)       # (TB, 864)

    # conv2 + bias + ReLU + 2x2 maxpool
    g = jnp.dot(h, m2_ref[0], preferred_element_type=jnp.float32)
    for off in range(1, 4):
        g = jnp.maximum(g, jnp.dot(h, m2_ref[off],
                                   preferred_element_type=jnp.float32))
    # (TB, 256) in NCHW flatten order == PyTorch x.view(-1, 256)
    g = jnp.maximum(g + b2_ref[...], 0.0).astype(jnp.bfloat16)

    # fc1 -> relu -> fc2 -> relu -> fc3   (output columns zero-padded to 128)
    f1 = jnp.dot(g, w1_ref[...], preferred_element_type=jnp.float32) + c1_ref[...]
    f1 = jnp.maximum(f1, 0.0).astype(jnp.bfloat16)                   # (TB, 128)
    f2 = jnp.dot(f1, w2_ref[...], preferred_element_type=jnp.float32) + c2_ref[...]
    f2 = jnp.maximum(f2, 0.0).astype(jnp.bfloat16)                   # (TB, 128)
    o_ref[...] = (jnp.dot(f2, w3_ref[...], preferred_element_type=jnp.float32)
                  + c3_ref[...])                                     # (TB, 128) f32


# ---------------------------------------------------------------------------
# One-time host-side parameter packing
# ---------------------------------------------------------------------------
def _expand_conv_pool(w, in_h, in_w, pool=2):
    """Fold a VALID kxk conv + 2x2 maxpool into 4 dense matmul operands.

    Returns (pool*pool, Cin*in_h*in_w, Cout*out_h*out_w) f32 such that for
    pool-window offset (di, dj):  x_nchw_flat @ M[di*pool+dj] equals the conv
    output sampled at positions (pool*i+di, pool*j+dj), flattened NCHW.
    """
    w = np.asarray(w, np.float32)
    cout, cin, k, _ = w.shape
    oh = (in_h - k + 1) // pool
    ow = (in_w - k + 1) // pool
    m = np.zeros((pool * pool, cin * in_h * in_w, cout * oh * ow), np.float32)
    ii, jj = np.meshgrid(np.arange(oh), np.arange(ow), indexing="ij")
    out_pos = (ii * ow + jj).reshape(-1)
    for di in range(pool):
        for dj in range(pool):
            off = di * pool + dj
            for ki in range(k):
                for kj in range(k):
                    r = (pool * ii + di + ki).reshape(-1)
                    c = (pool * jj + dj + kj).reshape(-1)
                    for ci in range(cin):
                        in_idx = ci * in_h * in_w + r * in_w + c
                        for co in range(cout):
                            m[off, in_idx, co * oh * ow + out_pos] = w[co, ci, ki, kj]
    return m


def prepare_params(params):
    """Pack PyTorch-layout params for the fused kernel (runs once, host side)."""
    def pad_fc(w, b, in_dim):
        w = np.asarray(w, np.float32)
        b = np.asarray(b, np.float32)
        wt = np.zeros((in_dim, LANE), np.float32)
        wt[: w.shape[1], : w.shape[0]] = w.T
        bp = np.zeros((1, LANE), np.float32)
        bp[0, : b.shape[0]] = b
        return wt, bp

    m1 = _expand_conv_pool(params["conv1_w"], 28, 28)          # (4, 784, 864)
    m2 = _expand_conv_pool(params["conv2_w"], 12, 12)          # (4, 864, 256)
    b1 = np.repeat(np.asarray(params["conv1_b"], np.float32), 12 * 12)[None, :]
    b2 = np.repeat(np.asarray(params["conv2_b"], np.float32), 4 * 4)[None, :]
    w1, c1 = pad_fc(params["fc1_w"], params["fc1_b"], 256)
    w2, c2 = pad_fc(params["fc2_w"], params["fc2_b"], LANE)
    w3, c3 = pad_fc(params["fc3_w"], params["fc3_b"], LANE)
    return {
        "m1": jnp.asarray(m1, jnp.bfloat16), "b1": jnp.asarray(b1, jnp.float32),
        "m2": jnp.asarray(m2, jnp.bfloat16), "b2": jnp.asarray(b2, jnp.float32),
        "w1": jnp.asarray(w1, jnp.bfloat16), "c1": jnp.asarray(c1, jnp.float32),
        "w2": jnp.asarray(w2, jnp.bfloat16), "c2": jnp.asarray(c2, jnp.float32),
        "w3": jnp.asarray(w3, jnp.bfloat16), "c3": jnp.asarray(c3, jnp.float32),
    }


# ---------------------------------------------------------------------------
# Forward wrapper: one pallas_call, grid over batch tiles
# ---------------------------------------------------------------------------
def _batch_tile(n):
    # 128 sample-rows per step (multiple of 8 sublanes, good MXU M-dim) while
    # keeping the per-step VMEM working set (~19 MiB incl. resident weights)
    # well under the 32 MiB scoped limit -> safe on v7x's 64 MiB physical VMEM.
    if n >= 128:
        return 128
    return max(8, ((n + 7) // 8) * 8)


@jax.jit
def mnist_cnn_forward(x_nchw, prepared):
    n = x_nchw.shape[0]
    # NCHW flatten (Cin=1) -> (N, 784); bf16 halves HBM->VMEM DMA bytes.
    x = x_nchw.reshape(n, 28 * 28).astype(jnp.bfloat16)
    tb = _batch_tile(n)
    n_pad = ((n + tb - 1) // tb) * tb
    if n_pad != n:
        x = jnp.pad(x, ((0, n_pad - n), (0, 0)))

    def const2(b):
        return (0, 0)

    def const3(b):
        return (0, 0, 0)

    in_specs = [
        pl.BlockSpec((tb, 784), lambda b: (b, 0)),     # x  (batch-tiled)
        pl.BlockSpec((4, 784, 864), const3),           # conv1 expanded weights
        pl.BlockSpec((1, 864), const2),                # conv1 bias (per feature)
        pl.BlockSpec((4, 864, 256), const3),           # conv2 expanded weights
        pl.BlockSpec((1, 256), const2),                # conv2 bias
        pl.BlockSpec((256, LANE), const2),             # fc1 W (padded to 128 cols)
        pl.BlockSpec((1, LANE), const2),               # fc1 b
        pl.BlockSpec((LANE, LANE), const2),            # fc2 W
        pl.BlockSpec((1, LANE), const2),               # fc2 b
        pl.BlockSpec((LANE, LANE), const2),            # fc3 W
        pl.BlockSpec((1, LANE), const2),               # fc3 b
    ]
    out_spec = pl.BlockSpec((tb, LANE), lambda b: (b, 0))

    out = pl.pallas_call(
        _fused_mnist_kernel,
        out_shape=jax.ShapeDtypeStruct((n_pad, LANE), jnp.float32),
        grid_spec=pltpu.PrefetchScalarGridSpec(
            num_scalar_prefetch=0,
            grid=(n_pad // tb,),
            in_specs=in_specs,
            out_specs=out_spec,
        ),
        compiler_params=pltpu.CompilerParams(
            dimension_semantics=("parallel",),          # v7x: split over 2 TCs
            vmem_limit_bytes=32 * 1024 * 1024,          # explicit (v5e default is 16 MiB)
        ),
    )(x, prepared["m1"], prepared["b1"], prepared["m2"], prepared["b2"],
      prepared["w1"], prepared["c1"], prepared["w2"], prepared["c2"],
      prepared["w3"], prepared["c3"])
    return out[:n, :10]


# ---------------------------------------------------------------------------
# Deterministic PyTorch-like parameter init
# ---------------------------------------------------------------------------
def init_params(key):
    def u(key, shape, fan_in):
        bound = 1.0 / np.sqrt(fan_in)
        return jax.random.uniform(key, shape, jnp.float32, -bound, bound)

    ks = jax.random.split(key, 10)
    return {
        "conv1_w": u(ks[0], (6, 1, 5, 5), 1 * 25),
        "conv1_b": u(ks[1], (6,), 1 * 25),
        "conv2_w": u(ks[2], (16, 6, 5, 5), 6 * 25),
        "conv2_b": u(ks[3], (16,), 6 * 25),
        "fc1_w": u(ks[4], (120, 256), 256),
        "fc1_b": u(ks[5], (120,), 256),
        "fc2_w": u(ks[6], (84, 120), 120),
        "fc2_b": u(ks[7], (84,), 120),
        "fc3_w": u(ks[8], (10, 84), 84),
        "fc3_b": u(ks[9], (10,), 84),
    }


# ---------------------------------------------------------------------------
# Pure-JAX f32 reference (true conv/pool/fc semantics) for the sanity check
# ---------------------------------------------------------------------------
def reference_forward(x_nchw, p):
    hp = jax.lax.Precision.HIGHEST
    y = jax.lax.conv_general_dilated(
        x_nchw, p["conv1_w"], (1, 1), "VALID",
        dimension_numbers=("NCHW", "OIHW", "NCHW"), precision=hp)
    y = jax.nn.relu(y + p["conv1_b"][None, :, None, None])
    y = jax.lax.reduce_window(y, -jnp.inf, jax.lax.max,
                              (1, 1, 2, 2), (1, 1, 2, 2), "VALID")
    y = jax.lax.conv_general_dilated(
        y, p["conv2_w"], (1, 1), "VALID",
        dimension_numbers=("NCHW", "OIHW", "NCHW"), precision=hp)
    y = jax.nn.relu(y + p["conv2_b"][None, :, None, None])
    y = jax.lax.reduce_window(y, -jnp.inf, jax.lax.max,
                              (1, 1, 2, 2), (1, 1, 2, 2), "VALID")
    y = y.reshape(y.shape[0], -1)
    y = jax.nn.relu(jnp.dot(y, p["fc1_w"].T, precision=hp) + p["fc1_b"])
    y = jax.nn.relu(jnp.dot(y, p["fc2_w"].T, precision=hp) + p["fc2_b"])
    return jnp.dot(y, p["fc3_w"].T, precision=hp) + p["fc3_b"]


if __name__ == "__main__":
    key = jax.random.PRNGKey(0)
    k_x, k_p = jax.random.split(key)
    params = init_params(k_p)
    prepared = prepare_params(params)

    # MNIST-shaped input: 28x28x1 is required so the flattened conv feature
    # size is exactly 256 (= 16*4*4) for fc1.
    x = jax.random.normal(k_x, (2, 1, 28, 28), dtype=jnp.float32)
    out = jax.block_until_ready(mnist_cnn_forward(x, prepared))
    assert out.shape == (2, 10), out.shape
    ref = jax.block_until_ready(reference_forward(x, params))
    np.testing.assert_allclose(np.asarray(out), np.asarray(ref),
                               rtol=5e-2, atol=3e-2)

    # A second, larger batch to exercise the multi-tile grid + padding path.
    x2 = jax.random.normal(k_x, (130, 1, 28, 28), dtype=jnp.float32)
    out2 = jax.block_until_ready(mnist_cnn_forward(x2, prepared))
    assert out2.shape == (130, 10), out2.shape
    ref2 = jax.block_until_ready(reference_forward(x2, params))
    np.testing.assert_allclose(np.asarray(out2), np.asarray(ref2),
                               rtol=5e-2, atol=3e-2)

    print("KERNEL_OK")
</pallas_src>

<mosaic_0001>
module attributes {stable_mosaic.version = 11 : i64} {
  func.func @_fused_mnist_kernel(%arg0: i32, %arg1: memref<8x784xbf16, #tpu.memory_space<vmem>>, %arg2: memref<4x784x864xbf16, #tpu.memory_space<vmem>>, %arg3: memref<1x864xf32, #tpu.memory_space<vmem>>, %arg4: memref<4x864x256xbf16, #tpu.memory_space<vmem>>, %arg5: memref<1x256xf32, #tpu.memory_space<vmem>>, %arg6: memref<256x128xbf16, #tpu.memory_space<vmem>>, %arg7: memref<1x128xf32, #tpu.memory_space<vmem>>, %arg8: memref<128x128xbf16, #tpu.memory_space<vmem>>, %arg9: memref<1x128xf32, #tpu.memory_space<vmem>>, %arg10: memref<128x128xbf16, #tpu.memory_space<vmem>>, %arg11: memref<1x128xf32, #tpu.memory_space<vmem>>, %arg12: memref<8x128xf32, #tpu.memory_space<vmem>>) attributes {dimension_semantics = [#tpu.dimension_semantics<parallel>], iteration_bounds = array<i64: 1>, scalar_prefetch = 0 : i64, scratch_operands = 0 : i64, tpu.core_type = #tpu.core_type<tc>, window_params = [{transform_indices = @transform_0, window_bounds = array<i64: 8, 784>}, {pipeline_mode = #tpu.pipeline_mode<synchronous>, transform_indices = @transform_1, window_bounds = array<i64: 4, 784, 864>}, {pipeline_mode = #tpu.pipeline_mode<synchronous>, transform_indices = @transform_2, window_bounds = array<i64: 1, 864>}, {pipeline_mode = #tpu.pipeline_mode<synchronous>, transform_indices = @transform_3, window_bounds = array<i64: 4, 864, 256>}, {pipeline_mode = #tpu.pipeline_mode<synchronous>, transform_indices = @transform_4, window_bounds = array<i64: 1, 256>}, {pipeline_mode = #tpu.pipeline_mode<synchronous>, transform_indices = @transform_5, window_bounds = array<i64: 256, 128>}, {pipeline_mode = #tpu.pipeline_mode<synchronous>, transform_indices = @transform_6, window_bounds = array<i64: 1, 128>}, {pipeline_mode = #tpu.pipeline_mode<synchronous>, transform_indices = @transform_7, window_bounds = array<i64: 128, 128>}, {pipeline_mode = #tpu.pipeline_mode<synchronous>, transform_indices = @transform_8, window_bounds = array<i64: 1, 128>}, {pipeline_mode = #tpu.pipeline_mode<synchronous>, transform_indices = @transform_9, window_bounds = array<i64: 128, 128>}, {pipeline_mode = #tpu.pipeline_mode<synchronous>, transform_indices = @transform_10, window_bounds = array<i64: 1, 128>}, {transform_indices = @transform_11, window_bounds = array<i64: 8, 128>}]} {
    %c0 = arith.constant 0 : index
    %c0_0 = arith.constant 0 : index
    %0 = vector.load %arg1[%c0, %c0_0] : memref<8x784xbf16, #tpu.memory_space<vmem>>, vector<8x784xbf16>
    %c0_1 = arith.constant 0 : index
    %c0_2 = arith.constant 0 : index
    %c0_3 = arith.constant 0 : index
    %1 = vector.load %arg2[%c0_1, %c0_2, %c0_3] : memref<4x784x864xbf16, #tpu.memory_space<vmem>>, vector<1x784x864xbf16>
    %2 = vector.shape_cast %1 : vector<1x784x864xbf16> to vector<784x864xbf16>
    %cst = arith.constant dense<0.000000e+00> : vector<8x864xf32>
    %3 = tpu.matmul %0, %2, %cst {dimension_numbers = #tpu.dot_dimension_numbers<[1], [0], [0], [1], [0, 0, 1, 1], [], []>} : vector<8x784xbf16>, vector<784x864xbf16>, vector<8x864xf32> -> vector<8x864xf32>
    %c1 = arith.constant 1 : index
    %c0_4 = arith.constant 0 : index
    %c0_5 = arith.constant 0 : index
    %4 = vector.load %arg2[%c1, %c0_4, %c0_5] : memref<4x784x864xbf16, #tpu.memory_space<vmem>>, vector<1x784x864xbf16>
    %5 = vector.shape_cast %4 : vector<1x784x864xbf16> to vector<784x864xbf16>
    %cst_6 = arith.constant dense<0.000000e+00> : vector<8x864xf32>
    %6 = tpu.matmul %0, %5, %cst_6 {dimension_numbers = #tpu.dot_dimension_numbers<[1], [0], [0], [1], [0, 0, 1, 1], [], []>} : vector<8x784xbf16>, vector<784x864xbf16>, vector<8x864xf32> -> vector<8x864xf32>
    %7 = arith.maximumf %3, %6 : vector<8x864xf32>
    %c2 = arith.constant 2 : index
    %c0_7 = arith.constant 0 : index
    %c0_8 = arith.constant 0 : index
    %8 = vector.load %arg2[%c2, %c0_7, %c0_8] : memref<4x784x864xbf16, #tpu.memory_space<vmem>>, vector<1x784x864xbf16>
    %9 = vector.shape_cast %8 : vector<1x784x864xbf16> to vector<784x864xbf16>
    %cst_9 = arith.constant dense<0.000000e+00> : vector<8x864xf32>
    %10 = tpu.matmul %0, %9, %cst_9 {dimension_numbers = #tpu.dot_dimension_numbers<[1], [0], [0], [1], [0, 0, 1, 1], [], []>} : vector<8x784xbf16>, vector<784x864xbf16>, vector<8x864xf32> -> vector<8x864xf32>
    %11 = arith.maximumf %7, %10 : vector<8x864xf32>
    %c3 = arith.constant 3 : index
    %c0_10 = arith.constant 0 : index
    %c0_11 = arith.constant 0 : index
    %12 = vector.load %arg2[%c3, %c0_10, %c0_11] : memref<4x784x864xbf16, #tpu.memory_space<vmem>>, vector<1x784x864xbf16>
    %13 = vector.shape_cast %12 : vector<1x784x864xbf16> to vector<784x864xbf16>
    %cst_12 = arith.constant dense<0.000000e+00> : vector<8x864xf32>
    %14 = tpu.matmul %0, %13, %cst_12 {dimension_numbers = #tpu.dot_dimension_numbers<[1], [0], [0], [1], [0, 0, 1, 1], [], []>} : vector<8x784xbf16>, vector<784x864xbf16>, vector<8x864xf32> -> vector<8x864xf32>
    %15 = arith.maximumf %11, %14 : vector<8x864xf32>
    %c0_13 = arith.constant 0 : index
    %c0_14 = arith.constant 0 : index
    %16 = vector.load %arg3[%c0_13, %c0_14] : memref<1x864xf32, #tpu.memory_space<vmem>>, vector<1x864xf32>
    %17 = vector.broadcast %16 : vector<1x864xf32> to vector<8x864xf32>
    %18 = arith.addf %15, %17 : vector<8x864xf32>
    %cst_15 = arith.constant 0.000000e+00 : f32
    %19 = vector.broadcast %cst_15 : f32 to vector<8x864xf32>
    %20 = arith.maximumf %18, %19 : vector<8x864xf32>
    %21 = arith.truncf %20 : vector<8x864xf32> to vector<8x864xbf16>
    %c0_16 = arith.constant 0 : index
    %c0_17 = arith.constant 0 : index
    %c0_18 = arith.constant 0 : index
    %22 = vector.load %arg4[%c0_16, %c0_17, %c0_18] : memref<4x864x256xbf16, #tpu.memory_space<vmem>>, vector<1x864x256xbf16>
    %23 = vector.shape_cast %22 : vector<1x864x256xbf16> to vector<864x256xbf16>
    %cst_19 = arith.constant dense<0.000000e+00> : vector<8x256xf32>
    %24 = tpu.matmul %21, %23, %cst_19 {dimension_numbers = #tpu.dot_dimension_numbers<[1], [0], [0], [1], [0, 0, 1, 1], [], []>} : vector<8x864xbf16>, vector<864x256xbf16>, vector<8x256xf32> -> vector<8x256xf32>
    %c1_20 = arith.constant 1 : index
    %c0_21 = arith.constant 0 : index
    %c0_22 = arith.constant 0 : index
    %25 = vector.load %arg4[%c1_20, %c0_21, %c0_22] : memref<4x864x256xbf16, #tpu.memory_space<vmem>>, vector<1x864x256xbf16>
    %26 = vector.shape_cast %25 : vector<1x864x256xbf16> to vector<864x256xbf16>
    %cst_23 = arith.constant dense<0.000000e+00> : vector<8x256xf32>
    %27 = tpu.matmul %21, %26, %cst_23 {dimension_numbers = #tpu.dot_dimension_numbers<[1], [0], [0], [1], [0, 0, 1, 1], [], []>} : vector<8x864xbf16>, vector<864x256xbf16>, vector<8x256xf32> -> vector<8x256xf32>
    %28 = arith.maximumf %24, %27 : vector<8x256xf32>
    %c2_24 = arith.constant 2 : index
    %c0_25 = arith.constant 0 : index
    %c0_26 = arith.constant 0 : index
    %29 = vector.load %arg4[%c2_24, %c0_25, %c0_26] : memref<4x864x256xbf16, #tpu.memory_space<vmem>>, vector<1x864x256xbf16>
    %30 = vector.shape_cast %29 : vector<1x864x256xbf16> to vector<864x256xbf16>
    %cst_27 = arith.constant dense<0.000000e+00> : vector<8x256xf32>
    %31 = tpu.matmul %21, %30, %cst_27 {dimension_numbers = #tpu.dot_dimension_numbers<[1], [0], [0], [1], [0, 0, 1, 1], [], []>} : vector<8x864xbf16>, vector<864x256xbf16>, vector<8x256xf32> -> vector<8x256xf32>
    %32 = arith.maximumf %28, %31 : vector<8x256xf32>
    %c3_28 = arith.constant 3 : index
    %c0_29 = arith.constant 0 : index
    %c0_30 = arith.constant 0 : index
    %33 = vector.load %arg4[%c3_28, %c0_29, %c0_30] : memref<4x864x256xbf16, #tpu.memory_space<vmem>>, vector<1x864x256xbf16>
    %34 = vector.shape_cast %33 : vector<1x864x256xbf16> to vector<864x256xbf16>
    %cst_31 = arith.constant dense<0.000000e+00> : vector<8x256xf32>
    %35 = tpu.matmul %21, %34, %cst_31 {dimension_numbers = #tpu.dot_dimension_numbers<[1], [0], [0], [1], [0, 0, 1, 1], [], []>} : vector<8x864xbf16>, vector<864x256xbf16>, vector<8x256xf32> -> vector<8x256xf32>
    %36 = arith.maximumf %32, %35 : vector<8x256xf32>
    %c0_32 = arith.constant 0 : index
    %c0_33 = arith.constant 0 : index
    %37 = vector.load %arg5[%c0_32, %c0_33] : memref<1x256xf32, #tpu.memory_space<vmem>>, vector<1x256xf32>
    %38 = vector.broadcast %37 : vector<1x256xf32> to vector<8x256xf32>
    %39 = arith.addf %36, %38 : vector<8x256xf32>
    %cst_34 = arith.constant 0.000000e+00 : f32
    %40 = vector.broadcast %cst_34 : f32 to vector<8x256xf32>
    %41 = arith.maximumf %39, %40 : vector<8x256xf32>
    %42 = arith.truncf %41 : vector<8x256xf32> to vector<8x256xbf16>
    %c0_35 = arith.constant 0 : index
    %c0_36 = arith.constant 0 : index
    %43 = vector.load %arg6[%c0_35, %c0_36] : memref<256x128xbf16, #tpu.memory_space<vmem>>, vector<256x128xbf16>
    %cst_37 = arith.constant dense<0.000000e+00> : vector<8x128xf32>
    %44 = tpu.matmul %42, %43, %cst_37 {dimension_numbers = #tpu.dot_dimension_numbers<[1], [0], [0], [1], [0, 0, 1, 1], [], []>} : vector<8x256xbf16>, vector<256x128xbf16>, vector<8x128xf32> -> vector<8x128xf32>
    %c0_38 = arith.constant 0 : index
    %c0_39 = arith.constant 0 : index
    %45 = vector.load %arg7[%c0_38, %c0_39] : memref<1x128xf32, #tpu.memory_space<vmem>>, vector<1x128xf32>
    %46 = vector.broadcast %45 : vector<1x128xf32> to vector<8x128xf32>
    %47 = arith.addf %44, %46 : vector<8x128xf32>
    %cst_40 = arith.constant 0.000000e+00 : f32
    %48 = vector.broadcast %cst_40 : f32 to vector<8x128xf32>
    %49 = arith.maximumf %47, %48 : vector<8x128xf32>
    %50 = arith.truncf %49 : vector<8x128xf32> to vector<8x128xbf16>
    %c0_41 = arith.constant 0 : index
    %c0_42 = arith.constant 0 : index
    %51 = vector.load %arg8[%c0_41, %c0_42] : memref<128x128xbf16, #tpu.memory_space<vmem>>, vector<128x128xbf16>
    %cst_43 = arith.constant dense<0.000000e+00> : vector<8x128xf32>
    %52 = tpu.matmul %50, %51, %cst_43 {dimension_numbers = #tpu.dot_dimension_numbers<[1], [0], [0], [1], [0, 0, 1, 1], [], []>} : vector<8x128xbf16>, vector<128x128xbf16>, vector<8x128xf32> -> vector<8x128xf32>
    %c0_44 = arith.constant 0 : index
    %c0_45 = arith.constant 0 : index
    %53 = vector.load %arg9[%c0_44, %c0_45] : memref<1x128xf32, #tpu.memory_space<vmem>>, vector<1x128xf32>
    %54 = vector.broadcast %53 : vector<1x128xf32> to vector<8x128xf32>
    %55 = arith.addf %52, %54 : vector<8x128xf32>
    %cst_46 = arith.constant 0.000000e+00 : f32
    %56 = vector.broadcast %cst_46 : f32 to vector<8x128xf32>
    %57 = arith.maximumf %55, %56 : vector<8x128xf32>
    %58 = arith.truncf %57 : vector<8x128xf32> to vector<8x128xbf16>
    %c0_47 = arith.constant 0 : index
    %c0_48 = arith.constant 0 : index
    %59 = vector.load %arg10[%c0_47, %c0_48] : memref<128x128xbf16, #tpu.memory_space<vmem>>, vector<128x128xbf16>
    %cst_49 = arith.constant dense<0.000000e+00> : vector<8x128xf32>
    %60 = tpu.matmul %58, %59, %cst_49 {dimension_numbers = #tpu.dot_dimension_numbers<[1], [0], [0], [1], [0, 0, 1, 1], [], []>} : vector<8x128xbf16>, vector<128x128xbf16>, vector<8x128xf32> -> vector<8x128xf32>
    %c0_50 = arith.constant 0 : index
    %c0_51 = arith.constant 0 : index
    %61 = vector.load %arg11[%c0_50, %c0_51] : memref<1x128xf32, #tpu.memory_space<vmem>>, vector<1x128xf32>
    %62 = vector.broadcast %61 : vector<1x128xf32> to vector<8x128xf32>
    %63 = arith.addf %60, %62 : vector<8x128xf32>
    %c0_52 = arith.constant 0 : index
    %c0_53 = arith.constant 0 : index
    %64 = vector.load %arg12[%c0_52, %c0_53] : memref<8x128xf32, #tpu.memory_space<vmem>>, vector<8x128xf32>
    tpu.vector_store %arg12[%c0_52, %c0_53], %63 {strides = array<i32>} : memref<8x128xf32, #tpu.memory_space<vmem>>, vector<8x128xf32>,
    return
  }
  func.func @transform_0(%arg0: i32) -> (i32, i32) {
    %c0_i32 = arith.constant 0 : i32
    %c0_i32_0 = arith.constant 0 : i32
    return %arg0, %c0_i32 : i32, i32
  }
  func.func @transform_1(%arg0: i32) -> (i32, i32, i32) {
    %c0_i32 = arith.constant 0 : i32
    %c0_i32_0 = arith.constant 0 : i32
    %c0_i32_1 = arith.constant 0 : i32
    %c0_i32_2 = arith.constant 0 : i32
    return %c0_i32, %c0_i32_0, %c0_i32_1 : i32, i32, i32
  }
  func.func @transform_2(%arg0: i32) -> (i32, i32) {
    %c0_i32 = arith.constant 0 : i32
    %c0_i32_0 = arith.constant 0 : i32
    %c0_i32_1 = arith.constant 0 : i32
    return %c0_i32, %c0_i32_0 : i32, i32
  }
  func.func @transform_3(%arg0: i32) -> (i32, i32, i32) {
    %c0_i32 = arith.constant 0 : i32
    %c0_i32_0 = arith.constant 0 : i32
    %c0_i32_1 = arith.constant 0 : i32
    %c0_i32_2 = arith.constant 0 : i32
    return %c0_i32, %c0_i32_0, %c0_i32_1 : i32, i32, i32
  }
  func.func @transform_4(%arg0: i32) -> (i32, i32) {
    %c0_i32 = arith.constant 0 : i32
    %c0_i32_0 = arith.constant 0 : i32
    %c0_i32_1 = arith.constant 0 : i32
    return %c0_i32, %c0_i32_0 : i32, i32
  }
  func.func @transform_5(%arg0: i32) -> (i32, i32) {
    %c0_i32 = arith.constant 0 : i32
    %c0_i32_0 = arith.constant 0 : i32
    %c0_i32_1 = arith.constant 0 : i32
    return %c0_i32, %c0_i32_0 : i32, i32
  }
  func.func @transform_6(%arg0: i32) -> (i32, i32) {
    %c0_i32 = arith.constant 0 : i32
    %c0_i32_0 = arith.constant 0 : i32
    %c0_i32_1 = arith.constant 0 : i32
    return %c0_i32, %c0_i32_0 : i32, i32
  }
  func.func @transform_7(%arg0: i32) -> (i32, i32) {
    %c0_i32 = arith.constant 0 : i32
    %c0_i32_0 = arith.constant 0 : i32
    %c0_i32_1 = arith.constant 0 : i32
    return %c0_i32, %c0_i32_0 : i32, i32
  }
  func.func @transform_8(%arg0: i32) -> (i32, i32) {
    %c0_i32 = arith.constant 0 : i32
    %c0_i32_0 = arith.constant 0 : i32
    %c0_i32_1 = arith.constant 0 : i32
    return %c0_i32, %c0_i32_0 : i32, i32
  }
  func.func @transform_9(%arg0: i32) -> (i32, i32) {
    %c0_i32 = arith.constant 0 : i32
    %c0_i32_0 = arith.constant 0 : i32
    %c0_i32_1 = arith.constant 0 : i32
    return %c0_i32, %c0_i32_0 : i32, i32
  }
  func.func @transform_10(%arg0: i32) -> (i32, i32) {
    %c0_i32 = arith.constant 0 : i32
    %c0_i32_0 = arith.constant 0 : i32
    %c0_i32_1 = arith.constant 0 : i32
    return %c0_i32, %c0_i32_0 : i32, i32
  }
  func.func @transform_11(%arg0: i32) -> (i32, i32) {
    %c0_i32 = arith.constant 0 : i32
    %c0_i32_0 = arith.constant 0 : i32
    return %arg0, %c0_i32 : i32, i32
  }
}

</mosaic_0001>

<llo_original>
// kernel: mnist_cnn_forward.1
$region0: #{mnist_cnn_forward.1}
  #allocation0 [shape = 'u32[]', space=smem, size = 0x4, offset = 0x4, fixed_abs, tag = 'smem constant byte address 0x4 - core index']
  #allocation1 [shape = 'u32[72,128]{1,0:T(1,128)}', space=vmem, size = 0x9000, scoped, tag = 'internal scratch']
  %s0 = inlined_call_operand.vmem [shape: bf16[8,784], index: 0, kind: input, shape index: {}]
  %s1 = inlined_call_operand.hbm [shape: bf16[4,784,864], index: 1, kind: input, shape index: {}]
  %s2 = inlined_call_operand.hbm [shape: f32[1,864], index: 2, kind: input, shape index: {}]
  %s3 = inlined_call_operand.hbm [shape: bf16[4,864,256], index: 3, kind: input, shape index: {}]
  %s4 = inlined_call_operand.hbm [shape: f32[1,256], index: 4, kind: input, shape index: {}]
  %s5 = inlined_call_operand.hbm [shape: bf16[256,128], index: 5, kind: input, shape index: {}]
  %s6 = inlined_call_operand.hbm [shape: f32[1,128], index: 6, kind: input, shape index: {}]
  %s7 = inlined_call_operand.hbm [shape: bf16[128,128], index: 7, kind: input, shape index: {}]
  %s8 = inlined_call_operand.hbm [shape: f32[1,128], index: 8, kind: input, shape index: {}]
  %s9 = inlined_call_operand.hbm [shape: bf16[128,128], index: 9, kind: input, shape index: {}]
  %s10 = inlined_call_operand.hbm [shape: f32[1,128], index: 10, kind: input, shape index: {}]
  %s11 = inlined_call_operand.vmem [shape: f32[8,128], index: 11, kind: output, shape index: {}]
  %s12 = sld [smem:[#allocation0]]
  $region94: #{mnist_cnn_forward.1} parent=0
    _
  %s14 = ssub.s32 1, %s12
  %s15 = scalar_select 0, %s14, %s12
  $region1: #{mnist_cnn_forward.1} parent=0
    #allocation2 [shape = 'u8[5619712]{0}', space=vmem, size = 0x55c000, scoped, tag = 'input window, operand 1, single buffered']
    #allocation3 [shape = 's32[1]{0}', space=sflag, size = 0x4, scoped, tag = 'scoped memory for mnist_cnn_forward.1']
    #allocation4 [shape = 'u8[3584]{0}', space=vmem, size = 0x1000, scoped, tag = 'input window, operand 2, single buffered']
    #allocation5 [shape = 's32[1]{0}', space=sflag, size = 0x4, scoped, tag = 'scoped memory for mnist_cnn_forward.1']
    #allocation6 [shape = 'u8[1769472]{0}', space=vmem, size = 0x1b0000, scoped, tag = 'input window, operand 3, single buffered']
    #allocation7 [shape = 'u8[1024]{0}', space=vmem, size = 0x400, scoped, tag = 'input window, operand 4, single buffered']
    #allocation8 [shape = 's32[1]{0}', space=sflag, size = 0x4, scoped, tag = 'scoped memory for mnist_cnn_forward.1']
    #allocation9 [shape = 'u8[65536]{0}', space=vmem, size = 0x10000, scoped, tag = 'input window, operand 5, single buffered']
    #allocation10 [shape = 'u8[512]{0}', space=vmem, size = 0x400, scoped, tag = 'input window, operand 6, single buffered']
    #allocation11 [shape = 's32[1]{0}', space=sflag, size = 0x4, scoped, tag = 'scoped memory for mnist_cnn_forward.1']
    #allocation12 [shape = 'u8[32768]{0}', space=vmem, size = 0x8000, scoped, tag = 'input window, operand 7, single buffered']
    #allocation13 [shape = 'u8[512]{0}', space=vmem, size = 0x400, scoped, tag = 'input window, operand 8, single buffered']
    #allocation14 [shape = 's32[1]{0}', space=sflag, size = 0x4, scoped, tag = 'scoped memory for mnist_cnn_forward.1']
    #allocation15 [shape = 'u8[32768]{0}', space=vmem, size = 0x8000, scoped, tag = 'input window, operand 9, single buffered']
    #allocation16 [shape = 'u8[512]{0}', space=vmem, size = 0x400, scoped, tag = 'input window, operand 10, single buffered']
    #allocation17 [shape = 's32[1]{0}', space=sflag, size = 0x4, scoped, tag = 'scoped memory for mnist_cnn_forward.1']
    %16 = vsyncpa [#allocation3], 0
    %17 = vsyncpa [#allocation5], 0
    %18 = vsyncpa [#allocation8], 0
    %19 = vsyncpa [#allocation11], 0
    %20 = vsyncpa [#allocation14], 0
    %21 = vsyncpa [#allocation17], 0
    // Predicated region
    $region2: #{mnist_cnn_forward.1} parent=1 // pred_check
      _
    $region3: #{mnist_cnn_forward.1} parent=1 // pred_check_branch
      %23 = sbr.rel (0) target = $region5
    $region4: #{mnist_cnn_forward.1} parent=1 // pred_region
      _
    $region5: #{mnist_cnn_forward.1} parent=1 // pred_fallthru
      _
    // Predicated region
    $region6: #{mnist_cnn_forward.1} parent=1 // pred_check
      _
    $region7: #{mnist_cnn_forward.1} parent=1 // pred_check_branch
      %25 = sbr.rel (0) target = $region9
    $region8: #{mnist_cnn_forward.1} parent=1 // pred_region
      %27 = vsyncadd [#allocation3], 0
      %s28 = sshll.u32 %s1, 4
      %s29 = int_to_ptr.hbm [resolvable:$true] %s28
      %s30 = sshll.u32 [#allocation2], 4
      %s31 = int_to_ptr.vmem [resolvable:$true] %s30
      %36 = dma.hbm_to_vmem [thread:$0]  %s29, 175616, %s31, [#allocation3], 448, 448, 28
    $region9: #{mnist_cnn_forward.1} parent=1 // pred_fallthru
      _
    // Predicated region
    $region10: #{mnist_cnn_forward.1} parent=1 // pred_check
      _
    $region11: #{mnist_cnn_forward.1} parent=1 // pred_check_branch
      %38 = sbr.rel (0) target = $region13
    $region12: #{mnist_cnn_forward.1} parent=1 // pred_region
      %40 = vsyncadd [#allocation5], 0
      %s42 = sshll.u32 %s2, 4
      %s43 = int_to_ptr.hbm [resolvable:$true] %s42
      %s44 = sshll.u32 [#allocation4], 4
      %s45 = int_to_ptr.vmem [resolvable:$true] %s44
      %47 = dma.hbm_to_vmem [thread:$0]  %s43, 112, %s45, [#allocation5]
    $region13: #{mnist_cnn_forward.1} parent=1 // pred_fallthru
      _
    // Predicated region
    $region14: #{mnist_cnn_forward.1} parent=1 // pred_check
      _
    $region15: #{mnist_cnn_forward.1} parent=1 // pred_check_branch
      %49 = sbr.rel (0) target = $region17
    $region16: #{mnist_cnn_forward.1} parent=1 // pred_region
      %51 = vsyncadd [#allocation5], 0
      %s52 = sshll.u32 %s3, 4
      %s53 = int_to_ptr.hbm [resolvable:$true] %s52
      %s54 = sshll.u32 [#allocation6], 4
      %s55 = int_to_ptr.vmem [resolvable:$true] %s54
      %60 = dma.hbm_to_vmem [thread:$0]  %s53, 55296, %s55, [#allocation5], 128, 128, 8
    $region17: #{mnist_cnn_forward.1} parent=1 // pred_fallthru
      _
    // Predicated region
    $region18: #{mnist_cnn_forward.1} parent=1 // pred_check
      _
    $region19: #{mnist_cnn_forward.1} parent=1 // pred_check_branch
      %62 = sbr.rel (0) target = $region21
    $region20: #{mnist_cnn_forward.1} parent=1 // pred_region
      %64 = vsyncadd [#allocation8], 0
      %s66 = sshll.u32 %s4, 4
      %s67 = int_to_ptr.hbm [resolvable:$true] %s66
      %s68 = sshll.u32 [#allocation7], 4
      %s69 = int_to_ptr.vmem [resolvable:$true] %s68
      %71 = dma.hbm_to_vmem [thread:$0]  %s67, 32, %s69, [#allocation8]
    $region21: #{mnist_cnn_forward.1} parent=1 // pred_fallthru
      _
    // Predicated region
    $region22: #{mnist_cnn_forward.1} parent=1 // pred_check
      _
    $region23: #{mnist_cnn_forward.1} parent=1 // pred_check_branch
      %73 = sbr.rel (0) target = $region25
    $region24: #{mnist_cnn_forward.1} parent=1 // pred_region
      %75 = vsyncadd [#allocation8], 0
      %s76 = sshll.u32 %s5, 4
      %s77 = int_to_ptr.hbm [resolvable:$true] %s76
      %s78 = sshll.u32 [#allocation9], 4
      %s79 = int_to_ptr.vmem [resolvable:$true] %s78
      %84 = dma.hbm_to_vmem [thread:$0]  %s77, 2048, %s79, [#allocation8], 64, 64, 4
    $region25: #{mnist_cnn_forward.1} parent=1 // pred_fallthru
      _
    // Predicated region
    $region26: #{mnist_cnn_forward.1} parent=1 // pred_check
      _
    $region27: #{mnist_cnn_forward.1} parent=1 // pred_check_branch
      %86 = sbr.rel (0) target = $region29
    $region28: #{mnist_cnn_forward.1} parent=1 // pred_region
      %88 = vsyncadd [#allocation11], 0
      %s90 = sshll.u32 %s6, 4
      %s91 = int_to_ptr.hbm [resolvable:$true] %s90
      %s92 = sshll.u32 [#allocation10], 4
      %s93 = int_to_ptr.vmem [resolvable:$true] %s92
      %95 = dma.hbm_to_vmem [thread:$0]  %s91, 16, %s93, [#allocation11]
    $region29: #{mnist_cnn_forward.1} parent=1 // pred_fallthru
      _
    // Predicated region
    $region30: #{mnist_cnn_forward.1} parent=1 // pred_check
      _
    $region31: #{mnist_cnn_forward.1} parent=1 // pred_check_branch
      %97 = sbr.rel (0) target = $region33
    $region32: #{mnist_cnn_forward.1} parent=1 // pred_region
      %99 = vsyncadd [#allocation11], 0
      %s100 = sshll.u32 %s7, 4
      %s101 = int_to_ptr.hbm [resolvable:$true] %s100
      %s102 = sshll.u32 [#allocation12], 4
      %s103 = int_to_ptr.vmem [resolvable:$true] %s102
      %108 = dma.hbm_to_vmem [thread:$0]  %s101, 1024, %s103, [#allocation11], 64, 64, 4
    $region33: #{mnist_cnn_forward.1} parent=1 // pred_fallthru
      _
    // Predicated region
    $region34: #{mnist_cnn_forward.1} parent=1 // pred_check
      _
    $region35: #{mnist_cnn_forward.1} parent=1 // pred_check_branch
      %110 = sbr.rel (0) target = $region37
    $region36: #{mnist_cnn_forward.1} parent=1 // pred_region
      %112 = vsyncadd [#allocation14], 0
      %s114 = sshll.u32 %s8, 4
      %s115 = int_to_ptr.hbm [resolvable:$true] %s114
      %s116 = sshll.u32 [#allocation13], 4
      %s117 = int_to_ptr.vmem [resolvable:$true] %s116
      %119 = dma.hbm_to_vmem [thread:$0]  %s115, 16, %s117, [#allocation14]
    $region37: #{mnist_cnn_forward.1} parent=1 // pred_fallthru
      _
    // Predicated region
    $region38: #{mnist_cnn_forward.1} parent=1 // pred_check
      _
    $region39: #{mnist_cnn_forward.1} parent=1 // pred_check_branch
      %121 = sbr.rel (0) target = $region41
    $region40: #{mnist_cnn_forward.1} parent=1 // pred_region
      %123 = vsyncadd [#allocation14], 0
      %s124 = sshll.u32 %s9, 4
      %s125 = int_to_ptr.hbm [resolvable:$true] %s124
      %s126 = sshll.u32 [#allocation15], 4
      %s127 = int_to_ptr.vmem [resolvable:$true] %s126
      %132 = dma.hbm_to_vmem [thread:$0]  %s125, 1024, %s127, [#allocation14], 64, 64, 4
    $region41: #{mnist_cnn_forward.1} parent=1 // pred_fallthru
      _
    // Predicated region
    $region42: #{mnist_cnn_forward.1} parent=1 // pred_check
      _
    $region43: #{mnist_cnn_forward.1} parent=1 // pred_check_branch
      %134 = sbr.rel (0) target = $region45
    $region44: #{mnist_cnn_forward.1} parent=1 // pred_region
      %136 = vsyncadd [#allocation17], 0
      %s138 = sshll.u32 %s10, 4
      %s139 = int_to_ptr.hbm [resolvable:$true] %s138
      %s140 = sshll.u32 [#allocation16], 4
      %s141 = int_to_ptr.vmem [resolvable:$true] %s140
      %143 = dma.hbm_to_vmem [thread:$0]  %s139, 16, %s141, [#allocation17]
    $region45: #{mnist_cnn_forward.1} parent=1 // pred_fallthru
      _
    // Predicated region
    $region46: #{mnist_cnn_forward.1} parent=1 // pred_check
      _
    $region47: #{mnist_cnn_forward.1} parent=1 // pred_check_branch
      %145 = sbr.rel (0) target = $region49
    $region48: #{mnist_cnn_forward.1} parent=1 // pred_region
      %147 = dma.done [#allocation3], 175616
    $region49: #{mnist_cnn_forward.1} parent=1 // pred_fallthru
      _
    // Predicated region
    $region50: #{mnist_cnn_forward.1} parent=1 // pred_check
      _
    $region51: #{mnist_cnn_forward.1} parent=1 // pred_check_branch
      %149 = sbr.rel (0) target = $region53
    $region52: #{mnist_cnn_forward.1} parent=1 // pred_region
      %151 = dma.done [#allocation5], 112
    $region53: #{mnist_cnn_forward.1} parent=1 // pred_fallthru
      _
    // Predicated region
    $region54: #{mnist_cnn_forward.1} parent=1 // pred_check
      _
    $region55: #{mnist_cnn_forward.1} parent=1 // pred_check_branch
      %153 = sbr.rel (0) target = $region57
    $region56: #{mnist_cnn_forward.1} parent=1 // pred_region
      %155 = dma.done [#allocation5], 55296
    $region57: #{mnist_cnn_forward.1} parent=1 // pred_fallthru
      _
    // Predicated region
    $region58: #{mnist_cnn_forward.1} parent=1 // pred_check
      _
    $region59: #{mnist_cnn_forward.1} parent=1 // pred_check_branch
      %157 = sbr.rel (0) target = $region61
    $region60: #{mnist_cnn_forward.1} parent=1 // pred_region
      %159 = dma.done [#allocation8], 32
    $region61: #{mnist_cnn_forward.1} parent=1 // pred_fallthru
      _
    // Predicated region
    $region62: #{mnist_cnn_forward.1} parent=1 // pred_check
      _
    $region63: #{mnist_cnn_forward.1} parent=1 // pred_check_branch
      %161 = sbr.rel (0) target = $region65
    $region64: #{mnist_cnn_forward.1} parent=1 // pred_region
      %163 = dma.done [#allocation8], 2048
    $region65: #{mnist_cnn_forward.1} parent=1 // pred_fallthru
      _
    // Predicated region
    $region66: #{mnist_cnn_forward.1} parent=1 // pred_check
      _
    $region67: #{mnist_cnn_forward.1} parent=1 // pred_check_branch
      %165 = sbr.rel (0) target = $region69
    $region68: #{mnist_cnn_forward.1} parent=1 // pred_region
      %167 = dma.done [#allocation11], 16
    $region69: #{mnist_cnn_forward.1} parent=1 // pred_fallthru
      _
    // Predicated region
    $region70: #{mnist_cnn_forward.1} parent=1 // pred_check
      _
    $region71: #{mnist_cnn_forward.1} parent=1 // pred_check_branch
      %169 = sbr.rel (0) target = $region73
    $region72: #{mnist_cnn_forward.1} parent=1 // pred_region
      %171 = dma.done [#allocation11], 1024
    $region73: #{mnist_cnn_forward.1} parent=1 // pred_fallthru
      _
    // Predicated region
    $region74: #{mnist_cnn_forward.1} parent=1 // pred_check
      _
    $region75: #{mnist_cnn_forward.1} parent=1 // pred_check_branch
      %173 = sbr.rel (0) target = $region77
    $region76: #{mnist_cnn_forward.1} parent=1 // pred_region
      %175 = dma.done [#allocation14], 16
    $region77: #{mnist_cnn_forward.1} parent=1 // pred_fallthru
      _
    // Predicated region
    $region78: #{mnist_cnn_forward.1} parent=1 // pred_check
      _
    $region79: #{mnist_cnn_forward.1} parent=1 // pred_check_branch
      %177 = sbr.rel (0) target = $region81
    $region80: #{mnist_cnn_forward.1} parent=1 // pred_region
      %179 = dma.done [#allocation14], 1024
    $region81: #{mnist_cnn_forward.1} parent=1 // pred_fallthru
      _
    // Predicated region
    $region82: #{mnist_cnn_forward.1} parent=1 // pred_check
      _
    $region83: #{mnist_cnn_forward.1} parent=1 // pred_check_branch
      %181 = sbr.rel (0) target = $region85
    $region84: #{mnist_cnn_forward.1} parent=1 // pred_region
      %183 = dma.done [#allocation17], 16
    $region85: #{mnist_cnn_forward.1} parent=1 // pred_fallthru
      _
    %v185 = vld [vmem:[%s0] sm:$0xff]
    %v186 = vld [vmem:[%s0 + $0x8] sm:$0xff]
    %v187 = vld [vmem:[%s0 + $0x10] sm:$0xff]
    %v188 = vld [vmem:[%s0 + $0x18] sm:$0xf]
    %v189 = vld [vmem:[#allocation2] sm:$0xff]
    %v190 = vld [vmem:[#allocation2 + $0x8] sm:$0xff]
    %v191 = vld [vmem:[#allocation2 + $0x10] sm:$0xff]
    %v192 = vld [vmem:[#allocation2 + $0x18] sm:$0xf]
    %v193 = vld [vmem:[#allocation2 + $0x1c] sm:$0xff]
    %v194 = vld [vmem:[#allocation2 + $0x24] sm:$0xff]
    %v195 = vld [vmem:[#allocation2 + $0x2c] sm:$0xff]
    %v196 = vld [vmem:[#allocation2 + $0x34] sm:$0xf]
    %v197 = vld [vmem:[#allocation2 + $0x38] sm:$0xff]
    %v198 = vld [vmem:[#allocation2 + $0x40] sm:$0xff]
    %v199 = vld [vmem:[#allocation2 + $0x48] sm:$0xff]
    %v200 = vld [vmem:[#allocation2 + $0x50] sm:$0xf]
    %v201 = vld [vmem:[#allocation2 + $0x54] sm:$0xff]
    %v202 = vld [vmem:[#allocation2 + $0x5c] sm:$0xff]
    %v203 = vld [vmem:[#allocation2 + $0x64] sm:$0xff]
    %v204 = vld [vmem:[#allocation2 + $0x6c] sm:$0xf]
    %v205 = vld [vmem:[#allocation2 + $0x70] sm:$0xff]
    %v206 = vld [vmem:[#allocation2 + $0x78] sm:$0xff]
    %v207 = vld [vmem:[#allocation2 + $0x80] sm:$0xff]
    %v208 = vld [vmem:[#allocation2 + $0x88] sm:$0xf]
    %v209 = vld [vmem:[#allocation2 + $0x8c] sm:$0xff]
    %v210 = vld [vmem:[#allocation2 + $0x94] sm:$0xff]
    %v211 = vld [vmem:[#allocation2 + $0x9c] sm:$0xff]
    %v212 = vld [vmem:[#allocation2 + $0xa4] sm:$0xf]
    %v213 = vld [vmem:[#allocation2 + $0xa8] sm:$0xff]
    %v214 = vld [vmem:[#allocation2 + $0xb0] sm:$0xff]
    %v215 = vld [vmem:[#allocation2 + $0xb8] sm:$0xff]
    %v216 = vld [vmem:[#allocation2 + $0xc0] sm:$0xf]
    %v217 = vld [vmem:[#allocation2 + $0xc4] sm:$0xff]
    %v218 = vld [vmem:[#allocation2 + $0xcc] sm:$0xff]
    %v219 = vld [vmem:[#allocation2 + $0xd4] sm:$0xff]
    %v220 = vld [vmem:[#allocation2 + $0xdc] sm:$0xf]
    %v221 = vld [vmem:[#allocation2 + $0xe0] sm:$0xff]
    %v222 = vld [vmem:[#allocation2 + $0xe8] sm:$0xff]
    %v223 = vld [vmem:[#allocation2 + $0xf0] sm:$0xff]
    %v224 = vld [vmem:[#allocation2 + $0xf8] sm:$0xf]
    %v225 = vld [vmem:[#allocation2 + $0xfc] sm:$0xff]
    %v226 = vld [vmem:[#allocation2 + $0x104] sm:$0xff]
    %v227 = vld [vmem:[#allocation2 + $0x10c] sm:$0xff]
    %v228 = vld [vmem:[#allocation2 + $0x114] sm:$0xf]
    %v229 = vld [vmem:[#allocation2 + $0x118] sm:$0xff]
    %v230 = vld [vmem:[#allocation2 + $0x120] sm:$0xff]
    %v231 = vld [vmem:[#allocation2 + $0x128] sm:$0xff]
    %v232 = vld [vmem:[#allocation2 + $0x130] sm:$0xf]
    %v233 = vld [vmem:[#allocation2 + $0x134] sm:$0xff]
    %v234 = vld [vmem:[#allocation2 + $0x13c] sm:$0xff]
    %v235 = vld [vmem:[#allocation2 + $0x144] sm:$0xff]
    %v236 = vld [vmem:[#allocation2 + $0x14c] sm:$0xf]
    %v237 = vld [vmem:[#allocation2 + $0x150] sm:$0xff]
    %v238 = vld [vmem:[#allocation2 + $0x158] sm:$0xff]
    %v239 = vld [vmem:[#allocation2 + $0x160] sm:$0xff]
    %v240 = vld [vmem:[#allocation2 + $0x168] sm:$0xf]
    %v241 = vld [vmem:[#allocation2 + $0x16c] sm:$0xff]
    %v242 = vld [vmem:[#allocation2 + $0x174] sm:$0xff]
    %v243 = vld [vmem:[#allocation2 + $0x17c] sm:$0xff]
    %v244 = vld [vmem:[#allocation2 + $0x184] sm:$0xf]
    %v245 = vld [vmem:[#allocation2 + $0x188] sm:$0xff]
    %v246 = vld [vmem:[#allocation2 + $0x190] sm:$0xff]
    %v247 = vld [vmem:[#allocation2 + $0x198] sm:$0xff]
    %v248 = vld [vmem:[#allocation2 + $0x1a0] sm:$0xf]
    %v249 = vld [vmem:[#allocation2 + $0x1a4] sm:$0xff]
    %v250 = vld [vmem:[#allocation2 + $0x1ac] sm:$0xff]
    %v251 = vld [vmem:[#allocation2 + $0x1b4] sm:$0xff]
    %v252 = vld [vmem:[#allocation2 + $0x1bc] sm:$0xf]
    %v253 = vld [vmem:[#allocation2 + $0x1c0] sm:$0xff]
    %v254 = vld [vmem:[#allocation2 + $0x1c8] sm:$0xff]
    %v255 = vld [vmem:[#allocation2 + $0x1d0] sm:$0xff]
    %v256 = vld [vmem:[#allocation2 + $0x1d8] sm:$0xf]
    %v257 = vld [vmem:[#allocation2 + $0x1dc] sm:$0xff]
    %v258 = vld [vmem:[#allocation2 + $0x1e4] sm:$0xff]
    %v259 = vld [vmem:[#allocation2 + $0x1ec] sm:$0xff]
    %v260 = vld [vmem:[#allocation2 + $0x1f4] sm:$0xf]
    %v261 = vld [vmem:[#allocation2 + $0x1f8] sm:$0xff]
    %v262 = vld [vmem:[#allocation2 + $0x200] sm:$0xff]
    %v263 = vld [vmem:[#allocation2 + $0x208] sm:$0xff]
    %v264 = vld [vmem:[#allocation2 + $0x210] sm:$0xf]
    %v265 = vld [vmem:[#allocation2 + $0x214] sm:$0xff]
    %v266 = vld [vmem:[#allocation2 + $0x21c] sm:$0xff]
    %v267 = vld [vmem:[#allocation2 + $0x224] sm:$0xff]
    %v268 = vld [vmem:[#allocation2 + $0x22c] sm:$0xf]
    %v269 = vld [vmem:[#allocation2 + $0x230] sm:$0xff]
    %v270 = vld [vmem:[#allocation2 + $0x238] sm:$0xff]
    %v271 = vld [vmem:[#allocation2 + $0x240] sm:$0xff]
    %v272 = vld [vmem:[#allocation2 + $0x248] sm:$0xf]
    %v273 = vld [vmem:[#allocation2 + $0x24c] sm:$0xff]
    %v274 = vld [vmem:[#allocation2 + $0x254] sm:$0xff]
    %v275 = vld [vmem:[#allocation2 + $0x25c] sm:$0xff]
    %v276 = vld [vmem:[#allocation2 + $0x264] sm:$0xf]
    %v277 = vld [vmem:[#allocation2 + $0x268] sm:$0xff]
    %v278 = vld [vmem:[#allocation2 + $0x270] sm:$0xff]
    %v279 = vld [vmem:[#allocation2 + $0x278] sm:$0xff]
    %v280 = vld [vmem:[#allocation2 + $0x280] sm:$0xf]
    %v281 = vld [vmem:[#allocation2 + $0x284] sm:$0xff]
    %v282 = vld [vmem:[#allocation2 + $0x28c] sm:$0xff]
    %v283 = vld [vmem:[#allocation2 + $0x294] sm:$0xff]
    %v284 = vld [vmem:[#allocation2 + $0x29c] sm:$0xf]
    %v285 = vld [vmem:[#allocation2 + $0x2a0] sm:$0xff]
    %v286 = vld [vmem:[#allocation2 + $0x2a8] sm:$0xff]
    %v287 = vld [vmem:[#allocation2 + $0x2b0] sm:$0xff]
    %v288 = vld [vmem:[#allocation2 + $0x2b8] sm:$0xf]
    %v289 = vld [vmem:[#allocation2 + $0x2bc] sm:$0xff]
    %v290 = vld [vmem:[#allocation2 + $0x2c4] sm:$0xff]
    %v291 = vld [vmem:[#allocation2 + $0x2cc] sm:$0xff]
    %v292 = vld [vmem:[#allocation2 + $0x2d4] sm:$0xf]
    %v293 = vld [vmem:[#allocation2 + $0x2d8] sm:$0xff]
    %v294 = vld [vmem:[#allocation2 + $0x2e0] sm:$0xff]
    %v295 = vld [vmem:[#allocation2 + $0x2e8] sm:$0xff]
    %v296 = vld [vmem:[#allocation2 + $0x2f0] sm:$0xf]
    %v297 = vld [vmem:[#allocation2 + $0x2f4] sm:$0xff]
    %v298 = vld [vmem:[#allocation2 + $0x2fc] sm:$0xff]
    %v299 = vld [vmem:[#allocation2 + $0x304] sm:$0xff]
    %v300 = vld [vmem:[#allocation2 + $0x30c] sm:$0xf]
    %v301 = vld [vmem:[#allocation2 + $0x310] sm:$0xff]
    %v302 = vld [vmem:[#allocation2 + $0x318] sm:$0xff]
    %v303 = vld [vmem:[#allocation2 + $0x320] sm:$0xff]
    %v304 = vld [vmem:[#allocation2 + $0x328] sm:$0xf]
    %v305 = vld [vmem:[#allocation2 + $0x32c] sm:$0xff]
    %v306 = vld [vmem:[#allocation2 + $0x334] sm:$0xff]
    %v307 = vld [vmem:[#allocation2 + $0x33c] sm:$0xff]
    %v308 = vld [vmem:[#allocation2 + $0x344] sm:$0xf]
    %v309 = vld [vmem:[#allocation2 + $0x348] sm:$0xff]
    %v310 = vld [vmem:[#allocation2 + $0x350] sm:$0xff]
    %v311 = vld [vmem:[#allocation2 + $0x358] sm:$0xff]
    %v312 = vld [vmem:[#allocation2 + $0x360] sm:$0xf]
    %v313 = vld [vmem:[#allocation2 + $0x364] sm:$0xff]
    %v314 = vld [vmem:[#allocation2 + $0x36c] sm:$0xff]
    %v315 = vld [vmem:[#allocation2 + $0x374] sm:$0xff]
    %v316 = vld [vmem:[#allocation2 + $0x37c] sm:$0xf]
    %v317 = vld [vmem:[#allocation2 + $0x380] sm:$0xff]
    %v318 = vld [vmem:[#allocation2 + $0x388] sm:$0xff]
    %v319 = vld [vmem:[#allocation2 + $0x390] sm:$0xff]
    %v320 = vld [vmem:[#allocation2 + $0x398] sm:$0xf]
    %v321 = vld [vmem:[#allocation2 + $0x39c] sm:$0xff]
    %v322 = vld [vmem:[#allocation2 + $0x3a4] sm:$0xff]
    %v323 = vld [vmem:[#allocation2 + $0x3ac] sm:$0xff]
    %v324 = vld [vmem:[#allocation2 + $0x3b4] sm:$0xf]
    %v325 = vld [vmem:[#allocation2 + $0x3b8] sm:$0xff]
    %v326 = vld [vmem:[#allocation2 + $0x3c0] sm:$0xff]
    %v327 = vld [vmem:[#allocation2 + $0x3c8] sm:$0xff]
    %v328 = vld [vmem:[#allocation2 + $0x3d0] sm:$0xf]
    %v329 = vld [vmem:[#allocation2 + $0x3d4] sm:$0xff]
    %v330 = vld [vmem:[#allocation2 + $0x3dc] sm:$0xff]
    %v331 = vld [vmem:[#allocation2 + $0x3e4] sm:$0xff]
    %v332 = vld [vmem:[#allocation2 + $0x3ec] sm:$0xf]
    %v333 = vld [vmem:[#allocation2 + $0x3f0] sm:$0xff]
    %v334 = vld [vmem:[#allocation2 + $0x3f8] sm:$0xff]
    %v335 = vld [vmem:[#allocation2 + $0x400] sm:$0xff]
    %v336 = vld [vmem:[#allocation2 + $0x408] sm:$0xf]
    %v337 = vld [vmem:[#allocation2 + $0x40c] sm:$0xff]
    %v338 = vld [vmem:[#allocation2 + $0x414] sm:$0xff]
    %v339 = vld [vmem:[#allocation2 + $0x41c] sm:$0xff]
    %v340 = vld [vmem:[#allocation2 + $0x424] sm:$0xf]
    %v341 = vld [vmem:[#allocation2 + $0x428] sm:$0xff]
    %v342 = vld [vmem:[#allocation2 + $0x430] sm:$0xff]
    %v343 = vld [vmem:[#allocation2 + $0x438] sm:$0xff]
    %v344 = vld [vmem:[#allocation2 + $0x440] sm:$0xf]
    %v345 = vld [vmem:[#allocation2 + $0x444] sm:$0xff]
    %v346 = vld [vmem:[#allocation2 + $0x44c] sm:$0xff]
    %v347 = vld [vmem:[#allocation2 + $0x454] sm:$0xff]
    %v348 = vld [vmem:[#allocation2 + $0x45c] sm:$0xf]
    %v349 = vld [vmem:[#allocation2 + $0x460] sm:$0xff]
    %v350 = vld [vmem:[#allocation2 + $0x468] sm:$0xff]
    %v351 = vld [vmem:[#allocation2 + $0x470] sm:$0xff]
    %v352 = vld [vmem:[#allocation2 + $0x478] sm:$0xf]
    %v353 = vld [vmem:[#allocation2 + $0x47c] sm:$0xff]
    %v354 = vld [vmem:[#allocation2 + $0x484] sm:$0xff]
    %v355 = vld [vmem:[#allocation2 + $0x48c] sm:$0xff]
    %v356 = vld [vmem:[#allocation2 + $0x494] sm:$0xf]
    %v357 = vld [vmem:[#allocation2 + $0x498] sm:$0xff]
    %v358 = vld [vmem:[#allocation2 + $0x4a0] sm:$0xff]
    %v359 = vld [vmem:[#allocation2 + $0x4a8] sm:$0xff]
    %v360 = vld [vmem:[#allocation2 + $0x4b0] sm:$0xf]
    %v361 = vld [vmem:[#allocation2 + $0x4b4] sm:$0xff]
    %v362 = vld [vmem:[#allocation2 + $0x4bc] sm:$0xff]
    %v363 = vld [vmem:[#allocation2 + $0x4c4] sm:$0xff]
    %v364 = vld [vmem:[#allocation2 + $0x4cc] sm:$0xf]
    %v365 = vld [vmem:[#allocation2 + $0x4d0] sm:$0xff]
    %v366 = vld [vmem:[#allocation2 + $0x4d8] sm:$0xff]
    %v367 = vld [vmem:[#allocation2 + $0x4e0] sm:$0xff]
    %v368 = vld [vmem:[#allocation2 + $0x4e8] sm:$0xf]
    %v369 = vld [vmem:[#allocation2 + $0x4ec] sm:$0xff]
    %v370 = vld [vmem:[#allocation2 + $0x4f4] sm:$0xff]
    %v371 = vld [vmem:[#allocation2 + $0x4fc] sm:$0xff]
    %v372 = vld [vmem:[#allocation2 + $0x504] sm:$0xf]
    %v373 = vld [vmem:[#allocation2 + $0x508] sm:$0xff]
    %v374 = vld [vmem:[#allocation2 + $0x510] sm:$0xff]
    %v375 = vld [vmem:[#allocation2 + $0x518] sm:$0xff]
    %v376 = vld [vmem:[#allocation2 + $0x520] sm:$0xf]
    %v377 = vld [vmem:[#allocation2 + $0x524] sm:$0xff]
    %v378 = vld [vmem:[#allocation2 + $0x52c] sm:$0xff]
    %v379 = vld [vmem:[#allocation2 + $0x534] sm:$0xff]
    %v380 = vld [vmem:[#allocation2 + $0x53c] sm:$0xf]
    %v381 = vld [vmem:[#allocation2 + $0x540] sm:$0xff]
    %v382 = vld [vmem:[#allocation2 + $0x548] sm:$0xff]
    %v383 = vld [vmem:[#allocation2 + $0x550] sm:$0xff]
    %v384 = vld [vmem:[#allocation2 + $0x558] sm:$0xf]
    %v385 = vld [vmem:[#allocation2 + $0x55c] sm:$0xff]
    %v386 = vld [vmem:[#allocation2 + $0x564] sm:$0xff]
    %v387 = vld [vmem:[#allocation2 + $0x56c] sm:$0xff]
    %v388 = vld [vmem:[#allocation2 + $0x574] sm:$0xf]
    %v389 = vld [vmem:[#allocation2 + $0x578] sm:$0xff]
    %v390 = vld [vmem:[#allocation2 + $0x580] sm:$0xff]
    %v391 = vld [vmem:[#allocation2 + $0x588] sm:$0xff]
    %v392 = vld [vmem:[#allocation2 + $0x590] sm:$0xf]
    %v393 = vld [vmem:[#allocation2 + $0x594] sm:$0xff]
    %v394 = vld [vmem:[#allocation2 + $0x59c] sm:$0xff]
    %v395 = vld [vmem:[#allocation2 + $0x5a4] sm:$0xff]
    %v396 = vld [vmem:[#allocation2 + $0x5ac] sm:$0xf]
    %v397 = vld [vmem:[#allocation2 + $0x5b0] sm:$0xff]
    %v398 = vld [vmem:[#allocation2 + $0x5b8] sm:$0xff]
    %v399 = vld [vmem:[#allocation2 + $0x5c0] sm:$0xff]
    %v400 = vld [vmem:[#allocation2 + $0x5c8] sm:$0xf]
    %v401 = vld [vmem:[#allocation2 + $0x5cc] sm:$0xff]
    %v402 = vld [vmem:[#allocation2 + $0x5d4] sm:$0xff]
    %v403 = vld [vmem:[#allocation2 + $0x5dc] sm:$0xff]
    %v404 = vld [vmem:[#allocation2 + $0x5e4] sm:$0xf]
    %v405 = vld [vmem:[#allocation2 + $0x5e8] sm:$0xff]
    %v406 = vld [vmem:[#allocation2 + $0x5f0] sm:$0xff]
    %v407 = vld [vmem:[#allocation2 + $0x5f8] sm:$0xff]
    %v408 = vld [vmem:[#allocation2 + $0x600] sm:$0xf]
    %v409 = vld [vmem:[#allocation2 + $0x604] sm:$0xff]
    %v410 = vld [vmem:[#allocation2 + $0x60c] sm:$0xff]
    %v411 = vld [vmem:[#allocation2 + $0x614] sm:$0xff]
    %v412 = vld [vmem:[#allocation2 + $0x61c] sm:$0xf]
    %v413 = vld [vmem:[#allocation2 + $0x620] sm:$0xff]
    %v414 = vld [vmem:[#allocation2 + $0x628] sm:$0xff]
    %v415 = vld [vmem:[#allocation2 + $0x630] sm:$0xff]
    %v416 = vld [vmem:[#allocation2 + $0x638] sm:$0xf]
    %v417 = vld [vmem:[#allocation2 + $0x63c] sm:$0xff]
    %v418 = vld [vmem:[#allocation2 + $0x644] sm:$0xff]
    %v419 = vld [vmem:[#allocation2 + $0x64c] sm:$0xff]
    %v420 = vld [vmem:[#allocation2 + $0x654] sm:$0xf]
    %v421 = vld [vmem:[#allocation2 + $0x658] sm:$0xff]
    %v422 = vld [vmem:[#allocation2 + $0x660] sm:$0xff]
    %v423 = vld [vmem:[#allocation2 + $0x668] sm:$0xff]
    %v424 = vld [vmem:[#allocation2 + $0x670] sm:$0xf]
    %v425 = vld [vmem:[#allocation2 + $0x674] sm:$0xff]
    %v426 = vld [vmem:[#allocation2 + $0x67c] sm:$0xff]
    %v427 = vld [vmem:[#allocation2 + $0x684] sm:$0xff]
    %v428 = vld [vmem:[#allocation2 + $0x68c] sm:$0xf]
    %v429 = vld [vmem:[#allocation2 + $0x690] sm:$0xff]
    %v430 = vld [vmem:[#allocation2 + $0x698] sm:$0xff]
    %v431 = vld [vmem:[#allocation2 + $0x6a0] sm:$0xff]
    %v432 = vld [vmem:[#allocation2 + $0x6a8] sm:$0xf]
    %v433 = vld [vmem:[#allocation2 + $0x6ac] sm:$0xff]
    %v434 = vld [vmem:[#allocation2 + $0x6b4] sm:$0xff]
    %v435 = vld [vmem:[#allocation2 + $0x6bc] sm:$0xff]
    %v436 = vld [vmem:[#allocation2 + $0x6c4] sm:$0xf]
    %v437 = vld [vmem:[#allocation2 + $0x6c8] sm:$0xff]
    %v438 = vld [vmem:[#allocation2 + $0x6d0] sm:$0xff]
    %v439 = vld [vmem:[#allocation2 + $0x6d8] sm:$0xff]
    %v440 = vld [vmem:[#allocation2 + $0x6e0] sm:$0xf]
    %v441 = vld [vmem:[#allocation2 + $0x6e4] sm:$0xff]
    %v442 = vld [vmem:[#allocation2 + $0x6ec] sm:$0xff]
    %v443 = vld [vmem:[#allocation2 + $0x6f4] sm:$0xff]
    %v444 = vld [vmem:[#allocation2 + $0x6fc] sm:$0xf]
    %v445 = vld [vmem:[#allocation2 + $0x700] sm:$0xff]
    %v446 = vld [vmem:[#allocation2 + $0x708] sm:$0xff]
    %v447 = vld [vmem:[#allocation2 + $0x710] sm:$0xff]
    %v448 = vld [vmem:[#allocation2 + $0x718] sm:$0xf]
    %v449 = vld [vmem:[#allocation2 + $0x71c] sm:$0xff]
    %v450 = vld [vmem:[#allocation2 + $0x724] sm:$0xff]
    %v451 = vld [vmem:[#allocation2 + $0x72c] sm:$0xff]
    %v452 = vld [vmem:[#allocation2 + $0x734] sm:$0xf]
    %v453 = vld [vmem:[#allocation2 + $0x738] sm:$0xff]
    %v454 = vld [vmem:[#allocation2 + $0x740] sm:$0xff]
    %v455 = vld [vmem:[#allocation2 + $0x748] sm:$0xff]
    %v456 = vld [vmem:[#allocation2 + $0x750] sm:$0xf]
    %v457 = vld [vmem:[#allocation2 + $0x754] sm:$0xff]
    %v458 = vld [vmem:[#allocation2 + $0x75c] sm:$0xff]
    %v459 = vld [vmem:[#allocation2 + $0x764] sm:$0xff]
    %v460 = vld [vmem:[#allocation2 + $0x76c] sm:$0xf]
    %v461 = vld [vmem:[#allocation2 + $0x770] sm:$0xff]
    %v462 = vld [vmem:[#allocation2 + $0x778] sm:$0xff]
    %v463 = vld [vmem:[#allocation2 + $0x780] sm:$0xff]
    %v464 = vld [vmem:[#allocation2 + $0x788] sm:$0xf]
    %v465 = vld [vmem:[#allocation2 + $0x78c] sm:$0xff]
    %v466 = vld [vmem:[#allocation2 + $0x794] sm:$0xff]
    %v467 = vld [vmem:[#allocation2 + $0x79c] sm:$0xff]
    %v468 = vld [vmem:[#allocation2 + $0x7a4] sm:$0xf]
    %v469 = vld [vmem:[#allocation2 + $0x7a8] sm:$0xff]
    %v470 = vld [vmem:[#allocation2 + $0x7b0] sm:$0xff]
    %v471 = vld [vmem:[#allocation2 + $0x7b8] sm:$0xff]
    %v472 = vld [vmem:[#allocation2 + $0x7c0] sm:$0xf]
    %v473 = vld [vmem:[#allocation2 + $0x7c4] sm:$0xff]
    %v474 = vld [vmem:[#allocation2 + $0x7cc] sm:$0xff]
    %v475 = vld [vmem:[#allocation2 + $0x7d4] sm:$0xff]
    %v476 = vld [vmem:[#allocation2 + $0x7dc] sm:$0xf]
    %v477 = vld [vmem:[#allocation2 + $0x7e0] sm:$0xff]
    %v478 = vld [vmem:[#allocation2 + $0x7e8] sm:$0xff]
    %v479 = vld [vmem:[#allocation2 + $0x7f0] sm:$0xff]
    %v480 = vld [vmem:[#allocation2 + $0x7f8] sm:$0xf]
    %v481 = vld [vmem:[#allocation2 + $0x7fc] sm:$0xff]
    %v482 = vld [vmem:[#allocation2 + $0x804] sm:$0xff]
    %v483 = vld [vmem:[#allocation2 + $0x80c] sm:$0xff]
    %v484 = vld [vmem:[#allocation2 + $0x814] sm:$0xf]
    %v485 = vld [vmem:[#allocation2 + $0x818] sm:$0xff]
    %v486 = vld [vmem:[#allocation2 + $0x820] sm:$0xff]
    %v487 = vld [vmem:[#allocation2 + $0x828] sm:$0xff]
    %v488 = vld [vmem:[#allocation2 + $0x830] sm:$0xf]
    %v489 = vld [vmem:[#allocation2 + $0x834] sm:$0xff]
    %v490 = vld [vmem:[#allocation2 + $0x83c] sm:$0xff]
    %v491 = vld [vmem:[#allocation2 + $0x844] sm:$0xff]
    %v492 = vld [vmem:[#allocation2 + $0x84c] sm:$0xf]
    %v493 = vld [vmem:[#allocation2 + $0x850] sm:$0xff]
    %v494 = vld [vmem:[#allocation2 + $0x858] sm:$0xff]
    %v495 = vld [vmem:[#allocation2 + $0x860] sm:$0xff]
    %v496 = vld [vmem:[#allocation2 + $0x868] sm:$0xf]
    %v497 = vld [vmem:[#allocation2 + $0x86c] sm:$0xff]
    %v498 = vld [vmem:[#allocation2 + $0x874] sm:$0xff]
    %v499 = vld [vmem:[#allocation2 + $0x87c] sm:$0xff]
    %v500 = vld [vmem:[#allocation2 + $0x884] sm:$0xf]
    %v501 = vld [vmem:[#allocation2 + $0x888] sm:$0xff]
    %v502 = vld [vmem:[#allocation2 + $0x890] sm:$0xff]
    %v503 = vld [vmem:[#allocation2 + $0x898] sm:$0xff]
    %v504 = vld [vmem:[#allocation2 + $0x8a0] sm:$0xf]
    %v505 = vld [vmem:[#allocation2 + $0x8a4] sm:$0xff]
    %v506 = vld [vmem:[#allocation2 + $0x8ac] sm:$0xff]
    %v507 = vld [vmem:[#allocation2 + $0x8b4] sm:$0xff]
    %v508 = vld [vmem:[#allocation2 + $0x8bc] sm:$0xf]
    %v509 = vld [vmem:[#allocation2 + $0x8c0] sm:$0xff]
    %v510 = vld [vmem:[#allocation2 + $0x8c8] sm:$0xff]
    %v511 = vld [vmem:[#allocation2 + $0x8d0] sm:$0xff]
    %v512 = vld [vmem:[#allocation2 + $0x8d8] sm:$0xf]
    %v513 = vld [vmem:[#allocation2 + $0x8dc] sm:$0xff]
    %v514 = vld [vmem:[#allocation2 + $0x8e4] sm:$0xff]
    %v515 = vld [vmem:[#allocation2 + $0x8ec] sm:$0xff]
    %v516 = vld [vmem:[#allocation2 + $0x8f4] sm:$0xf]
    %v517 = vld [vmem:[#allocation2 + $0x8f8] sm:$0xff]
    %v518 = vld [vmem:[#allocation2 + $0x900] sm:$0xff]
    %v519 = vld [vmem:[#allocation2 + $0x908] sm:$0xff]
    %v520 = vld [vmem:[#allocation2 + $0x910] sm:$0xf]
    %v521 = vld [vmem:[#allocation2 + $0x914] sm:$0xff]
    %v522 = vld [vmem:[#allocation2 + $0x91c] sm:$0xff]
    %v523 = vld [vmem:[#allocation2 + $0x924] sm:$0xff]
    %v524 = vld [vmem:[#allocation2 + $0x92c] sm:$0xf]
    %v525 = vld [vmem:[#allocation2 + $0x930] sm:$0xff]
    %v526 = vld [vmem:[#allocation2 + $0x938] sm:$0xff]
    %v527 = vld [vmem:[#allocation2 + $0x940] sm:$0xff]
    %v528 = vld [vmem:[#allocation2 + $0x948] sm:$0xf]
    %v529 = vld [vmem:[#allocation2 + $0x94c] sm:$0xff]
    %v530 = vld [vmem:[#allocation2 + $0x954] sm:$0xff]
    %v531 = vld [vmem:[#allocation2 + $0x95c] sm:$0xff]
    %v532 = vld [vmem:[#allocation2 + $0x964] sm:$0xf]
    %v533 = vld [vmem:[#allocation2 + $0x968] sm:$0xff]
    %v534 = vld [vmem:[#allocation2 + $0x970] sm:$0xff]
    %v535 = vld [vmem:[#allocation2 + $0x978] sm:$0xff]
    %v536 = vld [vmem:[#allocation2 + $0x980] sm:$0xf]
    %v537 = vld [vmem:[#allocation2 + $0x984] sm:$0xff]
    %v538 = vld [vmem:[#allocation2 + $0x98c] sm:$0xff]
    %v539 = vld [vmem:[#allocation2 + $0x994] sm:$0xff]
    %v540 = vld [vmem:[#allocation2 + $0x99c] sm:$0xf]
    %v541 = vld [vmem:[#allocation2 + $0x9a0] sm:$0xff]
    %v542 = vld [vmem:[#allocation2 + $0x9a8] sm:$0xff]
    %v543 = vld [vmem:[#allocation2 + $0x9b0] sm:$0xff]
    %v544 = vld [vmem:[#allocation2 + $0x9b8] sm:$0xf]
    %v545 = vld [vmem:[#allocation2 + $0x9bc] sm:$0xff]
    %v546 = vld [vmem:[#allocation2 + $0x9c4] sm:$0xff]
    %v547 = vld [vmem:[#allocation2 + $0x9cc] sm:$0xff]
    %v548 = vld [vmem:[#allocation2 + $0x9d4] sm:$0xf]
    %v549 = vld [vmem:[#allocation2 + $0x9d8] sm:$0xff]
    %v550 = vld [vmem:[#allocation2 + $0x9e0] sm:$0xff]
    %v551 = vld [vmem:[#allocation2 + $0x9e8] sm:$0xff]
    %v552 = vld [vmem:[#allocation2 + $0x9f0] sm:$0xf]
    %v553 = vld [vmem:[#allocation2 + $0x9f4] sm:$0xff]
    %v554 = vld [vmem:[#allocation2 + $0x9fc] sm:$0xff]
    %v555 = vld [vmem:[#allocation2 + $0xa04] sm:$0xff]
    %v556 = vld [vmem:[#allocation2 + $0xa0c] sm:$0xf]
    %v557 = vld [vmem:[#allocation2 + $0xa10] sm:$0xff]
    %v558 = vld [vmem:[#allocation2 + $0xa18] sm:$0xff]
    %v559 = vld [vmem:[#allocation2 + $0xa20] sm:$0xff]
    %v560 = vld [vmem:[#allocation2 + $0xa28] sm:$0xf]
    %v561 = vld [vmem:[#allocation2 + $0xa2c] sm:$0xff]
    %v562 = vld [vmem:[#allocation2 + $0xa34] sm:$0xff]
    %v563 = vld [vmem:[#allocation2 + $0xa3c] sm:$0xff]
    %v564 = vld [vmem:[#allocation2 + $0xa44] sm:$0xf]
    %v565 = vld [vmem:[#allocation2 + $0xa48] sm:$0xff]
    %v566 = vld [vmem:[#allocation2 + $0xa50] sm:$0xff]
    %v567 = vld [vmem:[#allocation2 + $0xa58] sm:$0xff]
    %v568 = vld [vmem:[#allocation2 + $0xa60] sm:$0xf]
    %v569 = vld [vmem:[#allocation2 + $0xa64] sm:$0xff]
    %v570 = vld [vmem:[#allocation2 + $0xa6c] sm:$0xff]
    %v571 = vld [vmem:[#allocation2 + $0xa74] sm:$0xff]
    %v572 = vld [vmem:[#allocation2 + $0xa7c] sm:$0xf]
    %v573 = vld [vmem:[#allocation2 + $0xa80] sm:$0xff]
    %v574 = vld [vmem:[#allocation2 + $0xa88] sm:$0xff]
    %v575 = vld [vmem:[#allocation2 + $0xa90] sm:$0xff]
    %v576 = vld [vmem:[#allocation2 + $0xa98] sm:$0xf]
    %v577 = vld [vmem:[#allocation2 + $0xa9c] sm:$0xff]
    %v578 = vld [vmem:[#allocation2 + $0xaa4] sm:$0xff]
    %v579 = vld [vmem:[#allocation2 + $0xaac] sm:$0xff]
    %v580 = vld [vmem:[#allocation2 + $0xab4] sm:$0xf]
    %v585 = vunpack.c.l.b16 %v185
    %v586 = vunpack.c.h.b16 %v185
    %v587 = vunpack.c.l.b16 %v186
    %v588 = vunpack.c.h.b16 %v186
    %v589 = vunpack.c.l.b16 %v187
    %v590 = vunpack.c.h.b16 %v187
    %v591 = vunpack.c.l.b16 %v188
    %v592 = vpack.c.b16 %v585, %v585
    %v593 = vpack.c.b16 %v586, %v586
    %v594 = vpack.c.b16 %v587, %v587
    %v595 = vpack.c.b16 %v588, %v588
    %v596 = vpack.c.b16 %v589, %v589
    %v597 = vpack.c.b16 %v590, %v590
    %v598 = vpack.c.b16 %v591, %v591
    %v997 = vunpack.c.l.b16 %v189
    %v998 = vunpack.c.h.b16 %v189
    %v999 = vunpack.c.l.b16 %v190
    %v1000 = vunpack.c.h.b16 %v190
    %v1001 = vunpack.c.l.b16 %v191
    %v1002 = vunpack.c.h.b16 %v191
    %v1003 = vunpack.c.l.b16 %v192
    %v1004 = vunpack.c.l.b16 %v193
    %v1005 = vunpack.c.h.b16 %v193
    %v1006 = vunpack.c.l.b16 %v194
    %v1007 = vunpack.c.h.b16 %v194
    %v1008 = vunpack.c.l.b16 %v195
    %v1009 = vunpack.c.h.b16 %v195
    %v1010 = vunpack.c.l.b16 %v196
    %v1011 = vunpack.c.l.b16 %v197
    %v1012 = vunpack.c.h.b16 %v197
    %v1013 = vunpack.c.l.b16 %v198
    %v1014 = vunpack.c.h.b16 %v198
    %v1015 = vunpack.c.l.b16 %v199
    %v1016 = vunpack.c.h.b16 %v199
    %v1017 = vunpack.c.l.b16 %v200
    %v1018 = vunpack.c.l.b16 %v201
    %v1019 = vunpack.c.h.b16 %v201
    %v1020 = vunpack.c.l.b16 %v202
    %v1021 = vunpack.c.h.b16 %v202
    %v1022 = vunpack.c.l.b16 %v203
    %v1023 = vunpack.c.h.b16 %v203
    %v1024 = vunpack.c.l.b16 %v204
    %v1025 = vunpack.c.l.b16 %v205
    %v1026 = vunpack.c.h.b16 %v205
    %v1027 = vunpack.c.l.b16 %v206
    %v1028 = vunpack.c.h.b16 %v206
    %v1029 = vunpack.c.l.b16 %v207
    %v1030 = vunpack.c.h.b16 %v207
    %v1031 = vunpack.c.l.b16 %v208
    %v1032 = vunpack.c.l.b16 %v209
    %v1033 = vunpack.c.h.b16 %v209
    %v1034 = vunpack.c.l.b16 %v210
    %v1035 = vunpack.c.h.b16 %v210
    %v1036 = vunpack.c.l.b16 %v211
    %v1037 = vunpack.c.h.b16 %v211
    %v1038 = vunpack.c.l.b16 %v212
    %v1039 = vunpack.c.l.b16 %v213
    %v1040 = vunpack.c.h.b16 %v213
    %v1041 = vunpack.c.l.b16 %v214
    %v1042 = vunpack.c.h.b16 %v214
    %v1043 = vunpack.c.l.b16 %v215
    %v1044 = vunpack.c.h.b16 %v215
    %v1045 = vunpack.c.l.b16 %v216
    %v1046 = vunpack.c.l.b16 %v217
    %v1047 = vunpack.c.h.b16 %v217
    %v1048 = vunpack.c.l.b16 %v218
    %v1049 = vunpack.c.h.b16 %v218
    %v1050 = vunpack.c.l.b16 %v219
    %v1051 = vunpack.c.h.b16 %v219
    %v1052 = vunpack.c.l.b16 %v220
    %v1053 = vunpack.c.l.b16 %v221
    %v1054 = vunpack.c.h.b16 %v221
    %v1055 = vunpack.c.l.b16 %v222
    %v1056 = vunpack.c.h.b16 %v222
    %v1057 = vunpack.c.l.b16 %v223
    %v1058 = vunpack.c.h.b16 %v223
    %v1059 = vunpack.c.l.b16 %v224
    %v1060 = vunpack.c.l.b16 %v225
    %v1061 = vunpack.c.h.b16 %v225
    %v1062 = vunpack.c.l.b16 %v226
    %v1063 = vunpack.c.h.b16 %v226
    %v1064 = vunpack.c.l.b16 %v227
    %v1065 = vunpack.c.h.b16 %v227
    %v1066 = vunpack.c.l.b16 %v228
    %v1067 = vunpack.c.l.b16 %v229
    %v1068 = vunpack.c.h.b16 %v229
    %v1069 = vunpack.c.l.b16 %v230
    %v1070 = vunpack.c.h.b16 %v230
    %v1071 = vunpack.c.l.b16 %v231
    %v1072 = vunpack.c.h.b16 %v231
    %v1073 = vunpack.c.l.b16 %v232
    %v1074 = vunpack.c.l.b16 %v233
    %v1075 = vunpack.c.h.b16 %v233
    %v1076 = vunpack.c.l.b16 %v234
    %v1077 = vunpack.c.h.b16 %v234
    %v1078 = vunpack.c.l.b16 %v235
    %v1079 = vunpack.c.h.b16 %v235
    %v1080 = vunpack.c.l.b16 %v236
    %v1081 = vunpack.c.l.b16 %v237
    %v1082 = vunpack.c.h.b16 %v237
    %v1083 = vunpack.c.l.b16 %v238
    %v1084 = vunpack.c.h.b16 %v238
    %v1085 = vunpack.c.l.b16 %v239
    %v1086 = vunpack.c.h.b16 %v239
    %v1087 = vunpack.c.l.b16 %v240
    %v1088 = vunpack.c.l.b16 %v241
    %v1089 = vunpack.c.h.b16 %v241
    %v1090 = vunpack.c.l.b16 %v242
    %v1091 = vunpack.c.h.b16 %v242
    %v1092 = vunpack.c.l.b16 %v243
    %v1093 = vunpack.c.h.b16 %v243
    %v1094 = vunpack.c.l.b16 %v244
    %v1095 = vunpack.c.l.b16 %v245
    %v1096 = vunpack.c.h.b16 %v245
    %v1097 = vunpack.c.l.b16 %v246
    %v1098 = vunpack.c.h.b16 %v246
    %v1099 = vunpack.c.l.b16 %v247
    %v1100 = vunpack.c.h.b16 %v247
    %v1101 = vunpack.c.l.b16 %v248
    %v1102 = vunpack.c.l.b16 %v249
    %v1103 = vunpack.c.h.b16 %v249
    %v1104 = vunpack.c.l.b16 %v250
    %v1105 = vunpack.c.h.b16 %v250
    %v1106 = vunpack.c.l.b16 %v251
    %v1107 = vunpack.c.h.b16 %v251
    %v1108 = vunpack.c.l.b16 %v252
    %v1109 = vunpack.c.l.b16 %v253
    %v1110 = vunpack.c.h.b16 %v253
    %v1111 = vunpack.c.l.b16 %v254
    %v1112 = vunpack.c.h.b16 %v254
    %v1113 = vunpack.c.l.b16 %v255
    %v1114 = vunpack.c.h.b16 %v255
    %v1115 = vunpack.c.l.b16 %v256
    %v1116 = vunpack.c.l.b16 %v257
    %v1117 = vunpack.c.h.b16 %v257
    %v1118 = vunpack.c.l.b16 %v258
    %v1119 = vunpack.c.h.b16 %v258
    %v1120 = vunpack.c.l.b16 %v259
    %v1121 = vunpack.c.h.b16 %v259
    %v1122 = vunpack.c.l.b16 %v260
    %v1123 = vunpack.c.l.b16 %v261
    %v1124 = vunpack.c.h.b16 %v261
    %v1125 = vunpack.c.l.b16 %v262
    %v1126 = vunpack.c.h.b16 %v262
    %v1127 = vunpack.c.l.b16 %v263
    %v1128 = vunpack.c.h.b16 %v263
    %v1129 = vunpack.c.l.b16 %v264
    %v1130 = vunpack.c.l.b16 %v265
    %v1131 = vunpack.c.h.b16 %v265
    %v1132 = vunpack.c.l.b16 %v266
    %v1133 = vunpack.c.h.b16 %v266
    %v1134 = vunpack.c.l.b16 %v267
    %v1135 = vunpack.c.h.b16 %v267
    %v1136 = vunpack.c.l.b16 %v268
    %v1137 = vunpack.c.l.b16 %v269
    %v1138 = vunpack.c.h.b16 %v269
    %v1139 = vunpack.c.l.b16 %v270
    %v1140 = vunpack.c.h.b16 %v270
    %v1141 = vunpack.c.l.b16 %v271
    %v1142 = vunpack.c.h.b16 %v271
    %v1143 = vunpack.c.l.b16 %v272
    %v1144 = vunpack.c.l.b16 %v273
    %v1145 = vunpack.c.h.b16 %v273
    %v1146 = vunpack.c.l.b16 %v274
    %v1147 = vunpack.c.h.b16 %v274
    %v1148 = vunpack.c.l.b16 %v275
    %v1149 = vunpack.c.h.b16 %v275
    %v1150 = vunpack.c.l.b16 %v276
    %v1151 = vunpack.c.l.b16 %v277
    %v1152 = vunpack.c.h.b16 %v277
    %v1153 = vunpack.c.l.b16 %v278
    %v1154 = vunpack.c.h.b16 %v278
    %v1155 = vunpack.c.l.b16 %v279
    %v1156 = vunpack.c.h.b16 %v279
    %v1157 = vunpack.c.l.b16 %v280
    %v1158 = vunpack.c.l.b16 %v281
    %v1159 = vunpack.c.h.b16 %v281
    %v1160 = vunpack.c.l.b16 %v282
    %v1161 = vunpack.c.h.b16 %v282
    %v1162 = vunpack.c.l.b16 %v283
    %v1163 = vunpack.c.h.b16 %v283
    %v1164 = vunpack.c.l.b16 %v284
    %v1165 = vunpack.c.l.b16 %v285
    %v1166 = vunpack.c.h.b16 %v285
    %v1167 = vunpack.c.l.b16 %v286
    %v1168 = vunpack.c.h.b16 %v286
    %v1169 = vunpack.c.l.b16 %v287
    %v1170 = vunpack.c.h.b16 %v287
    %v1171 = vunpack.c.l.b16 %v288
    %v1172 = vunpack.c.l.b16 %v289
    %v1173 = vunpack.c.h.b16 %v289
    %v1174 = vunpack.c.l.b16 %v290
    %v1175 = vunpack.c.h.b16 %v290
    %v1176 = vunpack.c.l.b16 %v291
    %v1177 = vunpack.c.h.b16 %v291
    %v1178 = vunpack.c.l.b16 %v292
    %v1179 = vunpack.c.l.b16 %v293
    %v1180 = vunpack.c.h.b16 %v293
    %v1181 = vunpack.c.l.b16 %v294
    %v1182 = vunpack.c.h.b16 %v294
    %v1183 = vunpack.c.l.b16 %v295
    %v1184 = vunpack.c.h.b16 %v295
    %v1185 = vunpack.c.l.b16 %v296
    %v1186 = vunpack.c.l.b16 %v297
    %v1187 = vunpack.c.h.b16 %v297
    %v1188 = vunpack.c.l.b16 %v298
    %v1189 = vunpack.c.h.b16 %v298
    %v1190 = vunpack.c.l.b16 %v299
    %v1191 = vunpack.c.h.b16 %v299
    %v1192 = vunpack.c.l.b16 %v300
    %v1193 = vunpack.c.l.b16 %v301
    %v1194 = vunpack.c.h.b16 %v301
    %v1195 = vunpack.c.l.b16 %v302
    %v1196 = vunpack.c.h.b16 %v302
    %v1197 = vunpack.c.l.b16 %v303
    %v1198 = vunpack.c.h.b16 %v303
    %v1199 = vunpack.c.l.b16 %v304
    %v1200 = vunpack.c.l.b16 %v305
    %v1201 = vunpack.c.h.b16 %v305
    %v1202 = vunpack.c.l.b16 %v306
    %v1203 = vunpack.c.h.b16 %v306
    %v1204 = vunpack.c.l.b16 %v307
    %v1205 = vunpack.c.h.b16 %v307
    %v1206 = vunpack.c.l.b16 %v308
    %v1207 = vunpack.c.l.b16 %v309
    %v1208 = vunpack.c.h.b16 %v309
    %v1209 = vunpack.c.l.b16 %v310
    %v1210 = vunpack.c.h.b16 %v310
    %v1211 = vunpack.c.l.b16 %v311
    %v1212 = vunpack.c.h.b16 %v311
    %v1213 = vunpack.c.l.b16 %v312
    %v1214 = vunpack.c.l.b16 %v313
    %v1215 = vunpack.c.h.b16 %v313
    %v1216 = vunpack.c.l.b16 %v314
    %v1217 = vunpack.c.h.b16 %v314
    %v1218 = vunpack.c.l.b16 %v315
    %v1219 = vunpack.c.h.b16 %v315
    %v1220 = vunpack.c.l.b16 %v316
    %v1221 = vunpack.c.l.b16 %v317
    %v1222 = vunpack.c.h.b16 %v317
    %v1223 = vunpack.c.l.b16 %v318
    %v1224 = vunpack.c.h.b16 %v318
    %v1225 = vunpack.c.l.b16 %v319
    %v1226 = vunpack.c.h.b16 %v319
    %v1227 = vunpack.c.l.b16 %v320
    %v1228 = vunpack.c.l.b16 %v321
    %v1229 = vunpack.c.h.b16 %v321
    %v1230 = vunpack.c.l.b16 %v322
    %v1231 = vunpack.c.h.b16 %v322
    %v1232 = vunpack.c.l.b16 %v323
    %v1233 = vunpack.c.h.b16 %v323
    %v1234 = vunpack.c.l.b16 %v324
    %v1235 = vunpack.c.l.b16 %v325
    %v1236 = vunpack.c.h.b16 %v325
    %v1237 = vunpack.c.l.b16 %v326
    %v1238 = vunpack.c.h.b16 %v326
    %v1239 = vunpack.c.l.b16 %v327
    %v1240 = vunpack.c.h.b16 %v327
    %v1241 = vunpack.c.l.b16 %v328
    %v1242 = vunpack.c.l.b16 %v329
    %v1243 = vunpack.c.h.b16 %v329
    %v1244 = vunpack.c.l.b16 %v330
    %v1245 = vunpack.c.h.b16 %v330
    %v1246 = vunpack.c.l.b16 %v331
    %v1247 = vunpack.c.h.b16 %v331
    %v1248 = vunpack.c.l.b16 %v332
    %v1249 = vunpack.c.l.b16 %v333
    %v1250 = vunpack.c.h.b16 %v333
    %v1251 = vunpack.c.l.b16 %v334
    %v1252 = vunpack.c.h.b16 %v334
    %v1253 = vunpack.c.l.b16 %v335
    %v1254 = vunpack.c.h.b16 %v335
    %v1255 = vunpack.c.l.b16 %v336
    %v1256 = vunpack.c.l.b16 %v337
    %v1257 = vunpack.c.h.b16 %v337
    %v1258 = vunpack.c.l.b16 %v338
    %v1259 = vunpack.c.h.b16 %v338
    %v1260 = vunpack.c.l.b16 %v339
    %v1261 = vunpack.c.h.b16 %v339
    %v1262 = vunpack.c.l.b16 %v340
    %v1263 = vunpack.c.l.b16 %v341
    %v1264 = vunpack.c.h.b16 %v341
    %v1265 = vunpack.c.l.b16 %v342
    %v1266 = vunpack.c.h.b16 %v342
    %v1267 = vunpack.c.l.b16 %v343
    %v1268 = vunpack.c.h.b16 %v343
    %v1269 = vunpack.c.l.b16 %v344
    %v1270 = vunpack.c.l.b16 %v345
    %v1271 = vunpack.c.h.b16 %v345
    %v1272 = vunpack.c.l.b16 %v346
    %v1273 = vunpack.c.h.b16 %v346
    %v1274 = vunpack.c.l.b16 %v347
    %v1275 = vunpack.c.h.b16 %v347
    %v1276 = vunpack.c.l.b16 %v348
    %v1277 = vunpack.c.l.b16 %v349
    %v1278 = vunpack.c.h.b16 %v349
    %v1279 = vunpack.c.l.b16 %v350
    %v1280 = vunpack.c.h.b16 %v350
    %v1281 = vunpack.c.l.b16 %v351
    %v1282 = vunpack.c.h.b16 %v351
    %v1283 = vunpack.c.l.b16 %v352
    %v1284 = vunpack.c.l.b16 %v353
    %v1285 = vunpack.c.h.b16 %v353
    %v1286 = vunpack.c.l.b16 %v354
    %v1287 = vunpack.c.h.b16 %v354
    %v1288 = vunpack.c.l.b16 %v355
    %v1289 = vunpack.c.h.b16 %v355
    %v1290 = vunpack.c.l.b16 %v356
    %v1291 = vunpack.c.l.b16 %v357
    %v1292 = vunpack.c.h.b16 %v357
    %v1293 = vunpack.c.l.b16 %v358
    %v1294 = vunpack.c.h.b16 %v358
    %v1295 = vunpack.c.l.b16 %v359
    %v1296 = vunpack.c.h.b16 %v359
    %v1297 = vunpack.c.l.b16 %v360
    %v1298 = vunpack.c.l.b16 %v361
    %v1299 = vunpack.c.h.b16 %v361
    %v1300 = vunpack.c.l.b16 %v362
    %v1301 = vunpack.c.h.b16 %v362
    %v1302 = vunpack.c.l.b16 %v363
    %v1303 = vunpack.c.h.b16 %v363
    %v1304 = vunpack.c.l.b16 %v364
    %v1305 = vunpack.c.l.b16 %v365
    %v1306 = vunpack.c.h.b16 %v365
    %v1307 = vunpack.c.l.b16 %v366
    %v1308 = vunpack.c.h.b16 %v366
    %v1309 = vunpack.c.l.b16 %v367
    %v1310 = vunpack.c.h.b16 %v367
    %v1311 = vunpack.c.l.b16 %v368
    %v1312 = vunpack.c.l.b16 %v369
    %v1313 = vunpack.c.h.b16 %v369
    %v1314 = vunpack.c.l.b16 %v370
    %v1315 = vunpack.c.h.b16 %v370
    %v1316 = vunpack.c.l.b16 %v371
    %v1317 = vunpack.c.h.b16 %v371
    %v1318 = vunpack.c.l.b16 %v372
    %v1319 = vunpack.c.l.b16 %v373
    %v1320 = vunpack.c.h.b16 %v373
    %v1321 = vunpack.c.l.b16 %v374
    %v1322 = vunpack.c.h.b16 %v374
    %v1323 = vunpack.c.l.b16 %v375
    %v1324 = vunpack.c.h.b16 %v375
    %v1325 = vunpack.c.l.b16 %v376
    %v1326 = vunpack.c.l.b16 %v377
    %v1327 = vunpack.c.h.b16 %v377
    %v1328 = vunpack.c.l.b16 %v378
    %v1329 = vunpack.c.h.b16 %v378
    %v1330 = vunpack.c.l.b16 %v379
    %v1331 = vunpack.c.h.b16 %v379
    %v1332 = vunpack.c.l.b16 %v380
    %v1333 = vunpack.c.l.b16 %v381
    %v1334 = vunpack.c.h.b16 %v381
    %v1335 = vunpack.c.l.b16 %v382
    %v1336 = vunpack.c.h.b16 %v382
    %v1337 = vunpack.c.l.b16 %v383
    %v1338 = vunpack.c.h.b16 %v383
    %v1339 = vunpack.c.l.b16 %v384
    %v1340 = vunpack.c.l.b16 %v385
    %v1341 = vunpack.c.h.b16 %v385
    %v1342 = vunpack.c.l.b16 %v386
    %v1343 = vunpack.c.h.b16 %v386
    %v1344 = vunpack.c.l.b16 %v387
    %v1345 = vunpack.c.h.b16 %v387
    %v1346 = vunpack.c.l.b16 %v388
    %v1347 = vunpack.c.l.b16 %v389
    %v1348 = vunpack.c.h.b16 %v389
    %v1349 = vunpack.c.l.b16 %v390
    %v1350 = vunpack.c.h.b16 %v390
    %v1351 = vunpack.c.l.b16 %v391
    %v1352 = vunpack.c.h.b16 %v391
    %v1353 = vunpack.c.l.b16 %v392
    %v1354 = vunpack.c.l.b16 %v393
    %v1355 = vunpack.c.h.b16 %v393
    %v1356 = vunpack.c.l.b16 %v394
    %v1357 = vunpack.c.h.b16 %v394
    %v1358 = vunpack.c.l.b16 %v395
    %v1359 = vunpack.c.h.b16 %v395
    %v1360 = vunpack.c.l.b16 %v396
    %v1361 = vunpack.c.l.b16 %v397
    %v1362 = vunpack.c.h.b16 %v397
    %v1363 = vunpack.c.l.b16 %v398
    %v1364 = vunpack.c.h.b16 %v398
    %v1365 = vunpack.c.l.b16 %v399
    %v1366 = vunpack.c.h.b16 %v399
    %v1367 = vunpack.c.l.b16 %v400
    %v1368 = vunpack.c.l.b16 %v401
    %v1369 = vunpack.c.h.b16 %v401
    %v1370 = vunpack.c.l.b16 %v402
    %v1371 = vunpack.c.h.b16 %v402
    %v1372 = vunpack.c.l.b16 %v403
    %v1373 = vunpack.c.h.b16 %v403
    %v1374 = vunpack.c.l.b16 %v404
    %v1375 = vunpack.c.l.b16 %v405
    %v1376 = vunpack.c.h.b16 %v405
    %v1377 = vunpack.c.l.b16 %v406
    %v1378 = vunpack.c.h.b16 %v406
    %v1379 = vunpack.c.l.b16 %v407
    %v1380 = vunpack.c.h.b16 %v407
    %v1381 = vunpack.c.l.b16 %v408
    %v1382 = vunpack.c.l.b16 %v409
    %v1383 = vunpack.c.h.b16 %v409
    %v1384 = vunpack.c.l.b16 %v410
    %v1385 = vunpack.c.h.b16 %v410
    %v1386 = vunpack.c.l.b16 %v411
    %v1387 = vunpack.c.h.b16 %v411
    %v1388 = vunpack.c.l.b16 %v412
    %v1389 = vunpack.c.l.b16 %v413
    %v1390 = vunpack.c.h.b16 %v413
    %v1391 = vunpack.c.l.b16 %v414
    %v1392 = vunpack.c.h.b16 %v414
    %v1393 = vunpack.c.l.b16 %v415
    %v1394 = vunpack.c.h.b16 %v415
    %v1395 = vunpack.c.l.b16 %v416
    %v1396 = vunpack.c.l.b16 %v417
    %v1397 = vunpack.c.h.b16 %v417
    %v1398 = vunpack.c.l.b16 %v418
    %v1399 = vunpack.c.h.b16 %v418
    %v1400 = vunpack.c.l.b16 %v419
    %v1401 = vunpack.c.h.b16 %v419
    %v1402 = vunpack.c.l.b16 %v420
    %v1403 = vunpack.c.l.b16 %v421
    %v1404 = vunpack.c.h.b16 %v421
    %v1405 = vunpack.c.l.b16 %v422
    %v1406 = vunpack.c.h.b16 %v422
    %v1407 = vunpack.c.l.b16 %v423
    %v1408 = vunpack.c.h.b16 %v423
    %v1409 = vunpack.c.l.b16 %v424
    %v1410 = vunpack.c.l.b16 %v425
    %v1411 = vunpack.c.h.b16 %v425
    %v1412 = vunpack.c.l.b16 %v426
    %v1413 = vunpack.c.h.b16 %v426
    %v1414 = vunpack.c.l.b16 %v427
    %v1415 = vunpack.c.h.b16 %v427
    %v1416 = vunpack.c.l.b16 %v428
    %v1417 = vunpack.c.l.b16 %v429
    %v1418 = vunpack.c.h.b16 %v429
    %v1419 = vunpack.c.l.b16 %v430
    %v1420 = vunpack.c.h.b16 %v430
    %v1421 = vunpack.c.l.b16 %v431
    %v1422 = vunpack.c.h.b16 %v431
    %v1423 = vunpack.c.l.b16 %v432
    %v1424 = vunpack.c.l.b16 %v433
    %v1425 = vunpack.c.h.b16 %v433
    %v1426 = vunpack.c.l.b16 %v434
    %v1427 = vunpack.c.h.b16 %v434
    %v1428 = vunpack.c.l.b16 %v435
    %v1429 = vunpack.c.h.b16 %v435
    %v1430 = vunpack.c.l.b16 %v436
    %v1431 = vunpack.c.l.b16 %v437
    %v1432 = vunpack.c.h.b16 %v437
    %v1433 = vunpack.c.l.b16 %v438
    %v1434 = vunpack.c.h.b16 %v438
    %v1435 = vunpack.c.l.b16 %v439
    %v1436 = vunpack.c.h.b16 %v439
    %v1437 = vunpack.c.l.b16 %v440
    %v1438 = vunpack.c.l.b16 %v441
    %v1439 = vunpack.c.h.b16 %v441
    %v1440 = vunpack.c.l.b16 %v442
    %v1441 = vunpack.c.h.b16 %v442
    %v1442 = vunpack.c.l.b16 %v443
    %v1443 = vunpack.c.h.b16 %v443
    %v1444 = vunpack.c.l.b16 %v444
    %v1445 = vunpack.c.l.b16 %v445
    %v1446 = vunpack.c.h.b16 %v445
    %v1447 = vunpack.c.l.b16 %v446
    %v1448 = vunpack.c.h.b16 %v446
    %v1449 = vunpack.c.l.b16 %v447
    %v1450 = vunpack.c.h.b16 %v447
    %v1451 = vunpack.c.l.b16 %v448
    %v1452 = vunpack.c.l.b16 %v449
    %v1453 = vunpack.c.h.b16 %v449
    %v1454 = vunpack.c.l.b16 %v450
    %v1455 = vunpack.c.h.b16 %v450
    %v1456 = vunpack.c.l.b16 %v451
    %v1457 = vunpack.c.h.b16 %v451
    %v1458 = vunpack.c.l.b16 %v452
    %v1459 = vunpack.c.l.b16 %v453
    %v1460 = vunpack.c.h.b16 %v453
    %v1461 = vunpack.c.l.b16 %v454
    %v1462 = vunpack.c.h.b16 %v454
    %v1463 = vunpack.c.l.b16 %v455
    %v1464 = vunpack.c.h.b16 %v455
    %v1465 = vunpack.c.l.b16 %v456
    %v1466 = vunpack.c.l.b16 %v457
    %v1467 = vunpack.c.h.b16 %v457
    %v1468 = vunpack.c.l.b16 %v458
    %v1469 = vunpack.c.h.b16 %v458
    %v1470 = vunpack.c.l.b16 %v459
    %v1471 = vunpack.c.h.b16 %v459
    %v1472 = vunpack.c.l.b16 %v460
    %v1473 = vunpack.c.l.b16 %v461
    %v1474 = vunpack.c.h.b16 %v461
    %v1475 = vunpack.c.l.b16 %v462
    %v1476 = vunpack.c.h.b16 %v462
    %v1477 = vunpack.c.l.b16 %v463
    %v1478 = vunpack.c.h.b16 %v463
    %v1479 = vunpack.c.l.b16 %v464
    %v1480 = vunpack.c.l.b16 %v465
    %v1481 = vunpack.c.h.b16 %v465
    %v1482 = vunpack.c.l.b16 %v466
    %v1483 = vunpack.c.h.b16 %v466
    %v1484 = vunpack.c.l.b16 %v467
    %v1485 = vunpack.c.h.b16 %v467
    %v1486 = vunpack.c.l.b16 %v468
    %v1487 = vunpack.c.l.b16 %v469
    %v1488 = vunpack.c.h.b16 %v469
    %v1489 = vunpack.c.l.b16 %v470
    %v1490 = vunpack.c.h.b16 %v470
    %v1491 = vunpack.c.l.b16 %v471
    %v1492 = vunpack.c.h.b16 %v471
    %v1493 = vunpack.c.l.b16 %v472
    %v1494 = vunpack.c.l.b16 %v473
    %v1495 = vunpack.c.h.b16 %v473
    %v1496 = vunpack.c.l.b16 %v474
    %v1497 = vunpack.c.h.b16 %v474
    %v1498 = vunpack.c.l.b16 %v475
    %v1499 = vunpack.c.h.b16 %v475
    %v1500 = vunpack.c.l.b16 %v476
    %v1501 = vunpack.c.l.b16 %v477
    %v1502 = vunpack.c.h.b16 %v477
    %v1503 = vunpack.c.l.b16 %v478
    %v1504 = vunpack.c.h.b16 %v478
    %v1505 = vunpack.c.l.b16 %v479
    %v1506 = vunpack.c.h.b16 %v479
    %v1507 = vunpack.c.l.b16 %v480
    %v1508 = vunpack.c.l.b16 %v481
    %v1509 = vunpack.c.h.b16 %v481
    %v1510 = vunpack.c.l.b16 %v482
    %v1511 = vunpack.c.h.b16 %v482
    %v1512 = vunpack.c.l.b16 %v483
    %v1513 = vunpack.c.h.b16 %v483
    %v1514 = vunpack.c.l.b16 %v484
    %v1515 = vunpack.c.l.b16 %v485
    %v1516 = vunpack.c.h.b16 %v485
    %v1517 = vunpack.c.l.b16 %v486
    %v1518 = vunpack.c.h.b16 %v486
    %v1519 = vunpack.c.l.b16 %v487
    %v1520 = vunpack.c.h.b16 %v487
    %v1521 = vunpack.c.l.b16 %v488
    %v1522 = vunpack.c.l.b16 %v489
    %v1523 = vunpack.c.h.b16 %v489
    %v1524 = vunpack.c.l.b16 %v490
    %v1525 = vunpack.c.h.b16 %v490
    %v1526 = vunpack.c.l.b16 %v491
    %v1527 = vunpack.c.h.b16 %v491
    %v1528 = vunpack.c.l.b16 %v492
    %v1529 = vunpack.c.l.b16 %v493
    %v1530 = vunpack.c.h.b16 %v493
    %v1531 = vunpack.c.l.b16 %v494
    %v1532 = vunpack.c.h.b16 %v494
    %v1533 = vunpack.c.l.b16 %v495
    %v1534 = vunpack.c.h.b16 %v495
    %v1535 = vunpack.c.l.b16 %v496
    %v1536 = vunpack.c.l.b16 %v497
    %v1537 = vunpack.c.h.b16 %v497
    %v1538 = vunpack.c.l.b16 %v498
    %v1539 = vunpack.c.h.b16 %v498
    %v1540 = vunpack.c.l.b16 %v499
    %v1541 = vunpack.c.h.b16 %v499
    %v1542 = vunpack.c.l.b16 %v500
    %v1543 = vunpack.c.l.b16 %v501
    %v1544 = vunpack.c.h.b16 %v501
    %v1545 = vunpack.c.l.b16 %v502
    %v1546 = vunpack.c.h.b16 %v502
    %v1547 = vunpack.c.l.b16 %v503
    %v1548 = vunpack.c.h.b16 %v503
    %v1549 = vunpack.c.l.b16 %v504
    %v1550 = vunpack.c.l.b16 %v505
    %v1551 = vunpack.c.h.b16 %v505
    %v1552 = vunpack.c.l.b16 %v506
    %v1553 = vunpack.c.h.b16 %v506
    %v1554 = vunpack.c.l.b16 %v507
    %v1555 = vunpack.c.h.b16 %v507
    %v1556 = vunpack.c.l.b16 %v508
    %v1557 = vunpack.c.l.b16 %v509
    %v1558 = vunpack.c.h.b16 %v509
    %v1559 = vunpack.c.l.b16 %v510
    %v1560 = vunpack.c.h.b16 %v510
    %v1561 = vunpack.c.l.b16 %v511
    %v1562 = vunpack.c.h.b16 %v511
    %v1563 = vunpack.c.l.b16 %v512
    %v1564 = vunpack.c.l.b16 %v513
    %v1565 = vunpack.c.h.b16 %v513
    %v1566 = vunpack.c.l.b16 %v514
    %v1567 = vunpack.c.h.b16 %v514
    %v1568 = vunpack.c.l.b16 %v515
    %v1569 = vunpack.c.h.b16 %v515
    %v1570 = vunpack.c.l.b16 %v516
    %v1571 = vunpack.c.l.b16 %v517
    %v1572 = vunpack.c.h.b16 %v517
    %v1573 = vunpack.c.l.b16 %v518
    %v1574 = vunpack.c.h.b16 %v518
    %v1575 = vunpack.c.l.b16 %v519
    %v1576 = vunpack.c.h.b16 %v519
    %v1577 = vunpack.c.l.b16 %v520
    %v1578 = vunpack.c.l.b16 %v521
    %v1579 = vunpack.c.h.b16 %v521
    %v1580 = vunpack.c.l.b16 %v522
    %v1581 = vunpack.c.h.b16 %v522
    %v1582 = vunpack.c.l.b16 %v523
    %v1583 = vunpack.c.h.b16 %v523
    %v1584 = vunpack.c.l.b16 %v524
    %v1585 = vunpack.c.l.b16 %v525
    %v1586 = vunpack.c.h.b16 %v525
    %v1587 = vunpack.c.l.b16 %v526
    %v1588 = vunpack.c.h.b16 %v526
    %v1589 = vunpack.c.l.b16 %v527
    %v1590 = vunpack.c.h.b16 %v527
    %v1591 = vunpack.c.l.b16 %v528
    %v1592 = vunpack.c.l.b16 %v529
    %v1593 = vunpack.c.h.b16 %v529
    %v1594 = vunpack.c.l.b16 %v530
    %v1595 = vunpack.c.h.b16 %v530
    %v1596 = vunpack.c.l.b16 %v531
    %v1597 = vunpack.c.h.b16 %v531
    %v1598 = vunpack.c.l.b16 %v532
    %v1599 = vunpack.c.l.b16 %v533
    %v1600 = vunpack.c.h.b16 %v533
    %v1601 = vunpack.c.l.b16 %v534
    %v1602 = vunpack.c.h.b16 %v534
    %v1603 = vunpack.c.l.b16 %v535
    %v1604 = vunpack.c.h.b16 %v535
    %v1605 = vunpack.c.l.b16 %v536
    %v1606 = vunpack.c.l.b16 %v537
    %v1607 = vunpack.c.h.b16 %v537
    %v1608 = vunpack.c.l.b16 %v538
    %v1609 = vunpack.c.h.b16 %v538
    %v1610 = vunpack.c.l.b16 %v539
    %v1611 = vunpack.c.h.b16 %v539
    %v1612 = vunpack.c.l.b16 %v540
    %v1613 = vunpack.c.l.b16 %v541
    %v1614 = vunpack.c.h.b16 %v541
    %v1615 = vunpack.c.l.b16 %v542
    %v1616 = vunpack.c.h.b16 %v542
    %v1617 = vunpack.c.l.b16 %v543
    %v1618 = vunpack.c.h.b16 %v543
    %v1619 = vunpack.c.l.b16 %v544
    %v1620 = vunpack.c.l.b16 %v545
    %v1621 = vunpack.c.h.b16 %v545
    %v1622 = vunpack.c.l.b16 %v546
    %v1623 = vunpack.c.h.b16 %v546
    %v1624 = vunpack.c.l.b16 %v547
    %v1625 = vunpack.c.h.b16 %v547
    %v1626 = vunpack.c.l.b16 %v548
    %v1627 = vunpack.c.l.b16 %v549
    %v1628 = vunpack.c.h.b16 %v549
    %v1629 = vunpack.c.l.b16 %v550
    %v1630 = vunpack.c.h.b16 %v550
    %v1631 = vunpack.c.l.b16 %v551
    %v1632 = vunpack.c.h.b16 %v551
    %v1633 = vunpack.c.l.b16 %v552
    %v1634 = vunpack.c.l.b16 %v553
    %v1635 = vunpack.c.h.b16 %v553
    %v1636 = vunpack.c.l.b16 %v554
    %v1637 = vunpack.c.h.b16 %v554
    %v1638 = vunpack.c.l.b16 %v555
    %v1639 = vunpack.c.h.b16 %v555
    %v1640 = vunpack.c.l.b16 %v556
    %v1641 = vunpack.c.l.b16 %v557
    %v1642 = vunpack.c.h.b16 %v557
    %v1643 = vunpack.c.l.b16 %v558
    %v1644 = vunpack.c.h.b16 %v558
    %v1645 = vunpack.c.l.b16 %v559
    %v1646 = vunpack.c.h.b16 %v559
    %v1647 = vunpack.c.l.b16 %v560
    %v1648 = vunpack.c.l.b16 %v561
    %v1649 = vunpack.c.h.b16 %v561
    %v1650 = vunpack.c.l.b16 %v562
    %v1651 = vunpack.c.h.b16 %v562
    %v1652 = vunpack.c.l.b16 %v563
    %v1653 = vunpack.c.h.b16 %v563
    %v1654 = vunpack.c.l.b16 %v564
    %v1655 = vunpack.c.l.b16 %v565
    %v1656 = vunpack.c.h.b16 %v565
    %v1657 = vunpack.c.l.b16 %v566
    %v1658 = vunpack.c.h.b16 %v566
    %v1659 = vunpack.c.l.b16 %v567
    %v1660 = vunpack.c.h.b16 %v567
    %v1661 = vunpack.c.l.b16 %v568
    %v1662 = vunpack.c.l.b16 %v569
    %v1663 = vunpack.c.h.b16 %v569
    %v1664 = vunpack.c.l.b16 %v570
    %v1665 = vunpack.c.h.b16 %v570
    %v1666 = vunpack.c.l.b16 %v571
    %v1667 = vunpack.c.h.b16 %v571
    %v1668 = vunpack.c.l.b16 %v572
    %v1669 = vunpack.c.l.b16 %v573
    %v1670 = vunpack.c.h.b16 %v573
    %v1671 = vunpack.c.l.b16 %v574
    %v1672 = vunpack.c.h.b16 %v574
    %v1673 = vunpack.c.l.b16 %v575
    %v1674 = vunpack.c.h.b16 %v575
    %v1675 = vunpack.c.l.b16 %v576
    %v1676 = vunpack.c.l.b16 %v577
    %v1677 = vunpack.c.h.b16 %v577
    %v1678 = vunpack.c.l.b16 %v578
    %v1679 = vunpack.c.h.b16 %v578
    %v1680 = vunpack.c.l.b16 %v579
    %v1681 = vunpack.c.h.b16 %v579
    %v1682 = vunpack.c.l.b16 %v580
    %v1683 = vpack.c.b16 %v1004, %v997
    %v1684 = vpack.c.b16 %v1005, %v998
    %v1685 = vpack.c.b16 %v1006, %v999
    %v1686 = vpack.c.b16 %v1007, %v1000
    %v1687 = vpack.c.b16 %v1008, %v1001
    %v1688 = vpack.c.b16 %v1009, %v1002
    %v1689 = vpack.c.b16 %v1010, %v1003
    %v1690 = vpack.c.b16 %v1018, %v1011
    %v1691 = vpack.c.b16 %v1019, %v1012
    %v1692 = vpack.c.b16 %v1020, %v1013
    %v1693 = vpack.c.b16 %v1021, %v1014
    %v1694 = vpack.c.b16 %v1022, %v1015
    %v1695 = vpack.c.b16 %v1023, %v1016
    %v1696 = vpack.c.b16 %v1024, %v1017
    %v1697 = vpack.c.b16 %v1032, %v1025
    %v1698 = vpack.c.b16 %v1033, %v1026
    %v1699 = vpack.c.b16 %v1034, %v1027
    %v1700 = vpack.c.b16 %v1035, %v1028
    %v1701 = vpack.c.b16 %v1036, %v1029
    %v1702 = vpack.c.b16 %v1037, %v1030
    %v1703 = vpack.c.b16 %v1038, %v1031
    %v1704 = vpack.c.b16 %v1046, %v1039
    %v1705 = vpack.c.b16 %v1047, %v1040
    %v1706 = vpack.c.b16 %v1048, %v1041
    %v1707 = vpack.c.b16 %v1049, %v1042
    %v1708 = vpack.c.b16 %v1050, %v1043
    %v1709 = vpack.c.b16 %v1051, %v1044
    %v1710 = vpack.c.b16 %v1052, %v1045
    %v1711 = vpack.c.b16 %v1060, %v1053
    %v1712 = vpack.c.b16 %v1061, %v1054
    %v1713 = vpack.c.b16 %v1062, %v1055
    %v1714 = vpack.c.b16 %v1063, %v1056
    %v1715 = vpack.c.b16 %v1064, %v1057
    %v1716 = vpack.c.b16 %v1065, %v1058
    %v1717 = vpack.c.b16 %v1066, %v1059
    %v1718 = vpack.c.b16 %v1074, %v1067
    %v1719 = vpack.c.b16 %v1075, %v1068
    %v1720 = vpack.c.b16 %v1076, %v1069
    %v1721 = vpack.c.b16 %v1077, %v1070
    %v1722 = vpack.c.b16 %v1078, %v1071
    %v1723 = vpack.c.b16 %v1079, %v1072
    %v1724 = vpack.c.b16 %v1080, %v1073
    %v1725 = vpack.c.b16 %v1088, %v1081
    %v1726 = vpack.c.b16 %v1089, %v1082
    %v1727 = vpack.c.b16 %v1090, %v1083
    %v1728 = vpack.c.b16 %v1091, %v1084
    %v1729 = vpack.c.b16 %v1092, %v1085
    %v1730 = vpack.c.b16 %v1093, %v1086
    %v1731 = vpack.c.b16 %v1094, %v1087
    %v1732 = vpack.c.b16 %v1102, %v1095
    %v1733 = vpack.c.b16 %v1103, %v1096
    %v1734 = vpack.c.b16 %v1104, %v1097
    %v1735 = vpack.c.b16 %v1105, %v1098
    %v1736 = vpack.c.b16 %v1106, %v1099
    %v1737 = vpack.c.b16 %v1107, %v1100
    %v1738 = vpack.c.b16 %v1108, %v1101
    %v1739 = vpack.c.b16 %v1116, %v1109
    %v1740 = vpack.c.b16 %v1117, %v1110
    %v1741 = vpack.c.b16 %v1118, %v1111
    %v1742 = vpack.c.b16 %v1119, %v1112
    %v1743 = vpack.c.b16 %v1120, %v1113
    %v1744 = vpack.c.b16 %v1121, %v1114
    %v1745 = vpack.c.b16 %v1122, %v1115
    %v1746 = vpack.c.b16 %v1130, %v1123
    %v1747 = vpack.c.b16 %v1131, %v1124
    %v1748 = vpack.c.b16 %v1132, %v1125
    %v1749 = vpack.c.b16 %v1133, %v1126
    %v1750 = vpack.c.b16 %v1134, %v1127
    %v1751 = vpack.c.b16 %v1135, %v1128
    %v1752 = vpack.c.b16 %v1136, %v1129
    %v1753 = vpack.c.b16 %v1144, %v1137
    %v1754 = vpack.c.b16 %v1145, %v1138
    %v1755 = vpack.c.b16 %v1146, %v1139
    %v1756 = vpack.c.b16 %v1147, %v1140
    %v1757 = vpack.c.b16 %v1148, %v1141
    %v1758 = vpack.c.b16 %v1149, %v1142
    %v1759 = vpack.c.b16 %v1150, %v1143
    %v1760 = vpack.c.b16 %v1158, %v1151
    %v1761 = vpack.c.b16 %v1159, %v1152
    %v1762 = vpack.c.b16 %v1160, %v1153
    %v1763 = vpack.c.b16 %v1161, %v1154
    %v1764 = vpack.c.b16 %v1162, %v1155
    %v1765 = vpack.c.b16 %v1163, %v1156
    %v1766 = vpack.c.b16 %v1164, %v1157
    %v1767 = vpack.c.b16 %v1172, %v1165
    %v1768 = vpack.c.b16 %v1173, %v1166
    %v1769 = vpack.c.b16 %v1174, %v1167
    %v1770 = vpack.c.b16 %v1175, %v1168
    %v1771 = vpack.c.b16 %v1176, %v1169
    %v1772 = vpack.c.b16 %v1177, %v1170
    %v1773 = vpack.c.b16 %v1178, %v1171
    %v1774 = vpack.c.b16 %v1186, %v1179
    %v1775 = vpack.c.b16 %v1187, %v1180
    %v1776 = vpack.c.b16 %v1188, %v1181
    %v1777 = vpack.c.b16 %v1189, %v1182
    %v1778 = vpack.c.b16 %v1190, %v1183
    %v1779 = vpack.c.b16 %v1191, %v1184
    %v1780 = vpack.c.b16 %v1192, %v1185
    %v1781 = vpack.c.b16 %v1200, %v1193
    %v1782 = vpack.c.b16 %v1201, %v1194
    %v1783 = vpack.c.b16 %v1202, %v1195
    %v1784 = vpack.c.b16 %v1203, %v1196
    %v1785 = vpack.c.b16 %v1204, %v1197
    %v1786 = vpack.c.b16 %v1205, %v1198
    %v1787 = vpack.c.b16 %v1206, %v1199
    %v1788 = vpack.c.b16 %v1214, %v1207
    %v1789 = vpack.c.b16 %v1215, %v1208
    %v1790 = vpack.c.b16 %v1216, %v1209
    %v1791 = vpack.c.b16 %v1217, %v1210
    %v1792 = vpack.c.b16 %v1218, %v1211
    %v1793 = vpack.c.b16 %v1219, %v1212
    %v1794 = vpack.c.b16 %v1220, %v1213
    %v1795 = vpack.c.b16 %v1228, %v1221
    %v1796 = vpack.c.b16 %v1229, %v1222
    %v1797 = vpack.c.b16 %v1230, %v1223
    %v1798 = vpack.c.b16 %v1231, %v1224
    %v1799 = vpack.c.b16 %v1232, %v1225
    %v1800 = vpack.c.b16 %v1233, %v1226
    %v1801 = vpack.c.b16 %v1234, %v1227
    %v1802 = vpack.c.b16 %v1242, %v1235
    %v1803 = vpack.c.b16 %v1243, %v1236
    %v1804 = vpack.c.b16 %v1244, %v1237
    %v1805 = vpack.c.b16 %v1245, %v1238
    %v1806 = vpack.c.b16 %v1246, %v1239
    %v1807 = vpack.c.b16 %v1247, %v1240
    %v1808 = vpack.c.b16 %v1248, %v1241
    %v1809 = vpack.c.b16 %v1256, %v1249
    %v1810 = vpack.c.b16 %v1257, %v1250
    %v1811 = vpack.c.b16 %v1258, %v1251
    %v1812 = vpack.c.b16 %v1259, %v1252
    %v1813 = vpack.c.b16 %v1260, %v1253
    %v1814 = vpack.c.b16 %v1261, %v1254
    %v1815 = vpack.c.b16 %v1262, %v1255
    %v1816 = vpack.c.b16 %v1270, %v1263
    %v1817 = vpack.c.b16 %v1271, %v1264
    %v1818 = vpack.c.b16 %v1272, %v1265
    %v1819 = vpack.c.b16 %v1273, %v1266
    %v1820 = vpack.c.b16 %v1274, %v1267
    %v1821 = vpack.c.b16 %v1275, %v1268
    %v1822 = vpack.c.b16 %v1276, %v1269
    %v1823 = vpack.c.b16 %v1284, %v1277
    %v1824 = vpack.c.b16 %v1285, %v1278
    %v1825 = vpack.c.b16 %v1286, %v1279
    %v1826 = vpack.c.b16 %v1287, %v1280
    %v1827 = vpack.c.b16 %v1288, %v1281
    %v1828 = vpack.c.b16 %v1289, %v1282
    %v1829 = vpack.c.b16 %v1290, %v1283
    %v1830 = vpack.c.b16 %v1298, %v1291
    %v1831 = vpack.c.b16 %v1299, %v1292
    %v1832 = vpack.c.b16 %v1300, %v1293
    %v1833 = vpack.c.b16 %v1301, %v1294
    %v1834 = vpack.c.b16 %v1302, %v1295
    %v1835 = vpack.c.b16 %v1303, %v1296
    %v1836 = vpack.c.b16 %v1304, %v1297
    %v1837 = vpack.c.b16 %v1312, %v1305
    %v1838 = vpack.c.b16 %v1313, %v1306
    %v1839 = vpack.c.b16 %v1314, %v1307
    %v1840 = vpack.c.b16 %v1315, %v1308
    %v1841 = vpack.c.b16 %v1316, %v1309
    %v1842 = vpack.c.b16 %v1317, %v1310
    %v1843 = vpack.c.b16 %v1318, %v1311
    %v1844 = vpack.c.b16 %v1326, %v1319
    %v1845 = vpack.c.b16 %v1327, %v1320
    %v1846 = vpack.c.b16 %v1328, %v1321
    %v1847 = vpack.c.b16 %v1329, %v1322
    %v1848 = vpack.c.b16 %v1330, %v1323
    %v1849 = vpack.c.b16 %v1331, %v1324
    %v1850 = vpack.c.b16 %v1332, %v1325
    %v1851 = vpack.c.b16 %v1340, %v1333
    %v1852 = vpack.c.b16 %v1341, %v1334
    %v1853 = vpack.c.b16 %v1342, %v1335
    %v1854 = vpack.c.b16 %v1343, %v1336
    %v1855 = vpack.c.b16 %v1344, %v1337
    %v1856 = vpack.c.b16 %v1345, %v1338
    %v1857 = vpack.c.b16 %v1346, %v1339
    %v1858 = vpack.c.b16 %v1354, %v1347
    %v1859 = vpack.c.b16 %v1355, %v1348
    %v1860 = vpack.c.b16 %v1356, %v1349
    %v1861 = vpack.c.b16 %v1357, %v1350
    %v1862 = vpack.c.b16 %v1358, %v1351
    %v1863 = vpack.c.b16 %v1359, %v1352
    %v1864 = vpack.c.b16 %v1360, %v1353
    %v1865 = vpack.c.b16 %v1368, %v1361
    %v1866 = vpack.c.b16 %v1369, %v1362
    %v1867 = vpack.c.b16 %v1370, %v1363
    %v1868 = vpack.c.b16 %v1371, %v1364
    %v1869 = vpack.c.b16 %v1372, %v1365
    %v1870 = vpack.c.b16 %v1373, %v1366
    %v1871 = vpack.c.b16 %v1374, %v1367
    %v1872 = vpack.c.b16 %v1382, %v1375
    %v1873 = vpack.c.b16 %v1383, %v1376
    %v1874 = vpack.c.b16 %v1384, %v1377
    %v1875 = vpack.c.b16 %v1385, %v1378
    %v1876 = vpack.c.b16 %v1386, %v1379
    %v1877 = vpack.c.b16 %v1387, %v1380
    %v1878 = vpack.c.b16 %v1388, %v1381
    %v1879 = vpack.c.b16 %v1396, %v1389
    %v1880 = vpack.c.b16 %v1397, %v1390
    %v1881 = vpack.c.b16 %v1398, %v1391
    %v1882 = vpack.c.b16 %v1399, %v1392
    %v1883 = vpack.c.b16 %v1400, %v1393
    %v1884 = vpack.c.b16 %v1401, %v1394
    %v1885 = vpack.c.b16 %v1402, %v1395
    %v1886 = vpack.c.b16 %v1410, %v1403
    %v1887 = vpack.c.b16 %v1411, %v1404
    %v1888 = vpack.c.b16 %v1412, %v1405
    %v1889 = vpack.c.b16 %v1413, %v1406
    %v1890 = vpack.c.b16 %v1414, %v1407
    %v1891 = vpack.c.b16 %v1415, %v1408
    %v1892 = vpack.c.b16 %v1416, %v1409
    %v1893 = vpack.c.b16 %v1424, %v1417
    %v1894 = vpack.c.b16 %v1425, %v1418
    %v1895 = vpack.c.b16 %v1426, %v1419
    %v1896 = vpack.c.b16 %v1427, %v1420
    %v1897 = vpack.c.b16 %v1428, %v1421
    %v1898 = vpack.c.b16 %v1429, %v1422
    %v1899 = vpack.c.b16 %v1430, %v1423
    %v1900 = vpack.c.b16 %v1438, %v1431
    %v1901 = vpack.c.b16 %v1439, %v1432
    %v1902 = vpack.c.b16 %v1440, %v1433
    %v1903 = vpack.c.b16 %v1441, %v1434
    %v1904 = vpack.c.b16 %v1442, %v1435
    %v1905 = vpack.c.b16 %v1443, %v1436
    %v1906 = vpack.c.b16 %v1444, %v1437
    %v1907 = vpack.c.b16 %v1452, %v1445
    %v1908 = vpack.c.b16 %v1453, %v1446
    %v1909 = vpack.c.b16 %v1454, %v1447
    %v1910 = vpack.c.b16 %v1455, %v1448
    %v1911 = vpack.c.b16 %v1456, %v1449
    %v1912 = vpack.c.b16 %v1457, %v1450
    %v1913 = vpack.c.b16 %v1458, %v1451
    %v1914 = vpack.c.b16 %v1466, %v1459
    %v1915 = vpack.c.b16 %v1467, %v1460
    %v1916 = vpack.c.b16 %v1468, %v1461
    %v1917 = vpack.c.b16 %v1469, %v1462
    %v1918 = vpack.c.b16 %v1470, %v1463
    %v1919 = vpack.c.b16 %v1471, %v1464
    %v1920 = vpack.c.b16 %v1472, %v1465
    %v1921 = vpack.c.b16 %v1480, %v1473
    %v1922 = vpack.c.b16 %v1481, %v1474
    %v1923 = vpack.c.b16 %v1482, %v1475
    %v1924 = vpack.c.b16 %v1483, %v1476
    %v1925 = vpack.c.b16 %v1484, %v1477
    %v1926 = vpack.c.b16 %v1485, %v1478
    %v1927 = vpack.c.b16 %v1486, %v1479
    %v1928 = vpack.c.b16 %v1494, %v1487
    %v1929 = vpack.c.b16 %v1495, %v1488
    %v1930 = vpack.c.b16 %v1496, %v1489
    %v1931 = vpack.c.b16 %v1497, %v1490
    %v1932 = vpack.c.b16 %v1498, %v1491
    %v1933 = vpack.c.b16 %v1499, %v1492
    %v1934 = vpack.c.b16 %v1500, %v1493
    %v1935 = vpack.c.b16 %v1508, %v1501
    %v1936 = vpack.c.b16 %v1509, %v1502
    %v1937 = vpack.c.b16 %v1510, %v1503
    %v1938 = vpack.c.b16 %v1511, %v1504
    %v1939 = vpack.c.b16 %v1512, %v1505
    %v1940 = vpack.c.b16 %v1513, %v1506
    %v1941 = vpack.c.b16 %v1514, %v1507
    %v1942 = vpack.c.b16 %v1522, %v1515
    %v1943 = vpack.c.b16 %v1523, %v1516
    %v1944 = vpack.c.b16 %v1524, %v1517
    %v1945 = vpack.c.b16 %v1525, %v1518
    %v1946 = vpack.c.b16 %v1526, %v1519
    %v1947 = vpack.c.b16 %v1527, %v1520
    %v1948 = vpack.c.b16 %v1528, %v1521
    %v1949 = vpack.c.b16 %v1536, %v1529
    %v1950 = vpack.c.b16 %v1537, %v1530
    %v1951 = vpack.c.b16 %v1538, %v1531
    %v1952 = vpack.c.b16 %v1539, %v1532
    %v1953 = vpack.c.b16 %v1540, %v1533
    %v1954 = vpack.c.b16 %v1541, %v1534
    %v1955 = vpack.c.b16 %v1542, %v1535
    %v1956 = vpack.c.b16 %v1550, %v1543
    %v1957 = vpack.c.b16 %v1551, %v1544
    %v1958 = vpack.c.b16 %v1552, %v1545
    %v1959 = vpack.c.b16 %v1553, %v1546
    %v1960 = vpack.c.b16 %v1554, %v1547
    %v1961 = vpack.c.b16 %v1555, %v1548
    %v1962 = vpack.c.b16 %v1556, %v1549
    %v1963 = vpack.c.b16 %v1564, %v1557
    %v1964 = vpack.c.b16 %v1565, %v1558
    %v1965 = vpack.c.b16 %v1566, %v1559
    %v1966 = vpack.c.b16 %v1567, %v1560
    %v1967 = vpack.c.b16 %v1568, %v1561
    %v1968 = vpack.c.b16 %v1569, %v1562
    %v1969 = vpack.c.b16 %v1570, %v1563
    %v1970 = vpack.c.b16 %v1578, %v1571
    %v1971 = vpack.c.b16 %v1579, %v1572
    %v1972 = vpack.c.b16 %v1580, %v1573
    %v1973 = vpack.c.b16 %v1581, %v1574
    %v1974 = vpack.c.b16 %v1582, %v1575
    %v1975 = vpack.c.b16 %v1583, %v1576
    %v1976 = vpack.c.b16 %v1584, %v1577
    %v1977 = vpack.c.b16 %v1592, %v1585
    %v1978 = vpack.c.b16 %v1593, %v1586
    %v1979 = vpack.c.b16 %v1594, %v1587
    %v1980 = vpack.c.b16 %v1595, %v1588
    %v1981 = vpack.c.b16 %v1596, %v1589
    %v1982 = vpack.c.b16 %v1597, %v1590
    %v1983 = vpack.c.b16 %v1598, %v1591
    %v1984 = vpack.c.b16 %v1606, %v1599
    %v1985 = vpack.c.b16 %v1607, %v1600
    %v1986 = vpack.c.b16 %v1608, %v1601
    %v1987 = vpack.c.b16 %v1609, %v1602
    %v1988 = vpack.c.b16 %v1610, %v1603
    %v1989 = vpack.c.b16 %v1611, %v1604
    %v1990 = vpack.c.b16 %v1612, %v1605
    %v1991 = vpack.c.b16 %v1620, %v1613
    %v1992 = vpack.c.b16 %v1621, %v1614
    %v1993 = vpack.c.b16 %v1622, %v1615
    %v1994 = vpack.c.b16 %v1623, %v1616
    %v1995 = vpack.c.b16 %v1624, %v1617
    %v1996 = vpack.c.b16 %v1625, %v1618
    %v1997 = vpack.c.b16 %v1626, %v1619
    %v1998 = vpack.c.b16 %v1634, %v1627
    %v1999 = vpack.c.b16 %v1635, %v1628
    %v2000 = vpack.c.b16 %v1636, %v1629
    %v2001 = vpack.c.b16 %v1637, %v1630
    %v2002 = vpack.c.b16 %v1638, %v1631
    %v2003 = vpack.c.b16 %v1639, %v1632
    %v2004 = vpack.c.b16 %v1640, %v1633
    %v2005 = vpack.c.b16 %v1648, %v1641
    %v2006 = vpack.c.b16 %v1649, %v1642
    %v2007 = vpack.c.b16 %v1650, %v1643
    %v2008 = vpack.c.b16 %v1651, %v1644
    %v2009 = vpack.c.b16 %v1652, %v1645
    %v2010 = vpack.c.b16 %v1653, %v1646
    %v2011 = vpack.c.b16 %v1654, %v1647
    %v2012 = vpack.c.b16 %v1662, %v1655
    %v2013 = vpack.c.b16 %v1663, %v1656
    %v2014 = vpack.c.b16 %v1664, %v1657
    %v2015 = vpack.c.b16 %v1665, %v1658
    %v2016 = vpack.c.b16 %v1666, %v1659
    %v2017 = vpack.c.b16 %v1667, %v1660
    %v2018 = vpack.c.b16 %v1668, %v1661
    %v2019 = vpack.c.b16 %v1676, %v1669
    %v2020 = vpack.c.b16 %v1677, %v1670
    %v2021 = vpack.c.b16 %v1678, %v1671
    %v2022 = vpack.c.b16 %v1679, %v1672
    %v2023 = vpack.c.b16 %v1680, %v1673
    %v2024 = vpack.c.b16 %v1681, %v1674
    %v2025 = vpack.c.b16 %v1682, %v1675
    %vm2369 = vcmask 130048
    %v2371 = vsel %vm2369, %v598, 0
    %2373 = vmatpush.bf16.msra.mxu0 %v1732
    %2374 = vmatpush.bf16.msra.mxu0 %v1725
    %2375 = vmatpush.bf16.msra.mxu0 %v1718
    %2376 = vmatpush.bf16.msra.mxu0 %v1711
    %2377 = vmatpush.bf16.msra.mxu0 %v1704
    %2378 = vmatpush.bf16.msra.mxu0 %v1697
    %2379 = vmatpush.bf16.msra.mxu0 %v1690
    %2380 = vmatpush.bf16.msra.mxu0 %v1683
    %2381 = vmatmul.bf16.gmra.mxu0 %v592
    %v2382 = vpop.f32.mrf.mxu0
    %v2383 = vadd.f32 0.0, %v2382
    %v2384 = vpop.f32.mrf.mxu0
    %2385 = vdwg.mxu0
    %2386 = vmatpush.bf16.msra.mxu0 %v1788
    %2387 = vmatpush.bf16.msra.mxu0 %v1781
    %2388 = vmatpush.bf16.msra.mxu0 %v1774
    %2389 = vmatpush.bf16.msra.mxu0 %v1767
    %2390 = vmatpush.bf16.msra.mxu0 %v1760
    %2391 = vmatpush.bf16.msra.mxu0 %v1753
    %2392 = vmatpush.bf16.msra.mxu0 %v1746
    %2393 = vmatpush.bf16.msra.mxu0 %v1739
    %2394 = vmatmul.bf16.gmra.mxu0 %v593
    %v2395 = vpop.f32.mrf.mxu0
    %v2396 = vadd.f32 %v2383, %v2395
    %v2397 = vpop.f32.mrf.mxu0
    %2398 = vdwg.mxu0
    %2399 = vmatpush.bf16.msra.mxu0 %v1844
    %2400 = vmatpush.bf16.msra.mxu0 %v1837
    %2401 = vmatpush.bf16.msra.mxu0 %v1830
    %2402 = vmatpush.bf16.msra.mxu0 %v1823
    %2403 = vmatpush.bf16.msra.mxu0 %v1816
    %2404 = vmatpush.bf16.msra.mxu0 %v1809
    %2405 = vmatpush.bf16.msra.mxu0 %v1802
    %2406 = vmatpush.bf16.msra.mxu0 %v1795
    %2407 = vmatmul.bf16.gmra.mxu0 %v594
    %v2408 = vpop.f32.mrf.mxu0
    %v2409 = vadd.f32 %v2396, %v2408
    %v2410 = vpop.f32.mrf.mxu0
    %2411 = vdwg.mxu0
    %2412 = vmatpush.bf16.msra.mxu0 %v1900
    %2413 = vmatpush.bf16.msra.mxu0 %v1893
    %2414 = vmatpush.bf16.msra.mxu0 %v1886
    %2415 = vmatpush.bf16.msra.mxu0 %v1879
    %2416 = vmatpush.bf16.msra.mxu0 %v1872
    %2417 = vmatpush.bf16.msra.mxu0 %v1865
    %2418 = vmatpush.bf16.msra.mxu0 %v1858
    %2419 = vmatpush.bf16.msra.mxu0 %v1851
    %2420 = vmatmul.bf16.gmra.mxu0 %v595
    %v2421 = vpop.f32.mrf.mxu0
    %v2422 = vadd.f32 %v2409, %v2421
    %v2423 = vpop.f32.mrf.mxu0
    %2424 = vdwg.mxu0
    %2425 = vmatpush.bf16.msra.mxu0 %v1956
    %2426 = vmatpush.bf16.msra.mxu0 %v1949
    %2427 = vmatpush.bf16.msra.mxu0 %v1942
    %2428 = vmatpush.bf16.msra.mxu0 %v1935
    %2429 = vmatpush.bf16.msra.mxu0 %v1928
    %2430 = vmatpush.bf16.msra.mxu0 %v1921
    %2431 = vmatpush.bf16.msra.mxu0 %v1914
    %2432 = vmatpush.bf16.msra.mxu0 %v1907
    %2433 = vmatmul.bf16.gmra.mxu0 %v596
    %v2434 = vpop.f32.mrf.mxu0
    %v2435 = vadd.f32 %v2422, %v2434
    %v2436 = vpop.f32.mrf.mxu0
    %2437 = vdwg.mxu0
    %2438 = vmatpush.bf16.msra.mxu0 %v2012
    %2439 = vmatpush.bf16.msra.mxu0 %v2005
    %2440 = vmatpush.bf16.msra.mxu0 %v1998
    %2441 = vmatpush.bf16.msra.mxu0 %v1991
    %2442 = vmatpush.bf16.msra.mxu0 %v1984
    %2443 = vmatpush.bf16.msra.mxu0 %v1977
    %2444 = vmatpush.bf16.msra.mxu0 %v1970
    %2445 = vmatpush.bf16.msra.mxu0 %v1963
    %2446 = vmatmul.bf16.gmra.mxu0 %v597
    %v2447 = vpop.f32.mrf.mxu0
    %v2448 = vadd.f32 %v2435, %v2447
    %v2449 = vpop.f32.mrf.mxu0
    %2450 = vdwg.mxu0
    %2451 = vmatpush.bf16.msra.mxu0 0
    %2452 = vmatpush.bf16.msra.mxu0 0
    %2453 = vmatpush.bf16.msra.mxu0 0
    %2454 = vmatpush.bf16.msra.mxu0 0
    %2455 = vmatpush.bf16.msra.mxu0 0
    %2456 = vmatpush.bf16.msra.mxu0 0
    %2457 = vmatpush.bf16.msra.mxu0 0
    %2458 = vmatpush.bf16.msra.mxu0 %v2019
    %2459 = vmatmul.bf16.gmra.mxu0 %v2371
    %v2460 = vpop.f32.mrf.mxu0
    %v2461 = vadd.f32 %v2448, %v2460
    %v2462 = vpop.f32.mrf.mxu0
    %2463 = vdwg.mxu0
    %2464 = vmatpush.bf16.msra.mxu0 %v1733
    %2465 = vmatpush.bf16.msra.mxu0 %v1726
    %2466 = vmatpush.bf16.msra.mxu0 %v1719
    %2467 = vmatpush.bf16.msra.mxu0 %v1712
    %2468 = vmatpush.bf16.msra.mxu0 %v1705
    %2469 = vmatpush.bf16.msra.mxu0 %v1698
    %2470 = vmatpush.bf16.msra.mxu0 %v1691
    %2471 = vmatpush.bf16.msra.mxu0 %v1684
    %2472 = vmatmul.bf16.gmra.mxu0 %v592
    %v2473 = vpop.f32.mrf.mxu0
    %v2474 = vadd.f32 0.0, %v2473
    %v2475 = vpop.f32.mrf.mxu0
    %2476 = vdwg.mxu0
    %2477 = vmatpush.bf16.msra.mxu0 %v1789
    %2478 = vmatpush.bf16.msra.mxu0 %v1782
    %2479 = vmatpush.bf16.msra.mxu0 %v1775
    %2480 = vmatpush.bf16.msra.mxu0 %v1768
    %2481 = vmatpush.bf16.msra.mxu0 %v1761
    %2482 = vmatpush.bf16.msra.mxu0 %v1754
    %2483 = vmatpush.bf16.msra.mxu0 %v1747
    %2484 = vmatpush.bf16.msra.mxu0 %v1740
    %2485 = vmatmul.bf16.gmra.mxu0 %v593
    %v2486 = vpop.f32.mrf.mxu0
    %v2487 = vadd.f32 %v2474, %v2486
    %v2488 = vpop.f32.mrf.mxu0
    %2489 = vdwg.mxu0
    %2490 = vmatpush.bf16.msra.mxu0 %v1845
    %2491 = vmatpush.bf16.msra.mxu0 %v1838
    %2492 = vmatpush.bf16.msra.mxu0 %v1831
    %2493 = vmatpush.bf16.msra.mxu0 %v1824
    %2494 = vmatpush.bf16.msra.mxu0 %v1817
    %2495 = vmatpush.bf16.msra.mxu0 %v1810
    %2496 = vmatpush.bf16.msra.mxu0 %v1803
    %2497 = vmatpush.bf16.msra.mxu0 %v1796
    %2498 = vmatmul.bf16.gmra.mxu0 %v594
    %v2499 = vpop.f32.mrf.mxu0
    %v2500 = vadd.f32 %v2487, %v2499
    %v2501 = vpop.f32.mrf.mxu0
    %2502 = vdwg.mxu0
    %2503 = vmatpush.bf16.msra.mxu0 %v1901
    %2504 = vmatpush.bf16.msra.mxu0 %v1894
    %2505 = vmatpush.bf16.msra.mxu0 %v1887
    %2506 = vmatpush.bf16.msra.mxu0 %v1880
    %2507 = vmatpush.bf16.msra.mxu0 %v1873
    %2508 = vmatpush.bf16.msra.mxu0 %v1866
    %2509 = vmatpush.bf16.msra.mxu0 %v1859
    %2510 = vmatpush.bf16.msra.mxu0 %v1852
    %2511 = vmatmul.bf16.gmra.mxu0 %v595
    %v2512 = vpop.f32.mrf.mxu0
    %v2513 = vadd.f32 %v2500, %v2512
    %v2514 = vpop.f32.mrf.mxu0
    %2515 = vdwg.mxu0
    %2516 = vmatpush.bf16.msra.mxu0 %v1957
    %2517 = vmatpush.bf16.msra.mxu0 %v1950
    %2518 = vmatpush.bf16.msra.mxu0 %v1943
    %2519 = vmatpush.bf16.msra.mxu0 %v1936
    %2520 = vmatpush.bf16.msra.mxu0 %v1929
    %2521 = vmatpush.bf16.msra.mxu0 %v1922
    %2522 = vmatpush.bf16.msra.mxu0 %v1915
    %2523 = vmatpush.bf16.msra.mxu0 %v1908
    %2524 = vmatmul.bf16.gmra.mxu0 %v596
    %v2525 = vpop.f32.mrf.mxu0
    %v2526 = vadd.f32 %v2513, %v2525
    %v2527 = vpop.f32.mrf.mxu0
    %2528 = vdwg.mxu0
    %2529 = vmatpush.bf16.msra.mxu0 %v2013
    %2530 = vmatpush.bf16.msra.mxu0 %v2006
    %2531 = vmatpush.bf16.msra.mxu0 %v1999
    %2532 = vmatpush.bf16.msra.mxu0 %v1992
    %2533 = vmatpush.bf16.msra.mxu0 %v1985
    %2534 = vmatpush.bf16.msra.mxu0 %v1978
    %2535 = vmatpush.bf16.msra.mxu0 %v1971
    %2536 = vmatpush.bf16.msra.mxu0 %v1964
    %2537 = vmatmul.bf16.gmra.mxu0 %v597
    %v2538 = vpop.f32.mrf.mxu0
    %v2539 = vadd.f32 %v2526, %v2538
    %v2540 = vpop.f32.mrf.mxu0
    %2541 = vdwg.mxu0
    %2542 = vmatpush.bf16.msra.mxu0 0
    %2543 = vmatpush.bf16.msra.mxu0 0
    %2544 = vmatpush.bf16.msra.mxu0 0
    %2545 = vmatpush.bf16.msra.mxu0 0
    %2546 = vmatpush.bf16.msra.mxu0 0
    %2547 = vmatpush.bf16.msra.mxu0 0
    %2548 = vmatpush.bf16.msra.mxu0 0
    %2549 = vmatpush.bf16.msra.mxu0 %v2020
    %2550 = vmatmul.bf16.gmra.mxu0 %v2371
    %v2551 = vpop.f32.mrf.mxu0
    %v2552 = vadd.f32 %v2539, %v2551
    %v2553 = vpop.f32.mrf.mxu0
    %2554 = vdwg.mxu0
    %2555 = vmatpush.bf16.msra.mxu0 %v1734
    %2556 = vmatpush.bf16.msra.mxu0 %v1727
    %2557 = vmatpush.bf16.msra.mxu0 %v1720
    %2558 = vmatpush.bf16.msra.mxu0 %v1713
    %2559 = vmatpush.bf16.msra.mxu0 %v1706
    %2560 = vmatpush.bf16.msra.mxu0 %v1699
    %2561 = vmatpush.bf16.msra.mxu0 %v1692
    %2562 = vmatpush.bf16.msra.mxu0 %v1685
    %2563 = vmatmul.bf16.gmra.mxu0 %v592
    %v2564 = vpop.f32.mrf.mxu0
    %v2565 = vadd.f32 0.0, %v2564
    %v2566 = vpop.f32.mrf.mxu0
    %2567 = vdwg.mxu0
    %2568 = vmatpush.bf16.msra.mxu0 %v1790
    %2569 = vmatpush.bf16.msra.mxu0 %v1783
    %2570 = vmatpush.bf16.msra.mxu0 %v1776
    %2571 = vmatpush.bf16.msra.mxu0 %v1769
    %2572 = vmatpush.bf16.msra.mxu0 %v1762
    %2573 = vmatpush.bf16.msra.mxu0 %v1755
    %2574 = vmatpush.bf16.msra.mxu0 %v1748
    %2575 = vmatpush.bf16.msra.mxu0 %v1741
    %2576 = vmatmul.bf16.gmra.mxu0 %v593
    %v2577 = vpop.f32.mrf.mxu0
    %v2578 = vadd.f32 %v2565, %v2577
    %v2579 = vpop.f32.mrf.mxu0
    %2580 = vdwg.mxu0
    %2581 = vmatpush.bf16.msra.mxu0 %v1846
    %2582 = vmatpush.bf16.msra.mxu0 %v1839
    %2583 = vmatpush.bf16.msra.mxu0 %v1832
    %2584 = vmatpush.bf16.msra.mxu0 %v1825
    %2585 = vmatpush.bf16.msra.mxu0 %v1818
    %2586 = vmatpush.bf16.msra.mxu0 %v1811
    %2587 = vmatpush.bf16.msra.mxu0 %v1804
    %2588 = vmatpush.bf16.msra.mxu0 %v1797
    %2589 = vmatmul.bf16.gmra.mxu0 %v594
    %v2590 = vpop.f32.mrf.mxu0
    %v2591 = vadd.f32 %v2578, %v2590
    %v2592 = vpop.f32.mrf.mxu0
    %2593 = vdwg.mxu0
    %2594 = vmatpush.bf16.msra.mxu0 %v1902
    %2595 = vmatpush.bf16.msra.mxu0 %v1895
    %2596 = vmatpush.bf16.msra.mxu0 %v1888
    %2597 = vmatpush.bf16.msra.mxu0 %v1881
    %2598 = vmatpush.bf16.msra.mxu0 %v1874
    %2599 = vmatpush.bf16.msra.mxu0 %v1867
    %2600 = vmatpush.bf16.msra.mxu0 %v1860
    %2601 = vmatpush.bf16.msra.mxu0 %v1853
    %2602 = vmatmul.bf16.gmra.mxu0 %v595
    %v2603 = vpop.f32.mrf.mxu0
    %v2604 = vadd.f32 %v2591, %v2603
    %v2605 = vpop.f32.mrf.mxu0
    %2606 = vdwg.mxu0
    %2607 = vmatpush.bf16.msra.mxu0 %v1958
    %2608 = vmatpush.bf16.msra.mxu0 %v1951
    %2609 = vmatpush.bf16.msra.mxu0 %v1944
    %2610 = vmatpush.bf16.msra.mxu0 %v1937
    %2611 = vmatpush.bf16.msra.mxu0 %v1930
    %2612 = vmatpush.bf16.msra.mxu0 %v1923
    %2613 = vmatpush.bf16.msra.mxu0 %v1916
    %2614 = vmatpush.bf16.msra.mxu0 %v1909
    %2615 = vmatmul.bf16.gmra.mxu0 %v596
    %v2616 = vpop.f32.mrf.mxu0
    %v2617 = vadd.f32 %v2604, %v2616
    %v2618 = vpop.f32.mrf.mxu0
    %2619 = vdwg.mxu0
    %2620 = vmatpush.bf16.msra.mxu0 %v2014
    %2621 = vmatpush.bf16.msra.mxu0 %v2007
    %2622 = vmatpush.bf16.msra.mxu0 %v2000
    %2623 = vmatpush.bf16.msra.mxu0 %v1993
    %2624 = vmatpush.bf16.msra.mxu0 %v1986
    %2625 = vmatpush.bf16.msra.mxu0 %v1979
    %2626 = vmatpush.bf16.msra.mxu0 %v1972
    %2627 = vmatpush.bf16.msra.mxu0 %v1965
    %2628 = vmatmul.bf16.gmra.mxu0 %v597
    %v2629 = vpop.f32.mrf.mxu0
    %v2630 = vadd.f32 %v2617, %v2629
    %v2631 = vpop.f32.mrf.mxu0
    %2632 = vdwg.mxu0
    %2633 = vmatpush.bf16.msra.mxu0 0
    %2634 = vmatpush.bf16.msra.mxu0 0
    %2635 = vmatpush.bf16.msra.mxu0 0
    %2636 = vmatpush.bf16.msra.mxu0 0
    %2637 = vmatpush.bf16.msra.mxu0 0
    %2638 = vmatpush.bf16.msra.mxu0 0
    %2639 = vmatpush.bf16.msra.mxu0 0
    %2640 = vmatpush.bf16.msra.mxu0 %v2021
    %2641 = vmatmul.bf16.gmra.mxu0 %v2371
    %v2642 = vpop.f32.mrf.mxu0
    %v2643 = vadd.f32 %v2630, %v2642
    %v2644 = vpop.f32.mrf.mxu0
    %2645 = vdwg.mxu0
    %2646 = vmatpush.bf16.msra.mxu0 %v1735
    %2647 = vmatpush.bf16.msra.mxu0 %v1728
    %2648 = vmatpush.bf16.msra.mxu0 %v1721
    %2649 = vmatpush.bf16.msra.mxu0 %v1714
    %2650 = vmatpush.bf16.msra.mxu0 %v1707
    %2651 = vmatpush.bf16.msra.mxu0 %v1700
    %2652 = vmatpush.bf16.msra.mxu0 %v1693
    %2653 = vmatpush.bf16.msra.mxu0 %v1686
    %2654 = vmatmul.bf16.gmra.mxu0 %v592
    %v2655 = vpop.f32.mrf.mxu0
    %v2656 = vadd.f32 0.0, %v2655
    %v2657 = vpop.f32.mrf.mxu0
    %2658 = vdwg.mxu0
    %2659 = vmatpush.bf16.msra.mxu0 %v1791
    %2660 = vmatpush.bf16.msra.mxu0 %v1784
    %2661 = vmatpush.bf16.msra.mxu0 %v1777
    %2662 = vmatpush.bf16.msra.mxu0 %v1770
    %2663 = vmatpush.bf16.msra.mxu0 %v1763
    %2664 = vmatpush.bf16.msra.mxu0 %v1756
    %2665 = vmatpush.bf16.msra.mxu0 %v1749
    %2666 = vmatpush.bf16.msra.mxu0 %v1742
    %2667 = vmatmul.bf16.gmra.mxu0 %v593
    %v2668 = vpop.f32.mrf.mxu0
    %v2669 = vadd.f32 %v2656, %v2668
    %v2670 = vpop.f32.mrf.mxu0
    %2671 = vdwg.mxu0
    %2672 = vmatpush.bf16.msra.mxu0 %v1847
    %2673 = vmatpush.bf16.msra.mxu0 %v1840
    %2674 = vmatpush.bf16.msra.mxu0 %v1833
    %2675 = vmatpush.bf16.msra.mxu0 %v1826
    %2676 = vmatpush.bf16.msra.mxu0 %v1819
    %2677 = vmatpush.bf16.msra.mxu0 %v1812
    %2678 = vmatpush.bf16.msra.mxu0 %v1805
    %2679 = vmatpush.bf16.msra.mxu0 %v1798
    %2680 = vmatmul.bf16.gmra.mxu0 %v594
    %v2681 = vpop.f32.mrf.mxu0
    %v2682 = vadd.f32 %v2669, %v2681
    %v2683 = vpop.f32.mrf.mxu0
    %2684 = vdwg.mxu0
    %2685 = vmatpush.bf16.msra.mxu0 %v1903
    %2686 = vmatpush.bf16.msra.mxu0 %v1896
    %2687 = vmatpush.bf16.msra.mxu0 %v1889
    %2688 = vmatpush.bf16.msra.mxu0 %v1882
    %2689 = vmatpush.bf16.msra.mxu0 %v1875
    %2690 = vmatpush.bf16.msra.mxu0 %v1868
    %2691 = vmatpush.bf16.msra.mxu0 %v1861
    %2692 = vmatpush.bf16.msra.mxu0 %v1854
    %2693 = vmatmul.bf16.gmra.mxu0 %v595
    %v2694 = vpop.f32.mrf.mxu0
    %v2695 = vadd.f32 %v2682, %v2694
    %v2696 = vpop.f32.mrf.mxu0
    %2697 = vdwg.mxu0
    %2698 = vmatpush.bf16.msra.mxu0 %v1959
    %2699 = vmatpush.bf16.msra.mxu0 %v1952
    %2700 = vmatpush.bf16.msra.mxu0 %v1945
    %2701 = vmatpush.bf16.msra.mxu0 %v1938
    %2702 = vmatpush.bf16.msra.mxu0 %v1931
    %2703 = vmatpush.bf16.msra.mxu0 %v1924
    %2704 = vmatpush.bf16.msra.mxu0 %v1917
    %2705 = vmatpush.bf16.msra.mxu0 %v1910
    %2706 = vmatmul.bf16.gmra.mxu0 %v596
    %v2707 = vpop.f32.mrf.mxu0
    %v2708 = vadd.f32 %v2695, %v2707
    %v2709 = vpop.f32.mrf.mxu0
    %2710 = vdwg.mxu0
    %2711 = vmatpush.bf16.msra.mxu0 %v2015
    %2712 = vmatpush.bf16.msra.mxu0 %v2008
    %2713 = vmatpush.bf16.msra.mxu0 %v2001
    %2714 = vmatpush.bf16.msra.mxu0 %v1994
    %2715 = vmatpush.bf16.msra.mxu0 %v1987
    %2716 = vmatpush.bf16.msra.mxu0 %v1980
    %2717 = vmatpush.bf16.msra.mxu0 %v1973
    %2718 = vmatpush.bf16.msra.mxu0 %v1966
    %2719 = vmatmul.bf16.gmra.mxu0 %v597
    %v2720 = vpop.f32.mrf.mxu0
    %v2721 = vadd.f32 %v2708, %v2720
    %v2722 = vpop.f32.mrf.mxu0
    %2723 = vdwg.mxu0
    %2724 = vmatpush.bf16.msra.mxu0 0
    %2725 = vmatpush.bf16.msra.mxu0 0
    %2726 = vmatpush.bf16.msra.mxu0 0
    %2727 = vmatpush.bf16.msra.mxu0 0
    %2728 = vmatpush.bf16.msra.mxu0 0
    %2729 = vmatpush.bf16.msra.mxu0 0
    %2730 = vmatpush.bf16.msra.mxu0 0
    %2731 = vmatpush.bf16.msra.mxu0 %v2022
    %2732 = vmatmul.bf16.gmra.mxu0 %v2371
    %v2733 = vpop.f32.mrf.mxu0
    %v2734 = vadd.f32 %v2721, %v2733
    %v2735 = vpop.f32.mrf.mxu0
    %2736 = vdwg.mxu0
    %2737 = vmatpush.bf16.msra.mxu0 %v1736
    %2738 = vmatpush.bf16.msra.mxu0 %v1729
    %2739 = vmatpush.bf16.msra.mxu0 %v1722
    %2740 = vmatpush.bf16.msra.mxu0 %v1715
    %2741 = vmatpush.bf16.msra.mxu0 %v1708
    %2742 = vmatpush.bf16.msra.mxu0 %v1701
    %2743 = vmatpush.bf16.msra.mxu0 %v1694
    %2744 = vmatpush.bf16.msra.mxu0 %v1687
    %2745 = vmatmul.bf16.gmra.mxu0 %v592
    %v2746 = vpop.f32.mrf.mxu0
    %v2747 = vadd.f32 0.0, %v2746
    %v2748 = vpop.f32.mrf.mxu0
    %2749 = vdwg.mxu0
    %2750 = vmatpush.bf16.msra.mxu0 %v1792
    %2751 = vmatpush.bf16.msra.mxu0 %v1785
    %2752 = vmatpush.bf16.msra.mxu0 %v1778
    %2753 = vmatpush.bf16.msra.mxu0 %v1771
    %2754 = vmatpush.bf16.msra.mxu0 %v1764
    %2755 = vmatpush.bf16.msra.mxu0 %v1757
    %2756 = vmatpush.bf16.msra.mxu0 %v1750
    %2757 = vmatpush.bf16.msra.mxu0 %v1743
    %2758 = vmatmul.bf16.gmra.mxu0 %v593
    %v2759 = vpop.f32.mrf.mxu0
    %v2760 = vadd.f32 %v2747, %v2759
    %v2761 = vpop.f32.mrf.mxu0
    %2762 = vdwg.mxu0
    %2763 = vmatpush.bf16.msra.mxu0 %v1848
    %2764 = vmatpush.bf16.msra.mxu0 %v1841
    %2765 = vmatpush.bf16.msra.mxu0 %v1834
    %2766 = vmatpush.bf16.msra.mxu0 %v1827
    %2767 = vmatpush.bf16.msra.mxu0 %v1820
    %2768 = vmatpush.bf16.msra.mxu0 %v1813
    %2769 = vmatpush.bf16.msra.mxu0 %v1806
    %2770 = vmatpush.bf16.msra.mxu0 %v1799
    %2771 = vmatmul.bf16.gmra.mxu0 %v594
    %v2772 = vpop.f32.mrf.mxu0
    %v2773 = vadd.f32 %v2760, %v2772
    %v2774 = vpop.f32.mrf.mxu0
    %2775 = vdwg.mxu0
    %2776 = vmatpush.bf16.msra.mxu0 %v1904
    %2777 = vmatpush.bf16.msra.mxu0 %v1897
    %2778 = vmatpush.bf16.msra.mxu0 %v1890
    %2779 = vmatpush.bf16.msra.mxu0 %v1883
    %2780 = vmatpush.bf16.msra.mxu0 %v1876
    %2781 = vmatpush.bf16.msra.mxu0 %v1869
    %2782 = vmatpush.bf16.msra.mxu0 %v1862
    %2783 = vmatpush.bf16.msra.mxu0 %v1855
    %2784 = vmatmul.bf16.gmra.mxu0 %v595
    %v2785 = vpop.f32.mrf.mxu0
    %v2786 = vadd.f32 %v2773, %v2785
    %v2787 = vpop.f32.mrf.mxu0
    %2788 = vdwg.mxu0
    %2789 = vmatpush.bf16.msra.mxu0 %v1960
    %2790 = vmatpush.bf16.msra.mxu0 %v1953
    %2791 = vmatpush.bf16.msra.mxu0 %v1946
    %2792 = vmatpush.bf16.msra.mxu0 %v1939
    %2793 = vmatpush.bf16.msra.mxu0 %v1932
    %2794 = vmatpush.bf16.msra.mxu0 %v1925
    %2795 = vmatpush.bf16.msra.mxu0 %v1918
    %2796 = vmatpush.bf16.msra.mxu0 %v1911
    %2797 = vmatmul.bf16.gmra.mxu0 %v596
    %v2798 = vpop.f32.mrf.mxu0
    %v2799 = vadd.f32 %v2786, %v2798
    %v2800 = vpop.f32.mrf.mxu0
    %2801 = vdwg.mxu0
    %2802 = vmatpush.bf16.msra.mxu0 %v2016
    %2803 = vmatpush.bf16.msra.mxu0 %v2009
    %2804 = vmatpush.bf16.msra.mxu0 %v2002
    %2805 = vmatpush.bf16.msra.mxu0 %v1995
    %2806 = vmatpush.bf16.msra.mxu0 %v1988
    %2807 = vmatpush.bf16.msra.mxu0 %v1981
    %2808 = vmatpush.bf16.msra.mxu0 %v1974
    %2809 = vmatpush.bf16.msra.mxu0 %v1967
    %2810 = vmatmul.bf16.gmra.mxu0 %v597
    %v2811 = vpop.f32.mrf.mxu0
    %v2812 = vadd.f32 %v2799, %v2811
    %v2813 = vpop.f32.mrf.mxu0
    %2814 = vdwg.mxu0
    %2815 = vmatpush.bf16.msra.mxu0 0
    %2816 = vmatpush.bf16.msra.mxu0 0
    %2817 = vmatpush.bf16.msra.mxu0 0
    %2818 = vmatpush.bf16.msra.mxu0 0
    %2819 = vmatpush.bf16.msra.mxu0 0
    %2820 = vmatpush.bf16.msra.mxu0 0
    %2821 = vmatpush.bf16.msra.mxu0 0
    %2822 = vmatpush.bf16.msra.mxu0 %v2023
    %2823 = vmatmul.bf16.gmra.mxu0 %v2371
    %v2824 = vpop.f32.mrf.mxu0
    %v2825 = vadd.f32 %v2812, %v2824
    %v2826 = vpop.f32.mrf.mxu0
    %2827 = vdwg.mxu0
    %2828 = vmatpush.bf16.msra.mxu0 %v1737
    %2829 = vmatpush.bf16.msra.mxu0 %v1730
    %2830 = vmatpush.bf16.msra.mxu0 %v1723
    %2831 = vmatpush.bf16.msra.mxu0 %v1716
    %2832 = vmatpush.bf16.msra.mxu0 %v1709
    %2833 = vmatpush.bf16.msra.mxu0 %v1702
    %2834 = vmatpush.bf16.msra.mxu0 %v1695
    %2835 = vmatpush.bf16.msra.mxu0 %v1688
    %2836 = vmatmul.bf16.gmra.mxu0 %v592
    %v2837 = vpop.f32.mrf.mxu0
    %v2838 = vadd.f32 0.0, %v2837
    %v2839 = vpop.f32.mrf.mxu0
    %2840 = vdwg.mxu0
    %2841 = vmatpush.bf16.msra.mxu0 %v1793
    %2842 = vmatpush.bf16.msra.mxu0 %v1786
    %2843 = vmatpush.bf16.msra.mxu0 %v1779
    %2844 = vmatpush.bf16.msra.mxu0 %v1772
    %2845 = vmatpush.bf16.msra.mxu0 %v1765
    %2846 = vmatpush.bf16.msra.mxu0 %v1758
    %2847 = vmatpush.bf16.msra.mxu0 %v1751
    %2848 = vmatpush.bf16.msra.mxu0 %v1744
    %2849 = vmatmul.bf16.gmra.mxu0 %v593
    %v2850 = vpop.f32.mrf.mxu0
    %v2851 = vadd.f32 %v2838, %v2850
    %v2852 = vpop.f32.mrf.mxu0
    %2853 = vdwg.mxu0
    %2854 = vmatpush.bf16.msra.mxu0 %v1849
    %2855 = vmatpush.bf16.msra.mxu0 %v1842
    %2856 = vmatpush.bf16.msra.mxu0 %v1835
    %2857 = vmatpush.bf16.msra.mxu0 %v1828
    %2858 = vmatpush.bf16.msra.mxu0 %v1821
    %2859 = vmatpush.bf16.msra.mxu0 %v1814
    %2860 = vmatpush.bf16.msra.mxu0 %v1807
    %2861 = vmatpush.bf16.msra.mxu0 %v1800
    %2862 = vmatmul.bf16.gmra.mxu0 %v594
    %v2863 = vpop.f32.mrf.mxu0
    %v2864 = vadd.f32 %v2851, %v2863
    %v2865 = vpop.f32.mrf.mxu0
    %2866 = vdwg.mxu0
    %2867 = vmatpush.bf16.msra.mxu0 %v1905
    %2868 = vmatpush.bf16.msra.mxu0 %v1898
    %2869 = vmatpush.bf16.msra.mxu0 %v1891
    %2870 = vmatpush.bf16.msra.mxu0 %v1884
    %2871 = vmatpush.bf16.msra.mxu0 %v1877
    %2872 = vmatpush.bf16.msra.mxu0 %v1870
    %2873 = vmatpush.bf16.msra.mxu0 %v1863
    %2874 = vmatpush.bf16.msra.mxu0 %v1856
    %2875 = vmatmul.bf16.gmra.mxu0 %v595
    %v2876 = vpop.f32.mrf.mxu0
    %v2877 = vadd.f32 %v2864, %v2876
    %v2878 = vpop.f32.mrf.mxu0
    %2879 = vdwg.mxu0
    %2880 = vmatpush.bf16.msra.mxu0 %v1961
    %2881 = vmatpush.bf16.msra.mxu0 %v1954
    %2882 = vmatpush.bf16.msra.mxu0 %v1947
    %2883 = vmatpush.bf16.msra.mxu0 %v1940
    %2884 = vmatpush.bf16.msra.mxu0 %v1933
    %2885 = vmatpush.bf16.msra.mxu0 %v1926
    %2886 = vmatpush.bf16.msra.mxu0 %v1919
    %2887 = vmatpush.bf16.msra.mxu0 %v1912
    %2888 = vmatmul.bf16.gmra.mxu0 %v596
    %v2889 = vpop.f32.mrf.mxu0
    %v2890 = vadd.f32 %v2877, %v2889
    %v2891 = vpop.f32.mrf.mxu0
    %2892 = vdwg.mxu0
    %2893 = vmatpush.bf16.msra.mxu0 %v2017
    %2894 = vmatpush.bf16.msra.mxu0 %v2010
    %2895 = vmatpush.bf16.msra.mxu0 %v2003
    %2896 = vmatpush.bf16.msra.mxu0 %v1996
    %2897 = vmatpush.bf16.msra.mxu0 %v1989
    %2898 = vmatpush.bf16.msra.mxu0 %v1982
    %2899 = vmatpush.bf16.msra.mxu0 %v1975
    %2900 = vmatpush.bf16.msra.mxu0 %v1968
    %2901 = vmatmul.bf16.gmra.mxu0 %v597
    %v2902 = vpop.f32.mrf.mxu0
    %v2903 = vadd.f32 %v2890, %v2902
    %v2904 = vpop.f32.mrf.mxu0
    %2905 = vdwg.mxu0
    %2906 = vmatpush.bf16.msra.mxu0 0
    %2907 = vmatpush.bf16.msra.mxu0 0
    %2908 = vmatpush.bf16.msra.mxu0 0
    %2909 = vmatpush.bf16.msra.mxu0 0
    %2910 = vmatpush.bf16.msra.mxu0 0
    %2911 = vmatpush.bf16.msra.mxu0 0
    %2912 = vmatpush.bf16.msra.mxu0 0
    %2913 = vmatpush.bf16.msra.mxu0 %v2024
    %2914 = vmatmul.bf16.gmra.mxu0 %v2371
    %v2915 = vpop.f32.mrf.mxu0
    %v2916 = vadd.f32 %v2903, %v2915
    %v2917 = vpop.f32.mrf.mxu0
    %2918 = vdwg.mxu0
    %2919 = vmatpush.bf16.msra.mxu0 %v1738
    %2920 = vmatpush.bf16.msra.mxu0 %v1731
    %2921 = vmatpush.bf16.msra.mxu0 %v1724
    %2922 = vmatpush.bf16.msra.mxu0 %v1717
    %2923 = vmatpush.bf16.msra.mxu0 %v1710
    %2924 = vmatpush.bf16.msra.mxu0 %v1703
    %2925 = vmatpush.bf16.msra.mxu0 %v1696
    %2926 = vmatpush.bf16.msra.mxu0 %v1689
    %2927 = vmatmul.bf16.gmra.mxu0 %v592
    %v2928 = vpop.f32.mrf.mxu0
    %v2929 = vadd.f32 0.0, %v2928
    %v2930 = vpop.f32.mrf.mxu0
    %2931 = vdwg.mxu0
    %2932 = vmatpush.bf16.msra.mxu0 %v1794
    %2933 = vmatpush.bf16.msra.mxu0 %v1787
    %2934 = vmatpush.bf16.msra.mxu0 %v1780
    %2935 = vmatpush.bf16.msra.mxu0 %v1773
    %2936 = vmatpush.bf16.msra.mxu0 %v1766
    %2937 = vmatpush.bf16.msra.mxu0 %v1759
    %2938 = vmatpush.bf16.msra.mxu0 %v1752
    %2939 = vmatpush.bf16.msra.mxu0 %v1745
    %2940 = vmatmul.bf16.gmra.mxu0 %v593
    %v2941 = vpop.f32.mrf.mxu0
    %v2942 = vadd.f32 %v2929, %v2941
    %v2943 = vpop.f32.mrf.mxu0
    %2944 = vdwg.mxu0
    %2945 = vmatpush.bf16.msra.mxu0 %v1850
    %2946 = vmatpush.bf16.msra.mxu0 %v1843
    %2947 = vmatpush.bf16.msra.mxu0 %v1836
    %2948 = vmatpush.bf16.msra.mxu0 %v1829
    %2949 = vmatpush.bf16.msra.mxu0 %v1822
    %2950 = vmatpush.bf16.msra.mxu0 %v1815
    %2951 = vmatpush.bf16.msra.mxu0 %v1808
    %2952 = vmatpush.bf16.msra.mxu0 %v1801
    %2953 = vmatmul.bf16.gmra.mxu0 %v594
    %v2954 = vpop.f32.mrf.mxu0
    %v2955 = vadd.f32 %v2942, %v2954
    %v2956 = vpop.f32.mrf.mxu0
    %2957 = vdwg.mxu0
    %2958 = vmatpush.bf16.msra.mxu0 %v1906
    %2959 = vmatpush.bf16.msra.mxu0 %v1899
    %2960 = vmatpush.bf16.msra.mxu0 %v1892
    %2961 = vmatpush.bf16.msra.mxu0 %v1885
    %2962 = vmatpush.bf16.msra.mxu0 %v1878
    %2963 = vmatpush.bf16.msra.mxu0 %v1871
    %2964 = vmatpush.bf16.msra.mxu0 %v1864
    %2965 = vmatpush.bf16.msra.mxu0 %v1857
    %2966 = vmatmul.bf16.gmra.mxu0 %v595
    %v2967 = vpop.f32.mrf.mxu0
    %v2968 = vadd.f32 %v2955, %v2967
    %v2969 = vpop.f32.mrf.mxu0
    %2970 = vdwg.mxu0
    %2971 = vmatpush.bf16.msra.mxu0 %v1962
    %2972 = vmatpush.bf16.msra.mxu0 %v1955
    %2973 = vmatpush.bf16.msra.mxu0 %v1948
    %2974 = vmatpush.bf16.msra.mxu0 %v1941
    %2975 = vmatpush.bf16.msra.mxu0 %v1934
    %2976 = vmatpush.bf16.msra.mxu0 %v1927
    %2977 = vmatpush.bf16.msra.mxu0 %v1920
    %2978 = vmatpush.bf16.msra.mxu0 %v1913
    %2979 = vmatmul.bf16.gmra.mxu0 %v596
    %v2980 = vpop.f32.mrf.mxu0
    %v2981 = vadd.f32 %v2968, %v2980
    %v2982 = vpop.f32.mrf.mxu0
    %2983 = vdwg.mxu0
    %2984 = vmatpush.bf16.msra.mxu0 %v2018
    %2985 = vmatpush.bf16.msra.mxu0 %v2011
    %2986 = vmatpush.bf16.msra.mxu0 %v2004
    %2987 = vmatpush.bf16.msra.mxu0 %v1997
    %2988 = vmatpush.bf16.msra.mxu0 %v1990
    %2989 = vmatpush.bf16.msra.mxu0 %v1983
    %2990 = vmatpush.bf16.msra.mxu0 %v1976
    %2991 = vmatpush.bf16.msra.mxu0 %v1969
    %2992 = vmatmul.bf16.gmra.mxu0 %v597
    %v2993 = vpop.f32.mrf.mxu0
    %v2994 = vadd.f32 %v2981, %v2993
    %v2995 = vpop.f32.mrf.mxu0
    %2996 = vdwg.mxu0
    %2997 = vmatpush.bf16.msra.mxu0 0
    %2998 = vmatpush.bf16.msra.mxu0 0
    %2999 = vmatpush.bf16.msra.mxu0 0
    %3000 = vmatpush.bf16.msra.mxu0 0
    %3001 = vmatpush.bf16.msra.mxu0 0
    %3002 = vmatpush.bf16.msra.mxu0 0
    %3003 = vmatpush.bf16.msra.mxu0 0
    %3004 = vmatpush.bf16.msra.mxu0 %v2025
    %3005 = vmatmul.bf16.gmra.mxu0 %v2371
    %v3006 = vpop.f32.mrf.mxu0
    %v3007 = vadd.f32 %v2994, %v3006
    %v3008 = vpop.f32.mrf.mxu0
    %3009 = vdwg.mxu0
    %s3010 = scalar_lea.vmem [#allocation2], 2744
    %v3011 = vld [vmem:[%s3010] sm:$0xff]
    %v3012 = vld [vmem:[%s3010 + $0x8] sm:$0xff]
    %v3013 = vld [vmem:[%s3010 + $0x10] sm:$0xff]
    %v3014 = vld [vmem:[%s3010 + $0x18] sm:$0xf]
    %v3015 = vld [vmem:[%s3010 + $0x1c] sm:$0xff]
    %v3016 = vld [vmem:[%s3010 + $0x24] sm:$0xff]
    %v3017 = vld [vmem:[%s3010 + $0x2c] sm:$0xff]
    %v3018 = vld [vmem:[%s3010 + $0x34] sm:$0xf]
    %v3019 = vld [vmem:[%s3010 + $0x38] sm:$0xff]
    %v3020 = vld [vmem:[%s3010 + $0x40] sm:$0xff]
    %v3021 = vld [vmem:[%s3010 + $0x48] sm:$0xff]
    %v3022 = vld [vmem:[%s3010 + $0x50] sm:$0xf]
    %v3023 = vld [vmem:[%s3010 + $0x54] sm:$0xff]
    %v3024 = vld [vmem:[%s3010 + $0x5c] sm:$0xff]
    %v3025 = vld [vmem:[%s3010 + $0x64] sm:$0xff]
    %v3026 = vld [vmem:[%s3010 + $0x6c] sm:$0xf]
    %v3027 = vld [vmem:[%s3010 + $0x70] sm:$0xff]
    %v3028 = vld [vmem:[%s3010 + $0x78] sm:$0xff]
    %v3029 = vld [vmem:[%s3010 + $0x80] sm:$0xff]
    %v3030 = vld [vmem:[%s3010 + $0x88] sm:$0xf]
    %v3031 = vld [vmem:[%s3010 + $0x8c] sm:$0xff]
    %v3032 = vld [vmem:[%s3010 + $0x94] sm:$0xff]
    %v3033 = vld [vmem:[%s3010 + $0x9c] sm:$0xff]
    %v3034 = vld [vmem:[%s3010 + $0xa4] sm:$0xf]
    %v3035 = vld [vmem:[%s3010 + $0xa8] sm:$0xff]
    %v3036 = vld [vmem:[%s3010 + $0xb0] sm:$0xff]
    %v3037 = vld [vmem:[%s3010 + $0xb8] sm:$0xff]
    %v3038 = vld [vmem:[%s3010 + $0xc0] sm:$0xf]
    %v3039 = vld [vmem:[%s3010 + $0xc4] sm:$0xff]
    %v3040 = vld [vmem:[%s3010 + $0xcc] sm:$0xff]
    %v3041 = vld [vmem:[%s3010 + $0xd4] sm:$0xff]
    %v3042 = vld [vmem:[%s3010 + $0xdc] sm:$0xf]
    %v3043 = vld [vmem:[%s3010 + $0xe0] sm:$0xff]
    %v3044 = vld [vmem:[%s3010 + $0xe8] sm:$0xff]
    %v3045 = vld [vmem:[%s3010 + $0xf0] sm:$0xff]
    %v3046 = vld [vmem:[%s3010 + $0xf8] sm:$0xf]
    %v3047 = vld [vmem:[%s3010 + $0xfc] sm:$0xff]
    %v3048 = vld [vmem:[%s3010 + $0x104] sm:$0xff]
    %v3049 = vld [vmem:[%s3010 + $0x10c] sm:$0xff]
    %v3050 = vld [vmem:[%s3010 + $0x114] sm:$0xf]
    %v3051 = vld [vmem:[%s3010 + $0x118] sm:$0xff]
    %v3052 = vld [vmem:[%s3010 + $0x120] sm:$0xff]
    %v3053 = vld [vmem:[%s3010 + $0x128] sm:$0xff]
    %v3054 = vld [vmem:[%s3010 + $0x130] sm:$0xf]
    %v3055 = vld [vmem:[%s3010 + $0x134] sm:$0xff]
    %v3056 = vld [vmem:[%s3010 + $0x13c] sm:$0xff]
    %v3057 = vld [vmem:[%s3010 + $0x144] sm:$0xff]
    %v3058 = vld [vmem:[%s3010 + $0x14c] sm:$0xf]
    %v3059 = vld [vmem:[%s3010 + $0x150] sm:$0xff]
    %v3060 = vld [vmem:[%s3010 + $0x158] sm:$0xff]
    %v3061 = vld [vmem:[%s3010 + $0x160] sm:$0xff]
    %v3062 = vld [vmem:[%s3010 + $0x168] sm:$0xf]
    %v3063 = vld [vmem:[%s3010 + $0x16c] sm:$0xff]
    %v3064 = vld [vmem:[%s3010 + $0x174] sm:$0xff]
    %v3065 = vld [vmem:[%s3010 + $0x17c] sm:$0xff]
    %v3066 = vld [vmem:[%s3010 + $0x184] sm:$0xf]
    %v3067 = vld [vmem:[%s3010 + $0x188] sm:$0xff]
    %v3068 = vld [vmem:[%s3010 + $0x190] sm:$0xff]
    %v3069 = vld [vmem:[%s3010 + $0x198] sm:$0xff]
    %v3070 = vld [vmem:[%s3010 + $0x1a0] sm:$0xf]
    %v3071 = vld [vmem:[%s3010 + $0x1a4] sm:$0xff]
    %v3072 = vld [vmem:[%s3010 + $0x1ac] sm:$0xff]
    %v3073 = vld [vmem:[%s3010 + $0x1b4] sm:$0xff]
    %v3074 = vld [vmem:[%s3010 + $0x1bc] sm:$0xf]
    %v3075 = vld [vmem:[%s3010 + $0x1c0] sm:$0xff]
    %v3076 = vld [vmem:[%s3010 + $0x1c8] sm:$0xff]
    %v3077 = vld [vmem:[%s3010 + $0x1d0] sm:$0xff]
    %v3078 = vld [vmem:[%s3010 + $0x1d8] sm:$0xf]
    %v3079 = vld [vmem:[%s3010 + $0x1dc] sm:$0xff]
    %v3080 = vld [vmem:[%s3010 + $0x1e4] sm:$0xff]
    %v3081 = vld [vmem:[%s3010 + $0x1ec] sm:$0xff]
    %v3082 = vld [vmem:[%s3010 + $0x1f4] sm:$0xf]
    %v3083 = vld [vmem:[%s3010 + $0x1f8] sm:$0xff]
    %v3084 = vld [vmem:[%s3010 + $0x200] sm:$0xff]
    %v3085 = vld [vmem:[%s3010 + $0x208] sm:$0xff]
    %v3086 = vld [vmem:[%s3010 + $0x210] sm:$0xf]
    %v3087 = vld [vmem:[%s3010 + $0x214] sm:$0xff]
    %v3088 = vld [vmem:[%s3010 + $0x21c] sm:$0xff]
    %v3089 = vld [vmem:[%s3010 + $0x224] sm:$0xff]
    %v3090 = vld [vmem:[%s3010 + $0x22c] sm:$0xf]
    %v3091 = vld [vmem:[%s3010 + $0x230] sm:$0xff]
    %v3092 = vld [vmem:[%s3010 + $0x238] sm:$0xff]
    %v3093 = vld [vmem:[%s3010 + $0x240] sm:$0xff]
    %v3094 = vld [vmem:[%s3010 + $0x248] sm:$0xf]
    %v3095 = vld [vmem:[%s3010 + $0x24c] sm:$0xff]
    %v3096 = vld [vmem:[%s3010 + $0x254] sm:$0xff]
    %v3097 = vld [vmem:[%s3010 + $0x25c] sm:$0xff]
    %v3098 = vld [vmem:[%s3010 + $0x264] sm:$0xf]
    %v3099 = vld [vmem:[%s3010 + $0x268] sm:$0xff]
    %v3100 = vld [vmem:[%s3010 + $0x270] sm:$0xff]
    %v3101 = vld [vmem:[%s3010 + $0x278] sm:$0xff]
    %v3102 = vld [vmem:[%s3010 + $0x280] sm:$0xf]
    %v3103 = vld [vmem:[%s3010 + $0x284] sm:$0xff]
    %v3104 = vld [vmem:[%s3010 + $0x28c] sm:$0xff]
    %v3105 = vld [vmem:[%s3010 + $0x294] sm:$0xff]
    %v3106 = vld [vmem:[%s3010 + $0x29c] sm:$0xf]
    %v3107 = vld [vmem:[%s3010 + $0x2a0] sm:$0xff]
    %v3108 = vld [vmem:[%s3010 + $0x2a8] sm:$0xff]
    %v3109 = vld [vmem:[%s3010 + $0x2b0] sm:$0xff]
    %v3110 = vld [vmem:[%s3010 + $0x2b8] sm:$0xf]
    %v3111 = vld [vmem:[%s3010 + $0x2bc] sm:$0xff]
    %v3112 = vld [vmem:[%s3010 + $0x2c4] sm:$0xff]
    %v3113 = vld [vmem:[%s3010 + $0x2cc] sm:$0xff]
    %v3114 = vld [vmem:[%s3010 + $0x2d4] sm:$0xf]
    %v3115 = vld [vmem:[%s3010 + $0x2d8] sm:$0xff]
    %v3116 = vld [vmem:[%s3010 + $0x2e0] sm:$0xff]
    %v3117 = vld [vmem:[%s3010 + $0x2e8] sm:$0xff]
    %v3118 = vld [vmem:[%s3010 + $0x2f0] sm:$0xf]
    %v3119 = vld [vmem:[%s3010 + $0x2f4] sm:$0xff]
    %v3120 = vld [vmem:[%s3010 + $0x2fc] sm:$0xff]
    %v3121 = vld [vmem:[%s3010 + $0x304] sm:$0xff]
    %v3122 = vld [vmem:[%s3010 + $0x30c] sm:$0xf]
    %v3123 = vld [vmem:[%s3010 + $0x310] sm:$0xff]
    %v3124 = vld [vmem:[%s3010 + $0x318] sm:$0xff]
    %v3125 = vld [vmem:[%s3010 + $0x320] sm:$0xff]
    %v3126 = vld [vmem:[%s3010 + $0x328] sm:$0xf]
    %v3127 = vld [vmem:[%s3010 + $0x32c] sm:$0xff]
    %v3128 = vld [vmem:[%s3010 + $0x334] sm:$0xff]
    %v3129 = vld [vmem:[%s3010 + $0x33c] sm:$0xff]
    %v3130 = vld [vmem:[%s3010 + $0x344] sm:$0xf]
    %v3131 = vld [vmem:[%s3010 + $0x348] sm:$0xff]
    %v3132 = vld [vmem:[%s3010 + $0x350] sm:$0xff]
    %v3133 = vld [vmem:[%s3010 + $0x358] sm:$0xff]
    %v3134 = vld [vmem:[%s3010 + $0x360] sm:$0xf]
    %v3135 = vld [vmem:[%s3010 + $0x364] sm:$0xff]
    %v3136 = vld [vmem:[%s3010 + $0x36c] sm:$0xff]
    %v3137 = vld [vmem:[%s3010 + $0x374] sm:$0xff]
    %v3138 = vld [vmem:[%s3010 + $0x37c] sm:$0xf]
    %v3139 = vld [vmem:[%s3010 + $0x380] sm:$0xff]
    %v3140 = vld [vmem:[%s3010 + $0x388] sm:$0xff]
    %v3141 = vld [vmem:[%s3010 + $0x390] sm:$0xff]
    %v3142 = vld [vmem:[%s3010 + $0x398] sm:$0xf]
    %v3143 = vld [vmem:[%s3010 + $0x39c] sm:$0xff]
    %v3144 = vld [vmem:[%s3010 + $0x3a4] sm:$0xff]
    %v3145 = vld [vmem:[%s3010 + $0x3ac] sm:$0xff]
    %v3146 = vld [vmem:[%s3010 + $0x3b4] sm:$0xf]
    %v3147 = vld [vmem:[%s3010 + $0x3b8] sm:$0xff]
    %v3148 = vld [vmem:[%s3010 + $0x3c0] sm:$0xff]
    %v3149 = vld [vmem:[%s3010 + $0x3c8] sm:$0xff]
    %v3150 = vld [vmem:[%s3010 + $0x3d0] sm:$0xf]
    %v3151 = vld [vmem:[%s3010 + $0x3d4] sm:$0xff]
    %v3152 = vld [vmem:[%s3010 + $0x3dc] sm:$0xff]
    %v3153 = vld [vmem:[%s3010 + $0x3e4] sm:$0xff]
    %v3154 = vld [vmem:[%s3010 + $0x3ec] sm:$0xf]
    %v3155 = vld [vmem:[%s3010 + $0x3f0] sm:$0xff]
    %v3156 = vld [vmem:[%s3010 + $0x3f8] sm:$0xff]
    %v3157 = vld [vmem:[%s3010 + $0x400] sm:$0xff]
    %v3158 = vld [vmem:[%s3010 + $0x408] sm:$0xf]
    %v3159 = vld [vmem:[%s3010 + $0x40c] sm:$0xff]
    %v3160 = vld [vmem:[%s3010 + $0x414] sm:$0xff]
    %v3161 = vld [vmem:[%s3010 + $0x41c] sm:$0xff]
    %v3162 = vld [vmem:[%s3010 + $0x424] sm:$0xf]
    %v3163 = vld [vmem:[%s3010 + $0x428] sm:$0xff]
    %v3164 = vld [vmem:[%s3010 + $0x430] sm:$0xff]
    %v3165 = vld [vmem:[%s3010 + $0x438] sm:$0xff]
    %v3166 = vld [vmem:[%s3010 + $0x440] sm:$0xf]
    %v3167 = vld [vmem:[%s3010 + $0x444] sm:$0xff]
    %v3168 = vld [vmem:[%s3010 + $0x44c] sm:$0xff]
    %v3169 = vld [vmem:[%s3010 + $0x454] sm:$0xff]
    %v3170 = vld [vmem:[%s3010 + $0x45c] sm:$0xf]
    %v3171 = vld [vmem:[%s3010 + $0x460] sm:$0xff]
    %v3172 = vld [vmem:[%s3010 + $0x468] sm:$0xff]
    %v3173 = vld [vmem:[%s3010 + $0x470] sm:$0xff]
    %v3174 = vld [vmem:[%s3010 + $0x478] sm:$0xf]
    %v3175 = vld [vmem:[%s3010 + $0x47c] sm:$0xff]
    %v3176 = vld [vmem:[%s3010 + $0x484] sm:$0xff]
    %v3177 = vld [vmem:[%s3010 + $0x48c] sm:$0xff]
    %v3178 = vld [vmem:[%s3010 + $0x494] sm:$0xf]
    %v3179 = vld [vmem:[%s3010 + $0x498] sm:$0xff]
    %v3180 = vld [vmem:[%s3010 + $0x4a0] sm:$0xff]
    %v3181 = vld [vmem:[%s3010 + $0x4a8] sm:$0xff]
    %v3182 = vld [vmem:[%s3010 + $0x4b0] sm:$0xf]
    %v3183 = vld [vmem:[%s3010 + $0x4b4] sm:$0xff]
    %v3184 = vld [vmem:[%s3010 + $0x4bc] sm:$0xff]
    %v3185 = vld [vmem:[%s3010 + $0x4c4] sm:$0xff]
    %v3186 = vld [vmem:[%s3010 + $0x4cc] sm:$0xf]
    %v3187 = vld [vmem:[%s3010 + $0x4d0] sm:$0xff]
    %v3188 = vld [vmem:[%s3010 + $0x4d8] sm:$0xff]
    %v3189 = vld [vmem:[%s3010 + $0x4e0] sm:$0xff]
    %v3190 = vld [vmem:[%s3010 + $0x4e8] sm:$0xf]
    %v3191 = vld [vmem:[%s3010 + $0x4ec] sm:$0xff]
    %v3192 = vld [vmem:[%s3010 + $0x4f4] sm:$0xff]
    %v3193 = vld [vmem:[%s3010 + $0x4fc] sm:$0xff]
    %v3194 = vld [vmem:[%s3010 + $0x504] sm:$0xf]
    %v3195 = vld [vmem:[%s3010 + $0x508] sm:$0xff]
    %v3196 = vld [vmem:[%s3010 + $0x510] sm:$0xff]
    %v3197 = vld [vmem:[%s3010 + $0x518] sm:$0xff]
    %v3198 = vld [vmem:[%s3010 + $0x520] sm:$0xf]
    %v3199 = vld [vmem:[%s3010 + $0x524] sm:$0xff]
    %v3200 = vld [vmem:[%s3010 + $0x52c] sm:$0xff]
    %v3201 = vld [vmem:[%s3010 + $0x534] sm:$0xff]
    %v3202 = vld [vmem:[%s3010 + $0x53c] sm:$0xf]
    %v3203 = vld [vmem:[%s3010 + $0x540] sm:$0xff]
    %v3204 = vld [vmem:[%s3010 + $0x548] sm:$0xff]
    %v3205 = vld [vmem:[%s3010 + $0x550] sm:$0xff]
    %v3206 = vld [vmem:[%s3010 + $0x558] sm:$0xf]
    %v3207 = vld [vmem:[%s3010 + $0x55c] sm:$0xff]
    %v3208 = vld [vmem:[%s3010 + $0x564] sm:$0xff]
    %v3209 = vld [vmem:[%s3010 + $0x56c] sm:$0xff]
    %v3210 = vld [vmem:[%s3010 + $0x574] sm:$0xf]
    %v3211 = vld [vmem:[%s3010 + $0x578] sm:$0xff]
    %v3212 = vld [vmem:[%s3010 + $0x580] sm:$0xff]
    %v3213 = vld [vmem:[%s3010 + $0x588] sm:$0xff]
    %v3214 = vld [vmem:[%s3010 + $0x590] sm:$0xf]
    %v3215 = vld [vmem:[%s3010 + $0x594] sm:$0xff]
    %v3216 = vld [vmem:[%s3010 + $0x59c] sm:$0xff]
    %v3217 = vld [vmem:[%s3010 + $0x5a4] sm:$0xff]
    %v3218 = vld [vmem:[%s3010 + $0x5ac] sm:$0xf]
    %v3219 = vld [vmem:[%s3010 + $0x5b0] sm:$0xff]
    %v3220 = vld [vmem:[%s3010 + $0x5b8] sm:$0xff]
    %v3221 = vld [vmem:[%s3010 + $0x5c0] sm:$0xff]
    %v3222 = vld [vmem:[%s3010 + $0x5c8] sm:$0xf]
    %v3223 = vld [vmem:[%s3010 + $0x5cc] sm:$0xff]
    %v3224 = vld [vmem:[%s3010 + $0x5d4] sm:$0xff]
    %v3225 = vld [vmem:[%s3010 + $0x5dc] sm:$0xff]
    %v3226 = vld [vmem:[%s3010 + $0x5e4] sm:$0xf]
    %v3227 = vld [vmem:[%s3010 + $0x5e8] sm:$0xff]
    %v3228 = vld [vmem:[%s3010 + $0x5f0] sm:$0xff]
    %v3229 = vld [vmem:[%s3010 + $0x5f8] sm:$0xff]
    %v3230 = vld [vmem:[%s3010 + $0x600] sm:$0xf]
    %v3231 = vld [vmem:[%s3010 + $0x604] sm:$0xff]
    %v3232 = vld [vmem:[%s3010 + $0x60c] sm:$0xff]
    %v3233 = vld [vmem:[%s3010 + $0x614] sm:$0xff]
    %v3234 = vld [vmem:[%s3010 + $0x61c] sm:$0xf]
    %v3235 = vld [vmem:[%s3010 + $0x620] sm:$0xff]
    %v3236 = vld [vmem:[%s3010 + $0x628] sm:$0xff]
    %v3237 = vld [vmem:[%s3010 + $0x630] sm:$0xff]
    %v3238 = vld [vmem:[%s3010 + $0x638] sm:$0xf]
    %v3239 = vld [vmem:[%s3010 + $0x63c] sm:$0xff]
    %v3240 = vld [vmem:[%s3010 + $0x644] sm:$0xff]
    %v3241 = vld [vmem:[%s3010 + $0x64c] sm:$0xff]
    %v3242 = vld [vmem:[%s3010 + $0x654] sm:$0xf]
    %v3243 = vld [vmem:[%s3010 + $0x658] sm:$0xff]
    %v3244 = vld [vmem:[%s3010 + $0x660] sm:$0xff]
    %v3245 = vld [vmem:[%s3010 + $0x668] sm:$0xff]
    %v3246 = vld [vmem:[%s3010 + $0x670] sm:$0xf]
    %v3247 = vld [vmem:[%s3010 + $0x674] sm:$0xff]
    %v3248 = vld [vmem:[%s3010 + $0x67c] sm:$0xff]
    %v3249 = vld [vmem:[%s3010 + $0x684] sm:$0xff]
    %v3250 = vld [vmem:[%s3010 + $0x68c] sm:$0xf]
    %v3251 = vld [vmem:[%s3010 + $0x690] sm:$0xff]
    %v3252 = vld [vmem:[%s3010 + $0x698] sm:$0xff]
    %v3253 = vld [vmem:[%s3010 + $0x6a0] sm:$0xff]
    %v3254 = vld [vmem:[%s3010 + $0x6a8] sm:$0xf]
    %v3255 = vld [vmem:[%s3010 + $0x6ac] sm:$0xff]
    %v3256 = vld [vmem:[%s3010 + $0x6b4] sm:$0xff]
    %v3257 = vld [vmem:[%s3010 + $0x6bc] sm:$0xff]
    %v3258 = vld [vmem:[%s3010 + $0x6c4] sm:$0xf]
    %v3259 = vld [vmem:[%s3010 + $0x6c8] sm:$0xff]
    %v3260 = vld [vmem:[%s3010 + $0x6d0] sm:$0xff]
    %v3261 = vld [vmem:[%s3010 + $0x6d8] sm:$0xff]
    %v3262 = vld [vmem:[%s3010 + $0x6e0] sm:$0xf]
    %v3263 = vld [vmem:[%s3010 + $0x6e4] sm:$0xff]
    %v3264 = vld [vmem:[%s3010 + $0x6ec] sm:$0xff]
    %v3265 = vld [vmem:[%s3010 + $0x6f4] sm:$0xff]
    %v3266 = vld [vmem:[%s3010 + $0x6fc] sm:$0xf]
    %v3267 = vld [vmem:[%s3010 + $0x700] sm:$0xff]
    %v3268 = vld [vmem:[%s3010 + $0x708] sm:$0xff]
    %v3269 = vld [vmem:[%s3010 + $0x710] sm:$0xff]
    %v3270 = vld [vmem:[%s3010 + $0x718] sm:$0xf]
    %v3271 = vld [vmem:[%s3010 + $0x71c] sm:$0xff]
    %v3272 = vld [vmem:[%s3010 + $0x724] sm:$0xff]
    %v3273 = vld [vmem:[%s3010 + $0x72c] sm:$0xff]
    %v3274 = vld [vmem:[%s3010 + $0x734] sm:$0xf]
    %v3275 = vld [vmem:[%s3010 + $0x738] sm:$0xff]
    %v3276 = vld [vmem:[%s3010 + $0x740] sm:$0xff]
    %v3277 = vld [vmem:[%s3010 + $0x748] sm:$0xff]
    %v3278 = vld [vmem:[%s3010 + $0x750] sm:$0xf]
    %v3279 = vld [vmem:[%s3010 + $0x754] sm:$0xff]
    %v3280 = vld [vmem:[%s3010 + $0x75c] sm:$0xff]
    %v3281 = vld [vmem:[%s3010 + $0x764] sm:$0xff]
    %v3282 = vld [vmem:[%s3010 + $0x76c] sm:$0xf]
    %v3283 = vld [vmem:[%s3010 + $0x770] sm:$0xff]
    %v3284 = vld [vmem:[%s3010 + $0x778] sm:$0xff]
    %v3285 = vld [vmem:[%s3010 + $0x780] sm:$0xff]
    %v3286 = vld [vmem:[%s3010 + $0x788] sm:$0xf]
    %v3287 = vld [vmem:[%s3010 + $0x78c] sm:$0xff]
    %v3288 = vld [vmem:[%s3010 + $0x794] sm:$0xff]
    %v3289 = vld [vmem:[%s3010 + $0x79c] sm:$0xff]
    %v3290 = vld [vmem:[%s3010 + $0x7a4] sm:$0xf]
    %v3291 = vld [vmem:[%s3010 + $0x7a8] sm:$0xff]
    %v3292 = vld [vmem:[%s3010 + $0x7b0] sm:$0xff]
    %v3293 = vld [vmem:[%s3010 + $0x7b8] sm:$0xff]
    %v3294 = vld [vmem:[%s3010 + $0x7c0] sm:$0xf]
    %v3295 = vld [vmem:[%s3010 + $0x7c4] sm:$0xff]
    %v3296 = vld [vmem:[%s3010 + $0x7cc] sm:$0xff]
    %v3297 = vld [vmem:[%s3010 + $0x7d4] sm:$0xff]
    %v3298 = vld [vmem:[%s3010 + $0x7dc] sm:$0xf]
    %v3299 = vld [vmem:[%s3010 + $0x7e0] sm:$0xff]
    %v3300 = vld [vmem:[%s3010 + $0x7e8] sm:$0xff]
    %v3301 = vld [vmem:[%s3010 + $0x7f0] sm:$0xff]
    %v3302 = vld [vmem:[%s3010 + $0x7f8] sm:$0xf]
    %v3303 = vld [vmem:[%s3010 + $0x7fc] sm:$0xff]
    %v3304 = vld [vmem:[%s3010 + $0x804] sm:$0xff]
    %v3305 = vld [vmem:[%s3010 + $0x80c] sm:$0xff]
    %v3306 = vld [vmem:[%s3010 + $0x814] sm:$0xf]
    %v3307 = vld [vmem:[%s3010 + $0x818] sm:$0xff]
    %v3308 = vld [vmem:[%s3010 + $0x820] sm:$0xff]
    %v3309 = vld [vmem:[%s3010 + $0x828] sm:$0xff]
    %v3310 = vld [vmem:[%s3010 + $0x830] sm:$0xf]
    %v3311 = vld [vmem:[%s3010 + $0x834] sm:$0xff]
    %v3312 = vld [vmem:[%s3010 + $0x83c] sm:$0xff]
    %v3313 = vld [vmem:[%s3010 + $0x844] sm:$0xff]
    %v3314 = vld [vmem:[%s3010 + $0x84c] sm:$0xf]
    %v3315 = vld [vmem:[%s3010 + $0x850] sm:$0xff]
    %v3316 = vld [vmem:[%s3010 + $0x858] sm:$0xff]
    %v3317 = vld [vmem:[%s3010 + $0x860] sm:$0xff]
    %v3318 = vld [vmem:[%s3010 + $0x868] sm:$0xf]
    %v3319 = vld [vmem:[%s3010 + $0x86c] sm:$0xff]
    %v3320 = vld [vmem:[%s3010 + $0x874] sm:$0xff]
    %v3321 = vld [vmem:[%s3010 + $0x87c] sm:$0xff]
    %v3322 = vld [vmem:[%s3010 + $0x884] sm:$0xf]
    %v3323 = vld [vmem:[%s3010 + $0x888] sm:$0xff]
    %v3324 = vld [vmem:[%s3010 + $0x890] sm:$0xff]
    %v3325 = vld [vmem:[%s3010 + $0x898] sm:$0xff]
    %v3326 = vld [vmem:[%s3010 + $0x8a0] sm:$0xf]
    %v3327 = vld [vmem:[%s3010 + $0x8a4] sm:$0xff]
    %v3328 = vld [vmem:[%s3010 + $0x8ac] sm:$0xff]
    %v3329 = vld [vmem:[%s3010 + $0x8b4] sm:$0xff]
    %v3330 = vld [vmem:[%s3010 + $0x8bc] sm:$0xf]
    %v3331 = vld [vmem:[%s3010 + $0x8c0] sm:$0xff]
    %v3332 = vld [vmem:[%s3010 + $0x8c8] sm:$0xff]
    %v3333 = vld [vmem:[%s3010 + $0x8d0] sm:$0xff]
    %v3334 = vld [vmem:[%s3010 + $0x8d8] sm:$0xf]
    %v3335 = vld [vmem:[%s3010 + $0x8dc] sm:$0xff]
    %v3336 = vld [vmem:[%s3010 + $0x8e4] sm:$0xff]
    %v3337 = vld [vmem:[%s3010 + $0x8ec] sm:$0xff]
    %v3338 = vld [vmem:[%s3010 + $0x8f4] sm:$0xf]
    %v3339 = vld [vmem:[%s3010 + $0x8f8] sm:$0xff]
    %v3340 = vld [vmem:[%s3010 + $0x900] sm:$0xff]
    %v3341 = vld [vmem:[%s3010 + $0x908] sm:$0xff]
    %v3342 = vld [vmem:[%s3010 + $0x910] sm:$0xf]
    %v3343 = vld [vmem:[%s3010 + $0x914] sm:$0xff]
    %v3344 = vld [vmem:[%s3010 + $0x91c] sm:$0xff]
    %v3345 = vld [vmem:[%s3010 + $0x924] sm:$0xff]
    %v3346 = vld [vmem:[%s3010 + $0x92c] sm:$0xf]
    %v3347 = vld [vmem:[%s3010 + $0x930] sm:$0xff]
    %v3348 = vld [vmem:[%s3010 + $0x938] sm:$0xff]
    %v3349 = vld [vmem:[%s3010 + $0x940] sm:$0xff]
    %v3350 = vld [vmem:[%s3010 + $0x948] sm:$0xf]
    %v3351 = vld [vmem:[%s3010 + $0x94c] sm:$0xff]
    %v3352 = vld [vmem:[%s3010 + $0x954] sm:$0xff]
    %v3353 = vld [vmem:[%s3010 + $0x95c] sm:$0xff]
    %v3354 = vld [vmem:[%s3010 + $0x964] sm:$0xf]
    %v3355 = vld [vmem:[%s3010 + $0x968] sm:$0xff]
    %v3356 = vld [vmem:[%s3010 + $0x970] sm:$0xff]
    %v3357 = vld [vmem:[%s3010 + $0x978] sm:$0xff]
    %v3358 = vld [vmem:[%s3010 + $0x980] sm:$0xf]
    %v3359 = vld [vmem:[%s3010 + $0x984] sm:$0xff]
    %v3360 = vld [vmem:[%s3010 + $0x98c] sm:$0xff]
    %v3361 = vld [vmem:[%s3010 + $0x994] sm:$0xff]
    %v3362 = vld [vmem:[%s3010 + $0x99c] sm:$0xf]
    %v3363 = vld [vmem:[%s3010 + $0x9a0] sm:$0xff]
    %v3364 = vld [vmem:[%s3010 + $0x9a8] sm:$0xff]
    %v3365 = vld [vmem:[%s3010 + $0x9b0] sm:$0xff]
    %v3366 = vld [vmem:[%s3010 + $0x9b8] sm:$0xf]
    %v3367 = vld [vmem:[%s3010 + $0x9bc] sm:$0xff]
    %v3368 = vld [vmem:[%s3010 + $0x9c4] sm:$0xff]
    %v3369 = vld [vmem:[%s3010 + $0x9cc] sm:$0xff]
    %v3370 = vld [vmem:[%s3010 + $0x9d4] sm:$0xf]
    %v3371 = vld [vmem:[%s3010 + $0x9d8] sm:$0xff]
    %v3372 = vld [vmem:[%s3010 + $0x9e0] sm:$0xff]
    %v3373 = vld [vmem:[%s3010 + $0x9e8] sm:$0xff]
    %v3374 = vld [vmem:[%s3010 + $0x9f0] sm:$0xf]
    %v3375 = vld [vmem:[%s3010 + $0x9f4] sm:$0xff]
    %v3376 = vld [vmem:[%s3010 + $0x9fc] sm:$0xff]
    %v3377 = vld [vmem:[%s3010 + $0xa04] sm:$0xff]
    %v3378 = vld [vmem:[%s3010 + $0xa0c] sm:$0xf]
    %v3379 = vld [vmem:[%s3010 + $0xa10] sm:$0xff]
    %v3380 = vld [vmem:[%s3010 + $0xa18] sm:$0xff]
    %v3381 = vld [vmem:[%s3010 + $0xa20] sm:$0xff]
    %v3382 = vld [vmem:[%s3010 + $0xa28] sm:$0xf]
    %v3383 = vld [vmem:[%s3010 + $0xa2c] sm:$0xff]
    %v3384 = vld [vmem:[%s3010 + $0xa34] sm:$0xff]
    %v3385 = vld [vmem:[%s3010 + $0xa3c] sm:$0xff]
    %v3386 = vld [vmem:[%s3010 + $0xa44] sm:$0xf]
    %v3387 = vld [vmem:[%s3010 + $0xa48] sm:$0xff]
    %v3388 = vld [vmem:[%s3010 + $0xa50] sm:$0xff]
    %v3389 = vld [vmem:[%s3010 + $0xa58] sm:$0xff]
    %v3390 = vld [vmem:[%s3010 + $0xa60] sm:$0xf]
    %v3391 = vld [vmem:[%s3010 + $0xa64] sm:$0xff]
    %v3392 = vld [vmem:[%s3010 + $0xa6c] sm:$0xff]
    %v3393 = vld [vmem:[%s3010 + $0xa74] sm:$0xff]
    %v3394 = vld [vmem:[%s3010 + $0xa7c] sm:$0xf]
    %v3395 = vld [vmem:[%s3010 + $0xa80] sm:$0xff]
    %v3396 = vld [vmem:[%s3010 + $0xa88] sm:$0xff]
    %v3397 = vld [vmem:[%s3010 + $0xa90] sm:$0xff]
    %v3398 = vld [vmem:[%s3010 + $0xa98] sm:$0xf]
    %v3399 = vld [vmem:[%s3010 + $0xa9c] sm:$0xff]
    %v3400 = vld [vmem:[%s3010 + $0xaa4] sm:$0xff]
    %v3401 = vld [vmem:[%s3010 + $0xaac] sm:$0xff]
    %v3402 = vld [vmem:[%s3010 + $0xab4] sm:$0xf]
    %v3795 = vunpack.c.l.b16 %v3011
    %v3796 = vunpack.c.h.b16 %v3011
    %v3797 = vunpack.c.l.b16 %v3012
    %v3798 = vunpack.c.h.b16 %v3012
    %v3799 = vunpack.c.l.b16 %v3013
    %v3800 = vunpack.c.h.b16 %v3013
    %v3801 = vunpack.c.l.b16 %v3014
    %v3802 = vunpack.c.l.b16 %v3015
    %v3803 = vunpack.c.h.b16 %v3015
    %v3804 = vunpack.c.l.b16 %v3016
    %v3805 = vunpack.c.h.b16 %v3016
    %v3806 = vunpack.c.l.b16 %v3017
    %v3807 = vunpack.c.h.b16 %v3017
    %v3808 = vunpack.c.l.b16 %v3018
    %v3809 = vunpack.c.l.b16 %v3019
    %v3810 = vunpack.c.h.b16 %v3019
    %v3811 = vunpack.c.l.b16 %v3020
    %v3812 = vunpack.c.h.b16 %v3020
    %v3813 = vunpack.c.l.b16 %v3021
    %v3814 = vunpack.c.h.b16 %v3021
    %v3815 = vunpack.c.l.b16 %v3022
    %v3816 = vunpack.c.l.b16 %v3023
    %v3817 = vunpack.c.h.b16 %v3023
    %v3818 = vunpack.c.l.b16 %v3024
    %v3819 = vunpack.c.h.b16 %v3024
    %v3820 = vunpack.c.l.b16 %v3025
    %v3821 = vunpack.c.h.b16 %v3025
    %v3822 = vunpack.c.l.b16 %v3026
    %v3823 = vunpack.c.l.b16 %v3027
    %v3824 = vunpack.c.h.b16 %v3027
    %v3825 = vunpack.c.l.b16 %v3028
    %v3826 = vunpack.c.h.b16 %v3028
    %v3827 = vunpack.c.l.b16 %v3029
    %v3828 = vunpack.c.h.b16 %v3029
    %v3829 = vunpack.c.l.b16 %v3030
    %v3830 = vunpack.c.l.b16 %v3031
    %v3831 = vunpack.c.h.b16 %v3031
    %v3832 = vunpack.c.l.b16 %v3032
    %v3833 = vunpack.c.h.b16 %v3032
    %v3834 = vunpack.c.l.b16 %v3033
    %v3835 = vunpack.c.h.b16 %v3033
    %v3836 = vunpack.c.l.b16 %v3034
    %v3837 = vunpack.c.l.b16 %v3035
    %v3838 = vunpack.c.h.b16 %v3035
    %v3839 = vunpack.c.l.b16 %v3036
    %v3840 = vunpack.c.h.b16 %v3036
    %v3841 = vunpack.c.l.b16 %v3037
    %v3842 = vunpack.c.h.b16 %v3037
    %v3843 = vunpack.c.l.b16 %v3038
    %v3844 = vunpack.c.l.b16 %v3039
    %v3845 = vunpack.c.h.b16 %v3039
    %v3846 = vunpack.c.l.b16 %v3040
    %v3847 = vunpack.c.h.b16 %v3040
    %v3848 = vunpack.c.l.b16 %v3041
    %v3849 = vunpack.c.h.b16 %v3041
    %v3850 = vunpack.c.l.b16 %v3042
    %v3851 = vunpack.c.l.b16 %v3043
    %v3852 = vunpack.c.h.b16 %v3043
    %v3853 = vunpack.c.l.b16 %v3044
    %v3854 = vunpack.c.h.b16 %v3044
    %v3855 = vunpack.c.l.b16 %v3045
    %v3856 = vunpack.c.h.b16 %v3045
    %v3857 = vunpack.c.l.b16 %v3046
    %v3858 = vunpack.c.l.b16 %v3047
    %v3859 = vunpack.c.h.b16 %v3047
    %v3860 = vunpack.c.l.b16 %v3048
    %v3861 = vunpack.c.h.b16 %v3048
    %v3862 = vunpack.c.l.b16 %v3049
    %v3863 = vunpack.c.h.b16 %v3049
    %v3864 = vunpack.c.l.b16 %v3050
    %v3865 = vunpack.c.l.b16 %v3051
    %v3866 = vunpack.c.h.b16 %v3051
    %v3867 = vunpack.c.l.b16 %v3052
    %v3868 = vunpack.c.h.b16 %v3052
    %v3869 = vunpack.c.l.b16 %v3053
    %v3870 = vunpack.c.h.b16 %v3053
    %v3871 = vunpack.c.l.b16 %v3054
    %v3872 = vunpack.c.l.b16 %v3055
    %v3873 = vunpack.c.h.b16 %v3055
    %v3874 = vunpack.c.l.b16 %v3056
    %v3875 = vunpack.c.h.b16 %v3056
    %v3876 = vunpack.c.l.b16 %v3057
    %v3877 = vunpack.c.h.b16 %v3057
    %v3878 = vunpack.c.l.b16 %v3058
    %v3879 = vunpack.c.l.b16 %v3059
    %v3880 = vunpack.c.h.b16 %v3059
    %v3881 = vunpack.c.l.b16 %v3060
    %v3882 = vunpack.c.h.b16 %v3060
    %v3883 = vunpack.c.l.b16 %v3061
    %v3884 = vunpack.c.h.b16 %v3061
    %v3885 = vunpack.c.l.b16 %v3062
    %v3886 = vunpack.c.l.b16 %v3063
    %v3887 = vunpack.c.h.b16 %v3063
    %v3888 = vunpack.c.l.b16 %v3064
    %v3889 = vunpack.c.h.b16 %v3064
    %v3890 = vunpack.c.l.b16 %v3065
    %v3891 = vunpack.c.h.b16 %v3065
    %v3892 = vunpack.c.l.b16 %v3066
    %v3893 = vunpack.c.l.b16 %v3067
    %v3894 = vunpack.c.h.b16 %v3067
    %v3895 = vunpack.c.l.b16 %v3068
    %v3896 = vunpack.c.h.b16 %v3068
    %v3897 = vunpack.c.l.b16 %v3069
    %v3898 = vunpack.c.h.b16 %v3069
    %v3899 = vunpack.c.l.b16 %v3070
    %v3900 = vunpack.c.l.b16 %v3071
    %v3901 = vunpack.c.h.b16 %v3071
    %v3902 = vunpack.c.l.b16 %v3072
    %v3903 = vunpack.c.h.b16 %v3072
    %v3904 = vunpack.c.l.b16 %v3073
    %v3905 = vunpack.c.h.b16 %v3073
    %v3906 = vunpack.c.l.b16 %v3074
    %v3907 = vunpack.c.l.b16 %v3075
    %v3908 = vunpack.c.h.b16 %v3075
    %v3909 = vunpack.c.l.b16 %v3076
    %v3910 = vunpack.c.h.b16 %v3076
    %v3911 = vunpack.c.l.b16 %v3077
    %v3912 = vunpack.c.h.b16 %v3077
    %v3913 = vunpack.c.l.b16 %v3078
    %v3914 = vunpack.c.l.b16 %v3079
    %v3915 = vunpack.c.h.b16 %v3079
    %v3916 = vunpack.c.l.b16 %v3080
    %v3917 = vunpack.c.h.b16 %v3080
    %v3918 = vunpack.c.l.b16 %v3081
    %v3919 = vunpack.c.h.b16 %v3081
    %v3920 = vunpack.c.l.b16 %v3082
    %v3921 = vunpack.c.l.b16 %v3083
    %v3922 = vunpack.c.h.b16 %v3083
    %v3923 = vunpack.c.l.b16 %v3084
    %v3924 = vunpack.c.h.b16 %v3084
    %v3925 = vunpack.c.l.b16 %v3085
    %v3926 = vunpack.c.h.b16 %v3085
    %v3927 = vunpack.c.l.b16 %v3086
    %v3928 = vunpack.c.l.b16 %v3087
    %v3929 = vunpack.c.h.b16 %v3087
    %v3930 = vunpack.c.l.b16 %v3088
    %v3931 = vunpack.c.h.b16 %v3088
    %v3932 = vunpack.c.l.b16 %v3089
    %v3933 = vunpack.c.h.b16 %v3089
    %v3934 = vunpack.c.l.b16 %v3090
    %v3935 = vunpack.c.l.b16 %v3091
    %v3936 = vunpack.c.h.b16 %v3091
    %v3937 = vunpack.c.l.b16 %v3092
    %v3938 = vunpack.c.h.b16 %v3092
    %v3939 = vunpack.c.l.b16 %v3093
    %v3940 = vunpack.c.h.b16 %v3093
    %v3941 = vunpack.c.l.b16 %v3094
    %v3942 = vunpack.c.l.b16 %v3095
    %v3943 = vunpack.c.h.b16 %v3095
    %v3944 = vunpack.c.l.b16 %v3096
    %v3945 = vunpack.c.h.b16 %v3096
    %v3946 = vunpack.c.l.b16 %v3097
    %v3947 = vunpack.c.h.b16 %v3097
    %v3948 = vunpack.c.l.b16 %v3098
    %v3949 = vunpack.c.l.b16 %v3099
    %v3950 = vunpack.c.h.b16 %v3099
    %v3951 = vunpack.c.l.b16 %v3100
    %v3952 = vunpack.c.h.b16 %v3100
    %v3953 = vunpack.c.l.b16 %v3101
    %v3954 = vunpack.c.h.b16 %v3101
    %v3955 = vunpack.c.l.b16 %v3102
    %v3956 = vunpack.c.l.b16 %v3103
    %v3957 = vunpack.c.h.b16 %v3103
    %v3958 = vunpack.c.l.b16 %v3104
    %v3959 = vunpack.c.h.b16 %v3104
    %v3960 = vunpack.c.l.b16 %v3105
    %v3961 = vunpack.c.h.b16 %v3105
    %v3962 = vunpack.c.l.b16 %v3106
    %v3963 = vunpack.c.l.b16 %v3107
    %v3964 = vunpack.c.h.b16 %v3107
    %v3965 = vunpack.c.l.b16 %v3108
    %v3966 = vunpack.c.h.b16 %v3108
    %v3967 = vunpack.c.l.b16 %v3109
    %v3968 = vunpack.c.h.b16 %v3109
    %v3969 = vunpack.c.l.b16 %v3110
    %v3970 = vunpack.c.l.b16 %v3111
    %v3971 = vunpack.c.h.b16 %v3111
    %v3972 = vunpack.c.l.b16 %v3112
    %v3973 = vunpack.c.h.b16 %v3112
    %v3974 = vunpack.c.l.b16 %v3113
    %v3975 = vunpack.c.h.b16 %v3113
    %v3976 = vunpack.c.l.b16 %v3114
    %v3977 = vunpack.c.l.b16 %v3115
    %v3978 = vunpack.c.h.b16 %v3115
    %v3979 = vunpack.c.l.b16 %v3116
    %v3980 = vunpack.c.h.b16 %v3116
    %v3981 = vunpack.c.l.b16 %v3117
    %v3982 = vunpack.c.h.b16 %v3117
    %v3983 = vunpack.c.l.b16 %v3118
    %v3984 = vunpack.c.l.b16 %v3119
    %v3985 = vunpack.c.h.b16 %v3119
    %v3986 = vunpack.c.l.b16 %v3120
    %v3987 = vunpack.c.h.b16 %v3120
    %v3988 = vunpack.c.l.b16 %v3121
    %v3989 = vunpack.c.h.b16 %v3121
    %v3990 = vunpack.c.l.b16 %v3122
    %v3991 = vunpack.c.l.b16 %v3123
    %v3992 = vunpack.c.h.b16 %v3123
    %v3993 = vunpack.c.l.b16 %v3124
    %v3994 = vunpack.c.h.b16 %v3124
    %v3995 = vunpack.c.l.b16 %v3125
    %v3996 = vunpack.c.h.b16 %v3125
    %v3997 = vunpack.c.l.b16 %v3126
    %v3998 = vunpack.c.l.b16 %v3127
    %v3999 = vunpack.c.h.b16 %v3127
    %v4000 = vunpack.c.l.b16 %v3128
    %v4001 = vunpack.c.h.b16 %v3128
    %v4002 = vunpack.c.l.b16 %v3129
    %v4003 = vunpack.c.h.b16 %v3129
    %v4004 = vunpack.c.l.b16 %v3130
    %v4005 = vunpack.c.l.b16 %v3131
    %v4006 = vunpack.c.h.b16 %v3131
    %v4007 = vunpack.c.l.b16 %v3132
    %v4008 = vunpack.c.h.b16 %v3132
    %v4009 = vunpack.c.l.b16 %v3133
    %v4010 = vunpack.c.h.b16 %v3133
    %v4011 = vunpack.c.l.b16 %v3134
    %v4012 = vunpack.c.l.b16 %v3135
    %v4013 = vunpack.c.h.b16 %v3135
    %v4014 = vunpack.c.l.b16 %v3136
    %v4015 = vunpack.c.h.b16 %v3136
    %v4016 = vunpack.c.l.b16 %v3137
    %v4017 = vunpack.c.h.b16 %v3137
    %v4018 = vunpack.c.l.b16 %v3138
    %v4019 = vunpack.c.l.b16 %v3139
    %v4020 = vunpack.c.h.b16 %v3139
    %v4021 = vunpack.c.l.b16 %v3140
    %v4022 = vunpack.c.h.b16 %v3140
    %v4023 = vunpack.c.l.b16 %v3141
    %v4024 = vunpack.c.h.b16 %v3141
    %v4025 = vunpack.c.l.b16 %v3142
    %v4026 = vunpack.c.l.b16 %v3143
    %v4027 = vunpack.c.h.b16 %v3143
    %v4028 = vunpack.c.l.b16 %v3144
    %v4029 = vunpack.c.h.b16 %v3144
    %v4030 = vunpack.c.l.b16 %v3145
    %v4031 = vunpack.c.h.b16 %v3145
    %v4032 = vunpack.c.l.b16 %v3146
    %v4033 = vunpack.c.l.b16 %v3147
    %v4034 = vunpack.c.h.b16 %v3147
    %v4035 = vunpack.c.l.b16 %v3148
    %v4036 = vunpack.c.h.b16 %v3148
    %v4037 = vunpack.c.l.b16 %v3149
    %v4038 = vunpack.c.h.b16 %v3149
    %v4039 = vunpack.c.l.b16 %v3150
    %v4040 = vunpack.c.l.b16 %v3151
    %v4041 = vunpack.c.h.b16 %v3151
    %v4042 = vunpack.c.l.b16 %v3152
    %v4043 = vunpack.c.h.b16 %v3152
    %v4044 = vunpack.c.l.b16 %v3153
    %v4045 = vunpack.c.h.b16 %v3153
    %v4046 = vunpack.c.l.b16 %v3154
    %v4047 = vunpack.c.l.b16 %v3155
    %v4048 = vunpack.c.h.b16 %v3155
    %v4049 = vunpack.c.l.b16 %v3156
    %v4050 = vunpack.c.h.b16 %v3156
    %v4051 = vunpack.c.l.b16 %v3157
    %v4052 = vunpack.c.h.b16 %v3157
    %v4053 = vunpack.c.l.b16 %v3158
    %v4054 = vunpack.c.l.b16 %v3159
    %v4055 = vunpack.c.h.b16 %v3159
    %v4056 = vunpack.c.l.b16 %v3160
    %v4057 = vunpack.c.h.b16 %v3160
    %v4058 = vunpack.c.l.b16 %v3161
    %v4059 = vunpack.c.h.b16 %v3161
    %v4060 = vunpack.c.l.b16 %v3162
    %v4061 = vunpack.c.l.b16 %v3163
    %v4062 = vunpack.c.h.b16 %v3163
    %v4063 = vunpack.c.l.b16 %v3164
    %v4064 = vunpack.c.h.b16 %v3164
    %v4065 = vunpack.c.l.b16 %v3165
    %v4066 = vunpack.c.h.b16 %v3165
    %v4067 = vunpack.c.l.b16 %v3166
    %v4068 = vunpack.c.l.b16 %v3167
    %v4069 = vunpack.c.h.b16 %v3167
    %v4070 = vunpack.c.l.b16 %v3168
    %v4071 = vunpack.c.h.b16 %v3168
    %v4072 = vunpack.c.l.b16 %v3169
    %v4073 = vunpack.c.h.b16 %v3169
    %v4074 = vunpack.c.l.b16 %v3170
    %v4075 = vunpack.c.l.b16 %v3171
    %v4076 = vunpack.c.h.b16 %v3171
    %v4077 = vunpack.c.l.b16 %v3172
    %v4078 = vunpack.c.h.b16 %v3172
    %v4079 = vunpack.c.l.b16 %v3173
    %v4080 = vunpack.c.h.b16 %v3173
    %v4081 = vunpack.c.l.b16 %v3174
    %v4082 = vunpack.c.l.b16 %v3175
    %v4083 = vunpack.c.h.b16 %v3175
    %v4084 = vunpack.c.l.b16 %v3176
    %v4085 = vunpack.c.h.b16 %v3176
    %v4086 = vunpack.c.l.b16 %v3177
    %v4087 = vunpack.c.h.b16 %v3177
    %v4088 = vunpack.c.l.b16 %v3178
    %v4089 = vunpack.c.l.b16 %v3179
    %v4090 = vunpack.c.h.b16 %v3179
    %v4091 = vunpack.c.l.b16 %v3180
    %v4092 = vunpack.c.h.b16 %v3180
    %v4093 = vunpack.c.l.b16 %v3181
    %v4094 = vunpack.c.h.b16 %v3181
    %v4095 = vunpack.c.l.b16 %v3182
    %v4096 = vunpack.c.l.b16 %v3183
    %v4097 = vunpack.c.h.b16 %v3183
    %v4098 = vunpack.c.l.b16 %v3184
    %v4099 = vunpack.c.h.b16 %v3184
    %v4100 = vunpack.c.l.b16 %v3185
    %v4101 = vunpack.c.h.b16 %v3185
    %v4102 = vunpack.c.l.b16 %v3186
    %v4103 = vunpack.c.l.b16 %v3187
    %v4104 = vunpack.c.h.b16 %v3187
    %v4105 = vunpack.c.l.b16 %v3188
    %v4106 = vunpack.c.h.b16 %v3188
    %v4107 = vunpack.c.l.b16 %v3189
    %v4108 = vunpack.c.h.b16 %v3189
    %v4109 = vunpack.c.l.b16 %v3190
    %v4110 = vunpack.c.l.b16 %v3191
    %v4111 = vunpack.c.h.b16 %v3191
    %v4112 = vunpack.c.l.b16 %v3192
    %v4113 = vunpack.c.h.b16 %v3192
    %v4114 = vunpack.c.l.b16 %v3193
    %v4115 = vunpack.c.h.b16 %v3193
    %v4116 = vunpack.c.l.b16 %v3194
    %v4117 = vunpack.c.l.b16 %v3195
    %v4118 = vunpack.c.h.b16 %v3195
    %v4119 = vunpack.c.l.b16 %v3196
    %v4120 = vunpack.c.h.b16 %v3196
    %v4121 = vunpack.c.l.b16 %v3197
    %v4122 = vunpack.c.h.b16 %v3197
    %v4123 = vunpack.c.l.b16 %v3198
    %v4124 = vunpack.c.l.b16 %v3199
    %v4125 = vunpack.c.h.b16 %v3199
    %v4126 = vunpack.c.l.b16 %v3200
    %v4127 = vunpack.c.h.b16 %v3200
    %v4128 = vunpack.c.l.b16 %v3201
    %v4129 = vunpack.c.h.b16 %v3201
    %v4130 = vunpack.c.l.b16 %v3202
    %v4131 = vunpack.c.l.b16 %v3203
    %v4132 = vunpack.c.h.b16 %v3203
    %v4133 = vunpack.c.l.b16 %v3204
    %v4134 = vunpack.c.h.b16 %v3204
    %v4135 = vunpack.c.l.b16 %v3205
    %v4136 = vunpack.c.h.b16 %v3205
    %v4137 = vunpack.c.l.b16 %v3206
    %v4138 = vunpack.c.l.b16 %v3207
    %v4139 = vunpack.c.h.b16 %v3207
    %v4140 = vunpack.c.l.b16 %v3208
    %v4141 = vunpack.c.h.b16 %v3208
    %v4142 = vunpack.c.l.b16 %v3209
    %v4143 = vunpack.c.h.b16 %v3209
    %v4144 = vunpack.c.l.b16 %v3210
    %v4145 = vunpack.c.l.b16 %v3211
    %v4146 = vunpack.c.h.b16 %v3211
    %v4147 = vunpack.c.l.b16 %v3212
    %v4148 = vunpack.c.h.b16 %v3212
    %v4149 = vunpack.c.l.b16 %v3213
    %v4150 = vunpack.c.h.b16 %v3213
    %v4151 = vunpack.c.l.b16 %v3214
    %v4152 = vunpack.c.l.b16 %v3215
    %v4153 = vunpack.c.h.b16 %v3215
    %v4154 = vunpack.c.l.b16 %v3216
    %v4155 = vunpack.c.h.b16 %v3216
    %v4156 = vunpack.c.l.b16 %v3217
    %v4157 = vunpack.c.h.b16 %v3217
    %v4158 = vunpack.c.l.b16 %v3218
    %v4159 = vunpack.c.l.b16 %v3219
    %v4160 = vunpack.c.h.b16 %v3219
    %v4161 = vunpack.c.l.b16 %v3220
    %v4162 = vunpack.c.h.b16 %v3220
    %v4163 = vunpack.c.l.b16 %v3221
    %v4164 = vunpack.c.h.b16 %v3221
    %v4165 = vunpack.c.l.b16 %v3222
    %v4166 = vunpack.c.l.b16 %v3223
    %v4167 = vunpack.c.h.b16 %v3223
    %v4168 = vunpack.c.l.b16 %v3224
    %v4169 = vunpack.c.h.b16 %v3224
    %v4170 = vunpack.c.l.b16 %v3225
    %v4171 = vunpack.c.h.b16 %v3225
    %v4172 = vunpack.c.l.b16 %v3226
    %v4173 = vunpack.c.l.b16 %v3227
    %v4174 = vunpack.c.h.b16 %v3227
    %v4175 = vunpack.c.l.b16 %v3228
    %v4176 = vunpack.c.h.b16 %v3228
    %v4177 = vunpack.c.l.b16 %v3229
    %v4178 = vunpack.c.h.b16 %v3229
    %v4179 = vunpack.c.l.b16 %v3230
    %v4180 = vunpack.c.l.b16 %v3231
    %v4181 = vunpack.c.h.b16 %v3231
    %v4182 = vunpack.c.l.b16 %v3232
    %v4183 = vunpack.c.h.b16 %v3232
    %v4184 = vunpack.c.l.b16 %v3233
    %v4185 = vunpack.c.h.b16 %v3233
    %v4186 = vunpack.c.l.b16 %v3234
    %v4187 = vunpack.c.l.b16 %v3235
    %v4188 = vunpack.c.h.b16 %v3235
    %v4189 = vunpack.c.l.b16 %v3236
    %v4190 = vunpack.c.h.b16 %v3236
    %v4191 = vunpack.c.l.b16 %v3237
    %v4192 = vunpack.c.h.b16 %v3237
    %v4193 = vunpack.c.l.b16 %v3238
    %v4194 = vunpack.c.l.b16 %v3239
    %v4195 = vunpack.c.h.b16 %v3239
    %v4196 = vunpack.c.l.b16 %v3240
    %v4197 = vunpack.c.h.b16 %v3240
    %v4198 = vunpack.c.l.b16 %v3241
    %v4199 = vunpack.c.h.b16 %v3241
    %v4200 = vunpack.c.l.b16 %v3242
    %v4201 = vunpack.c.l.b16 %v3243
    %v4202 = vunpack.c.h.b16 %v3243
    %v4203 = vunpack.c.l.b16 %v3244
    %v4204 = vunpack.c.h.b16 %v3244
    %v4205 = vunpack.c.l.b16 %v3245
    %v4206 = vunpack.c.h.b16 %v3245
    %v4207 = vunpack.c.l.b16 %v3246
    %v4208 = vunpack.c.l.b16 %v3247
    %v4209 = vunpack.c.h.b16 %v3247
    %v4210 = vunpack.c.l.b16 %v3248
    %v4211 = vunpack.c.h.b16 %v3248
    %v4212 = vunpack.c.l.b16 %v3249
    %v4213 = vunpack.c.h.b16 %v3249
    %v4214 = vunpack.c.l.b16 %v3250
    %v4215 = vunpack.c.l.b16 %v3251
    %v4216 = vunpack.c.h.b16 %v3251
    %v4217 = vunpack.c.l.b16 %v3252
    %v4218 = vunpack.c.h.b16 %v3252
    %v4219 = vunpack.c.l.b16 %v3253
    %v4220 = vunpack.c.h.b16 %v3253
    %v4221 = vunpack.c.l.b16 %v3254
    %v4222 = vunpack.c.l.b16 %v3255
    %v4223 = vunpack.c.h.b16 %v3255
    %v4224 = vunpack.c.l.b16 %v3256
    %v4225 = vunpack.c.h.b16 %v3256
    %v4226 = vunpack.c.l.b16 %v3257
    %v4227 = vunpack.c.h.b16 %v3257
    %v4228 = vunpack.c.l.b16 %v3258
    %v4229 = vunpack.c.l.b16 %v3259
    %v4230 = vunpack.c.h.b16 %v3259
    %v4231 = vunpack.c.l.b16 %v3260
    %v4232 = vunpack.c.h.b16 %v3260
    %v4233 = vunpack.c.l.b16 %v3261
    %v4234 = vunpack.c.h.b16 %v3261
    %v4235 = vunpack.c.l.b16 %v3262
    %v4236 = vunpack.c.l.b16 %v3263
    %v4237 = vunpack.c.h.b16 %v3263
    %v4238 = vunpack.c.l.b16 %v3264
    %v4239 = vunpack.c.h.b16 %v3264
    %v4240 = vunpack.c.l.b16 %v3265
    %v4241 = vunpack.c.h.b16 %v3265
    %v4242 = vunpack.c.l.b16 %v3266
    %v4243 = vunpack.c.l.b16 %v3267
    %v4244 = vunpack.c.h.b16 %v3267
    %v4245 = vunpack.c.l.b16 %v3268
    %v4246 = vunpack.c.h.b16 %v3268
    %v4247 = vunpack.c.l.b16 %v3269
    %v4248 = vunpack.c.h.b16 %v3269
    %v4249 = vunpack.c.l.b16 %v3270
    %v4250 = vunpack.c.l.b16 %v3271
    %v4251 = vunpack.c.h.b16 %v3271
    %v4252 = vunpack.c.l.b16 %v3272
    %v4253 = vunpack.c.h.b16 %v3272
    %v4254 = vunpack.c.l.b16 %v3273
    %v4255 = vunpack.c.h.b16 %v3273
    %v4256 = vunpack.c.l.b16 %v3274
    %v4257 = vunpack.c.l.b16 %v3275
    %v4258 = vunpack.c.h.b16 %v3275
    %v4259 = vunpack.c.l.b16 %v3276
    %v4260 = vunpack.c.h.b16 %v3276
    %v4261 = vunpack.c.l.b16 %v3277
    %v4262 = vunpack.c.h.b16 %v3277
    %v4263 = vunpack.c.l.b16 %v3278
    %v4264 = vunpack.c.l.b16 %v3279
    %v4265 = vunpack.c.h.b16 %v3279
    %v4266 = vunpack.c.l.b16 %v3280
    %v4267 = vunpack.c.h.b16 %v3280
    %v4268 = vunpack.c.l.b16 %v3281
    %v4269 = vunpack.c.h.b16 %v3281
    %v4270 = vunpack.c.l.b16 %v3282
    %v4271 = vunpack.c.l.b16 %v3283
    %v4272 = vunpack.c.h.b16 %v3283
    %v4273 = vunpack.c.l.b16 %v3284
    %v4274 = vunpack.c.h.b16 %v3284
    %v4275 = vunpack.c.l.b16 %v3285
    %v4276 = vunpack.c.h.b16 %v3285
    %v4277 = vunpack.c.l.b16 %v3286
    %v4278 = vunpack.c.l.b16 %v3287
    %v4279 = vunpack.c.h.b16 %v3287
    %v4280 = vunpack.c.l.b16 %v3288
    %v4281 = vunpack.c.h.b16 %v3288
    %v4282 = vunpack.c.l.b16 %v3289
    %v4283 = vunpack.c.h.b16 %v3289
    %v4284 = vunpack.c.l.b16 %v3290
    %v4285 = vunpack.c.l.b16 %v3291
    %v4286 = vunpack.c.h.b16 %v3291
    %v4287 = vunpack.c.l.b16 %v3292
    %v4288 = vunpack.c.h.b16 %v3292
    %v4289 = vunpack.c.l.b16 %v3293
    %v4290 = vunpack.c.h.b16 %v3293
    %v4291 = vunpack.c.l.b16 %v3294
    %v4292 = vunpack.c.l.b16 %v3295
    %v4293 = vunpack.c.h.b16 %v3295
    %v4294 = vunpack.c.l.b16 %v3296
    %v4295 = vunpack.c.h.b16 %v3296
    %v4296 = vunpack.c.l.b16 %v3297
    %v4297 = vunpack.c.h.b16 %v3297
    %v4298 = vunpack.c.l.b16 %v3298
    %v4299 = vunpack.c.l.b16 %v3299
    %v4300 = vunpack.c.h.b16 %v3299
    %v4301 = vunpack.c.l.b16 %v3300
    %v4302 = vunpack.c.h.b16 %v3300
    %v4303 = vunpack.c.l.b16 %v3301
    %v4304 = vunpack.c.h.b16 %v3301
    %v4305 = vunpack.c.l.b16 %v3302
    %v4306 = vunpack.c.l.b16 %v3303
    %v4307 = vunpack.c.h.b16 %v3303
    %v4308 = vunpack.c.l.b16 %v3304
    %v4309 = vunpack.c.h.b16 %v3304
    %v4310 = vunpack.c.l.b16 %v3305
    %v4311 = vunpack.c.h.b16 %v3305
    %v4312 = vunpack.c.l.b16 %v3306
    %v4313 = vunpack.c.l.b16 %v3307
    %v4314 = vunpack.c.h.b16 %v3307
    %v4315 = vunpack.c.l.b16 %v3308
    %v4316 = vunpack.c.h.b16 %v3308
    %v4317 = vunpack.c.l.b16 %v3309
    %v4318 = vunpack.c.h.b16 %v3309
    %v4319 = vunpack.c.l.b16 %v3310
    %v4320 = vunpack.c.l.b16 %v3311
    %v4321 = vunpack.c.h.b16 %v3311
    %v4322 = vunpack.c.l.b16 %v3312
    %v4323 = vunpack.c.h.b16 %v3312
    %v4324 = vunpack.c.l.b16 %v3313
    %v4325 = vunpack.c.h.b16 %v3313
    %v4326 = vunpack.c.l.b16 %v3314
    %v4327 = vunpack.c.l.b16 %v3315
    %v4328 = vunpack.c.h.b16 %v3315
    %v4329 = vunpack.c.l.b16 %v3316
    %v4330 = vunpack.c.h.b16 %v3316
    %v4331 = vunpack.c.l.b16 %v3317
    %v4332 = vunpack.c.h.b16 %v3317
    %v4333 = vunpack.c.l.b16 %v3318
    %v4334 = vunpack.c.l.b16 %v3319
    %v4335 = vunpack.c.h.b16 %v3319
    %v4336 = vunpack.c.l.b16 %v3320
    %v4337 = vunpack.c.h.b16 %v3320
    %v4338 = vunpack.c.l.b16 %v3321
    %v4339 = vunpack.c.h.b16 %v3321
    %v4340 = vunpack.c.l.b16 %v3322
    %v4341 = vunpack.c.l.b16 %v3323
    %v4342 = vunpack.c.h.b16 %v3323
    %v4343 = vunpack.c.l.b16 %v3324
    %v4344 = vunpack.c.h.b16 %v3324
    %v4345 = vunpack.c.l.b16 %v3325
    %v4346 = vunpack.c.h.b16 %v3325
    %v4347 = vunpack.c.l.b16 %v3326
    %v4348 = vunpack.c.l.b16 %v3327
    %v4349 = vunpack.c.h.b16 %v3327
    %v4350 = vunpack.c.l.b16 %v3328
    %v4351 = vunpack.c.h.b16 %v3328
    %v4352 = vunpack.c.l.b16 %v3329
    %v4353 = vunpack.c.h.b16 %v3329
    %v4354 = vunpack.c.l.b16 %v3330
    %v4355 = vunpack.c.l.b16 %v3331
    %v4356 = vunpack.c.h.b16 %v3331
    %v4357 = vunpack.c.l.b16 %v3332
    %v4358 = vunpack.c.h.b16 %v3332
    %v4359 = vunpack.c.l.b16 %v3333
    %v4360 = vunpack.c.h.b16 %v3333
    %v4361 = vunpack.c.l.b16 %v3334
    %v4362 = vunpack.c.l.b16 %v3335
    %v4363 = vunpack.c.h.b16 %v3335
    %v4364 = vunpack.c.l.b16 %v3336
    %v4365 = vunpack.c.h.b16 %v3336
    %v4366 = vunpack.c.l.b16 %v3337
    %v4367 = vunpack.c.h.b16 %v3337
    %v4368 = vunpack.c.l.b16 %v3338
    %v4369 = vunpack.c.l.b16 %v3339
    %v4370 = vunpack.c.h.b16 %v3339
    %v4371 = vunpack.c.l.b16 %v3340
    %v4372 = vunpack.c.h.b16 %v3340
    %v4373 = vunpack.c.l.b16 %v3341
    %v4374 = vunpack.c.h.b16 %v3341
    %v4375 = vunpack.c.l.b16 %v3342
    %v4376 = vunpack.c.l.b16 %v3343
    %v4377 = vunpack.c.h.b16 %v3343
    %v4378 = vunpack.c.l.b16 %v3344
    %v4379 = vunpack.c.h.b16 %v3344
    %v4380 = vunpack.c.l.b16 %v3345
    %v4381 = vunpack.c.h.b16 %v3345
    %v4382 = vunpack.c.l.b16 %v3346
    %v4383 = vunpack.c.l.b16 %v3347
    %v4384 = vunpack.c.h.b16 %v3347
    %v4385 = vunpack.c.l.b16 %v3348
    %v4386 = vunpack.c.h.b16 %v3348
    %v4387 = vunpack.c.l.b16 %v3349
    %v4388 = vunpack.c.h.b16 %v3349
    %v4389 = vunpack.c.l.b16 %v3350
    %v4390 = vunpack.c.l.b16 %v3351
    %v4391 = vunpack.c.h.b16 %v3351
    %v4392 = vunpack.c.l.b16 %v3352
    %v4393 = vunpack.c.h.b16 %v3352
    %v4394 = vunpack.c.l.b16 %v3353
    %v4395 = vunpack.c.h.b16 %v3353
    %v4396 = vunpack.c.l.b16 %v3354
    %v4397 = vunpack.c.l.b16 %v3355
    %v4398 = vunpack.c.h.b16 %v3355
    %v4399 = vunpack.c.l.b16 %v3356
    %v4400 = vunpack.c.h.b16 %v3356
    %v4401 = vunpack.c.l.b16 %v3357
    %v4402 = vunpack.c.h.b16 %v3357
    %v4403 = vunpack.c.l.b16 %v3358
    %v4404 = vunpack.c.l.b16 %v3359
    %v4405 = vunpack.c.h.b16 %v3359
    %v4406 = vunpack.c.l.b16 %v3360
    %v4407 = vunpack.c.h.b16 %v3360
    %v4408 = vunpack.c.l.b16 %v3361
    %v4409 = vunpack.c.h.b16 %v3361
    %v4410 = vunpack.c.l.b16 %v3362
    %v4411 = vunpack.c.l.b16 %v3363
    %v4412 = vunpack.c.h.b16 %v3363
    %v4413 = vunpack.c.l.b16 %v3364
    %v4414 = vunpack.c.h.b16 %v3364
    %v4415 = vunpack.c.l.b16 %v3365
    %v4416 = vunpack.c.h.b16 %v3365
    %v4417 = vunpack.c.l.b16 %v3366
    %v4418 = vunpack.c.l.b16 %v3367
    %v4419 = vunpack.c.h.b16 %v3367
    %v4420 = vunpack.c.l.b16 %v3368
    %v4421 = vunpack.c.h.b16 %v3368
    %v4422 = vunpack.c.l.b16 %v3369
    %v4423 = vunpack.c.h.b16 %v3369
    %v4424 = vunpack.c.l.b16 %v3370
    %v4425 = vunpack.c.l.b16 %v3371
    %v4426 = vunpack.c.h.b16 %v3371
    %v4427 = vunpack.c.l.b16 %v3372
    %v4428 = vunpack.c.h.b16 %v3372
    %v4429 = vunpack.c.l.b16 %v3373
    %v4430 = vunpack.c.h.b16 %v3373
    %v4431 = vunpack.c.l.b16 %v3374
    %v4432 = vunpack.c.l.b16 %v3375
    %v4433 = vunpack.c.h.b16 %v3375
    %v4434 = vunpack.c.l.b16 %v3376
    %v4435 = vunpack.c.h.b16 %v3376
    %v4436 = vunpack.c.l.b16 %v3377
    %v4437 = vunpack.c.h.b16 %v3377
    %v4438 = vunpack.c.l.b16 %v3378
    %v4439 = vunpack.c.l.b16 %v3379
    %v4440 = vunpack.c.h.b16 %v3379
    %v4441 = vunpack.c.l.b16 %v3380
    %v4442 = vunpack.c.h.b16 %v3380
    %v4443 = vunpack.c.l.b16 %v3381
    %v4444 = vunpack.c.h.b16 %v3381
    %v4445 = vunpack.c.l.b16 %v3382
    %v4446 = vunpack.c.l.b16 %v3383
    %v4447 = vunpack.c.h.b16 %v3383
    %v4448 = vunpack.c.l.b16 %v3384
    %v4449 = vunpack.c.h.b16 %v3384
    %v4450 = vunpack.c.l.b16 %v3385
    %v4451 = vunpack.c.h.b16 %v3385
    %v4452 = vunpack.c.l.b16 %v3386
    %v4453 = vunpack.c.l.b16 %v3387
    %v4454 = vunpack.c.h.b16 %v3387
    %v4455 = vunpack.c.l.b16 %v3388
    %v4456 = vunpack.c.h.b16 %v3388
    %v4457 = vunpack.c.l.b16 %v3389
    %v4458 = vunpack.c.h.b16 %v3389
    %v4459 = vunpack.c.l.b16 %v3390
    %v4460 = vunpack.c.l.b16 %v3391
    %v4461 = vunpack.c.h.b16 %v3391
    %v4462 = vunpack.c.l.b16 %v3392
    %v4463 = vunpack.c.h.b16 %v3392
    %v4464 = vunpack.c.l.b16 %v3393
    %v4465 = vunpack.c.h.b16 %v3393
    %v4466 = vunpack.c.l.b16 %v3394
    %v4467 = vunpack.c.l.b16 %v3395
    %v4468 = vunpack.c.h.b16 %v3395
    %v4469 = vunpack.c.l.b16 %v3396
    %v4470 = vunpack.c.h.b16 %v3396
    %v4471 = vunpack.c.l.b16 %v3397
    %v4472 = vunpack.c.h.b16 %v3397
    %v4473 = vunpack.c.l.b16 %v3398
    %v4474 = vunpack.c.l.b16 %v3399
    %v4475 = vunpack.c.h.b16 %v3399
    %v4476 = vunpack.c.l.b16 %v3400
    %v4477 = vunpack.c.h.b16 %v3400
    %v4478 = vunpack.c.l.b16 %v3401
    %v4479 = vunpack.c.h.b16 %v3401
    %v4480 = vunpack.c.l.b16 %v3402
    %v4481 = vpack.c.b16 %v3802, %v3795
    %v4482 = vpack.c.b16 %v3803, %v3796
    %v4483 = vpack.c.b16 %v3804, %v3797
    %v4484 = vpack.c.b16 %v3805, %v3798
    %v4485 = vpack.c.b16 %v3806, %v3799
    %v4486 = vpack.c.b16 %v3807, %v3800
    %v4487 = vpack.c.b16 %v3808, %v3801
    %v4488 = vpack.c.b16 %v3816, %v3809
    %v4489 = vpack.c.b16 %v3817, %v3810
    %v4490 = vpack.c.b16 %v3818, %v3811
    %v4491 = vpack.c.b16 %v3819, %v3812
    %v4492 = vpack.c.b16 %v3820, %v3813
    %v4493 = vpack.c.b16 %v3821, %v3814
    %v4494 = vpack.c.b16 %v3822, %v3815
    %v4495 = vpack.c.b16 %v3830, %v3823
    %v4496 = vpack.c.b16 %v3831, %v3824
    %v4497 = vpack.c.b16 %v3832, %v3825
    %v4498 = vpack.c.b16 %v3833, %v3826
    %v4499 = vpack.c.b16 %v3834, %v3827
    %v4500 = vpack.c.b16 %v3835, %v3828
    %v4501 = vpack.c.b16 %v3836, %v3829
    %v4502 = vpack.c.b16 %v3844, %v3837
    %v4503 = vpack.c.b16 %v3845, %v3838
    %v4504 = vpack.c.b16 %v3846, %v3839
    %v4505 = vpack.c.b16 %v3847, %v3840
    %v4506 = vpack.c.b16 %v3848, %v3841
    %v4507 = vpack.c.b16 %v3849, %v3842
    %v4508 = vpack.c.b16 %v3850, %v3843
    %v4509 = vpack.c.b16 %v3858, %v3851
    %v4510 = vpack.c.b16 %v3859, %v3852
    %v4511 = vpack.c.b16 %v3860, %v3853
    %v4512 = vpack.c.b16 %v3861, %v3854
    %v4513 = vpack.c.b16 %v3862, %v3855
    %v4514 = vpack.c.b16 %v3863, %v3856
    %v4515 = vpack.c.b16 %v3864, %v3857
    %v4516 = vpack.c.b16 %v3872, %v3865
    %v4517 = vpack.c.b16 %v3873, %v3866
    %v4518 = vpack.c.b16 %v3874, %v3867
    %v4519 = vpack.c.b16 %v3875, %v3868
    %v4520 = vpack.c.b16 %v3876, %v3869
    %v4521 = vpack.c.b16 %v3877, %v3870
    %v4522 = vpack.c.b16 %v3878, %v3871
    %v4523 = vpack.c.b16 %v3886, %v3879
    %v4524 = vpack.c.b16 %v3887, %v3880
    %v4525 = vpack.c.b16 %v3888, %v3881
    %v4526 = vpack.c.b16 %v3889, %v3882
    %v4527 = vpack.c.b16 %v3890, %v3883
    %v4528 = vpack.c.b16 %v3891, %v3884
    %v4529 = vpack.c.b16 %v3892, %v3885
    %v4530 = vpack.c.b16 %v3900, %v3893
    %v4531 = vpack.c.b16 %v3901, %v3894
    %v4532 = vpack.c.b16 %v3902, %v3895
    %v4533 = vpack.c.b16 %v3903, %v3896
    %v4534 = vpack.c.b16 %v3904, %v3897
    %v4535 = vpack.c.b16 %v3905, %v3898
    %v4536 = vpack.c.b16 %v3906, %v3899
    %v4537 = vpack.c.b16 %v3914, %v3907
    %v4538 = vpack.c.b16 %v3915, %v3908
    %v4539 = vpack.c.b16 %v3916, %v3909
    %v4540 = vpack.c.b16 %v3917, %v3910
    %v4541 = vpack.c.b16 %v3918, %v3911
    %v4542 = vpack.c.b16 %v3919, %v3912
    %v4543 = vpack.c.b16 %v3920, %v3913
    %v4544 = vpack.c.b16 %v3928, %v3921
    %v4545 = vpack.c.b16 %v3929, %v3922
    %v4546 = vpack.c.b16 %v3930, %v3923
    %v4547 = vpack.c.b16 %v3931, %v3924
    %v4548 = vpack.c.b16 %v3932, %v3925
    %v4549 = vpack.c.b16 %v3933, %v3926
    %v4550 = vpack.c.b16 %v3934, %v3927
    %v4551 = vpack.c.b16 %v3942, %v3935
    %v4552 = vpack.c.b16 %v3943, %v3936
    %v4553 = vpack.c.b16 %v3944, %v3937
    %v4554 = vpack.c.b16 %v3945, %v3938
    %v4555 = vpack.c.b16 %v3946, %v3939
    %v4556 = vpack.c.b16 %v3947, %v3940
    %v4557 = vpack.c.b16 %v3948, %v3941
    %v4558 = vpack.c.b16 %v3956, %v3949
    %v4559 = vpack.c.b16 %v3957, %v3950
    %v4560 = vpack.c.b16 %v3958, %v3951
    %v4561 = vpack.c.b16 %v3959, %v3952
    %v4562 = vpack.c.b16 %v3960, %v3953
    %v4563 = vpack.c.b16 %v3961, %v3954
    %v4564 = vpack.c.b16 %v3962, %v3955
    %v4565 = vpack.c.b16 %v3970, %v3963
    %v4566 = vpack.c.b16 %v3971, %v3964
    %v4567 = vpack.c.b16 %v3972, %v3965
    %v4568 = vpack.c.b16 %v3973, %v3966
    %v4569 = vpack.c.b16 %v3974, %v3967
    %v4570 = vpack.c.b16 %v3975, %v3968
    %v4571 = vpack.c.b16 %v3976, %v3969
    %v4572 = vpack.c.b16 %v3984, %v3977
    %v4573 = vpack.c.b16 %v3985, %v3978
    %v4574 = vpack.c.b16 %v3986, %v3979
    %v4575 = vpack.c.b16 %v3987, %v3980
    %v4576 = vpack.c.b16 %v3988, %v3981
    %v4577 = vpack.c.b16 %v3989, %v3982
    %v4578 = vpack.c.b16 %v3990, %v3983
    %v4579 = vpack.c.b16 %v3998, %v3991
    %v4580 = vpack.c.b16 %v3999, %v3992
    %v4581 = vpack.c.b16 %v4000, %v3993
    %v4582 = vpack.c.b16 %v4001, %v3994
    %v4583 = vpack.c.b16 %v4002, %v3995
    %v4584 = vpack.c.b16 %v4003, %v3996
    %v4585 = vpack.c.b16 %v4004, %v3997
    %v4586 = vpack.c.b16 %v4012, %v4005
    %v4587 = vpack.c.b16 %v4013, %v4006
    %v4588 = vpack.c.b16 %v4014, %v4007
    %v4589 = vpack.c.b16 %v4015, %v4008
    %v4590 = vpack.c.b16 %v4016, %v4009
    %v4591 = vpack.c.b16 %v4017, %v4010
    %v4592 = vpack.c.b16 %v4018, %v4011
    %v4593 = vpack.c.b16 %v4026, %v4019
    %v4594 = vpack.c.b16 %v4027, %v4020
    %v4595 = vpack.c.b16 %v4028, %v4021
    %v4596 = vpack.c.b16 %v4029, %v4022
    %v4597 = vpack.c.b16 %v4030, %v4023
    %v4598 = vpack.c.b16 %v4031, %v4024
    %v4599 = vpack.c.b16 %v4032, %v4025
    %v4600 = vpack.c.b16 %v4040, %v4033
    %v4601 = vpack.c.b16 %v4041, %v4034
    %v4602 = vpack.c.b16 %v4042, %v4035
    %v4603 = vpack.c.b16 %v4043, %v4036
    %v4604 = vpack.c.b16 %v4044, %v4037
    %v4605 = vpack.c.b16 %v4045, %v4038
    %v4606 = vpack.c.b16 %v4046, %v4039
    %v4607 = vpack.c.b16 %v4054, %v4047
    %v4608 = vpack.c.b16 %v4055, %v4048
    %v4609 = vpack.c.b16 %v4056, %v4049
    %v4610 = vpack.c.b16 %v4057, %v4050
    %v4611 = vpack.c.b16 %v4058, %v4051
    %v4612 = vpack.c.b16 %v4059, %v4052
    %v4613 = vpack.c.b16 %v4060, %v4053
    %v4614 = vpack.c.b16 %v4068, %v4061
    %v4615 = vpack.c.b16 %v4069, %v4062
    %v4616 = vpack.c.b16 %v4070, %v4063
    %v4617 = vpack.c.b16 %v4071, %v4064
    %v4618 = vpack.c.b16 %v4072, %v4065
    %v4619 = vpack.c.b16 %v4073, %v4066
    %v4620 = vpack.c.b16 %v4074, %v4067
    %v4621 = vpack.c.b16 %v4082, %v4075
    %v4622 = vpack.c.b16 %v4083, %v4076
    %v4623 = vpack.c.b16 %v4084, %v4077
    %v4624 = vpack.c.b16 %v4085, %v4078
    %v4625 = vpack.c.b16 %v4086, %v4079
    %v4626 = vpack.c.b16 %v4087, %v4080
    %v4627 = vpack.c.b16 %v4088, %v4081
    %v4628 = vpack.c.b16 %v4096, %v4089
    %v4629 = vpack.c.b16 %v4097, %v4090
    %v4630 = vpack.c.b16 %v4098, %v4091
    %v4631 = vpack.c.b16 %v4099, %v4092
    %v4632 = vpack.c.b16 %v4100, %v4093
    %v4633 = vpack.c.b16 %v4101, %v4094
    %v4634 = vpack.c.b16 %v4102, %v4095
    %v4635 = vpack.c.b16 %v4110, %v4103
    %v4636 = vpack.c.b16 %v4111, %v4104
    %v4637 = vpack.c.b16 %v4112, %v4105
    %v4638 = vpack.c.b16 %v4113, %v4106
    %v4639 = vpack.c.b16 %v4114, %v4107
    %v4640 = vpack.c.b16 %v4115, %v4108
    %v4641 = vpack.c.b16 %v4116, %v4109
    %v4642 = vpack.c.b16 %v4124, %v4117
    %v4643 = vpack.c.b16 %v4125, %v4118
    %v4644 = vpack.c.b16 %v4126, %v4119
    %v4645 = vpack.c.b16 %v4127, %v4120
    %v4646 = vpack.c.b16 %v4128, %v4121
    %v4647 = vpack.c.b16 %v4129, %v4122
    %v4648 = vpack.c.b16 %v4130, %v4123
    %v4649 = vpack.c.b16 %v4138, %v4131
    %v4650 = vpack.c.b16 %v4139, %v4132
    %v4651 = vpack.c.b16 %v4140, %v4133
    %v4652 = vpack.c.b16 %v4141, %v4134
    %v4653 = vpack.c.b16 %v4142, %v4135
    %v4654 = vpack.c.b16 %v4143, %v4136
    %v4655 = vpack.c.b16 %v4144, %v4137
    %v4656 = vpack.c.b16 %v4152, %v4145
    %v4657 = vpack.c.b16 %v4153, %v4146
    %v4658 = vpack.c.b16 %v4154, %v4147
    %v4659 = vpack.c.b16 %v4155, %v4148
    %v4660 = vpack.c.b16 %v4156, %v4149
    %v4661 = vpack.c.b16 %v4157, %v4150
    %v4662 = vpack.c.b16 %v4158, %v4151
    %v4663 = vpack.c.b16 %v4166, %v4159
    %v4664 = vpack.c.b16 %v4167, %v4160
    %v4665 = vpack.c.b16 %v4168, %v4161
    %v4666 = vpack.c.b16 %v4169, %v4162
    %v4667 = vpack.c.b16 %v4170, %v4163
    %v4668 = vpack.c.b16 %v4171, %v4164
    %v4669 = vpack.c.b16 %v4172, %v4165
    %v4670 = vpack.c.b16 %v4180, %v4173
    %v4671 = vpack.c.b16 %v4181, %v4174
    %v4672 = vpack.c.b16 %v4182, %v4175
    %v4673 = vpack.c.b16 %v4183, %v4176
    %v4674 = vpack.c.b16 %v4184, %v4177
    %v4675 = vpack.c.b16 %v4185, %v4178
    %v4676 = vpack.c.b16 %v4186, %v4179
    %v4677 = vpack.c.b16 %v4194, %v4187
    %v4678 = vpack.c.b16 %v4195, %v4188
    %v4679 = vpack.c.b16 %v4196, %v4189
    %v4680 = vpack.c.b16 %v4197, %v4190
    %v4681 = vpack.c.b16 %v4198, %v4191
    %v4682 = vpack.c.b16 %v4199, %v4192
    %v4683 = vpack.c.b16 %v4200, %v4193
    %v4684 = vpack.c.b16 %v4208, %v4201
    %v4685 = vpack.c.b16 %v4209, %v4202
    %v4686 = vpack.c.b16 %v4210, %v4203
    %v4687 = vpack.c.b16 %v4211, %v4204
    %v4688 = vpack.c.b16 %v4212, %v4205
    %v4689 = vpack.c.b16 %v4213, %v4206
    %v4690 = vpack.c.b16 %v4214, %v4207
    %v4691 = vpack.c.b16 %v4222, %v4215
    %v4692 = vpack.c.b16 %v4223, %v4216
    %v4693 = vpack.c.b16 %v4224, %v4217
    %v4694 = vpack.c.b16 %v4225, %v4218
    %v4695 = vpack.c.b16 %v4226, %v4219
    %v4696 = vpack.c.b16 %v4227, %v4220
    %v4697 = vpack.c.b16 %v4228, %v4221
    %v4698 = vpack.c.b16 %v4236, %v4229
    %v4699 = vpack.c.b16 %v4237, %v4230
    %v4700 = vpack.c.b16 %v4238, %v4231
    %v4701 = vpack.c.b16 %v4239, %v4232
    %v4702 = vpack.c.b16 %v4240, %v4233
    %v4703 = vpack.c.b16 %v4241, %v4234
    %v4704 = vpack.c.b16 %v4242, %v4235
    %v4705 = vpack.c.b16 %v4250, %v4243
    %v4706 = vpack.c.b16 %v4251, %v4244
    %v4707 = vpack.c.b16 %v4252, %v4245
    %v4708 = vpack.c.b16 %v4253, %v4246
    %v4709 = vpack.c.b16 %v4254, %v4247
    %v4710 = vpack.c.b16 %v4255, %v4248
    %v4711 = vpack.c.b16 %v4256, %v4249
    %v4712 = vpack.c.b16 %v4264, %v4257
    %v4713 = vpack.c.b16 %v4265, %v4258
    %v4714 = vpack.c.b16 %v4266, %v4259
    %v4715 = vpack.c.b16 %v4267, %v4260
    %v4716 = vpack.c.b16 %v4268, %v4261
    %v4717 = vpack.c.b16 %v4269, %v4262
    %v4718 = vpack.c.b16 %v4270, %v4263
    %v4719 = vpack.c.b16 %v4278, %v4271
    %v4720 = vpack.c.b16 %v4279, %v4272
    %v4721 = vpack.c.b16 %v4280, %v4273
    %v4722 = vpack.c.b16 %v4281, %v4274
    %v4723 = vpack.c.b16 %v4282, %v4275
    %v4724 = vpack.c.b16 %v4283, %v4276
    %v4725 = vpack.c.b16 %v4284, %v4277
    %v4726 = vpack.c.b16 %v4292, %v4285
    %v4727 = vpack.c.b16 %v4293, %v4286
    %v4728 = vpack.c.b16 %v4294, %v4287
    %v4729 = vpack.c.b16 %v4295, %v4288
    %v4730 = vpack.c.b16 %v4296, %v4289
    %v4731 = vpack.c.b16 %v4297, %v4290
    %v4732 = vpack.c.b16 %v4298, %v4291
    %v4733 = vpack.c.b16 %v4306, %v4299
    %v4734 = vpack.c.b16 %v4307, %v4300
    %v4735 = vpack.c.b16 %v4308, %v4301
    %v4736 = vpack.c.b16 %v4309, %v4302
    %v4737 = vpack.c.b16 %v4310, %v4303
    %v4738 = vpack.c.b16 %v4311, %v4304
    %v4739 = vpack.c.b16 %v4312, %v4305
    %v4740 = vpack.c.b16 %v4320, %v4313
    %v4741 = vpack.c.b16 %v4321, %v4314
    %v4742 = vpack.c.b16 %v4322, %v4315
    %v4743 = vpack.c.b16 %v4323, %v4316
    %v4744 = vpack.c.b16 %v4324, %v4317
    %v4745 = vpack.c.b16 %v4325, %v4318
    %v4746 = vpack.c.b16 %v4326, %v4319
    %v4747 = vpack.c.b16 %v4334, %v4327
    %v4748 = vpack.c.b16 %v4335, %v4328
    %v4749 = vpack.c.b16 %v4336, %v4329
    %v4750 = vpack.c.b16 %v4337, %v4330
    %v4751 = vpack.c.b16 %v4338, %v4331
    %v4752 = vpack.c.b16 %v4339, %v4332
    %v4753 = vpack.c.b16 %v4340, %v4333
    %v4754 = vpack.c.b16 %v4348, %v4341
    %v4755 = vpack.c.b16 %v4349, %v4342
    %v4756 = vpack.c.b16 %v4350, %v4343
    %v4757 = vpack.c.b16 %v4351, %v4344
    %v4758 = vpack.c.b16 %v4352, %v4345
    %v4759 = vpack.c.b16 %v4353, %v4346
    %v4760 = vpack.c.b16 %v4354, %v4347
    %v4761 = vpack.c.b16 %v4362, %v4355
    %v4762 = vpack.c.b16 %v4363, %v4356
    %v4763 = vpack.c.b16 %v4364, %v4357
    %v4764 = vpack.c.b16 %v4365, %v4358
    %v4765 = vpack.c.b16 %v4366, %v4359
    %v4766 = vpack.c.b16 %v4367, %v4360
    %v4767 = vpack.c.b16 %v4368, %v4361
    %v4768 = vpack.c.b16 %v4376, %v4369
    %v4769 = vpack.c.b16 %v4377, %v4370
    %v4770 = vpack.c.b16 %v4378, %v4371
    %v4771 = vpack.c.b16 %v4379, %v4372
    %v4772 = vpack.c.b16 %v4380, %v4373
    %v4773 = vpack.c.b16 %v4381, %v4374
    %v4774 = vpack.c.b16 %v4382, %v4375
    %v4775 = vpack.c.b16 %v4390, %v4383
    %v4776 = vpack.c.b16 %v4391, %v4384
    %v4777 = vpack.c.b16 %v4392, %v4385
    %v4778 = vpack.c.b16 %v4393, %v4386
    %v4779 = vpack.c.b16 %v4394, %v4387
    %v4780 = vpack.c.b16 %v4395, %v4388
    %v4781 = vpack.c.b16 %v4396, %v4389
    %v4782 = vpack.c.b16 %v4404, %v4397
    %v4783 = vpack.c.b16 %v4405, %v4398
    %v4784 = vpack.c.b16 %v4406, %v4399
    %v4785 = vpack.c.b16 %v4407, %v4400
    %v4786 = vpack.c.b16 %v4408, %v4401
    %v4787 = vpack.c.b16 %v4409, %v4402
    %v4788 = vpack.c.b16 %v4410, %v4403
    %v4789 = vpack.c.b16 %v4418, %v4411
    %v4790 = vpack.c.b16 %v4419, %v4412
    %v4791 = vpack.c.b16 %v4420, %v4413
    %v4792 = vpack.c.b16 %v4421, %v4414
    %v4793 = vpack.c.b16 %v4422, %v4415
    %v4794 = vpack.c.b16 %v4423, %v4416
    %v4795 = vpack.c.b16 %v4424, %v4417
    %v4796 = vpack.c.b16 %v4432, %v4425
    %v4797 = vpack.c.b16 %v4433, %v4426
    %v4798 = vpack.c.b16 %v4434, %v4427
    %v4799 = vpack.c.b16 %v4435, %v4428
    %v4800 = vpack.c.b16 %v4436, %v4429
    %v4801 = vpack.c.b16 %v4437, %v4430
    %v4802 = vpack.c.b16 %v4438, %v4431
    %v4803 = vpack.c.b16 %v4446, %v4439
    %v4804 = vpack.c.b16 %v4447, %v4440
    %v4805 = vpack.c.b16 %v4448, %v4441
    %v4806 = vpack.c.b16 %v4449, %v4442
    %v4807 = vpack.c.b16 %v4450, %v4443
    %v4808 = vpack.c.b16 %v4451, %v4444
    %v4809 = vpack.c.b16 %v4452, %v4445
    %v4810 = vpack.c.b16 %v4460, %v4453
    %v4811 = vpack.c.b16 %v4461, %v4454
    %v4812 = vpack.c.b16 %v4462, %v4455
    %v4813 = vpack.c.b16 %v4463, %v4456
    %v4814 = vpack.c.b16 %v4464, %v4457
    %v4815 = vpack.c.b16 %v4465, %v4458
    %v4816 = vpack.c.b16 %v4466, %v4459
    %v4817 = vpack.c.b16 %v4474, %v4467
    %v4818 = vpack.c.b16 %v4475, %v4468
    %v4819 = vpack.c.b16 %v4476, %v4469
    %v4820 = vpack.c.b16 %v4477, %v4470
    %v4821 = vpack.c.b16 %v4478, %v4471
    %v4822 = vpack.c.b16 %v4479, %v4472
    %v4823 = vpack.c.b16 %v4480, %v4473
    %5167 = vmatpush.bf16.msra.mxu0 %v4530
    %5168 = vmatpush.bf16.msra.mxu0 %v4523
    %5169 = vmatpush.bf16.msra.mxu0 %v4516
    %5170 = vmatpush.bf16.msra.mxu0 %v4509
    %5171 = vmatpush.bf16.msra.mxu0 %v4502
    %5172 = vmatpush.bf16.msra.mxu0 %v4495
    %5173 = vmatpush.bf16.msra.mxu0 %v4488
    %5174 = vmatpush.bf16.msra.mxu0 %v4481
    %5175 = vmatmul.bf16.gmra.mxu0 %v592
    %v5176 = vpop.f32.mrf.mxu0
    %v5177 = vadd.f32 0.0, %v5176
    %v5178 = vpop.f32.mrf.mxu0
    %5179 = vdwg.mxu0
    %5180 = vmatpush.bf16.msra.mxu0 %v4586
    %5181 = vmatpush.bf16.msra.mxu0 %v4579
    %5182 = vmatpush.bf16.msra.mxu0 %v4572
    %5183 = vmatpush.bf16.msra.mxu0 %v4565
    %5184 = vmatpush.bf16.msra.mxu0 %v4558
    %5185 = vmatpush.bf16.msra.mxu0 %v4551
    %5186 = vmatpush.bf16.msra.mxu0 %v4544
    %5187 = vmatpush.bf16.msra.mxu0 %v4537
    %5188 = vmatmul.bf16.gmra.mxu0 %v593
    %v5189 = vpop.f32.mrf.mxu0
    %v5190 = vadd.f32 %v5177, %v5189
    %v5191 = vpop.f32.mrf.mxu0
    %5192 = vdwg.mxu0
    %5193 = vmatpush.bf16.msra.mxu0 %v4642
    %5194 = vmatpush.bf16.msra.mxu0 %v4635
    %5195 = vmatpush.bf16.msra.mxu0 %v4628
    %5196 = vmatpush.bf16.msra.mxu0 %v4621
    %5197 = vmatpush.bf16.msra.mxu0 %v4614
    %5198 = vmatpush.bf16.msra.mxu0 %v4607
    %5199 = vmatpush.bf16.msra.mxu0 %v4600
    %5200 = vmatpush.bf16.msra.mxu0 %v4593
    %5201 = vmatmul.bf16.gmra.mxu0 %v594
    %v5202 = vpop.f32.mrf.mxu0
    %v5203 = vadd.f32 %v5190, %v5202
    %v5204 = vpop.f32.mrf.mxu0
    %5205 = vdwg.mxu0
    %5206 = vmatpush.bf16.msra.mxu0 %v4698
    %5207 = vmatpush.bf16.msra.mxu0 %v4691
    %5208 = vmatpush.bf16.msra.mxu0 %v4684
    %5209 = vmatpush.bf16.msra.mxu0 %v4677
    %5210 = vmatpush.bf16.msra.mxu0 %v4670
    %5211 = vmatpush.bf16.msra.mxu0 %v4663
    %5212 = vmatpush.bf16.msra.mxu0 %v4656
    %5213 = vmatpush.bf16.msra.mxu0 %v4649
    %5214 = vmatmul.bf16.gmra.mxu0 %v595
    %v5215 = vpop.f32.mrf.mxu0
    %v5216 = vadd.f32 %v5203, %v5215
    %v5217 = vpop.f32.mrf.mxu0
    %5218 = vdwg.mxu0
    %5219 = vmatpush.bf16.msra.mxu0 %v4754
    %5220 = vmatpush.bf16.msra.mxu0 %v4747
    %5221 = vmatpush.bf16.msra.mxu0 %v4740
    %5222 = vmatpush.bf16.msra.mxu0 %v4733
    %5223 = vmatpush.bf16.msra.mxu0 %v4726
    %5224 = vmatpush.bf16.msra.mxu0 %v4719
    %5225 = vmatpush.bf16.msra.mxu0 %v4712
    %5226 = vmatpush.bf16.msra.mxu0 %v4705
    %5227 = vmatmul.bf16.gmra.mxu0 %v596
    %v5228 = vpop.f32.mrf.mxu0
    %v5229 = vadd.f32 %v5216, %v5228
    %v5230 = vpop.f32.mrf.mxu0
    %5231 = vdwg.mxu0
    %5232 = vmatpush.bf16.msra.mxu0 %v4810
    %5233 = vmatpush.bf16.msra.mxu0 %v4803
    %5234 = vmatpush.bf16.msra.mxu0 %v4796
    %5235 = vmatpush.bf16.msra.mxu0 %v4789
    %5236 = vmatpush.bf16.msra.mxu0 %v4782
    %5237 = vmatpush.bf16.msra.mxu0 %v4775
    %5238 = vmatpush.bf16.msra.mxu0 %v4768
    %5239 = vmatpush.bf16.msra.mxu0 %v4761
    %5240 = vmatmul.bf16.gmra.mxu0 %v597
    %v5241 = vpop.f32.mrf.mxu0
    %v5242 = vadd.f32 %v5229, %v5241
    %v5243 = vpop.f32.mrf.mxu0
    %5244 = vdwg.mxu0
    %5245 = vmatpush.bf16.msra.mxu0 0
    %5246 = vmatpush.bf16.msra.mxu0 0
    %5247 = vmatpush.bf16.msra.mxu0 0
    %5248 = vmatpush.bf16.msra.mxu0 0
    %5249 = vmatpush.bf16.msra.mxu0 0
    %5250 = vmatpush.bf16.msra.mxu0 0
    %5251 = vmatpush.bf16.msra.mxu0 0
    %5252 = vmatpush.bf16.msra.mxu0 %v4817
    %5253 = vmatmul.bf16.gmra.mxu0 %v2371
    %v5254 = vpop.f32.mrf.mxu0
    %v5255 = vadd.f32 %v5242, %v5254
    %v5256 = vpop.f32.mrf.mxu0
    %5257 = vdwg.mxu0
    %5258 = vmatpush.bf16.msra.mxu0 %v4531
    %5259 = vmatpush.bf16.msra.mxu0 %v4524
    %5260 = vmatpush.bf16.msra.mxu0 %v4517
    %5261 = vmatpush.bf16.msra.mxu0 %v4510
    %5262 = vmatpush.bf16.msra.mxu0 %v4503
    %5263 = vmatpush.bf16.msra.mxu0 %v4496
    %5264 = vmatpush.bf16.msra.mxu0 %v4489
    %5265 = vmatpush.bf16.msra.mxu0 %v4482
    %5266 = vmatmul.bf16.gmra.mxu0 %v592
    %v5267 = vpop.f32.mrf.mxu0
    %v5268 = vadd.f32 0.0, %v5267
    %v5269 = vpop.f32.mrf.mxu0
    %5270 = vdwg.mxu0
    %5271 = vmatpush.bf16.msra.mxu0 %v4587
    %5272 = vmatpush.bf16.msra.mxu0 %v4580
    %5273 = vmatpush.bf16.msra.mxu0 %v4573
    %5274 = vmatpush.bf16.msra.mxu0 %v4566
    %5275 = vmatpush.bf16.msra.mxu0 %v4559
    %5276 = vmatpush.bf16.msra.mxu0 %v4552
    %5277 = vmatpush.bf16.msra.mxu0 %v4545
    %5278 = vmatpush.bf16.msra.mxu0 %v4538
    %5279 = vmatmul.bf16.gmra.mxu0 %v593
    %v5280 = vpop.f32.mrf.mxu0
    %v5281 = vadd.f32 %v5268, %v5280
    %v5282 = vpop.f32.mrf.mxu0
    %5283 = vdwg.mxu0
    %5284 = vmatpush.bf16.msra.mxu0 %v4643
    %5285 = vmatpush.bf16.msra.mxu0 %v4636
    %5286 = vmatpush.bf16.msra.mxu0 %v4629
    %5287 = vmatpush.bf16.msra.mxu0 %v4622
    %5288 = vmatpush.bf16.msra.mxu0 %v4615
    %5289 = vmatpush.bf16.msra.mxu0 %v4608
    %5290 = vmatpush.bf16.msra.mxu0 %v4601
    %5291 = vmatpush.bf16.msra.mxu0 %v4594
    %5292 = vmatmul.bf16.gmra.mxu0 %v594
    %v5293 = vpop.f32.mrf.mxu0
    %v5294 = vadd.f32 %v5281, %v5293
    %v5295 = vpop.f32.mrf.mxu0
    %5296 = vdwg.mxu0
    %5297 = vmatpush.bf16.msra.mxu0 %v4699
    %5298 = vmatpush.bf16.msra.mxu0 %v4692
    %5299 = vmatpush.bf16.msra.mxu0 %v4685
    %5300 = vmatpush.bf16.msra.mxu0 %v4678
    %5301 = vmatpush.bf16.msra.mxu0 %v4671
    %5302 = vmatpush.bf16.msra.mxu0 %v4664
    %5303 = vmatpush.bf16.msra.mxu0 %v4657
    %5304 = vmatpush.bf16.msra.mxu0 %v4650
    %5305 = vmatmul.bf16.gmra.mxu0 %v595
    %v5306 = vpop.f32.mrf.mxu0
    %v5307 = vadd.f32 %v5294, %v5306
    %v5308 = vpop.f32.mrf.mxu0
    %5309 = vdwg.mxu0
    %5310 = vmatpush.bf16.msra.mxu0 %v4755
    %5311 = vmatpush.bf16.msra.mxu0 %v4748
    %5312 = vmatpush.bf16.msra.mxu0 %v4741
    %5313 = vmatpush.bf16.msra.mxu0 %v4734
    %5314 = vmatpush.bf16.msra.mxu0 %v4727
    %5315 = vmatpush.bf16.msra.mxu0 %v4720
    %5316 = vmatpush.bf16.msra.mxu0 %v4713
    %5317 = vmatpush.bf16.msra.mxu0 %v4706
    %5318 = vmatmul.bf16.gmra.mxu0 %v596
    %v5319 = vpop.f32.mrf.mxu0
    %v5320 = vadd.f32 %v5307, %v5319
    %v5321 = vpop.f32.mrf.mxu0
    %5322 = vdwg.mxu0
    %5323 = vmatpush.bf16.msra.mxu0 %v4811
    %5324 = vmatpush.bf16.msra.mxu0 %v4804
    %5325 = vmatpush.bf16.msra.mxu0 %v4797
    %5326 = vmatpush.bf16.msra.mxu0 %v4790
    %5327 = vmatpush.bf16.msra.mxu0 %v4783
    %5328 = vmatpush.bf16.msra.mxu0 %v4776
    %5329 = vmatpush.bf16.msra.mxu0 %v4769
    %5330 = vmatpush.bf16.msra.mxu0 %v4762
    %5331 = vmatmul.bf16.gmra.mxu0 %v597
    %v5332 = vpop.f32.mrf.mxu0
    %v5333 = vadd.f32 %v5320, %v5332
    %v5334 = vpop.f32.mrf.mxu0
    %5335 = vdwg.mxu0
    %5336 = vmatpush.bf16.msra.mxu0 0
    %5337 = vmatpush.bf16.msra.mxu0 0
    %5338 = vmatpush.bf16.msra.mxu0 0
    %5339 = vmatpush.bf16.msra.mxu0 0
    %5340 = vmatpush.bf16.msra.mxu0 0
    %5341 = vmatpush.bf16.msra.mxu0 0
    %5342 = vmatpush.bf16.msra.mxu0 0
    %5343 = vmatpush.bf16.msra.mxu0 %v4818
    %5344 = vmatmul.bf16.gmra.mxu0 %v2371
    %v5345 = vpop.f32.mrf.mxu0
    %v5346 = vadd.f32 %v5333, %v5345
    %v5347 = vpop.f32.mrf.mxu0
    %5348 = vdwg.mxu0
    %5349 = vmatpush.bf16.msra.mxu0 %v4532
    %5350 = vmatpush.bf16.msra.mxu0 %v4525
    %5351 = vmatpush.bf16.msra.mxu0 %v4518
    %5352 = vmatpush.bf16.msra.mxu0 %v4511
    %5353 = vmatpush.bf16.msra.mxu0 %v4504
    %5354 = vmatpush.bf16.msra.mxu0 %v4497
    %5355 = vmatpush.bf16.msra.mxu0 %v4490
    %5356 = vmatpush.bf16.msra.mxu0 %v4483
    %5357 = vmatmul.bf16.gmra.mxu0 %v592
    %v5358 = vpop.f32.mrf.mxu0
    %v5359 = vadd.f32 0.0, %v5358
    %v5360 = vpop.f32.mrf.mxu0
    %5361 = vdwg.mxu0
    %5362 = vmatpush.bf16.msra.mxu0 %v4588
    %5363 = vmatpush.bf16.msra.mxu0 %v4581
    %5364 = vmatpush.bf16.msra.mxu0 %v4574
    %5365 = vmatpush.bf16.msra.mxu0 %v4567
    %5366 = vmatpush.bf16.msra.mxu0 %v4560
    %5367 = vmatpush.bf16.msra.mxu0 %v4553
    %5368 = vmatpush.bf16.msra.mxu0 %v4546
    %5369 = vmatpush.bf16.msra.mxu0 %v4539
    %5370 = vmatmul.bf16.gmra.mxu0 %v593
    %v5371 = vpop.f32.mrf.mxu0
    %v5372 = vadd.f32 %v5359, %v5371
    %v5373 = vpop.f32.mrf.mxu0
    %5374 = vdwg.mxu0
    %5375 = vmatpush.bf16.msra.mxu0 %v4644
    %5376 = vmatpush.bf16.msra.mxu0 %v4637
    %5377 = vmatpush.bf16.msra.mxu0 %v4630
    %5378 = vmatpush.bf16.msra.mxu0 %v4623
    %5379 = vmatpush.bf16.msra.mxu0 %v4616
    %5380 = vmatpush.bf16.msra.mxu0 %v4609
    %5381 = vmatpush.bf16.msra.mxu0 %v4602
    %5382 = vmatpush.bf16.msra.mxu0 %v4595
    %5383 = vmatmul.bf16.gmra.mxu0 %v594
    %v5384 = vpop.f32.mrf.mxu0
    %v5385 = vadd.f32 %v5372, %v5384
    %v5386 = vpop.f32.mrf.mxu0
    %5387 = vdwg.mxu0
    %5388 = vmatpush.bf16.msra.mxu0 %v4700
    %5389 = vmatpush.bf16.msra.mxu0 %v4693
    %5390 = vmatpush.bf16.msra.mxu0 %v4686
    %5391 = vmatpush.bf16.msra.mxu0 %v4679
    %5392 = vmatpush.bf16.msra.mxu0 %v4672
    %5393 = vmatpush.bf16.msra.mxu0 %v4665
    %5394 = vmatpush.bf16.msra.mxu0 %v4658
    %5395 = vmatpush.bf16.msra.mxu0 %v4651
    %5396 = vmatmul.bf16.gmra.mxu0 %v595
    %v5397 = vpop.f32.mrf.mxu0
    %v5398 = vadd.f32 %v5385, %v5397
    %v5399 = vpop.f32.mrf.mxu0
    %5400 = vdwg.mxu0
    %5401 = vmatpush.bf16.msra.mxu0 %v4756
    %5402 = vmatpush.bf16.msra.mxu0 %v4749
    %5403 = vmatpush.bf16.msra.mxu0 %v4742
    %5404 = vmatpush.bf16.msra.mxu0 %v4735
    %5405 = vmatpush.bf16.msra.mxu0 %v4728
    %5406 = vmatpush.bf16.msra.mxu0 %v4721
    %5407 = vmatpush.bf16.msra.mxu0 %v4714
    %5408 = vmatpush.bf16.msra.mxu0 %v4707
    %5409 = vmatmul.bf16.gmra.mxu0 %v596
    %v5410 = vpop.f32.mrf.mxu0
    %v5411 = vadd.f32 %v5398, %v5410
    %v5412 = vpop.f32.mrf.mxu0
    %5413 = vdwg.mxu0
    %5414 = vmatpush.bf16.msra.mxu0 %v4812
    %5415 = vmatpush.bf16.msra.mxu0 %v4805
    %5416 = vmatpush.bf16.msra.mxu0 %v4798
    %5417 = vmatpush.bf16.msra.mxu0 %v4791
    %5418 = vmatpush.bf16.msra.mxu0 %v4784
    %5419 = vmatpush.bf16.msra.mxu0 %v4777
    %5420 = vmatpush.bf16.msra.mxu0 %v4770
    %5421 = vmatpush.bf16.msra.mxu0 %v4763
    %5422 = vmatmul.bf16.gmra.mxu0 %v597
    %v5423 = vpop.f32.mrf.mxu0
    %v5424 = vadd.f32 %v5411, %v5423
    %v5425 = vpop.f32.mrf.mxu0
    %5426 = vdwg.mxu0
    %5427 = vmatpush.bf16.msra.mxu0 0
    %5428 = vmatpush.bf16.msra.mxu0 0
    %5429 = vmatpush.bf16.msra.mxu0 0
    %5430 = vmatpush.bf16.msra.mxu0 0
    %5431 = vmatpush.bf16.msra.mxu0 0
    %5432 = vmatpush.bf16.msra.mxu0 0
    %5433 = vmatpush.bf16.msra.mxu0 0
    %5434 = vmatpush.bf16.msra.mxu0 %v4819
    %5435 = vmatmul.bf16.gmra.mxu0 %v2371
    %v5436 = vpop.f32.mrf.mxu0
    %v5437 = vadd.f32 %v5424, %v5436
    %v5438 = vpop.f32.mrf.mxu0
    %5439 = vdwg.mxu0
    %5440 = vmatpush.bf16.msra.mxu0 %v4533
    %5441 = vmatpush.bf16.msra.mxu0 %v4526
    %5442 = vmatpush.bf16.msra.mxu0 %v4519
    %5443 = vmatpush.bf16.msra.mxu0 %v4512
    %5444 = vmatpush.bf16.msra.mxu0 %v4505
    %5445 = vmatpush.bf16.msra.mxu0 %v4498
    %5446 = vmatpush.bf16.msra.mxu0 %v4491
    %5447 = vmatpush.bf16.msra.mxu0 %v4484
    %5448 = vmatmul.bf16.gmra.mxu0 %v592
    %v5449 = vpop.f32.mrf.mxu0
    %v5450 = vadd.f32 0.0, %v5449
    %v5451 = vpop.f32.mrf.mxu0
    %5452 = vdwg.mxu0
    %5453 = vmatpush.bf16.msra.mxu0 %v4589
    %5454 = vmatpush.bf16.msra.mxu0 %v4582
    %5455 = vmatpush.bf16.msra.mxu0 %v4575
    %5456 = vmatpush.bf16.msra.mxu0 %v4568
    %5457 = vmatpush.bf16.msra.mxu0 %v4561
    %5458 = vmatpush.bf16.msra.mxu0 %v4554
    %5459 = vmatpush.bf16.msra.mxu0 %v4547
    %5460 = vmatpush.bf16.msra.mxu0 %v4540
    %5461 = vmatmul.bf16.gmra.mxu0 %v593
    %v5462 = vpop.f32.mrf.mxu0
    %v5463 = vadd.f32 %v5450, %v5462
    %v5464 = vpop.f32.mrf.mxu0
    %5465 = vdwg.mxu0
    %5466 = vmatpush.bf16.msra.mxu0 %v4645
    %5467 = vmatpush.bf16.msra.mxu0 %v4638
    %5468 = vmatpush.bf16.msra.mxu0 %v4631
    %5469 = vmatpush.bf16.msra.mxu0 %v4624
    %5470 = vmatpush.bf16.msra.mxu0 %v4617
    %5471 = vmatpush.bf16.msra.mxu0 %v4610
    %5472 = vmatpush.bf16.msra.mxu0 %v4603
    %5473 = vmatpush.bf16.msra.mxu0 %v4596
    %5474 = vmatmul.bf16.gmra.mxu0 %v594
    %v5475 = vpop.f32.mrf.mxu0
    %v5476 = vadd.f32 %v5463, %v5475
    %v5477 = vpop.f32.mrf.mxu0
    %5478 = vdwg.mxu0
    %5479 = vmatpush.bf16.msra.mxu0 %v4701
    %5480 = vmatpush.bf16.msra.mxu0 %v4694
    %5481 = vmatpush.bf16.msra.mxu0 %v4687
    %5482 = vmatpush.bf16.msra.mxu0 %v4680
    %5483 = vmatpush.bf16.msra.mxu0 %v4673
    %5484 = vmatpush.bf16.msra.mxu0 %v4666
    %5485 = vmatpush.bf16.msra.mxu0 %v4659
    %5486 = vmatpush.bf16.msra.mxu0 %v4652
    %5487 = vmatmul.bf16.gmra.mxu0 %v595
    %v5488 = vpop.f32.mrf.mxu0
    %v5489 = vadd.f32 %v5476, %v5488
    %v5490 = vpop.f32.mrf.mxu0
    %5491 = vdwg.mxu0
    %5492 = vmatpush.bf16.msra.mxu0 %v4757
    %5493 = vmatpush.bf16.msra.mxu0 %v4750
    %5494 = vmatpush.bf16.msra.mxu0 %v4743
    %5495 = vmatpush.bf16.msra.mxu0 %v4736
    %5496 = vmatpush.bf16.msra.mxu0 %v4729
    %5497 = vmatpush.bf16.msra.mxu0 %v4722
    %5498 = vmatpush.bf16.msra.mxu0 %v4715
    %5499 = vmatpush.bf16.msra.mxu0 %v4708
    %5500 = vmatmul.bf16.gmra.mxu0 %v596
    %v5501 = vpop.f32.mrf.mxu0
    %v5502 = vadd.f32 %v5489, %v5501
    %v5503 = vpop.f32.mrf.mxu0
    %5504 = vdwg.mxu0
    %5505 = vmatpush.bf16.msra.mxu0 %v4813
    %5506 = vmatpush.bf16.msra.mxu0 %v4806
    %5507 = vmatpush.bf16.msra.mxu0 %v4799
    %5508 = vmatpush.bf16.msra.mxu0 %v4792
    %5509 = vmatpush.bf16.msra.mxu0 %v4785
    %5510 = vmatpush.bf16.msra.mxu0 %v4778
    %5511 = vmatpush.bf16.msra.mxu0 %v4771
    %5512 = vmatpush.bf16.msra.mxu0 %v4764
    %5513 = vmatmul.bf16.gmra.mxu0 %v597
    %v5514 = vpop.f32.mrf.mxu0
    %v5515 = vadd.f32 %v5502, %v5514
    %v5516 = vpop.f32.mrf.mxu0
    %5517 = vdwg.mxu0
    %5518 = vmatpush.bf16.msra.mxu0 0
    %5519 = vmatpush.bf16.msra.mxu0 0
    %5520 = vmatpush.bf16.msra.mxu0 0
    %5521 = vmatpush.bf16.msra.mxu0 0
    %5522 = vmatpush.bf16.msra.mxu0 0
    %5523 = vmatpush.bf16.msra.mxu0 0
    %5524 = vmatpush.bf16.msra.mxu0 0
    %5525 = vmatpush.bf16.msra.mxu0 %v4820
    %5526 = vmatmul.bf16.gmra.mxu0 %v2371
    %v5527 = vpop.f32.mrf.mxu0
    %v5528 = vadd.f32 %v5515, %v5527
    %v5529 = vpop.f32.mrf.mxu0
    %5530 = vdwg.mxu0
    %5531 = vmatpush.bf16.msra.mxu0 %v4534
    %5532 = vmatpush.bf16.msra.mxu0 %v4527
    %5533 = vmatpush.bf16.msra.mxu0 %v4520
    %5534 = vmatpush.bf16.msra.mxu0 %v4513
    %5535 = vmatpush.bf16.msra.mxu0 %v4506
    %5536 = vmatpush.bf16.msra.mxu0 %v4499
    %5537 = vmatpush.bf16.msra.mxu0 %v4492
    %5538 = vmatpush.bf16.msra.mxu0 %v4485
    %5539 = vmatmul.bf16.gmra.mxu0 %v592
    %v5540 = vpop.f32.mrf.mxu0
    %v5541 = vadd.f32 0.0, %v5540
    %v5542 = vpop.f32.mrf.mxu0
    %5543 = vdwg.mxu0
    %5544 = vmatpush.bf16.msra.mxu0 %v4590
    %5545 = vmatpush.bf16.msra.mxu0 %v4583
    %5546 = vmatpush.bf16.msra.mxu0 %v4576
    %5547 = vmatpush.bf16.msra.mxu0 %v4569
    %5548 = vmatpush.bf16.msra.mxu0 %v4562
    %5549 = vmatpush.bf16.msra.mxu0 %v4555
    %5550 = vmatpush.bf16.msra.mxu0 %v4548
    %5551 = vmatpush.bf16.msra.mxu0 %v4541
    %5552 = vmatmul.bf16.gmra.mxu0 %v593
    %v5553 = vpop.f32.mrf.mxu0
    %v5554 = vadd.f32 %v5541, %v5553
    %v5555 = vpop.f32.mrf.mxu0
    %5556 = vdwg.mxu0
    %5557 = vmatpush.bf16.msra.mxu0 %v4646
    %5558 = vmatpush.bf16.msra.mxu0 %v4639
    %5559 = vmatpush.bf16.msra.mxu0 %v4632
    %5560 = vmatpush.bf16.msra.mxu0 %v4625
    %5561 = vmatpush.bf16.msra.mxu0 %v4618
    %5562 = vmatpush.bf16.msra.mxu0 %v4611
    %5563 = vmatpush.bf16.msra.mxu0 %v4604
    %5564 = vmatpush.bf16.msra.mxu0 %v4597
    %5565 = vmatmul.bf16.gmra.mxu0 %v594
    %v5566 = vpop.f32.mrf.mxu0
    %v5567 = vadd.f32 %v5554, %v5566
    %v5568 = vpop.f32.mrf.mxu0
    %5569 = vdwg.mxu0
    %5570 = vmatpush.bf16.msra.mxu0 %v4702
    %5571 = vmatpush.bf16.msra.mxu0 %v4695
    %5572 = vmatpush.bf16.msra.mxu0 %v4688
    %5573 = vmatpush.bf16.msra.mxu0 %v4681
    %5574 = vmatpush.bf16.msra.mxu0 %v4674
    %5575 = vmatpush.bf16.msra.mxu0 %v4667
    %5576 = vmatpush.bf16.msra.mxu0 %v4660
    %5577 = vmatpush.bf16.msra.mxu0 %v4653
    %5578 = vmatmul.bf16.gmra.mxu0 %v595
    %v5579 = vpop.f32.mrf.mxu0
    %v5580 = vadd.f32 %v5567, %v5579
    %v5581 = vpop.f32.mrf.mxu0
    %5582 = vdwg.mxu0
    %5583 = vmatpush.bf16.msra.mxu0 %v4758
    %5584 = vmatpush.bf16.msra.mxu0 %v4751
    %5585 = vmatpush.bf16.msra.mxu0 %v4744
    %5586 = vmatpush.bf16.msra.mxu0 %v4737
    %5587 = vmatpush.bf16.msra.mxu0 %v4730
    %5588 = vmatpush.bf16.msra.mxu0 %v4723
    %5589 = vmatpush.bf16.msra.mxu0 %v4716
    %5590 = vmatpush.bf16.msra.mxu0 %v4709
    %5591 = vmatmul.bf16.gmra.mxu0 %v596
    %v5592 = vpop.f32.mrf.mxu0
    %v5593 = vadd.f32 %v5580, %v5592
    %v5594 = vpop.f32.mrf.mxu0
    %5595 = vdwg.mxu0
    %5596 = vmatpush.bf16.msra.mxu0 %v4814
    %5597 = vmatpush.bf16.msra.mxu0 %v4807
    %5598 = vmatpush.bf16.msra.mxu0 %v4800
    %5599 = vmatpush.bf16.msra.mxu0 %v4793
    %5600 = vmatpush.bf16.msra.mxu0 %v4786
    %5601 = vmatpush.bf16.msra.mxu0 %v4779
    %5602 = vmatpush.bf16.msra.mxu0 %v4772
    %5603 = vmatpush.bf16.msra.mxu0 %v4765
    %5604 = vmatmul.bf16.gmra.mxu0 %v597
    %v5605 = vpop.f32.mrf.mxu0
    %v5606 = vadd.f32 %v5593, %v5605
    %v5607 = vpop.f32.mrf.mxu0
    %5608 = vdwg.mxu0
    %5609 = vmatpush.bf16.msra.mxu0 0
    %5610 = vmatpush.bf16.msra.mxu0 0
    %5611 = vmatpush.bf16.msra.mxu0 0
    %5612 = vmatpush.bf16.msra.mxu0 0
    %5613 = vmatpush.bf16.msra.mxu0 0
    %5614 = vmatpush.bf16.msra.mxu0 0
    %5615 = vmatpush.bf16.msra.mxu0 0
    %5616 = vmatpush.bf16.msra.mxu0 %v4821
    %5617 = vmatmul.bf16.gmra.mxu0 %v2371
    %v5618 = vpop.f32.mrf.mxu0
    %v5619 = vadd.f32 %v5606, %v5618
    %v5620 = vpop.f32.mrf.mxu0
    %5621 = vdwg.mxu0
    %5622 = vmatpush.bf16.msra.mxu0 %v4535
    %5623 = vmatpush.bf16.msra.mxu0 %v4528
    %5624 = vmatpush.bf16.msra.mxu0 %v4521
    %5625 = vmatpush.bf16.msra.mxu0 %v4514
    %5626 = vmatpush.bf16.msra.mxu0 %v4507
    %5627 = vmatpush.bf16.msra.mxu0 %v4500
    %5628 = vmatpush.bf16.msra.mxu0 %v4493
    %5629 = vmatpush.bf16.msra.mxu0 %v4486
    %5630 = vmatmul.bf16.gmra.mxu0 %v592
    %v5631 = vpop.f32.mrf.mxu0
    %v5632 = vadd.f32 0.0, %v5631
    %v5633 = vpop.f32.mrf.mxu0
    %5634 = vdwg.mxu0
    %5635 = vmatpush.bf16.msra.mxu0 %v4591
    %5636 = vmatpush.bf16.msra.mxu0 %v4584
    %5637 = vmatpush.bf16.msra.mxu0 %v4577
    %5638 = vmatpush.bf16.msra.mxu0 %v4570
    %5639 = vmatpush.bf16.msra.mxu0 %v4563
    %5640 = vmatpush.bf16.msra.mxu0 %v4556
    %5641 = vmatpush.bf16.msra.mxu0 %v4549
    %5642 = vmatpush.bf16.msra.mxu0 %v4542
    %5643 = vmatmul.bf16.gmra.mxu0 %v593
    %v5644 = vpop.f32.mrf.mxu0
    %v5645 = vadd.f32 %v5632, %v5644
    %v5646 = vpop.f32.mrf.mxu0
    %5647 = vdwg.mxu0
    %5648 = vmatpush.bf16.msra.mxu0 %v4647
    %5649 = vmatpush.bf16.msra.mxu0 %v4640
    %5650 = vmatpush.bf16.msra.mxu0 %v4633
    %5651 = vmatpush.bf16.msra.mxu0 %v4626
    %5652 = vmatpush.bf16.msra.mxu0 %v4619
    %5653 = vmatpush.bf16.msra.mxu0 %v4612
    %5654 = vmatpush.bf16.msra.mxu0 %v4605
    %5655 = vmatpush.bf16.msra.mxu0 %v4598
    %5656 = vmatmul.bf16.gmra.mxu0 %v594
    %v5657 = vpop.f32.mrf.mxu0
    %v5658 = vadd.f32 %v5645, %v5657
    %v5659 = vpop.f32.mrf.mxu0
    %5660 = vdwg.mxu0
    %5661 = vmatpush.bf16.msra.mxu0 %v4703
    %5662 = vmatpush.bf16.msra.mxu0 %v4696
    %5663 = vmatpush.bf16.msra.mxu0 %v4689
    %5664 = vmatpush.bf16.msra.mxu0 %v4682
    %5665 = vmatpush.bf16.msra.mxu0 %v4675
    %5666 = vmatpush.bf16.msra.mxu0 %v4668
    %5667 = vmatpush.bf16.msra.mxu0 %v4661
    %5668 = vmatpush.bf16.msra.mxu0 %v4654
    %5669 = vmatmul.bf16.gmra.mxu0 %v595
    %v5670 = vpop.f32.mrf.mxu0
    %v5671 = vadd.f32 %v5658, %v5670
    %v5672 = vpop.f32.mrf.mxu0
    %5673 = vdwg.mxu0
    %5674 = vmatpush.bf16.msra.mxu0 %v4759
    %5675 = vmatpush.bf16.msra.mxu0 %v4752
    %5676 = vmatpush.bf16.msra.mxu0 %v4745
    %5677 = vmatpush.bf16.msra.mxu0 %v4738
    %5678 = vmatpush.bf16.msra.mxu0 %v4731
    %5679 = vmatpush.bf16.msra.mxu0 %v4724
    %5680 = vmatpush.bf16.msra.mxu0 %v4717
    %5681 = vmatpush.bf16.msra.mxu0 %v4710
    %5682 = vmatmul.bf16.gmra.mxu0 %v596
    %v5683 = vpop.f32.mrf.mxu0
    %v5684 = vadd.f32 %v5671, %v5683
    %v5685 = vpop.f32.mrf.mxu0
    %5686 = vdwg.mxu0
    %5687 = vmatpush.bf16.msra.mxu0 %v4815
    %5688 = vmatpush.bf16.msra.mxu0 %v4808
    %5689 = vmatpush.bf16.msra.mxu0 %v4801
    %5690 = vmatpush.bf16.msra.mxu0 %v4794
    %5691 = vmatpush.bf16.msra.mxu0 %v4787
    %5692 = vmatpush.bf16.msra.mxu0 %v4780
    %5693 = vmatpush.bf16.msra.mxu0 %v4773
    %5694 = vmatpush.bf16.msra.mxu0 %v4766
    %5695 = vmatmul.bf16.gmra.mxu0 %v597
    %v5696 = vpop.f32.mrf.mxu0
    %v5697 = vadd.f32 %v5684, %v5696
    %v5698 = vpop.f32.mrf.mxu0
    %5699 = vdwg.mxu0
    %5700 = vmatpush.bf16.msra.mxu0 0
    %5701 = vmatpush.bf16.msra.mxu0 0
    %5702 = vmatpush.bf16.msra.mxu0 0
    %5703 = vmatpush.bf16.msra.mxu0 0
    %5704 = vmatpush.bf16.msra.mxu0 0
    %5705 = vmatpush.bf16.msra.mxu0 0
    %5706 = vmatpush.bf16.msra.mxu0 0
    %5707 = vmatpush.bf16.msra.mxu0 %v4822
    %5708 = vmatmul.bf16.gmra.mxu0 %v2371
    %v5709 = vpop.f32.mrf.mxu0
    %v5710 = vadd.f32 %v5697, %v5709
    %v5711 = vpop.f32.mrf.mxu0
    %5712 = vdwg.mxu0
    %5713 = vmatpush.bf16.msra.mxu0 %v4536
    %5714 = vmatpush.bf16.msra.mxu0 %v4529
    %5715 = vmatpush.bf16.msra.mxu0 %v4522
    %5716 = vmatpush.bf16.msra.mxu0 %v4515
    %5717 = vmatpush.bf16.msra.mxu0 %v4508
    %5718 = vmatpush.bf16.msra.mxu0 %v4501
    %5719 = vmatpush.bf16.msra.mxu0 %v4494
    %5720 = vmatpush.bf16.msra.mxu0 %v4487
    %5721 = vmatmul.bf16.gmra.mxu0 %v592
    %v5722 = vpop.f32.mrf.mxu0
    %v5723 = vadd.f32 0.0, %v5722
    %v5724 = vpop.f32.mrf.mxu0
    %5725 = vdwg.mxu0
    %5726 = vmatpush.bf16.msra.mxu0 %v4592
    %5727 = vmatpush.bf16.msra.mxu0 %v4585
    %5728 = vmatpush.bf16.msra.mxu0 %v4578
    %5729 = vmatpush.bf16.msra.mxu0 %v4571
    %5730 = vmatpush.bf16.msra.mxu0 %v4564
    %5731 = vmatpush.bf16.msra.mxu0 %v4557
    %5732 = vmatpush.bf16.msra.mxu0 %v4550
    %5733 = vmatpush.bf16.msra.mxu0 %v4543
    %5734 = vmatmul.bf16.gmra.mxu0 %v593
    %v5735 = vpop.f32.mrf.mxu0
    %v5736 = vadd.f32 %v5723, %v5735
    %v5737 = vpop.f32.mrf.mxu0
    %5738 = vdwg.mxu0
    %5739 = vmatpush.bf16.msra.mxu0 %v4648
    %5740 = vmatpush.bf16.msra.mxu0 %v4641
    %5741 = vmatpush.bf16.msra.mxu0 %v4634
    %5742 = vmatpush.bf16.msra.mxu0 %v4627
    %5743 = vmatpush.bf16.msra.mxu0 %v4620
    %5744 = vmatpush.bf16.msra.mxu0 %v4613
    %5745 = vmatpush.bf16.msra.mxu0 %v4606
    %5746 = vmatpush.bf16.msra.mxu0 %v4599
    %5747 = vmatmul.bf16.gmra.mxu0 %v594
    %v5748 = vpop.f32.mrf.mxu0
    %v5749 = vadd.f32 %v5736, %v5748
    %v5750 = vpop.f32.mrf.mxu0
    %5751 = vdwg.mxu0
    %5752 = vmatpush.bf16.msra.mxu0 %v4704
    %5753 = vmatpush.bf16.msra.mxu0 %v4697
    %5754 = vmatpush.bf16.msra.mxu0 %v4690
    %5755 = vmatpush.bf16.msra.mxu0 %v4683
    %5756 = vmatpush.bf16.msra.mxu0 %v4676
    %5757 = vmatpush.bf16.msra.mxu0 %v4669
    %5758 = vmatpush.bf16.msra.mxu0 %v4662
    %5759 = vmatpush.bf16.msra.mxu0 %v4655
    %5760 = vmatmul.bf16.gmra.mxu0 %v595
    %v5761 = vpop.f32.mrf.mxu0
    %v5762 = vadd.f32 %v5749, %v5761
    %v5763 = vpop.f32.mrf.mxu0
    %5764 = vdwg.mxu0
    %5765 = vmatpush.bf16.msra.mxu0 %v4760
    %5766 = vmatpush.bf16.msra.mxu0 %v4753
    %5767 = vmatpush.bf16.msra.mxu0 %v4746
    %5768 = vmatpush.bf16.msra.mxu0 %v4739
    %5769 = vmatpush.bf16.msra.mxu0 %v4732
    %5770 = vmatpush.bf16.msra.mxu0 %v4725
    %5771 = vmatpush.bf16.msra.mxu0 %v4718
    %5772 = vmatpush.bf16.msra.mxu0 %v4711
    %5773 = vmatmul.bf16.gmra.mxu0 %v596
    %v5774 = vpop.f32.mrf.mxu0
    %v5775 = vadd.f32 %v5762, %v5774
    %v5776 = vpop.f32.mrf.mxu0
    %5777 = vdwg.mxu0
    %5778 = vmatpush.bf16.msra.mxu0 %v4816
    %5779 = vmatpush.bf16.msra.mxu0 %v4809
    %5780 = vmatpush.bf16.msra.mxu0 %v4802
    %5781 = vmatpush.bf16.msra.mxu0 %v4795
    %5782 = vmatpush.bf16.msra.mxu0 %v4788
    %5783 = vmatpush.bf16.msra.mxu0 %v4781
    %5784 = vmatpush.bf16.msra.mxu0 %v4774
    %5785 = vmatpush.bf16.msra.mxu0 %v4767
    %5786 = vmatmul.bf16.gmra.mxu0 %v597
    %v5787 = vpop.f32.mrf.mxu0
    %v5788 = vadd.f32 %v5775, %v5787
    %v5789 = vpop.f32.mrf.mxu0
    %5790 = vdwg.mxu0
    %5791 = vmatpush.bf16.msra.mxu0 0
    %5792 = vmatpush.bf16.msra.mxu0 0
    %5793 = vmatpush.bf16.msra.mxu0 0
    %5794 = vmatpush.bf16.msra.mxu0 0
    %5795 = vmatpush.bf16.msra.mxu0 0
    %5796 = vmatpush.bf16.msra.mxu0 0
    %5797 = vmatpush.bf16.msra.mxu0 0
    %5798 = vmatpush.bf16.msra.mxu0 %v4823
    %5799 = vmatmul.bf16.gmra.mxu0 %v2371
    %v5800 = vpop.f32.mrf.mxu0
    %v5801 = vadd.f32 %v5788, %v5800
    %v5802 = vpop.f32.mrf.mxu0
    %5803 = vdwg.mxu0
    %v5804 = vmax.f32 %v2461, %v5255
    %v5805 = vmax.f32 %v2552, %v5346
    %v5806 = vmax.f32 %v2643, %v5437
    %v5807 = vmax.f32 %v2734, %v5528
    %v5808 = vmax.f32 %v2825, %v5619
    %v5809 = vmax.f32 %v2916, %v5710
    %v5810 = vmax.f32 %v3007, %v5801
    %s5811 = scalar_lea.vmem [#allocation2], 5488
    %v5812 = vld [vmem:[%s5811] sm:$0xff]
    %v5813 = vld [vmem:[%s5811 + $0x8] sm:$0xff]
    %v5814 = vld [vmem:[%s5811 + $0x10] sm:$0xff]
    %v5815 = vld [vmem:[%s5811 + $0x18] sm:$0xf]
    %v5816 = vld [vmem:[%s5811 + $0x1c] sm:$0xff]
    %v5817 = vld [vmem:[%s5811 + $0x24] sm:$0xff]
    %v5818 = vld [vmem:[%s5811 + $0x2c] sm:$0xff]
    %v5819 = vld [vmem:[%s5811 + $0x34] sm:$0xf]
    %v5820 = vld [vmem:[%s5811 + $0x38] sm:$0xff]
    %v5821 = vld [vmem:[%s5811 + $0x40] sm:$0xff]
    %v5822 = vld [vmem:[%s5811 + $0x48] sm:$0xff]
    %v5823 = vld [vmem:[%s5811 + $0x50] sm:$0xf]
    %v5824 = vld [vmem:[%s5811 + $0x54] sm:$0xff]
    %v5825 = vld [vmem:[%s5811 + $0x5c] sm:$0xff]
    %v5826 = vld [vmem:[%s5811 + $0x64] sm:$0xff]
    %v5827 = vld [vmem:[%s5811 + $0x6c] sm:$0xf]
    %v5828 = vld [vmem:[%s5811 + $0x70] sm:$0xff]
    %v5829 = vld [vmem:[%s5811 + $0x78] sm:$0xff]
    %v5830 = vld [vmem:[%s5811 + $0x80] sm:$0xff]
    %v5831 = vld [vmem:[%s5811 + $0x88] sm:$0xf]
    %v5832 = vld [vmem:[%s5811 + $0x8c] sm:$0xff]
    %v5833 = vld [vmem:[%s5811 + $0x94] sm:$0xff]
    %v5834 = vld [vmem:[%s5811 + $0x9c] sm:$0xff]
    %v5835 = vld [vmem:[%s5811 + $0xa4] sm:$0xf]
    %v5836 = vld [vmem:[%s5811 + $0xa8] sm:$0xff]
    %v5837 = vld [vmem:[%s5811 + $0xb0] sm:$0xff]
    %v5838 = vld [vmem:[%s5811 + $0xb8] sm:$0xff]
    %v5839 = vld [vmem:[%s5811 + $0xc0] sm:$0xf]
    %v5840 = vld [vmem:[%s5811 + $0xc4] sm:$0xff]
    %v5841 = vld [vmem:[%s5811 + $0xcc] sm:$0xff]
    %v5842 = vld [vmem:[%s5811 + $0xd4] sm:$0xff]
    %v5843 = vld [vmem:[%s5811 + $0xdc] sm:$0xf]
    %v5844 = vld [vmem:[%s5811 + $0xe0] sm:$0xff]
    %v5845 = vld [vmem:[%s5811 + $0xe8] sm:$0xff]
    %v5846 = vld [vmem:[%s5811 + $0xf0] sm:$0xff]
    %v5847 = vld [vmem:[%s5811 + $0xf8] sm:$0xf]
    %v5848 = vld [vmem:[%s5811 + $0xfc] sm:$0xff]
    %v5849 = vld [vmem:[%s5811 + $0x104] sm:$0xff]
    %v5850 = vld [vmem:[%s5811 + $0x10c] sm:$0xff]
    %v5851 = vld [vmem:[%s5811 + $0x114] sm:$0xf]
    %v5852 = vld [vmem:[%s5811 + $0x118] sm:$0xff]
    %v5853 = vld [vmem:[%s5811 + $0x120] sm:$0xff]
    %v5854 = vld [vmem:[%s5811 + $0x128] sm:$0xff]
    %v5855 = vld [vmem:[%s5811 + $0x130] sm:$0xf]
    %v5856 = vld [vmem:[%s5811 + $0x134] sm:$0xff]
    %v5857 = vld [vmem:[%s5811 + $0x13c] sm:$0xff]
    %v5858 = vld [vmem:[%s5811 + $0x144] sm:$0xff]
    %v5859 = vld [vmem:[%s5811 + $0x14c] sm:$0xf]
    %v5860 = vld [vmem:[%s5811 + $0x150] sm:$0xff]
    %v5861 = vld [vmem:[%s5811 + $0x158] sm:$0xff]
    %v5862 = vld [vmem:[%s5811 + $0x160] sm:$0xff]
    %v5863 = vld [vmem:[%s5811 + $0x168] sm:$0xf]
    %v5864 = vld [vmem:[%s5811 + $0x16c] sm:$0xff]
    %v5865 = vld [vmem:[%s5811 + $0x174] sm:$0xff]
    %v5866 = vld [vmem:[%s5811 + $0x17c] sm:$0xff]
    %v5867 = vld [vmem:[%s5811 + $0x184] sm:$0xf]
    %v5868 = vld [vmem:[%s5811 + $0x188] sm:$0xff]
    %v5869 = vld [vmem:[%s5811 + $0x190] sm:$0xff]
    %v5870 = vld [vmem:[%s5811 + $0x198] sm:$0xff]
    %v5871 = vld [vmem:[%s5811 + $0x1a0] sm:$0xf]
    %v5872 = vld [vmem:[%s5811 + $0x1a4] sm:$0xff]
    %v5873 = vld [vmem:[%s5811 + $0x1ac] sm:$0xff]
    %v5874 = vld [vmem:[%s5811 + $0x1b4] sm:$0xff]
    %v5875 = vld [vmem:[%s5811 + $0x1bc] sm:$0xf]
    %v5876 = vld [vmem:[%s5811 + $0x1c0] sm:$0xff]
    %v5877 = vld [vmem:[%s5811 + $0x1c8] sm:$0xff]
    %v5878 = vld [vmem:[%s5811 + $0x1d0] sm:$0xff]
    %v5879 = vld [vmem:[%s5811 + $0x1d8] sm:$0xf]
    %v5880 = vld [vmem:[%s5811 + $0x1dc] sm:$0xff]
    %v5881 = vld [vmem:[%s5811 + $0x1e4] sm:$0xff]
    %v5882 = vld [vmem:[%s5811 + $0x1ec] sm:$0xff]
    %v5883 = vld [vmem:[%s5811 + $0x1f4] sm:$0xf]
    %v5884 = vld [vmem:[%s5811 + $0x1f8] sm:$0xff]
    %v5885 = vld [vmem:[%s5811 + $0x200] sm:$0xff]
    %v5886 = vld [vmem:[%s5811 + $0x208] sm:$0xff]
    %v5887 = vld [vmem:[%s5811 + $0x210] sm:$0xf]
    %v5888 = vld [vmem:[%s5811 + $0x214] sm:$0xff]
    %v5889 = vld [vmem:[%s5811 + $0x21c] sm:$0xff]
    %v5890 = vld [vmem:[%s5811 + $0x224] sm:$0xff]
    %v5891 = vld [vmem:[%s5811 + $0x22c] sm:$0xf]
    %v5892 = vld [vmem:[%s5811 + $0x230] sm:$0xff]
    %v5893 = vld [vmem:[%s5811 + $0x238] sm:$0xff]
    %v5894 = vld [vmem:[%s5811 + $0x240] sm:$0xff]
    %v5895 = vld [vmem:[%s5811 + $0x248] sm:$0xf]
    %v5896 = vld [vmem:[%s5811 + $0x24c] sm:$0xff]
    %v5897 = vld [vmem:[%s5811 + $0x254] sm:$0xff]
    %v5898 = vld [vmem:[%s5811 + $0x25c] sm:$0xff]
    %v5899 = vld [vmem:[%s5811 + $0x264] sm:$0xf]
    %v5900 = vld [vmem:[%s5811 + $0x268] sm:$0xff]
    %v5901 = vld [vmem:[%s5811 + $0x270] sm:$0xff]
    %v5902 = vld [vmem:[%s5811 + $0x278] sm:$0xff]
    %v5903 = vld [vmem:[%s5811 + $0x280] sm:$0xf]
    %v5904 = vld [vmem:[%s5811 + $0x284] sm:$0xff]
    %v5905 = vld [vmem:[%s5811 + $0x28c] sm:$0xff]
    %v5906 = vld [vmem:[%s5811 + $0x294] sm:$0xff]
    %v5907 = vld [vmem:[%s5811 + $0x29c] sm:$0xf]
    %v5908 = vld [vmem:[%s5811 + $0x2a0] sm:$0xff]
    %v5909 = vld [vmem:[%s5811 + $0x2a8] sm:$0xff]
    %v5910 = vld [vmem:[%s5811 + $0x2b0] sm:$0xff]
    %v5911 = vld [vmem:[%s5811 + $0x2b8] sm:$0xf]
    %v5912 = vld [vmem:[%s5811 + $0x2bc] sm:$0xff]
    %v5913 = vld [vmem:[%s5811 + $0x2c4] sm:$0xff]
    %v5914 = vld [vmem:[%s5811 + $0x2cc] sm:$0xff]
    %v5915 = vld [vmem:[%s5811 + $0x2d4] sm:$0xf]
    %v5916 = vld [vmem:[%s5811 + $0x2d8] sm:$0xff]
    %v5917 = vld [vmem:[%s5811 + $0x2e0] sm:$0xff]
    %v5918 = vld [vmem:[%s5811 + $0x2e8] sm:$0xff]
    %v5919 = vld [vmem:[%s5811 + $0x2f0] sm:$0xf]
    %v5920 = vld [vmem:[%s5811 + $0x2f4] sm:$0xff]
    %v5921 = vld [vmem:[%s5811 + $0x2fc] sm:$0xff]
    %v5922 = vld [vmem:[%s5811 + $0x304] sm:$0xff]
    %v5923 = vld [vmem:[%s5811 + $0x30c] sm:$0xf]
    %v5924 = vld [vmem:[%s5811 + $0x310] sm:$0xff]
    %v5925 = vld [vmem:[%s5811 + $0x318] sm:$0xff]
    %v5926 = vld [vmem:[%s5811 + $0x320] sm:$0xff]
    %v5927 = vld [vmem:[%s5811 + $0x328] sm:$0xf]
    %v5928 = vld [vmem:[%s5811 + $0x32c] sm:$0xff]
    %v5929 = vld [vmem:[%s5811 + $0x334] sm:$0xff]
    %v5930 = vld [vmem:[%s5811 + $0x33c] sm:$0xff]
    %v5931 = vld [vmem:[%s5811 + $0x344] sm:$0xf]
    %v5932 = vld [vmem:[%s5811 + $0x348] sm:$0xff]
    %v5933 = vld [vmem:[%s5811 + $0x350] sm:$0xff]
    %v5934 = vld [vmem:[%s5811 + $0x358] sm:$0xff]
    %v5935 = vld [vmem:[%s5811 + $0x360] sm:$0xf]
    %v5936 = vld [vmem:[%s5811 + $0x364] sm:$0xff]
    %v5937 = vld [vmem:[%s5811 + $0x36c] sm:$0xff]
    %v5938 = vld [vmem:[%s5811 + $0x374] sm:$0xff]
    %v5939 = vld [vmem:[%s5811 + $0x37c] sm:$0xf]
    %v5940 = vld [vmem:[%s5811 + $0x380] sm:$0xff]
    %v5941 = vld [vmem:[%s5811 + $0x388] sm:$0xff]
    %v5942 = vld [vmem:[%s5811 + $0x390] sm:$0xff]
    %v5943 = vld [vmem:[%s5811 + $0x398] sm:$0xf]
    %v5944 = vld [vmem:[%s5811 + $0x39c] sm:$0xff]
    %v5945 = vld [vmem:[%s5811 + $0x3a4] sm:$0xff]
    %v5946 = vld [vmem:[%s5811 + $0x3ac] sm:$0xff]
    %v5947 = vld [vmem:[%s5811 + $0x3b4] sm:$0xf]
    %v5948 = vld [vmem:[%s5811 + $0x3b8] sm:$0xff]
    %v5949 = vld [vmem:[%s5811 + $0x3c0] sm:$0xff]
    %v5950 = vld [vmem:[%s5811 + $0x3c8] sm:$0xff]
    %v5951 = vld [vmem:[%s5811 + $0x3d0] sm:$0xf]
    %v5952 = vld [vmem:[%s5811 + $0x3d4] sm:$0xff]
    %v5953 = vld [vmem:[%s5811 + $0x3dc] sm:$0xff]
    %v5954 = vld [vmem:[%s5811 + $0x3e4] sm:$0xff]
    %v5955 = vld [vmem:[%s5811 + $0x3ec] sm:$0xf]
    %v5956 = vld [vmem:[%s5811 + $0x3f0] sm:$0xff]
    %v5957 = vld [vmem:[%s5811 + $0x3f8] sm:$0xff]
    %v5958 = vld [vmem:[%s5811 + $0x400] sm:$0xff]
    %v5959 = vld [vmem:[%s5811 + $0x408] sm:$0xf]
    %v5960 = vld [vmem:[%s5811 + $0x40c] sm:$0xff]
    %v5961 = vld [vmem:[%s5811 + $0x414] sm:$0xff]
    %v5962 = vld [vmem:[%s5811 + $0x41c] sm:$0xff]
    %v5963 = vld [vmem:[%s5811 + $0x424] sm:$0xf]
    %v5964 = vld [vmem:[%s5811 + $0x428] sm:$0xff]
    %v5965 = vld [vmem:[%s5811 + $0x430] sm:$0xff]
    %v5966 = vld [vmem:[%s5811 + $0x438] sm:$0xff]
    %v5967 = vld [vmem:[%s5811 + $0x440] sm:$0xf]
    %v5968 = vld [vmem:[%s5811 + $0x444] sm:$0xff]
    %v5969 = vld [vmem:[%s5811 + $0x44c] sm:$0xff]
    %v5970 = vld [vmem:[%s5811 + $0x454] sm:$0xff]
    %v5971 = vld [vmem:[%s5811 + $0x45c] sm:$0xf]
    %v5972 = vld [vmem:[%s5811 + $0x460] sm:$0xff]
    %v5973 = vld [vmem:[%s5811 + $0x468] sm:$0xff]
    %v5974 = vld [vmem:[%s5811 + $0x470] sm:$0xff]
    %v5975 = vld [vmem:[%s5811 + $0x478] sm:$0xf]
    %v5976 = vld [vmem:[%s5811 + $0x47c] sm:$0xff]
    %v5977 = vld [vmem:[%s5811 + $0x484] sm:$0xff]
    %v5978 = vld [vmem:[%s5811 + $0x48c] sm:$0xff]
    %v5979 = vld [vmem:[%s5811 + $0x494] sm:$0xf]
    %v5980 = vld [vmem:[%s5811 + $0x498] sm:$0xff]
    %v5981 = vld [vmem:[%s5811 + $0x4a0] sm:$0xff]
    %v5982 = vld [vmem:[%s5811 + $0x4a8] sm:$0xff]
    %v5983 = vld [vmem:[%s5811 + $0x4b0] sm:$0xf]
    %v5984 = vld [vmem:[%s5811 + $0x4b4] sm:$0xff]
    %v5985 = vld [vmem:[%s5811 + $0x4bc] sm:$0xff]
    %v5986 = vld [vmem:[%s5811 + $0x4c4] sm:$0xff]
    %v5987 = vld [vmem:[%s5811 + $0x4cc] sm:$0xf]
    %v5988 = vld [vmem:[%s5811 + $0x4d0] sm:$0xff]
    %v5989 = vld [vmem:[%s5811 + $0x4d8] sm:$0xff]
    %v5990 = vld [vmem:[%s5811 + $0x4e0] sm:$0xff]
    %v5991 = vld [vmem:[%s5811 + $0x4e8] sm:$0xf]
    %v5992 = vld [vmem:[%s5811 + $0x4ec] sm:$0xff]
    %v5993 = vld [vmem:[%s5811 + $0x4f4] sm:$0xff]
    %v5994 = vld [vmem:[%s5811 + $0x4fc] sm:$0xff]
    %v5995 = vld [vmem:[%s5811 + $0x504] sm:$0xf]
    %v5996 = vld [vmem:[%s5811 + $0x508] sm:$0xff]
    %v5997 = vld [vmem:[%s5811 + $0x510] sm:$0xff]
    %v5998 = vld [vmem:[%s5811 + $0x518] sm:$0xff]
    %v5999 = vld [vmem:[%s5811 + $0x520] sm:$0xf]
    %v6000 = vld [vmem:[%s5811 + $0x524] sm:$0xff]
    %v6001 = vld [vmem:[%s5811 + $0x52c] sm:$0xff]
    %v6002 = vld [vmem:[%s5811 + $0x534] sm:$0xff]
    %v6003 = vld [vmem:[%s5811 + $0x53c] sm:$0xf]
    %v6004 = vld [vmem:[%s5811 + $0x540] sm:$0xff]
    %v6005 = vld [vmem:[%s5811 + $0x548] sm:$0xff]
    %v6006 = vld [vmem:[%s5811 + $0x550] sm:$0xff]
    %v6007 = vld [vmem:[%s5811 + $0x558] sm:$0xf]
    %v6008 = vld [vmem:[%s5811 + $0x55c] sm:$0xff]
    %v6009 = vld [vmem:[%s5811 + $0x564] sm:$0xff]
    %v6010 = vld [vmem:[%s5811 + $0x56c] sm:$0xff]
    %v6011 = vld [vmem:[%s5811 + $0x574] sm:$0xf]
    %v6012 = vld [vmem:[%s5811 + $0x578] sm:$0xff]
    %v6013 = vld [vmem:[%s5811 + $0x580] sm:$0xff]
    %v6014 = vld [vmem:[%s5811 + $0x588] sm:$0xff]
    %v6015 = vld [vmem:[%s5811 + $0x590] sm:$0xf]
    %v6016 = vld [vmem:[%s5811 + $0x594] sm:$0xff]
    %v6017 = vld [vmem:[%s5811 + $0x59c] sm:$0xff]
    %v6018 = vld [vmem:[%s5811 + $0x5a4] sm:$0xff]
    %v6019 = vld [vmem:[%s5811 + $0x5ac] sm:$0xf]
    %v6020 = vld [vmem:[%s5811 + $0x5b0] sm:$0xff]
    %v6021 = vld [vmem:[%s5811 + $0x5b8] sm:$0xff]
    %v6022 = vld [vmem:[%s5811 + $0x5c0] sm:$0xff]
    %v6023 = vld [vmem:[%s5811 + $0x5c8] sm:$0xf]
    %v6024 = vld [vmem:[%s5811 + $0x5cc] sm:$0xff]
    %v6025 = vld [vmem:[%s5811 + $0x5d4] sm:$0xff]
    %v6026 = vld [vmem:[%s5811 + $0x5dc] sm:$0xff]
    %v6027 = vld [vmem:[%s5811 + $0x5e4] sm:$0xf]
    %v6028 = vld [vmem:[%s5811 + $0x5e8] sm:$0xff]
    %v6029 = vld [vmem:[%s5811 + $0x5f0] sm:$0xff]
    %v6030 = vld [vmem:[%s5811 + $0x5f8] sm:$0xff]
    %v6031 = vld [vmem:[%s5811 + $0x600] sm:$0xf]
    %v6032 = vld [vmem:[%s5811 + $0x604] sm:$0xff]
    %v6033 = vld [vmem:[%s5811 + $0x60c] sm:$0xff]
    %v6034 = vld [vmem:[%s5811 + $0x614] sm:$0xff]
    %v6035 = vld [vmem:[%s5811 + $0x61c] sm:$0xf]
    %v6036 = vld [vmem:[%s5811 + $0x620] sm:$0xff]
    %v6037 = vld [vmem:[%s5811 + $0x628] sm:$0xff]
    %v6038 = vld [vmem:[%s5811 + $0x630] sm:$0xff]
    %v6039 = vld [vmem:[%s5811 + $0x638] sm:$0xf]
    %v6040 = vld [vmem:[%s5811 + $0x63c] sm:$0xff]
    %v6041 = vld [vmem:[%s5811 + $0x644] sm:$0xff]
    %v6042 = vld [vmem:[%s5811 + $0x64c] sm:$0xff]
    %v6043 = vld [vmem:[%s5811 + $0x654] sm:$0xf]
    %v6044 = vld [vmem:[%s5811 + $0x658] sm:$0xff]
    %v6045 = vld [vmem:[%s5811 + $0x660] sm:$0xff]
    %v6046 = vld [vmem:[%s5811 + $0x668] sm:$0xff]
    %v6047 = vld [vmem:[%s5811 + $0x670] sm:$0xf]
    %v6048 = vld [vmem:[%s5811 + $0x674] sm:$0xff]
    %v6049 = vld [vmem:[%s5811 + $0x67c] sm:$0xff]
    %v6050 = vld [vmem:[%s5811 + $0x684] sm:$0xff]
    %v6051 = vld [vmem:[%s5811 + $0x68c] sm:$0xf]
    %v6052 = vld [vmem:[%s5811 + $0x690] sm:$0xff]
    %v6053 = vld [vmem:[%s5811 + $0x698] sm:$0xff]
    %v6054 = vld [vmem:[%s5811 + $0x6a0] sm:$0xff]
    %v6055 = vld [vmem:[%s5811 + $0x6a8] sm:$0xf]
    %v6056 = vld [vmem:[%s5811 + $0x6ac] sm:$0xff]
    %v6057 = vld [vmem:[%s5811 + $0x6b4] sm:$0xff]
    %v6058 = vld [vmem:[%s5811 + $0x6bc] sm:$0xff]
    %v6059 = vld [vmem:[%s5811 + $0x6c4] sm:$0xf]
    %v6060 = vld [vmem:[%s5811 + $0x6c8] sm:$0xff]
    %v6061 = vld [vmem:[%s5811 + $0x6d0] sm:$0xff]
    %v6062 = vld [vmem:[%s5811 + $0x6d8] sm:$0xff]
    %v6063 = vld [vmem:[%s5811 + $0x6e0] sm:$0xf]
    %v6064 = vld [vmem:[%s5811 + $0x6e4] sm:$0xff]
    %v6065 = vld [vmem:[%s5811 + $0x6ec] sm:$0xff]
    %v6066 = vld [vmem:[%s5811 + $0x6f4] sm:$0xff]
    %v6067 = vld [vmem:[%s5811 + $0x6fc] sm:$0xf]
    %v6068 = vld [vmem:[%s5811 + $0x700] sm:$0xff]
    %v6069 = vld [vmem:[%s5811 + $0x708] sm:$0xff]
    %v6070 = vld [vmem:[%s5811 + $0x710] sm:$0xff]
    %v6071 = vld [vmem:[%s5811 + $0x718] sm:$0xf]
    %v6072 = vld [vmem:[%s5811 + $0x71c] sm:$0xff]
    %v6073 = vld [vmem:[%s5811 + $0x724] sm:$0xff]
    %v6074 = vld [vmem:[%s5811 + $0x72c] sm:$0xff]
    %v6075 = vld [vmem:[%s5811 + $0x734] sm:$0xf]
    %v6076 = vld [vmem:[%s5811 + $0x738] sm:$0xff]
    %v6077 = vld [vmem:[%s5811 + $0x740] sm:$0xff]
    %v6078 = vld [vmem:[%s5811 + $0x748] sm:$0xff]
    %v6079 = vld [vmem:[%s5811 + $0x750] sm:$0xf]
    %v6080 = vld [vmem:[%s5811 + $0x754] sm:$0xff]
    %v6081 = vld [vmem:[%s5811 + $0x75c] sm:$0xff]
    %v6082 = vld [vmem:[%s5811 + $0x764] sm:$0xff]
    %v6083 = vld [vmem:[%s5811 + $0x76c] sm:$0xf]
    %v6084 = vld [vmem:[%s5811 + $0x770] sm:$0xff]
    %v6085 = vld [vmem:[%s5811 + $0x778] sm:$0xff]
    %v6086 = vld [vmem:[%s5811 + $0x780] sm:$0xff]
    %v6087 = vld [vmem:[%s5811 + $0x788] sm:$0xf]
    %v6088 = vld [vmem:[%s5811 + $0x78c] sm:$0xff]
    %v6089 = vld [vmem:[%s5811 + $0x794] sm:$0xff]
    %v6090 = vld [vmem:[%s5811 + $0x79c] sm:$0xff]
    %v6091 = vld [vmem:[%s5811 + $0x7a4] sm:$0xf]
    %v6092 = vld [vmem:[%s5811 + $0x7a8] sm:$0xff]
    %v6093 = vld [vmem:[%s5811 + $0x7b0] sm:$0xff]
    %v6094 = vld [vmem:[%s5811 + $0x7b8] sm:$0xff]
    %v6095 = vld [vmem:[%s5811 + $0x7c0] sm:$0xf]
    %v6096 = vld [vmem:[%s5811 + $0x7c4] sm:$0xff]
    %v6097 = vld [vmem:[%s5811 + $0x7cc] sm:$0xff]
    %v6098 = vld [vmem:[%s5811 + $0x7d4] sm:$0xff]
    %v6099 = vld [vmem:[%s5811 + $0x7dc] sm:$0xf]
    %v6100 = vld [vmem:[%s5811 + $0x7e0] sm:$0xff]
    %v6101 = vld [vmem:[%s5811 + $0x7e8] sm:$0xff]
    %v6102 = vld [vmem:[%s5811 + $0x7f0] sm:$0xff]
    %v6103 = vld [vmem:[%s5811 + $0x7f8] sm:$0xf]
    %v6104 = vld [vmem:[%s5811 + $0x7fc] sm:$0xff]
    %v6105 = vld [vmem:[%s5811 + $0x804] sm:$0xff]
    %v6106 = vld [vmem:[%s5811 + $0x80c] sm:$0xff]
    %v6107 = vld [vmem:[%s5811 + $0x814] sm:$0xf]
    %v6108 = vld [vmem:[%s5811 + $0x818] sm:$0xff]
    %v6109 = vld [vmem:[%s5811 + $0x820] sm:$0xff]
    %v6110 = vld [vmem:[%s5811 + $0x828] sm:$0xff]
    %v6111 = vld [vmem:[%s5811 + $0x830] sm:$0xf]
    %v6112 = vld [vmem:[%s5811 + $0x834] sm:$0xff]
    %v6113 = vld [vmem:[%s5811 + $0x83c] sm:$0xff]
    %v6114 = vld [vmem:[%s5811 + $0x844] sm:$0xff]
    %v6115 = vld [vmem:[%s5811 + $0x84c] sm:$0xf]
    %v6116 = vld [vmem:[%s5811 + $0x850] sm:$0xff]
    %v6117 = vld [vmem:[%s5811 + $0x858] sm:$0xff]
    %v6118 = vld [vmem:[%s5811 + $0x860] sm:$0xff]
    %v6119 = vld [vmem:[%s5811 + $0x868] sm:$0xf]
    %v6120 = vld [vmem:[%s5811 + $0x86c] sm:$0xff]
    %v6121 = vld [vmem:[%s5811 + $0x874] sm:$0xff]
    %v6122 = vld [vmem:[%s5811 + $0x87c] sm:$0xff]
    %v6123 = vld [vmem:[%s5811 + $0x884] sm:$0xf]
    %v6124 = vld [vmem:[%s5811 + $0x888] sm:$0xff]
    %v6125 = vld [vmem:[%s5811 + $0x890] sm:$0xff]
    %v6126 = vld [vmem:[%s5811 + $0x898] sm:$0xff]
    %v6127 = vld [vmem:[%s5811 + $0x8a0] sm:$0xf]
    %v6128 = vld [vmem:[%s5811 + $0x8a4] sm:$0xff]
    %v6129 = vld [vmem:[%s5811 + $0x8ac] sm:$0xff]
    %v6130 = vld [vmem:[%s5811 + $0x8b4] sm:$0xff]
    %v6131 = vld [vmem:[%s5811 + $0x8bc] sm:$0xf]
    %v6132 = vld [vmem:[%s5811 + $0x8c0] sm:$0xff]
    %v6133 = vld [vmem:[%s5811 + $0x8c8] sm:$0xff]
    %v6134 = vld [vmem:[%s5811 + $0x8d0] sm:$0xff]
    %v6135 = vld [vmem:[%s5811 + $0x8d8] sm:$0xf]
    %v6136 = vld [vmem:[%s5811 + $0x8dc] sm:$0xff]
    %v6137 = vld [vmem:[%s5811 + $0x8e4] sm:$0xff]
    %v6138 = vld [vmem:[%s5811 + $0x8ec] sm:$0xff]
    %v6139 = vld [vmem:[%s5811 + $0x8f4] sm:$0xf]
    %v6140 = vld [vmem:[%s5811 + $0x8f8] sm:$0xff]
    %v6141 = vld [vmem:[%s5811 + $0x900] sm:$0xff]
    %v6142 = vld [vmem:[%s5811 + $0x908] sm:$0xff]
    %v6143 = vld [vmem:[%s5811 + $0x910] sm:$0xf]
    %v6144 = vld [vmem:[%s5811 + $0x914] sm:$0xff]
    %v6145 = vld [vmem:[%s5811 + $0x91c] sm:$0xff]
    %v6146 = vld [vmem:[%s5811 + $0x924] sm:$0xff]
    %v6147 = vld [vmem:[%s5811 + $0x92c] sm:$0xf]
    %v6148 = vld [vmem:[%s5811 + $0x930] sm:$0xff]
    %v6149 = vld [vmem:[%s5811 + $0x938] sm:$0xff]
    %v6150 = vld [vmem:[%s5811 + $0x940] sm:$0xff]
    %v6151 = vld [vmem:[%s5811 + $0x948] sm:$0xf]
    %v6152 = vld [vmem:[%s5811 + $0x94c] sm:$0xff]
    %v6153 = vld [vmem:[%s5811 + $0x954] sm:$0xff]
    %v6154 = vld [vmem:[%s5811 + $0x95c] sm:$0xff]
    %v6155 = vld [vmem:[%s5811 + $0x964] sm:$0xf]
    %v6156 = vld [vmem:[%s5811 + $0x968] sm:$0xff]
    %v6157 = vld [vmem:[%s5811 + $0x970] sm:$0xff]
    %v6158 = vld [vmem:[%s5811 + $0x978] sm:$0xff]
    %v6159 = vld [vmem:[%s5811 + $0x980] sm:$0xf]
    %v6160 = vld [vmem:[%s5811 + $0x984] sm:$0xff]
    %v6161 = vld [vmem:[%s5811 + $0x98c] sm:$0xff]
    %v6162 = vld [vmem:[%s5811 + $0x994] sm:$0xff]
    %v6163 = vld [vmem:[%s5811 + $0x99c] sm:$0xf]
    %v6164 = vld [vmem:[%s5811 + $0x9a0] sm:$0xff]
    %v6165 = vld [vmem:[%s5811 + $0x9a8] sm:$0xff]
    %v6166 = vld [vmem:[%s5811 + $0x9b0] sm:$0xff]
    %v6167 = vld [vmem:[%s5811 + $0x9b8] sm:$0xf]
    %v6168 = vld [vmem:[%s5811 + $0x9bc] sm:$0xff]
    %v6169 = vld [vmem:[%s5811 + $0x9c4] sm:$0xff]
    %v6170 = vld [vmem:[%s5811 + $0x9cc] sm:$0xff]
    %v6171 = vld [vmem:[%s5811 + $0x9d4] sm:$0xf]
    %v6172 = vld [vmem:[%s5811 + $0x9d8] sm:$0xff]
    %v6173 = vld [vmem:[%s5811 + $0x9e0] sm:$0xff]
    %v6174 = vld [vmem:[%s5811 + $0x9e8] sm:$0xff]
    %v6175 = vld [vmem:[%s5811 + $0x9f0] sm:$0xf]
    %v6176 = vld [vmem:[%s5811 + $0x9f4] sm:$0xff]
    %v6177 = vld [vmem:[%s5811 + $0x9fc] sm:$0xff]
    %v6178 = vld [vmem:[%s5811 + $0xa04] sm:$0xff]
    %v6179 = vld [vmem:[%s5811 + $0xa0c] sm:$0xf]
    %v6180 = vld [vmem:[%s5811 + $0xa10] sm:$0xff]
    %v6181 = vld [vmem:[%s5811 + $0xa18] sm:$0xff]
    %v6182 = vld [vmem:[%s5811 + $0xa20] sm:$0xff]
    %v6183 = vld [vmem:[%s5811 + $0xa28] sm:$0xf]
    %v6184 = vld [vmem:[%s5811 + $0xa2c] sm:$0xff]
    %v6185 = vld [vmem:[%s5811 + $0xa34] sm:$0xff]
    %v6186 = vld [vmem:[%s5811 + $0xa3c] sm:$0xff]
    %v6187 = vld [vmem:[%s5811 + $0xa44] sm:$0xf]
    %v6188 = vld [vmem:[%s5811 + $0xa48] sm:$0xff]
    %v6189 = vld [vmem:[%s5811 + $0xa50] sm:$0xff]
    %v6190 = vld [vmem:[%s5811 + $0xa58] sm:$0xff]
    %v6191 = vld [vmem:[%s5811 + $0xa60] sm:$0xf]
    %v6192 = vld [vmem:[%s5811 + $0xa64] sm:$0xff]
    %v6193 = vld [vmem:[%s5811 + $0xa6c] sm:$0xff]
    %v6194 = vld [vmem:[%s5811 + $0xa74] sm:$0xff]
    %v6195 = vld [vmem:[%s5811 + $0xa7c] sm:$0xf]
    %v6196 = vld [vmem:[%s5811 + $0xa80] sm:$0xff]
    %v6197 = vld [vmem:[%s5811 + $0xa88] sm:$0xff]
    %v6198 = vld [vmem:[%s5811 + $0xa90] sm:$0xff]
    %v6199 = vld [vmem:[%s5811 + $0xa98] sm:$0xf]
    %v6200 = vld [vmem:[%s5811 + $0xa9c] sm:$0xff]
    %v6201 = vld [vmem:[%s5811 + $0xaa4] sm:$0xff]
    %v6202 = vld [vmem:[%s5811 + $0xaac] sm:$0xff]
    %v6203 = vld [vmem:[%s5811 + $0xab4] sm:$0xf]
    %v6596 = vunpack.c.l.b16 %v5812
    %v6597 = vunpack.c.h.b16 %v5812
    %v6598 = vunpack.c.l.b16 %v5813
    %v6599 = vunpack.c.h.b16 %v5813
    %v6600 = vunpack.c.l.b16 %v5814
    %v6601 = vunpack.c.h.b16 %v5814
    %v6602 = vunpack.c.l.b16 %v5815
    %v6603 = vunpack.c.l.b16 %v5816
    %v6604 = vunpack.c.h.b16 %v5816
    %v6605 = vunpack.c.l.b16 %v5817
    %v6606 = vunpack.c.h.b16 %v5817
    %v6607 = vunpack.c.l.b16 %v5818
    %v6608 = vunpack.c.h.b16 %v5818
    %v6609 = vunpack.c.l.b16 %v5819
    %v6610 = vunpack.c.l.b16 %v5820
    %v6611 = vunpack.c.h.b16 %v5820
    %v6612 = vunpack.c.l.b16 %v5821
    %v6613 = vunpack.c.h.b16 %v5821
    %v6614 = vunpack.c.l.b16 %v5822
    %v6615 = vunpack.c.h.b16 %v5822
    %v6616 = vunpack.c.l.b16 %v5823
    %v6617 = vunpack.c.l.b16 %v5824
    %v6618 = vunpack.c.h.b16 %v5824
    %v6619 = vunpack.c.l.b16 %v5825
    %v6620 = vunpack.c.h.b16 %v5825
    %v6621 = vunpack.c.l.b16 %v5826
    %v6622 = vunpack.c.h.b16 %v5826
    %v6623 = vunpack.c.l.b16 %v5827
    %v6624 = vunpack.c.l.b16 %v5828
    %v6625 = vunpack.c.h.b16 %v5828
    %v6626 = vunpack.c.l.b16 %v5829
    %v6627 = vunpack.c.h.b16 %v5829
    %v6628 = vunpack.c.l.b16 %v5830
    %v6629 = vunpack.c.h.b16 %v5830
    %v6630 = vunpack.c.l.b16 %v5831
    %v6631 = vunpack.c.l.b16 %v5832
    %v6632 = vunpack.c.h.b16 %v5832
    %v6633 = vunpack.c.l.b16 %v5833
    %v6634 = vunpack.c.h.b16 %v5833
    %v6635 = vunpack.c.l.b16 %v5834
    %v6636 = vunpack.c.h.b16 %v5834
    %v6637 = vunpack.c.l.b16 %v5835
    %v6638 = vunpack.c.l.b16 %v5836
    %v6639 = vunpack.c.h.b16 %v5836
    %v6640 = vunpack.c.l.b16 %v5837
    %v6641 = vunpack.c.h.b16 %v5837
    %v6642 = vunpack.c.l.b16 %v5838
    %v6643 = vunpack.c.h.b16 %v5838
    %v6644 = vunpack.c.l.b16 %v5839
    %v6645 = vunpack.c.l.b16 %v5840
    %v6646 = vunpack.c.h.b16 %v5840
    %v6647 = vunpack.c.l.b16 %v5841
    %v6648 = vunpack.c.h.b16 %v5841
    %v6649 = vunpack.c.l.b16 %v5842
    %v6650 = vunpack.c.h.b16 %v5842
    %v6651 = vunpack.c.l.b16 %v5843
    %v6652 = vunpack.c.l.b16 %v5844
    %v6653 = vunpack.c.h.b16 %v5844
    %v6654 = vunpack.c.l.b16 %v5845
    %v6655 = vunpack.c.h.b16 %v5845
    %v6656 = vunpack.c.l.b16 %v5846
    %v6657 = vunpack.c.h.b16 %v5846
    %v6658 = vunpack.c.l.b16 %v5847
    %v6659 = vunpack.c.l.b16 %v5848
    %v6660 = vunpack.c.h.b16 %v5848
    %v6661 = vunpack.c.l.b16 %v5849
    %v6662 = vunpack.c.h.b16 %v5849
    %v6663 = vunpack.c.l.b16 %v5850
    %v6664 = vunpack.c.h.b16 %v5850
    %v6665 = vunpack.c.l.b16 %v5851
    %v6666 = vunpack.c.l.b16 %v5852
    %v6667 = vunpack.c.h.b16 %v5852
    %v6668 = vunpack.c.l.b16 %v5853
    %v6669 = vunpack.c.h.b16 %v5853
    %v6670 = vunpack.c.l.b16 %v5854
    %v6671 = vunpack.c.h.b16 %v5854
    %v6672 = vunpack.c.l.b16 %v5855
    %v6673 = vunpack.c.l.b16 %v5856
    %v6674 = vunpack.c.h.b16 %v5856
    %v6675 = vunpack.c.l.b16 %v5857
    %v6676 = vunpack.c.h.b16 %v5857
    %v6677 = vunpack.c.l.b16 %v5858
    %v6678 = vunpack.c.h.b16 %v5858
    %v6679 = vunpack.c.l.b16 %v5859
    %v6680 = vunpack.c.l.b16 %v5860
    %v6681 = vunpack.c.h.b16 %v5860
    %v6682 = vunpack.c.l.b16 %v5861
    %v6683 = vunpack.c.h.b16 %v5861
    %v6684 = vunpack.c.l.b16 %v5862
    %v6685 = vunpack.c.h.b16 %v5862
    %v6686 = vunpack.c.l.b16 %v5863
    %v6687 = vunpack.c.l.b16 %v5864
    %v6688 = vunpack.c.h.b16 %v5864
    %v6689 = vunpack.c.l.b16 %v5865
    %v6690 = vunpack.c.h.b16 %v5865
    %v6691 = vunpack.c.l.b16 %v5866
    %v6692 = vunpack.c.h.b16 %v5866
    %v6693 = vunpack.c.l.b16 %v5867
    %v6694 = vunpack.c.l.b16 %v5868
    %v6695 = vunpack.c.h.b16 %v5868
    %v6696 = vunpack.c.l.b16 %v5869
    %v6697 = vunpack.c.h.b16 %v5869
    %v6698 = vunpack.c.l.b16 %v5870
    %v6699 = vunpack.c.h.b16 %v5870
    %v6700 = vunpack.c.l.b16 %v5871
    %v6701 = vunpack.c.l.b16 %v5872
    %v6702 = vunpack.c.h.b16 %v5872
    %v6703 = vunpack.c.l.b16 %v5873
    %v6704 = vunpack.c.h.b16 %v5873
    %v6705 = vunpack.c.l.b16 %v5874
    %v6706 = vunpack.c.h.b16 %v5874
    %v6707 = vunpack.c.l.b16 %v5875
    %v6708 = vunpack.c.l.b16 %v5876
    %v6709 = vunpack.c.h.b16 %v5876
    %v6710 = vunpack.c.l.b16 %v5877
    %v6711 = vunpack.c.h.b16 %v5877
    %v6712 = vunpack.c.l.b16 %v5878
    %v6713 = vunpack.c.h.b16 %v5878
    %v6714 = vunpack.c.l.b16 %v5879
    %v6715 = vunpack.c.l.b16 %v5880
    %v6716 = vunpack.c.h.b16 %v5880
    %v6717 = vunpack.c.l.b16 %v5881
    %v6718 = vunpack.c.h.b16 %v5881
    %v6719 = vunpack.c.l.b16 %v5882
    %v6720 = vunpack.c.h.b16 %v5882
    %v6721 = vunpack.c.l.b16 %v5883
    %v6722 = vunpack.c.l.b16 %v5884
    %v6723 = vunpack.c.h.b16 %v5884
    %v6724 = vunpack.c.l.b16 %v5885
    %v6725 = vunpack.c.h.b16 %v5885
    %v6726 = vunpack.c.l.b16 %v5886
    %v6727 = vunpack.c.h.b16 %v5886
    %v6728 = vunpack.c.l.b16 %v5887
    %v6729 = vunpack.c.l.b16 %v5888
    %v6730 = vunpack.c.h.b16 %v5888
    %v6731 = vunpack.c.l.b16 %v5889
    %v6732 = vunpack.c.h.b16 %v5889
    %v6733 = vunpack.c.l.b16 %v5890
    %v6734 = vunpack.c.h.b16 %v5890
    %v6735 = vunpack.c.l.b16 %v5891
    %v6736 = vunpack.c.l.b16 %v5892
    %v6737 = vunpack.c.h.b16 %v5892
    %v6738 = vunpack.c.l.b16 %v5893
    %v6739 = vunpack.c.h.b16 %v5893
    %v6740 = vunpack.c.l.b16 %v5894
    %v6741 = vunpack.c.h.b16 %v5894
    %v6742 = vunpack.c.l.b16 %v5895
    %v6743 = vunpack.c.l.b16 %v5896
    %v6744 = vunpack.c.h.b16 %v5896
    %v6745 = vunpack.c.l.b16 %v5897
    %v6746 = vunpack.c.h.b16 %v5897
    %v6747 = vunpack.c.l.b16 %v5898
    %v6748 = vunpack.c.h.b16 %v5898
    %v6749 = vunpack.c.l.b16 %v5899
    %v6750 = vunpack.c.l.b16 %v5900
    %v6751 = vunpack.c.h.b16 %v5900
    %v6752 = vunpack.c.l.b16 %v5901
    %v6753 = vunpack.c.h.b16 %v5901
    %v6754 = vunpack.c.l.b16 %v5902
    %v6755 = vunpack.c.h.b16 %v5902
    %v6756 = vunpack.c.l.b16 %v5903
    %v6757 = vunpack.c.l.b16 %v5904
    %v6758 = vunpack.c.h.b16 %v5904
    %v6759 = vunpack.c.l.b16 %v5905
    %v6760 = vunpack.c.h.b16 %v5905
    %v6761 = vunpack.c.l.b16 %v5906
    %v6762 = vunpack.c.h.b16 %v5906
    %v6763 = vunpack.c.l.b16 %v5907
    %v6764 = vunpack.c.l.b16 %v5908
    %v6765 = vunpack.c.h.b16 %v5908
    %v6766 = vunpack.c.l.b16 %v5909
    %v6767 = vunpack.c.h.b16 %v5909
    %v6768 = vunpack.c.l.b16 %v5910
    %v6769 = vunpack.c.h.b16 %v5910
    %v6770 = vunpack.c.l.b16 %v5911
    %v6771 = vunpack.c.l.b16 %v5912
    %v6772 = vunpack.c.h.b16 %v5912
    %v6773 = vunpack.c.l.b16 %v5913
    %v6774 = vunpack.c.h.b16 %v5913
    %v6775 = vunpack.c.l.b16 %v5914
    %v6776 = vunpack.c.h.b16 %v5914
    %v6777 = vunpack.c.l.b16 %v5915
    %v6778 = vunpack.c.l.b16 %v5916
    %v6779 = vunpack.c.h.b16 %v5916
    %v6780 = vunpack.c.l.b16 %v5917
    %v6781 = vunpack.c.h.b16 %v5917
    %v6782 = vunpack.c.l.b16 %v5918
    %v6783 = vunpack.c.h.b16 %v5918
    %v6784 = vunpack.c.l.b16 %v5919
    %v6785 = vunpack.c.l.b16 %v5920
    %v6786 = vunpack.c.h.b16 %v5920
    %v6787 = vunpack.c.l.b16 %v5921
    %v6788 = vunpack.c.h.b16 %v5921
    %v6789 = vunpack.c.l.b16 %v5922
    %v6790 = vunpack.c.h.b16 %v5922
    %v6791 = vunpack.c.l.b16 %v5923
    %v6792 = vunpack.c.l.b16 %v5924
    %v6793 = vunpack.c.h.b16 %v5924
    %v6794 = vunpack.c.l.b16 %v5925
    %v6795 = vunpack.c.h.b16 %v5925
    %v6796 = vunpack.c.l.b16 %v5926
    %v6797 = vunpack.c.h.b16 %v5926
    %v6798 = vunpack.c.l.b16 %v5927
    %v6799 = vunpack.c.l.b16 %v5928
    %v6800 = vunpack.c.h.b16 %v5928
    %v6801 = vunpack.c.l.b16 %v5929
    %v6802 = vunpack.c.h.b16 %v5929
    %v6803 = vunpack.c.l.b16 %v5930
    %v6804 = vunpack.c.h.b16 %v5930
    %v6805 = vunpack.c.l.b16 %v5931
    %v6806 = vunpack.c.l.b16 %v5932
    %v6807 = vunpack.c.h.b16 %v5932
    %v6808 = vunpack.c.l.b16 %v5933
    %v6809 = vunpack.c.h.b16 %v5933
    %v6810 = vunpack.c.l.b16 %v5934
    %v6811 = vunpack.c.h.b16 %v5934
    %v6812 = vunpack.c.l.b16 %v5935
    %v6813 = vunpack.c.l.b16 %v5936
    %v6814 = vunpack.c.h.b16 %v5936
    %v6815 = vunpack.c.l.b16 %v5937
    %v6816 = vunpack.c.h.b16 %v5937
    %v6817 = vunpack.c.l.b16 %v5938
    %v6818 = vunpack.c.h.b16 %v5938
    %v6819 = vunpack.c.l.b16 %v5939
    %v6820 = vunpack.c.l.b16 %v5940
    %v6821 = vunpack.c.h.b16 %v5940
    %v6822 = vunpack.c.l.b16 %v5941
    %v6823 = vunpack.c.h.b16 %v5941
    %v6824 = vunpack.c.l.b16 %v5942
    %v6825 = vunpack.c.h.b16 %v5942
    %v6826 = vunpack.c.l.b16 %v5943
    %v6827 = vunpack.c.l.b16 %v5944
    %v6828 = vunpack.c.h.b16 %v5944
    %v6829 = vunpack.c.l.b16 %v5945
    %v6830 = vunpack.c.h.b16 %v5945
    %v6831 = vunpack.c.l.b16 %v5946
    %v6832 = vunpack.c.h.b16 %v5946
    %v6833 = vunpack.c.l.b16 %v5947
    %v6834 = vunpack.c.l.b16 %v5948
    %v6835 = vunpack.c.h.b16 %v5948
    %v6836 = vunpack.c.l.b16 %v5949
    %v6837 = vunpack.c.h.b16 %v5949
    %v6838 = vunpack.c.l.b16 %v5950
    %v6839 = vunpack.c.h.b16 %v5950
    %v6840 = vunpack.c.l.b16 %v5951
    %v6841 = vunpack.c.l.b16 %v5952
    %v6842 = vunpack.c.h.b16 %v5952
    %v6843 = vunpack.c.l.b16 %v5953
    %v6844 = vunpack.c.h.b16 %v5953
    %v6845 = vunpack.c.l.b16 %v5954
    %v6846 = vunpack.c.h.b16 %v5954
    %v6847 = vunpack.c.l.b16 %v5955
    %v6848 = vunpack.c.l.b16 %v5956
    %v6849 = vunpack.c.h.b16 %v5956
    %v6850 = vunpack.c.l.b16 %v5957
    %v6851 = vunpack.c.h.b16 %v5957
    %v6852 = vunpack.c.l.b16 %v5958
    %v6853 = vunpack.c.h.b16 %v5958
    %v6854 = vunpack.c.l.b16 %v5959
    %v6855 = vunpack.c.l.b16 %v5960
    %v6856 = vunpack.c.h.b16 %v5960
    %v6857 = vunpack.c.l.b16 %v5961
    %v6858 = vunpack.c.h.b16 %v5961
    %v6859 = vunpack.c.l.b16 %v5962
    %v6860 = vunpack.c.h.b16 %v5962
    %v6861 = vunpack.c.l.b16 %v5963
    %v6862 = vunpack.c.l.b16 %v5964
    %v6863 = vunpack.c.h.b16 %v5964
    %v6864 = vunpack.c.l.b16 %v5965
    %v6865 = vunpack.c.h.b16 %v5965
    %v6866 = vunpack.c.l.b16 %v5966
    %v6867 = vunpack.c.h.b16 %v5966
    %v6868 = vunpack.c.l.b16 %v5967
    %v6869 = vunpack.c.l.b16 %v5968
    %v6870 = vunpack.c.h.b16 %v5968
    %v6871 = vunpack.c.l.b16 %v5969
    %v6872 = vunpack.c.h.b16 %v5969
    %v6873 = vunpack.c.l.b16 %v5970
    %v6874 = vunpack.c.h.b16 %v5970
    %v6875 = vunpack.c.l.b16 %v5971
    %v6876 = vunpack.c.l.b16 %v5972
    %v6877 = vunpack.c.h.b16 %v5972
    %v6878 = vunpack.c.l.b16 %v5973
    %v6879 = vunpack.c.h.b16 %v5973
    %v6880 = vunpack.c.l.b16 %v5974
    %v6881 = vunpack.c.h.b16 %v5974
    %v6882 = vunpack.c.l.b16 %v5975
    %v6883 = vunpack.c.l.b16 %v5976
    %v6884 = vunpack.c.h.b16 %v5976
    %v6885 = vunpack.c.l.b16 %v5977
    %v6886 = vunpack.c.h.b16 %v5977
    %v6887 = vunpack.c.l.b16 %v5978
    %v6888 = vunpack.c.h.b16 %v5978
    %v6889 = vunpack.c.l.b16 %v5979
    %v6890 = vunpack.c.l.b16 %v5980
    %v6891 = vunpack.c.h.b16 %v5980
    %v6892 = vunpack.c.l.b16 %v5981
    %v6893 = vunpack.c.h.b16 %v5981
    %v6894 = vunpack.c.l.b16 %v5982
    %v6895 = vunpack.c.h.b16 %v5982
    %v6896 = vunpack.c.l.b16 %v5983
    %v6897 = vunpack.c.l.b16 %v5984
    %v6898 = vunpack.c.h.b16 %v5984
    %v6899 = vunpack.c.l.b16 %v5985
    %v6900 = vunpack.c.h.b16 %v5985
    %v6901 = vunpack.c.l.b16 %v5986
    %v6902 = vunpack.c.h.b16 %v5986
    %v6903 = vunpack.c.l.b16 %v5987
    %v6904 = vunpack.c.l.b16 %v5988
    %v6905 = vunpack.c.h.b16 %v5988
    %v6906 = vunpack.c.l.b16 %v5989
    %v6907 = vunpack.c.h.b16 %v5989
    %v6908 = vunpack.c.l.b16 %v5990
    %v6909 = vunpack.c.h.b16 %v5990
    %v6910 = vunpack.c.l.b16 %v5991
    %v6911 = vunpack.c.l.b16 %v5992
    %v6912 = vunpack.c.h.b16 %v5992
    %v6913 = vunpack.c.l.b16 %v5993
    %v6914 = vunpack.c.h.b16 %v5993
    %v6915 = vunpack.c.l.b16 %v5994
    %v6916 = vunpack.c.h.b16 %v5994
    %v6917 = vunpack.c.l.b16 %v5995
    %v6918 = vunpack.c.l.b16 %v5996
    %v6919 = vunpack.c.h.b16 %v5996
    %v6920 = vunpack.c.l.b16 %v5997
    %v6921 = vunpack.c.h.b16 %v5997
    %v6922 = vunpack.c.l.b16 %v5998
    %v6923 = vunpack.c.h.b16 %v5998
    %v6924 = vunpack.c.l.b16 %v5999
    %v6925 = vunpack.c.l.b16 %v6000
    %v6926 = vunpack.c.h.b16 %v6000
    %v6927 = vunpack.c.l.b16 %v6001
    %v6928 = vunpack.c.h.b16 %v6001
    %v6929 = vunpack.c.l.b16 %v6002
    %v6930 = vunpack.c.h.b16 %v6002
    %v6931 = vunpack.c.l.b16 %v6003
    %v6932 = vunpack.c.l.b16 %v6004
    %v6933 = vunpack.c.h.b16 %v6004
    %v6934 = vunpack.c.l.b16 %v6005
    %v6935 = vunpack.c.h.b16 %v6005
    %v6936 = vunpack.c.l.b16 %v6006
    %v6937 = vunpack.c.h.b16 %v6006
    %v6938 = vunpack.c.l.b16 %v6007
    %v6939 = vunpack.c.l.b16 %v6008
    %v6940 = vunpack.c.h.b16 %v6008
    %v6941 = vunpack.c.l.b16 %v6009
    %v6942 = vunpack.c.h.b16 %v6009
    %v6943 = vunpack.c.l.b16 %v6010
    %v6944 = vunpack.c.h.b16 %v6010
    %v6945 = vunpack.c.l.b16 %v6011
    %v6946 = vunpack.c.l.b16 %v6012
    %v6947 = vunpack.c.h.b16 %v6012
    %v6948 = vunpack.c.l.b16 %v6013
    %v6949 = vunpack.c.h.b16 %v6013
    %v6950 = vunpack.c.l.b16 %v6014
    %v6951 = vunpack.c.h.b16 %v6014
    %v6952 = vunpack.c.l.b16 %v6015
    %v6953 = vunpack.c.l.b16 %v6016
    %v6954 = vunpack.c.h.b16 %v6016
    %v6955 = vunpack.c.l.b16 %v6017
    %v6956 = vunpack.c.h.b16 %v6017
    %v6957 = vunpack.c.l.b16 %v6018
    %v6958 = vunpack.c.h.b16 %v6018
    %v6959 = vunpack.c.l.b16 %v6019
    %v6960 = vunpack.c.l.b16 %v6020
    %v6961 = vunpack.c.h.b16 %v6020
    %v6962 = vunpack.c.l.b16 %v6021
    %v6963 = vunpack.c.h.b16 %v6021
    %v6964 = vunpack.c.l.b16 %v6022
    %v6965 = vunpack.c.h.b16 %v6022
    %v6966 = vunpack.c.l.b16 %v6023
    %v6967 = vunpack.c.l.b16 %v6024
    %v6968 = vunpack.c.h.b16 %v6024
    %v6969 = vunpack.c.l.b16 %v6025
    %v6970 = vunpack.c.h.b16 %v6025
    %v6971 = vunpack.c.l.b16 %v6026
    %v6972 = vunpack.c.h.b16 %v6026
    %v6973 = vunpack.c.l.b16 %v6027
    %v6974 = vunpack.c.l.b16 %v6028
    %v6975 = vunpack.c.h.b16 %v6028
    %v6976 = vunpack.c.l.b16 %v6029
    %v6977 = vunpack.c.h.b16 %v6029
    %v6978 = vunpack.c.l.b16 %v6030
    %v6979 = vunpack.c.h.b16 %v6030
    %v6980 = vunpack.c.l.b16 %v6031
    %v6981 = vunpack.c.l.b16 %v6032
    %v6982 = vunpack.c.h.b16 %v6032
    %v6983 = vunpack.c.l.b16 %v6033
    %v6984 = vunpack.c.h.b16 %v6033
    %v6985 = vunpack.c.l.b16 %v6034
    %v6986 = vunpack.c.h.b16 %v6034
    %v6987 = vunpack.c.l.b16 %v6035
    %v6988 = vunpack.c.l.b16 %v6036
    %v6989 = vunpack.c.h.b16 %v6036
    %v6990 = vunpack.c.l.b16 %v6037
    %v6991 = vunpack.c.h.b16 %v6037
    %v6992 = vunpack.c.l.b16 %v6038
    %v6993 = vunpack.c.h.b16 %v6038
    %v6994 = vunpack.c.l.b16 %v6039
    %v6995 = vunpack.c.l.b16 %v6040
    %v6996 = vunpack.c.h.b16 %v6040
    %v6997 = vunpack.c.l.b16 %v6041
    %v6998 = vunpack.c.h.b16 %v6041
    %v6999 = vunpack.c.l.b16 %v6042
    %v7000 = vunpack.c.h.b16 %v6042
    %v7001 = vunpack.c.l.b16 %v6043
    %v7002 = vunpack.c.l.b16 %v6044
    %v7003 = vunpack.c.h.b16 %v6044
    %v7004 = vunpack.c.l.b16 %v6045
    %v7005 = vunpack.c.h.b16 %v6045
    %v7006 = vunpack.c.l.b16 %v6046
    %v7007 = vunpack.c.h.b16 %v6046
    %v7008 = vunpack.c.l.b16 %v6047
    %v7009 = vunpack.c.l.b16 %v6048
    %v7010 = vunpack.c.h.b16 %v6048
    %v7011 = vunpack.c.l.b16 %v6049
    %v7012 = vunpack.c.h.b16 %v6049
    %v7013 = vunpack.c.l.b16 %v6050
    %v7014 = vunpack.c.h.b16 %v6050
    %v7015 = vunpack.c.l.b16 %v6051
    %v7016 = vunpack.c.l.b16 %v6052
    %v7017 = vunpack.c.h.b16 %v6052
    %v7018 = vunpack.c.l.b16 %v6053
    %v7019 = vunpack.c.h.b16 %v6053
    %v7020 = vunpack.c.l.b16 %v6054
    %v7021 = vunpack.c.h.b16 %v6054
    %v7022 = vunpack.c.l.b16 %v6055
    %v7023 = vunpack.c.l.b16 %v6056
    %v7024 = vunpack.c.h.b16 %v6056
    %v7025 = vunpack.c.l.b16 %v6057
    %v7026 = vunpack.c.h.b16 %v6057
    %v7027 = vunpack.c.l.b16 %v6058
    %v7028 = vunpack.c.h.b16 %v6058
    %v7029 = vunpack.c.l.b16 %v6059
    %v7030 = vunpack.c.l.b16 %v6060
    %v7031 = vunpack.c.h.b16 %v6060
    %v7032 = vunpack.c.l.b16 %v6061
    %v7033 = vunpack.c.h.b16 %v6061
    %v7034 = vunpack.c.l.b16 %v6062
    %v7035 = vunpack.c.h.b16 %v6062
    %v7036 = vunpack.c.l.b16 %v6063
    %v7037 = vunpack.c.l.b16 %v6064
    %v7038 = vunpack.c.h.b16 %v6064
    %v7039 = vunpack.c.l.b16 %v6065
    %v7040 = vunpack.c.h.b16 %v6065
    %v7041 = vunpack.c.l.b16 %v6066
    %v7042 = vunpack.c.h.b16 %v6066
    %v7043 = vunpack.c.l.b16 %v6067
    %v7044 = vunpack.c.l.b16 %v6068
    %v7045 = vunpack.c.h.b16 %v6068
    %v7046 = vunpack.c.l.b16 %v6069
    %v7047 = vunpack.c.h.b16 %v6069
    %v7048 = vunpack.c.l.b16 %v6070
    %v7049 = vunpack.c.h.b16 %v6070
    %v7050 = vunpack.c.l.b16 %v6071
    %v7051 = vunpack.c.l.b16 %v6072
    %v7052 = vunpack.c.h.b16 %v6072
    %v7053 = vunpack.c.l.b16 %v6073
    %v7054 = vunpack.c.h.b16 %v6073
    %v7055 = vunpack.c.l.b16 %v6074
    %v7056 = vunpack.c.h.b16 %v6074
    %v7057 = vunpack.c.l.b16 %v6075
    %v7058 = vunpack.c.l.b16 %v6076
    %v7059 = vunpack.c.h.b16 %v6076
    %v7060 = vunpack.c.l.b16 %v6077
    %v7061 = vunpack.c.h.b16 %v6077
    %v7062 = vunpack.c.l.b16 %v6078
    %v7063 = vunpack.c.h.b16 %v6078
    %v7064 = vunpack.c.l.b16 %v6079
    %v7065 = vunpack.c.l.b16 %v6080
    %v7066 = vunpack.c.h.b16 %v6080
    %v7067 = vunpack.c.l.b16 %v6081
    %v7068 = vunpack.c.h.b16 %v6081
    %v7069 = vunpack.c.l.b16 %v6082
    %v7070 = vunpack.c.h.b16 %v6082
    %v7071 = vunpack.c.l.b16 %v6083
    %v7072 = vunpack.c.l.b16 %v6084
    %v7073 = vunpack.c.h.b16 %v6084
    %v7074 = vunpack.c.l.b16 %v6085
    %v7075 = vunpack.c.h.b16 %v6085
    %v7076 = vunpack.c.l.b16 %v6086
    %v7077 = vunpack.c.h.b16 %v6086
    %v7078 = vunpack.c.l.b16 %v6087
    %v7079 = vunpack.c.l.b16 %v6088
    %v7080 = vunpack.c.h.b16 %v6088
    %v7081 = vunpack.c.l.b16 %v6089
    %v7082 = vunpack.c.h.b16 %v6089
    %v7083 = vunpack.c.l.b16 %v6090
    %v7084 = vunpack.c.h.b16 %v6090
    %v7085 = vunpack.c.l.b16 %v6091
    %v7086 = vunpack.c.l.b16 %v6092
    %v7087 = vunpack.c.h.b16 %v6092
    %v7088 = vunpack.c.l.b16 %v6093
    %v7089 = vunpack.c.h.b16 %v6093
    %v7090 = vunpack.c.l.b16 %v6094
    %v7091 = vunpack.c.h.b16 %v6094
    %v7092 = vunpack.c.l.b16 %v6095
    %v7093 = vunpack.c.l.b16 %v6096
    %v7094 = vunpack.c.h.b16 %v6096
    %v7095 = vunpack.c.l.b16 %v6097
    %v7096 = vunpack.c.h.b16 %v6097
    %v7097 = vunpack.c.l.b16 %v6098
    %v7098 = vunpack.c.h.b16 %v6098
    %v7099 = vunpack.c.l.b16 %v6099
    %v7100 = vunpack.c.l.b16 %v6100
    %v7101 = vunpack.c.h.b16 %v6100
    %v7102 = vunpack.c.l.b16 %v6101
    %v7103 = vunpack.c.h.b16 %v6101
    %v7104 = vunpack.c.l.b16 %v6102
    %v7105 = vunpack.c.h.b16 %v6102
    %v7106 = vunpack.c.l.b16 %v6103
    %v7107 = vunpack.c.l.b16 %v6104
    %v7108 = vunpack.c.h.b16 %v6104
    %v7109 = vunpack.c.l.b16 %v6105
    %v7110 = vunpack.c.h.b16 %v6105
    %v7111 = vunpack.c.l.b16 %v6106
    %v7112 = vunpack.c.h.b16 %v6106
    %v7113 = vunpack.c.l.b16 %v6107
    %v7114 = vunpack.c.l.b16 %v6108
    %v7115 = vunpack.c.h.b16 %v6108
    %v7116 = vunpack.c.l.b16 %v6109
    %v7117 = vunpack.c.h.b16 %v6109
    %v7118 = vunpack.c.l.b16 %v6110
    %v7119 = vunpack.c.h.b16 %v6110
    %v7120 = vunpack.c.l.b16 %v6111
    %v7121 = vunpack.c.l.b16 %v6112
    %v7122 = vunpack.c.h.b16 %v6112
    %v7123 = vunpack.c.l.b16 %v6113
    %v7124 = vunpack.c.h.b16 %v6113
    %v7125 = vunpack.c.l.b16 %v6114
    %v7126 = vunpack.c.h.b16 %v6114
    %v7127 = vunpack.c.l.b16 %v6115
    %v7128 = vunpack.c.l.b16 %v6116
    %v7129 = vunpack.c.h.b16 %v6116
    %v7130 = vunpack.c.l.b16 %v6117
    %v7131 = vunpack.c.h.b16 %v6117
    %v7132 = vunpack.c.l.b16 %v6118
    %v7133 = vunpack.c.h.b16 %v6118
    %v7134 = vunpack.c.l.b16 %v6119
    %v7135 = vunpack.c.l.b16 %v6120
    %v7136 = vunpack.c.h.b16 %v6120
    %v7137 = vunpack.c.l.b16 %v6121
    %v7138 = vunpack.c.h.b16 %v6121
    %v7139 = vunpack.c.l.b16 %v6122
    %v7140 = vunpack.c.h.b16 %v6122
    %v7141 = vunpack.c.l.b16 %v6123
    %v7142 = vunpack.c.l.b16 %v6124
    %v7143 = vunpack.c.h.b16 %v6124
    %v7144 = vunpack.c.l.b16 %v6125
    %v7145 = vunpack.c.h.b16 %v6125
    %v7146 = vunpack.c.l.b16 %v6126
    %v7147 = vunpack.c.h.b16 %v6126
    %v7148 = vunpack.c.l.b16 %v6127
    %v7149 = vunpack.c.l.b16 %v6128
    %v7150 = vunpack.c.h.b16 %v6128
    %v7151 = vunpack.c.l.b16 %v6129
    %v7152 = vunpack.c.h.b16 %v6129
    %v7153 = vunpack.c.l.b16 %v6130
    %v7154 = vunpack.c.h.b16 %v6130
    %v7155 = vunpack.c.l.b16 %v6131
    %v7156 = vunpack.c.l.b16 %v6132
    %v7157 = vunpack.c.h.b16 %v6132
    %v7158 = vunpack.c.l.b16 %v6133
    %v7159 = vunpack.c.h.b16 %v6133
    %v7160 = vunpack.c.l.b16 %v6134
    %v7161 = vunpack.c.h.b16 %v6134
    %v7162 = vunpack.c.l.b16 %v6135
    %v7163 = vunpack.c.l.b16 %v6136
    %v7164 = vunpack.c.h.b16 %v6136
    %v7165 = vunpack.c.l.b16 %v6137
    %v7166 = vunpack.c.h.b16 %v6137
    %v7167 = vunpack.c.l.b16 %v6138
    %v7168 = vunpack.c.h.b16 %v6138
    %v7169 = vunpack.c.l.b16 %v6139
    %v7170 = vunpack.c.l.b16 %v6140
    %v7171 = vunpack.c.h.b16 %v6140
    %v7172 = vunpack.c.l.b16 %v6141
    %v7173 = vunpack.c.h.b16 %v6141
    %v7174 = vunpack.c.l.b16 %v6142
    %v7175 = vunpack.c.h.b16 %v6142
    %v7176 = vunpack.c.l.b16 %v6143
    %v7177 = vunpack.c.l.b16 %v6144
    %v7178 = vunpack.c.h.b16 %v6144
    %v7179 = vunpack.c.l.b16 %v6145
    %v7180 = vunpack.c.h.b16 %v6145
    %v7181 = vunpack.c.l.b16 %v6146
    %v7182 = vunpack.c.h.b16 %v6146
    %v7183 = vunpack.c.l.b16 %v6147
    %v7184 = vunpack.c.l.b16 %v6148
    %v7185 = vunpack.c.h.b16 %v6148
    %v7186 = vunpack.c.l.b16 %v6149
    %v7187 = vunpack.c.h.b16 %v6149
    %v7188 = vunpack.c.l.b16 %v6150
    %v7189 = vunpack.c.h.b16 %v6150
    %v7190 = vunpack.c.l.b16 %v6151
    %v7191 = vunpack.c.l.b16 %v6152
    %v7192 = vunpack.c.h.b16 %v6152
    %v7193 = vunpack.c.l.b16 %v6153
    %v7194 = vunpack.c.h.b16 %v6153
    %v7195 = vunpack.c.l.b16 %v6154
    %v7196 = vunpack.c.h.b16 %v6154
    %v7197 = vunpack.c.l.b16 %v6155
    %v7198 = vunpack.c.l.b16 %v6156
    %v7199 = vunpack.c.h.b16 %v6156
    %v7200 = vunpack.c.l.b16 %v6157
    %v7201 = vunpack.c.h.b16 %v6157
    %v7202 = vunpack.c.l.b16 %v6158
    %v7203 = vunpack.c.h.b16 %v6158
    %v7204 = vunpack.c.l.b16 %v6159
    %v7205 = vunpack.c.l.b16 %v6160
    %v7206 = vunpack.c.h.b16 %v6160
    %v7207 = vunpack.c.l.b16 %v6161
    %v7208 = vunpack.c.h.b16 %v6161
    %v7209 = vunpack.c.l.b16 %v6162
    %v7210 = vunpack.c.h.b16 %v6162
    %v7211 = vunpack.c.l.b16 %v6163
    %v7212 = vunpack.c.l.b16 %v6164
    %v7213 = vunpack.c.h.b16 %v6164
    %v7214 = vunpack.c.l.b16 %v6165
    %v7215 = vunpack.c.h.b16 %v6165
    %v7216 = vunpack.c.l.b16 %v6166
    %v7217 = vunpack.c.h.b16 %v6166
    %v7218 = vunpack.c.l.b16 %v6167
    %v7219 = vunpack.c.l.b16 %v6168
    %v7220 = vunpack.c.h.b16 %v6168
    %v7221 = vunpack.c.l.b16 %v6169
    %v7222 = vunpack.c.h.b16 %v6169
    %v7223 = vunpack.c.l.b16 %v6170
    %v7224 = vunpack.c.h.b16 %v6170
    %v7225 = vunpack.c.l.b16 %v6171
    %v7226 = vunpack.c.l.b16 %v6172
    %v7227 = vunpack.c.h.b16 %v6172
    %v7228 = vunpack.c.l.b16 %v6173
    %v7229 = vunpack.c.h.b16 %v6173
    %v7230 = vunpack.c.l.b16 %v6174
    %v7231 = vunpack.c.h.b16 %v6174
    %v7232 = vunpack.c.l.b16 %v6175
    %v7233 = vunpack.c.l.b16 %v6176
    %v7234 = vunpack.c.h.b16 %v6176
    %v7235 = vunpack.c.l.b16 %v6177
    %v7236 = vunpack.c.h.b16 %v6177
    %v7237 = vunpack.c.l.b16 %v6178
    %v7238 = vunpack.c.h.b16 %v6178
    %v7239 = vunpack.c.l.b16 %v6179
    %v7240 = vunpack.c.l.b16 %v6180
    %v7241 = vunpack.c.h.b16 %v6180
    %v7242 = vunpack.c.l.b16 %v6181
    %v7243 = vunpack.c.h.b16 %v6181
    %v7244 = vunpack.c.l.b16 %v6182
    %v7245 = vunpack.c.h.b16 %v6182
    %v7246 = vunpack.c.l.b16 %v6183
    %v7247 = vunpack.c.l.b16 %v6184
    %v7248 = vunpack.c.h.b16 %v6184
    %v7249 = vunpack.c.l.b16 %v6185
    %v7250 = vunpack.c.h.b16 %v6185
    %v7251 = vunpack.c.l.b16 %v6186
    %v7252 = vunpack.c.h.b16 %v6186
    %v7253 = vunpack.c.l.b16 %v6187
    %v7254 = vunpack.c.l.b16 %v6188
    %v7255 = vunpack.c.h.b16 %v6188
    %v7256 = vunpack.c.l.b16 %v6189
    %v7257 = vunpack.c.h.b16 %v6189
    %v7258 = vunpack.c.l.b16 %v6190
    %v7259 = vunpack.c.h.b16 %v6190
    %v7260 = vunpack.c.l.b16 %v6191
    %v7261 = vunpack.c.l.b16 %v6192
    %v7262 = vunpack.c.h.b16 %v6192
    %v7263 = vunpack.c.l.b16 %v6193
    %v7264 = vunpack.c.h.b16 %v6193
    %v7265 = vunpack.c.l.b16 %v6194
    %v7266 = vunpack.c.h.b16 %v6194
    %v7267 = vunpack.c.l.b16 %v6195
    %v7268 = vunpack.c.l.b16 %v6196
    %v7269 = vunpack.c.h.b16 %v6196
    %v7270 = vunpack.c.l.b16 %v6197
    %v7271 = vunpack.c.h.b16 %v6197
    %v7272 = vunpack.c.l.b16 %v6198
    %v7273 = vunpack.c.h.b16 %v6198
    %v7274 = vunpack.c.l.b16 %v6199
    %v7275 = vunpack.c.l.b16 %v6200
    %v7276 = vunpack.c.h.b16 %v6200
    %v7277 = vunpack.c.l.b16 %v6201
    %v7278 = vunpack.c.h.b16 %v6201
    %v7279 = vunpack.c.l.b16 %v6202
    %v7280 = vunpack.c.h.b16 %v6202
    %v7281 = vunpack.c.l.b16 %v6203
    %v7282 = vpack.c.b16 %v6603, %v6596
    %v7283 = vpack.c.b16 %v6604, %v6597
    %v7284 = vpack.c.b16 %v6605, %v6598
    %v7285 = vpack.c.b16 %v6606, %v6599
    %v7286 = vpack.c.b16 %v6607, %v6600
    %v7287 = vpack.c.b16 %v6608, %v6601
    %v7288 = vpack.c.b16 %v6609, %v6602
    %v7289 = vpack.c.b16 %v6617, %v6610
    %v7290 = vpack.c.b16 %v6618, %v6611
    %v7291 = vpack.c.b16 %v6619, %v6612
    %v7292 = vpack.c.b16 %v6620, %v6613
    %v7293 = vpack.c.b16 %v6621, %v6614
    %v7294 = vpack.c.b16 %v6622, %v6615
    %v7295 = vpack.c.b16 %v6623, %v6616
    %v7296 = vpack.c.b16 %v6631, %v6624
    %v7297 = vpack.c.b16 %v6632, %v6625
    %v7298 = vpack.c.b16 %v6633, %v6626
    %v7299 = vpack.c.b16 %v6634, %v6627
    %v7300 = vpack.c.b16 %v6635, %v6628
    %v7301 = vpack.c.b16 %v6636, %v6629
    %v7302 = vpack.c.b16 %v6637, %v6630
    %v7303 = vpack.c.b16 %v6645, %v6638
    %v7304 = vpack.c.b16 %v6646, %v6639
    %v7305 = vpack.c.b16 %v6647, %v6640
    %v7306 = vpack.c.b16 %v6648, %v6641
    %v7307 = vpack.c.b16 %v6649, %v6642
    %v7308 = vpack.c.b16 %v6650, %v6643
    %v7309 = vpack.c.b16 %v6651, %v6644
    %v7310 = vpack.c.b16 %v6659, %v6652
    %v7311 = vpack.c.b16 %v6660, %v6653
    %v7312 = vpack.c.b16 %v6661, %v6654
    %v7313 = vpack.c.b16 %v6662, %v6655
    %v7314 = vpack.c.b16 %v6663, %v6656
    %v7315 = vpack.c.b16 %v6664, %v6657
    %v7316 = vpack.c.b16 %v6665, %v6658
    %v7317 = vpack.c.b16 %v6673, %v6666
    %v7318 = vpack.c.b16 %v6674, %v6667
    %v7319 = vpack.c.b16 %v6675, %v6668
    %v7320 = vpack.c.b16 %v6676, %v6669
    %v7321 = vpack.c.b16 %v6677, %v6670
    %v7322 = vpack.c.b16 %v6678, %v6671
    %v7323 = vpack.c.b16 %v6679, %v6672
    %v7324 = vpack.c.b16 %v6687, %v6680
    %v7325 = vpack.c.b16 %v6688, %v6681
    %v7326 = vpack.c.b16 %v6689, %v6682
    %v7327 = vpack.c.b16 %v6690, %v6683
    %v7328 = vpack.c.b16 %v6691, %v6684
    %v7329 = vpack.c.b16 %v6692, %v6685
    %v7330 = vpack.c.b16 %v6693, %v6686
    %v7331 = vpack.c.b16 %v6701, %v6694
    %v7332 = vpack.c.b16 %v6702, %v6695
    %v7333 = vpack.c.b16 %v6703, %v6696
    %v7334 = vpack.c.b16 %v6704, %v6697
    %v7335 = vpack.c.b16 %v6705, %v6698
    %v7336 = vpack.c.b16 %v6706, %v6699
    %v7337 = vpack.c.b16 %v6707, %v6700
    %v7338 = vpack.c.b16 %v6715, %v6708
    %v7339 = vpack.c.b16 %v6716, %v6709
    %v7340 = vpack.c.b16 %v6717, %v6710
    %v7341 = vpack.c.b16 %v6718, %v6711
    %v7342 = vpack.c.b16 %v6719, %v6712
    %v7343 = vpack.c.b16 %v6720, %v6713
    %v7344 = vpack.c.b16 %v6721, %v6714
    %v7345 = vpack.c.b16 %v6729, %v6722
    %v7346 = vpack.c.b16 %v6730, %v6723
    %v7347 = vpack.c.b16 %v6731, %v6724
    %v7348 = vpack.c.b16 %v6732, %v6725
    %v7349 = vpack.c.b16 %v6733, %v6726
    %v7350 = vpack.c.b16 %v6734, %v6727
    %v7351 = vpack.c.b16 %v6735, %v6728
    %v7352 = vpack.c.b16 %v6743, %v6736
    %v7353 = vpack.c.b16 %v6744, %v6737
    %v7354 = vpack.c.b16 %v6745, %v6738
    %v7355 = vpack.c.b16 %v6746, %v6739
    %v7356 = vpack.c.b16 %v6747, %v6740
    %v7357 = vpack.c.b16 %v6748, %v6741
    %v7358 = vpack.c.b16 %v6749, %v6742
    %v7359 = vpack.c.b16 %v6757, %v6750
    %v7360 = vpack.c.b16 %v6758, %v6751
    %v7361 = vpack.c.b16 %v6759, %v6752
    %v7362 = vpack.c.b16 %v6760, %v6753
    %v7363 = vpack.c.b16 %v6761, %v6754
    %v7364 = vpack.c.b16 %v6762, %v6755
    %v7365 = vpack.c.b16 %v6763, %v6756
    %v7366 = vpack.c.b16 %v6771, %v6764
    %v7367 = vpack.c.b16 %v6772, %v6765
    %v7368 = vpack.c.b16 %v6773, %v6766
    %v7369 = vpack.c.b16 %v6774, %v6767
    %v7370 = vpack.c.b16 %v6775, %v6768
    %v7371 = vpack.c.b16 %v6776, %v6769
    %v7372 = vpack.c.b16 %v6777, %v6770
    %v7373 = vpack.c.b16 %v6785, %v6778
    %v7374 = vpack.c.b16 %v6786, %v6779
    %v7375 = vpack.c.b16 %v6787, %v6780
    %v7376 = vpack.c.b16 %v6788, %v6781
    %v7377 = vpack.c.b16 %v6789, %v6782
    %v7378 = vpack.c.b16 %v6790, %v6783
    %v7379 = vpack.c.b16 %v6791, %v6784
    %v7380 = vpack.c.b16 %v6799, %v6792
    %v7381 = vpack.c.b16 %v6800, %v6793
    %v7382 = vpack.c.b16 %v6801, %v6794
    %v7383 = vpack.c.b16 %v6802, %v6795
    %v7384 = vpack.c.b16 %v6803, %v6796
    %v7385 = vpack.c.b16 %v6804, %v6797
    %v7386 = vpack.c.b16 %v6805, %v6798
    %v7387 = vpack.c.b16 %v6813, %v6806
    %v7388 = vpack.c.b16 %v6814, %v6807
    %v7389 = vpack.c.b16 %v6815, %v6808
    %v7390 = vpack.c.b16 %v6816, %v6809
    %v7391 = vpack.c.b16 %v6817, %v6810
    %v7392 = vpack.c.b16 %v6818, %v6811
    %v7393 = vpack.c.b16 %v6819, %v6812
    %v7394 = vpack.c.b16 %v6827, %v6820
    %v7395 = vpack.c.b16 %v6828, %v6821
    %v7396 = vpack.c.b16 %v6829, %v6822
    %v7397 = vpack.c.b16 %v6830, %v6823
    %v7398 = vpack.c.b16 %v6831, %v6824
    %v7399 = vpack.c.b16 %v6832, %v6825
    %v7400 = vpack.c.b16 %v6833, %v6826
    %v7401 = vpack.c.b16 %v6841, %v6834
    %v7402 = vpack.c.b16 %v6842, %v6835
    %v7403 = vpack.c.b16 %v6843, %v6836
    %v7404 = vpack.c.b16 %v6844, %v6837
    %v7405 = vpack.c.b16 %v6845, %v6838
    %v7406 = vpack.c.b16 %v6846, %v6839
    %v7407 = vpack.c.b16 %v6847, %v6840
    %v7408 = vpack.c.b16 %v6855, %v6848
    %v7409 = vpack.c.b16 %v6856, %v6849
    %v7410 = vpack.c.b16 %v6857, %v6850
    %v7411 = vpack.c.b16 %v6858, %v6851
    %v7412 = vpack.c.b16 %v6859, %v6852
    %v7413 = vpack.c.b16 %v6860, %v6853
    %v7414 = vpack.c.b16 %v6861, %v6854
    %v7415 = vpack.c.b16 %v6869, %v6862
    %v7416 = vpack.c.b16 %v6870, %v6863
    %v7417 = vpack.c.b16 %v6871, %v6864
    %v7418 = vpack.c.b16 %v6872, %v6865
    %v7419 = vpack.c.b16 %v6873, %v6866
    %v7420 = vpack.c.b16 %v6874, %v6867
    %v7421 = vpack.c.b16 %v6875, %v6868
    %v7422 = vpack.c.b16 %v6883, %v6876
    %v7423 = vpack.c.b16 %v6884, %v6877
    %v7424 = vpack.c.b16 %v6885, %v6878
    %v7425 = vpack.c.b16 %v6886, %v6879
    %v7426 = vpack.c.b16 %v6887, %v6880
    %v7427 = vpack.c.b16 %v6888, %v6881
    %v7428 = vpack.c.b16 %v6889, %v6882
    %v7429 = vpack.c.b16 %v6897, %v6890
    %v7430 = vpack.c.b16 %v6898, %v6891
    %v7431 = vpack.c.b16 %v6899, %v6892
    %v7432 = vpack.c.b16 %v6900, %v6893
    %v7433 = vpack.c.b16 %v6901, %v6894
    %v7434 = vpack.c.b16 %v6902, %v6895
    %v7435 = vpack.c.b16 %v6903, %v6896
    %v7436 = vpack.c.b16 %v6911, %v6904
    %v7437 = vpack.c.b16 %v6912, %v6905
    %v7438 = vpack.c.b16 %v6913, %v6906
    %v7439 = vpack.c.b16 %v6914, %v6907
    %v7440 = vpack.c.b16 %v6915, %v6908
    %v7441 = vpack.c.b16 %v6916, %v6909
    %v7442 = vpack.c.b16 %v6917, %v6910
    %v7443 = vpack.c.b16 %v6925, %v6918
    %v7444 = vpack.c.b16 %v6926, %v6919
    %v7445 = vpack.c.b16 %v6927, %v6920
    %v7446 = vpack.c.b16 %v6928, %v6921
    %v7447 = vpack.c.b16 %v6929, %v6922
    %v7448 = vpack.c.b16 %v6930, %v6923
    %v7449 = vpack.c.b16 %v6931, %v6924
    %v7450 = vpack.c.b16 %v6939, %v6932
    %v7451 = vpack.c.b16 %v6940, %v6933
    %v7452 = vpack.c.b16 %v6941, %v6934
    %v7453 = vpack.c.b16 %v6942, %v6935
    %v7454 = vpack.c.b16 %v6943, %v6936
    %v7455 = vpack.c.b16 %v6944, %v6937
    %v7456 = vpack.c.b16 %v6945, %v6938
    %v7457 = vpack.c.b16 %v6953, %v6946
    %v7458 = vpack.c.b16 %v6954, %v6947
    %v7459 = vpack.c.b16 %v6955, %v6948
    %v7460 = vpack.c.b16 %v6956, %v6949
    %v7461 = vpack.c.b16 %v6957, %v6950
    %v7462 = vpack.c.b16 %v6958, %v6951
    %v7463 = vpack.c.b16 %v6959, %v6952
    %v7464 = vpack.c.b16 %v6967, %v6960
    %v7465 = vpack.c.b16 %v6968, %v6961
    %v7466 = vpack.c.b16 %v6969, %v6962
    %v7467 = vpack.c.b16 %v6970, %v6963
    %v7468 = vpack.c.b16 %v6971, %v6964
    %v7469 = vpack.c.b16 %v6972, %v6965
    %v7470 = vpack.c.b16 %v6973, %v6966
    %v7471 = vpack.c.b16 %v6981, %v6974
    %v7472 = vpack.c.b16 %v6982, %v6975
    %v7473 = vpack.c.b16 %v6983, %v6976
    %v7474 = vpack.c.b16 %v6984, %v6977
    %v7475 = vpack.c.b16 %v6985, %v6978
    %v7476 = vpack.c.b16 %v6986, %v6979
    %v7477 = vpack.c.b16 %v6987, %v6980
    %v7478 = vpack.c.b16 %v6995, %v6988
    %v7479 = vpack.c.b16 %v6996, %v6989
    %v7480 = vpack.c.b16 %v6997, %v6990
    %v7481 = vpack.c.b16 %v6998, %v6991
    %v7482 = vpack.c.b16 %v6999, %v6992
    %v7483 = vpack.c.b16 %v7000, %v6993
    %v7484 = vpack.c.b16 %v7001, %v6994
    %v7485 = vpack.c.b16 %v7009, %v7002
    %v7486 = vpack.c.b16 %v7010, %v7003
    %v7487 = vpack.c.b16 %v7011, %v7004
    %v7488 = vpack.c.b16 %v7012, %v7005
    %v7489 = vpack.c.b16 %v7013, %v7006
    %v7490 = vpack.c.b16 %v7014, %v7007
    %v7491 = vpack.c.b16 %v7015, %v7008
    %v7492 = vpack.c.b16 %v7023, %v7016
    %v7493 = vpack.c.b16 %v7024, %v7017
    %v7494 = vpack.c.b16 %v7025, %v7018
    %v7495 = vpack.c.b16 %v7026, %v7019
    %v7496 = vpack.c.b16 %v7027, %v7020
    %v7497 = vpack.c.b16 %v7028, %v7021
    %v7498 = vpack.c.b16 %v7029, %v7022
    %v7499 = vpack.c.b16 %v7037, %v7030
    %v7500 = vpack.c.b16 %v7038, %v7031
    %v7501 = vpack.c.b16 %v7039, %v7032
    %v7502 = vpack.c.b16 %v7040, %v7033
    %v7503 = vpack.c.b16 %v7041, %v7034
    %v7504 = vpack.c.b16 %v7042, %v7035
    %v7505 = vpack.c.b16 %v7043, %v7036
    %v7506 = vpack.c.b16 %v7051, %v7044
    %v7507 = vpack.c.b16 %v7052, %v7045
    %v7508 = vpack.c.b16 %v7053, %v7046
    %v7509 = vpack.c.b16 %v7054, %v7047
    %v7510 = vpack.c.b16 %v7055, %v7048
    %v7511 = vpack.c.b16 %v7056, %v7049
    %v7512 = vpack.c.b16 %v7057, %v7050
    %v7513 = vpack.c.b16 %v7065, %v7058
    %v7514 = vpack.c.b16 %v7066, %v7059
    %v7515 = vpack.c.b16 %v7067, %v7060
    %v7516 = vpack.c.b16 %v7068, %v7061
    %v7517 = vpack.c.b16 %v7069, %v7062
    %v7518 = vpack.c.b16 %v7070, %v7063
    %v7519 = vpack.c.b16 %v7071, %v7064
    %v7520 = vpack.c.b16 %v7079, %v7072
    %v7521 = vpack.c.b16 %v7080, %v7073
    %v7522 = vpack.c.b16 %v7081, %v7074
    %v7523 = vpack.c.b16 %v7082, %v7075
    %v7524 = vpack.c.b16 %v7083, %v7076
    %v7525 = vpack.c.b16 %v7084, %v7077
    %v7526 = vpack.c.b16 %v7085, %v7078
    %v7527 = vpack.c.b16 %v7093, %v7086
    %v7528 = vpack.c.b16 %v7094, %v7087
    %v7529 = vpack.c.b16 %v7095, %v7088
    %v7530 = vpack.c.b16 %v7096, %v7089
    %v7531 = vpack.c.b16 %v7097, %v7090
    %v7532 = vpack.c.b16 %v7098, %v7091
    %v7533 = vpack.c.b16 %v7099, %v7092
    %v7534 = vpack.c.b16 %v7107, %v7100
    %v7535 = vpack.c.b16 %v7108, %v7101
    %v7536 = vpack.c.b16 %v7109, %v7102
    %v7537 = vpack.c.b16 %v7110, %v7103
    %v7538 = vpack.c.b16 %v7111, %v7104
    %v7539 = vpack.c.b16 %v7112, %v7105
    %v7540 = vpack.c.b16 %v7113, %v7106
    %v7541 = vpack.c.b16 %v7121, %v7114
    %v7542 = vpack.c.b16 %v7122, %v7115
    %v7543 = vpack.c.b16 %v7123, %v7116
    %v7544 = vpack.c.b16 %v7124, %v7117
    %v7545 = vpack.c.b16 %v7125, %v7118
    %v7546 = vpack.c.b16 %v7126, %v7119
    %v7547 = vpack.c.b16 %v7127, %v7120
    %v7548 = vpack.c.b16 %v7135, %v7128
    %v7549 = vpack.c.b16 %v7136, %v7129
    %v7550 = vpack.c.b16 %v7137, %v7130
    %v7551 = vpack.c.b16 %v7138, %v7131
    %v7552 = vpack.c.b16 %v7139, %v7132
    %v7553 = vpack.c.b16 %v7140, %v7133
    %v7554 = vpack.c.b16 %v7141, %v7134
    %v7555 = vpack.c.b16 %v7149, %v7142
    %v7556 = vpack.c.b16 %v7150, %v7143
    %v7557 = vpack.c.b16 %v7151, %v7144
    %v7558 = vpack.c.b16 %v7152, %v7145
    %v7559 = vpack.c.b16 %v7153, %v7146
    %v7560 = vpack.c.b16 %v7154, %v7147
    %v7561 = vpack.c.b16 %v7155, %v7148
    %v7562 = vpack.c.b16 %v7163, %v7156
    %v7563 = vpack.c.b16 %v7164, %v7157
    %v7564 = vpack.c.b16 %v7165, %v7158
    %v7565 = vpack.c.b16 %v7166, %v7159
    %v7566 = vpack.c.b16 %v7167, %v7160
    %v7567 = vpack.c.b16 %v7168, %v7161
    %v7568 = vpack.c.b16 %v7169, %v7162
    %v7569 = vpack.c.b16 %v7177, %v7170
    %v7570 = vpack.c.b16 %v7178, %v7171
    %v7571 = vpack.c.b16 %v7179, %v7172
    %v7572 = vpack.c.b16 %v7180, %v7173
    %v7573 = vpack.c.b16 %v7181, %v7174
    %v7574 = vpack.c.b16 %v7182, %v7175
    %v7575 = vpack.c.b16 %v7183, %v7176
    %v7576 = vpack.c.b16 %v7191, %v7184
    %v7577 = vpack.c.b16 %v7192, %v7185
    %v7578 = vpack.c.b16 %v7193, %v7186
    %v7579 = vpack.c.b16 %v7194, %v7187
    %v7580 = vpack.c.b16 %v7195, %v7188
    %v7581 = vpack.c.b16 %v7196, %v7189
    %v7582 = vpack.c.b16 %v7197, %v7190
    %v7583 = vpack.c.b16 %v7205, %v7198
    %v7584 = vpack.c.b16 %v7206, %v7199
    %v7585 = vpack.c.b16 %v7207, %v7200
    %v7586 = vpack.c.b16 %v7208, %v7201
    %v7587 = vpack.c.b16 %v7209, %v7202
    %v7588 = vpack.c.b16 %v7210, %v7203
    %v7589 = vpack.c.b16 %v7211, %v7204
    %v7590 = vpack.c.b16 %v7219, %v7212
    %v7591 = vpack.c.b16 %v7220, %v7213
    %v7592 = vpack.c.b16 %v7221, %v7214
    %v7593 = vpack.c.b16 %v7222, %v7215
    %v7594 = vpack.c.b16 %v7223, %v7216
    %v7595 = vpack.c.b16 %v7224, %v7217
    %v7596 = vpack.c.b16 %v7225, %v7218
    %v7597 = vpack.c.b16 %v7233, %v7226
    %v7598 = vpack.c.b16 %v7234, %v7227
    %v7599 = vpack.c.b16 %v7235, %v7228
    %v7600 = vpack.c.b16 %v7236, %v7229
    %v7601 = vpack.c.b16 %v7237, %v7230
    %v7602 = vpack.c.b16 %v7238, %v7231
    %v7603 = vpack.c.b16 %v7239, %v7232
    %v7604 = vpack.c.b16 %v7247, %v7240
    %v7605 = vpack.c.b16 %v7248, %v7241
    %v7606 = vpack.c.b16 %v7249, %v7242
    %v7607 = vpack.c.b16 %v7250, %v7243
    %v7608 = vpack.c.b16 %v7251, %v7244
    %v7609 = vpack.c.b16 %v7252, %v7245
    %v7610 = vpack.c.b16 %v7253, %v7246
    %v7611 = vpack.c.b16 %v7261, %v7254
    %v7612 = vpack.c.b16 %v7262, %v7255
    %v7613 = vpack.c.b16 %v7263, %v7256
    %v7614 = vpack.c.b16 %v7264, %v7257
    %v7615 = vpack.c.b16 %v7265, %v7258
    %v7616 = vpack.c.b16 %v7266, %v7259
    %v7617 = vpack.c.b16 %v7267, %v7260
    %v7618 = vpack.c.b16 %v7275, %v7268
    %v7619 = vpack.c.b16 %v7276, %v7269
    %v7620 = vpack.c.b16 %v7277, %v7270
    %v7621 = vpack.c.b16 %v7278, %v7271
    %v7622 = vpack.c.b16 %v7279, %v7272
    %v7623 = vpack.c.b16 %v7280, %v7273
    %v7624 = vpack.c.b16 %v7281, %v7274
    %7968 = vmatpush.bf16.msra.mxu0 %v7331
    %7969 = vmatpush.bf16.msra.mxu0 %v7324
    %7970 = vmatpush.bf16.msra.mxu0 %v7317
    %7971 = vmatpush.bf16.msra.mxu0 %v7310
    %7972 = vmatpush.bf16.msra.mxu0 %v7303
    %7973 = vmatpush.bf16.msra.mxu0 %v7296
    %7974 = vmatpush.bf16.msra.mxu0 %v7289
    %7975 = vmatpush.bf16.msra.mxu0 %v7282
    %7976 = vmatmul.bf16.gmra.mxu0 %v592
    %v7977 = vpop.f32.mrf.mxu0
    %v7978 = vadd.f32 0.0, %v7977
    %v7979 = vpop.f32.mrf.mxu0
    %7980 = vdwg.mxu0
    %7981 = vmatpush.bf16.msra.mxu0 %v7387
    %7982 = vmatpush.bf16.msra.mxu0 %v7380
    %7983 = vmatpush.bf16.msra.mxu0 %v7373
    %7984 = vmatpush.bf16.msra.mxu0 %v7366
    %7985 = vmatpush.bf16.msra.mxu0 %v7359
    %7986 = vmatpush.bf16.msra.mxu0 %v7352
    %7987 = vmatpush.bf16.msra.mxu0 %v7345
    %7988 = vmatpush.bf16.msra.mxu0 %v7338
    %7989 = vmatmul.bf16.gmra.mxu0 %v593
    %v7990 = vpop.f32.mrf.mxu0
    %v7991 = vadd.f32 %v7978, %v7990
    %v7992 = vpop.f32.mrf.mxu0
    %7993 = vdwg.mxu0
    %7994 = vmatpush.bf16.msra.mxu0 %v7443
    %7995 = vmatpush.bf16.msra.mxu0 %v7436
    %7996 = vmatpush.bf16.msra.mxu0 %v7429
    %7997 = vmatpush.bf16.msra.mxu0 %v7422
    %7998 = vmatpush.bf16.msra.mxu0 %v7415
    %7999 = vmatpush.bf16.msra.mxu0 %v7408
    %8000 = vmatpush.bf16.msra.mxu0 %v7401
    %8001 = vmatpush.bf16.msra.mxu0 %v7394
    %8002 = vmatmul.bf16.gmra.mxu0 %v594
    %v8003 = vpop.f32.mrf.mxu0
    %v8004 = vadd.f32 %v7991, %v8003
    %v8005 = vpop.f32.mrf.mxu0
    %8006 = vdwg.mxu0
    %8007 = vmatpush.bf16.msra.mxu0 %v7499
    %8008 = vmatpush.bf16.msra.mxu0 %v7492
    %8009 = vmatpush.bf16.msra.mxu0 %v7485
    %8010 = vmatpush.bf16.msra.mxu0 %v7478
    %8011 = vmatpush.bf16.msra.mxu0 %v7471
    %8012 = vmatpush.bf16.msra.mxu0 %v7464
    %8013 = vmatpush.bf16.msra.mxu0 %v7457
    %8014 = vmatpush.bf16.msra.mxu0 %v7450
    %8015 = vmatmul.bf16.gmra.mxu0 %v595
    %v8016 = vpop.f32.mrf.mxu0
    %v8017 = vadd.f32 %v8004, %v8016
    %v8018 = vpop.f32.mrf.mxu0
    %8019 = vdwg.mxu0
    %8020 = vmatpush.bf16.msra.mxu0 %v7555
    %8021 = vmatpush.bf16.msra.mxu0 %v7548
    %8022 = vmatpush.bf16.msra.mxu0 %v7541
    %8023 = vmatpush.bf16.msra.mxu0 %v7534
    %8024 = vmatpush.bf16.msra.mxu0 %v7527
    %8025 = vmatpush.bf16.msra.mxu0 %v7520
    %8026 = vmatpush.bf16.msra.mxu0 %v7513
    %8027 = vmatpush.bf16.msra.mxu0 %v7506
    %8028 = vmatmul.bf16.gmra.mxu0 %v596
    %v8029 = vpop.f32.mrf.mxu0
    %v8030 = vadd.f32 %v8017, %v8029
    %v8031 = vpop.f32.mrf.mxu0
    %8032 = vdwg.mxu0
    %8033 = vmatpush.bf16.msra.mxu0 %v7611
    %8034 = vmatpush.bf16.msra.mxu0 %v7604
    %8035 = vmatpush.bf16.msra.mxu0 %v7597
    %8036 = vmatpush.bf16.msra.mxu0 %v7590
    %8037 = vmatpush.bf16.msra.mxu0 %v7583
    %8038 = vmatpush.bf16.msra.mxu0 %v7576
    %8039 = vmatpush.bf16.msra.mxu0 %v7569
    %8040 = vmatpush.bf16.msra.mxu0 %v7562
    %8041 = vmatmul.bf16.gmra.mxu0 %v597
    %v8042 = vpop.f32.mrf.mxu0
    %v8043 = vadd.f32 %v8030, %v8042
    %v8044 = vpop.f32.mrf.mxu0
    %8045 = vdwg.mxu0
    %8046 = vmatpush.bf16.msra.mxu0 0
    %8047 = vmatpush.bf16.msra.mxu0 0
    %8048 = vmatpush.bf16.msra.mxu0 0
    %8049 = vmatpush.bf16.msra.mxu0 0
    %8050 = vmatpush.bf16.msra.mxu0 0
    %8051 = vmatpush.bf16.msra.mxu0 0
    %8052 = vmatpush.bf16.msra.mxu0 0
    %8053 = vmatpush.bf16.msra.mxu0 %v7618
    %8054 = vmatmul.bf16.gmra.mxu0 %v2371
    %v8055 = vpop.f32.mrf.mxu0
    %v8056 = vadd.f32 %v8043, %v8055
    %v8057 = vpop.f32.mrf.mxu0
    %8058 = vdwg.mxu0
    %8059 = vmatpush.bf16.msra.mxu0 %v7332
    %8060 = vmatpush.bf16.msra.mxu0 %v7325
    %8061 = vmatpush.bf16.msra.mxu0 %v7318
    %8062 = vmatpush.bf16.msra.mxu0 %v7311
    %8063 = vmatpush.bf16.msra.mxu0 %v7304
    %8064 = vmatpush.bf16.msra.mxu0 %v7297
    %8065 = vmatpush.bf16.msra.mxu0 %v7290
    %8066 = vmatpush.bf16.msra.mxu0 %v7283
    %8067 = vmatmul.bf16.gmra.mxu0 %v592
    %v8068 = vpop.f32.mrf.mxu0
    %v8069 = vadd.f32 0.0, %v8068
    %v8070 = vpop.f32.mrf.mxu0
    %8071 = vdwg.mxu0
    %8072 = vmatpush.bf16.msra.mxu0 %v7388
    %8073 = vmatpush.bf16.msra.mxu0 %v7381
    %8074 = vmatpush.bf16.msra.mxu0 %v7374
    %8075 = vmatpush.bf16.msra.mxu0 %v7367
    %8076 = vmatpush.bf16.msra.mxu0 %v7360
    %8077 = vmatpush.bf16.msra.mxu0 %v7353
    %8078 = vmatpush.bf16.msra.mxu0 %v7346
    %8079 = vmatpush.bf16.msra.mxu0 %v7339
    %8080 = vmatmul.bf16.gmra.mxu0 %v593
    %v8081 = vpop.f32.mrf.mxu0
    %v8082 = vadd.f32 %v8069, %v8081
    %v8083 = vpop.f32.mrf.mxu0
    %8084 = vdwg.mxu0
    %8085 = vmatpush.bf16.msra.mxu0 %v7444
    %8086 = vmatpush.bf16.msra.mxu0 %v7437
    %8087 = vmatpush.bf16.msra.mxu0 %v7430
    %8088 = vmatpush.bf16.msra.mxu0 %v7423
    %8089 = vmatpush.bf16.msra.mxu0 %v7416
    %8090 = vmatpush.bf16.msra.mxu0 %v7409
    %8091 = vmatpush.bf16.msra.mxu0 %v7402
    %8092 = vmatpush.bf16.msra.mxu0 %v7395
    %8093 = vmatmul.bf16.gmra.mxu0 %v594
    %v8094 = vpop.f32.mrf.mxu0
    %v8095 = vadd.f32 %v8082, %v8094
    %v8096 = vpop.f32.mrf.mxu0
    %8097 = vdwg.mxu0
    %8098 = vmatpush.bf16.msra.mxu0 %v7500
    %8099 = vmatpush.bf16.msra.mxu0 %v7493
    %8100 = vmatpush.bf16.msra.mxu0 %v7486
    %8101 = vmatpush.bf16.msra.mxu0 %v7479
    %8102 = vmatpush.bf16.msra.mxu0 %v7472
    %8103 = vmatpush.bf16.msra.mxu0 %v7465
    %8104 = vmatpush.bf16.msra.mxu0 %v7458
    %8105 = vmatpush.bf16.msra.mxu0 %v7451
    %8106 = vmatmul.bf16.gmra.mxu0 %v595
    %v8107 = vpop.f32.mrf.mxu0
    %v8108 = vadd.f32 %v8095, %v8107
    %v8109 = vpop.f32.mrf.mxu0
    %8110 = vdwg.mxu0
    %8111 = vmatpush.bf16.msra.mxu0 %v7556
    %8112 = vmatpush.bf16.msra.mxu0 %v7549
    %8113 = vmatpush.bf16.msra.mxu0 %v7542
    %8114 = vmatpush.bf16.msra.mxu0 %v7535
    %8115 = vmatpush.bf16.msra.mxu0 %v7528
    %8116 = vmatpush.bf16.msra.mxu0 %v7521
    %8117 = vmatpush.bf16.msra.mxu0 %v7514
    %8118 = vmatpush.bf16.msra.mxu0 %v7507
    %8119 = vmatmul.bf16.gmra.mxu0 %v596
    %v8120 = vpop.f32.mrf.mxu0
    %v8121 = vadd.f32 %v8108, %v8120
    %v8122 = vpop.f32.mrf.mxu0
    %8123 = vdwg.mxu0
    %8124 = vmatpush.bf16.msra.mxu0 %v7612
    %8125 = vmatpush.bf16.msra.mxu0 %v7605
    %8126 = vmatpush.bf16.msra.mxu0 %v7598
    %8127 = vmatpush.bf16.msra.mxu0 %v7591
    %8128 = vmatpush.bf16.msra.mxu0 %v7584
    %8129 = vmatpush.bf16.msra.mxu0 %v7577
    %8130 = vmatpush.bf16.msra.mxu0 %v7570
    %8131 = vmatpush.bf16.msra.mxu0 %v7563
    %8132 = vmatmul.bf16.gmra.mxu0 %v597
    %v8133 = vpop.f32.mrf.mxu0
    %v8134 = vadd.f32 %v8121, %v8133
    %v8135 = vpop.f32.mrf.mxu0
    %8136 = vdwg.mxu0
    %8137 = vmatpush.bf16.msra.mxu0 0
    %8138 = vmatpush.bf16.msra.mxu0 0
    %8139 = vmatpush.bf16.msra.mxu0 0
    %8140 = vmatpush.bf16.msra.mxu0 0
    %8141 = vmatpush.bf16.msra.mxu0 0
    %8142 = vmatpush.bf16.msra.mxu0 0
    %8143 = vmatpush.bf16.msra.mxu0 0
    %8144 = vmatpush.bf16.msra.mxu0 %v7619
    %8145 = vmatmul.bf16.gmra.mxu0 %v2371
    %v8146 = vpop.f32.mrf.mxu0
    %v8147 = vadd.f32 %v8134, %v8146
    %v8148 = vpop.f32.mrf.mxu0
    %8149 = vdwg.mxu0
    %8150 = vmatpush.bf16.msra.mxu0 %v7333
    %8151 = vmatpush.bf16.msra.mxu0 %v7326
    %8152 = vmatpush.bf16.msra.mxu0 %v7319
    %8153 = vmatpush.bf16.msra.mxu0 %v7312
    %8154 = vmatpush.bf16.msra.mxu0 %v7305
    %8155 = vmatpush.bf16.msra.mxu0 %v7298
    %8156 = vmatpush.bf16.msra.mxu0 %v7291
    %8157 = vmatpush.bf16.msra.mxu0 %v7284
    %8158 = vmatmul.bf16.gmra.mxu0 %v592
    %v8159 = vpop.f32.mrf.mxu0
    %v8160 = vadd.f32 0.0, %v8159
    %v8161 = vpop.f32.mrf.mxu0
    %8162 = vdwg.mxu0
    %8163 = vmatpush.bf16.msra.mxu0 %v7389
    %8164 = vmatpush.bf16.msra.mxu0 %v7382
    %8165 = vmatpush.bf16.msra.mxu0 %v7375
    %8166 = vmatpush.bf16.msra.mxu0 %v7368
    %8167 = vmatpush.bf16.msra.mxu0 %v7361
    %8168 = vmatpush.bf16.msra.mxu0 %v7354
    %8169 = vmatpush.bf16.msra.mxu0 %v7347
    %8170 = vmatpush.bf16.msra.mxu0 %v7340
    %8171 = vmatmul.bf16.gmra.mxu0 %v593
    %v8172 = vpop.f32.mrf.mxu0
    %v8173 = vadd.f32 %v8160, %v8172
    %v8174 = vpop.f32.mrf.mxu0
    %8175 = vdwg.mxu0
    %8176 = vmatpush.bf16.msra.mxu0 %v7445
    %8177 = vmatpush.bf16.msra.mxu0 %v7438
    %8178 = vmatpush.bf16.msra.mxu0 %v7431
    %8179 = vmatpush.bf16.msra.mxu0 %v7424
    %8180 = vmatpush.bf16.msra.mxu0 %v7417
    %8181 = vmatpush.bf16.msra.mxu0 %v7410
    %8182 = vmatpush.bf16.msra.mxu0 %v7403
    %8183 = vmatpush.bf16.msra.mxu0 %v7396
    %8184 = vmatmul.bf16.gmra.mxu0 %v594
    %v8185 = vpop.f32.mrf.mxu0
    %v8186 = vadd.f32 %v8173, %v8185
    %v8187 = vpop.f32.mrf.mxu0
    %8188 = vdwg.mxu0
    %8189 = vmatpush.bf16.msra.mxu0 %v7501
    %8190 = vmatpush.bf16.msra.mxu0 %v7494
    %8191 = vmatpush.bf16.msra.mxu0 %v7487
    %8192 = vmatpush.bf16.msra.mxu0 %v7480
    %8193 = vmatpush.bf16.msra.mxu0 %v7473
    %8194 = vmatpush.bf16.msra.mxu0 %v7466
    %8195 = vmatpush.bf16.msra.mxu0 %v7459
    %8196 = vmatpush.bf16.msra.mxu0 %v7452
    %8197 = vmatmul.bf16.gmra.mxu0 %v595
    %v8198 = vpop.f32.mrf.mxu0
    %v8199 = vadd.f32 %v8186, %v8198
    %v8200 = vpop.f32.mrf.mxu0
    %8201 = vdwg.mxu0
    %8202 = vmatpush.bf16.msra.mxu0 %v7557
    %8203 = vmatpush.bf16.msra.mxu0 %v7550
    %8204 = vmatpush.bf16.msra.mxu0 %v7543
    %8205 = vmatpush.bf16.msra.mxu0 %v7536
    %8206 = vmatpush.bf16.msra.mxu0 %v7529
    %8207 = vmatpush.bf16.msra.mxu0 %v7522
    %8208 = vmatpush.bf16.msra.mxu0 %v7515
    %8209 = vmatpush.bf16.msra.mxu0 %v7508
    %8210 = vmatmul.bf16.gmra.mxu0 %v596
    %v8211 = vpop.f32.mrf.mxu0
    %v8212 = vadd.f32 %v8199, %v8211
    %v8213 = vpop.f32.mrf.mxu0
    %8214 = vdwg.mxu0
    %8215 = vmatpush.bf16.msra.mxu0 %v7613
    %8216 = vmatpush.bf16.msra.mxu0 %v7606
    %8217 = vmatpush.bf16.msra.mxu0 %v7599
    %8218 = vmatpush.bf16.msra.mxu0 %v7592
    %8219 = vmatpush.bf16.msra.mxu0 %v7585
    %8220 = vmatpush.bf16.msra.mxu0 %v7578
    %8221 = vmatpush.bf16.msra.mxu0 %v7571
    %8222 = vmatpush.bf16.msra.mxu0 %v7564
    %8223 = vmatmul.bf16.gmra.mxu0 %v597
    %v8224 = vpop.f32.mrf.mxu0
    %v8225 = vadd.f32 %v8212, %v8224
    %v8226 = vpop.f32.mrf.mxu0
    %8227 = vdwg.mxu0
    %8228 = vmatpush.bf16.msra.mxu0 0
    %8229 = vmatpush.bf16.msra.mxu0 0
    %8230 = vmatpush.bf16.msra.mxu0 0
    %8231 = vmatpush.bf16.msra.mxu0 0
    %8232 = vmatpush.bf16.msra.mxu0 0
    %8233 = vmatpush.bf16.msra.mxu0 0
    %8234 = vmatpush.bf16.msra.mxu0 0
    %8235 = vmatpush.bf16.msra.mxu0 %v7620
    %8236 = vmatmul.bf16.gmra.mxu0 %v2371
    %v8237 = vpop.f32.mrf.mxu0
    %v8238 = vadd.f32 %v8225, %v8237
    %v8239 = vpop.f32.mrf.mxu0
    %8240 = vdwg.mxu0
    %8241 = vmatpush.bf16.msra.mxu0 %v7334
    %8242 = vmatpush.bf16.msra.mxu0 %v7327
    %8243 = vmatpush.bf16.msra.mxu0 %v7320
    %8244 = vmatpush.bf16.msra.mxu0 %v7313
    %8245 = vmatpush.bf16.msra.mxu0 %v7306
    %8246 = vmatpush.bf16.msra.mxu0 %v7299
    %8247 = vmatpush.bf16.msra.mxu0 %v7292
    %8248 = vmatpush.bf16.msra.mxu0 %v7285
    %8249 = vmatmul.bf16.gmra.mxu0 %v592
    %v8250 = vpop.f32.mrf.mxu0
    %v8251 = vadd.f32 0.0, %v8250
    %v8252 = vpop.f32.mrf.mxu0
    %8253 = vdwg.mxu0
    %8254 = vmatpush.bf16.msra.mxu0 %v7390
    %8255 = vmatpush.bf16.msra.mxu0 %v7383
    %8256 = vmatpush.bf16.msra.mxu0 %v7376
    %8257 = vmatpush.bf16.msra.mxu0 %v7369
    %8258 = vmatpush.bf16.msra.mxu0 %v7362
    %8259 = vmatpush.bf16.msra.mxu0 %v7355
    %8260 = vmatpush.bf16.msra.mxu0 %v7348
    %8261 = vmatpush.bf16.msra.mxu0 %v7341
    %8262 = vmatmul.bf16.gmra.mxu0 %v593
    %v8263 = vpop.f32.mrf.mxu0
    %v8264 = vadd.f32 %v8251, %v8263
    %v8265 = vpop.f32.mrf.mxu0
    %8266 = vdwg.mxu0
    %8267 = vmatpush.bf16.msra.mxu0 %v7446
    %8268 = vmatpush.bf16.msra.mxu0 %v7439
    %8269 = vmatpush.bf16.msra.mxu0 %v7432
    %8270 = vmatpush.bf16.msra.mxu0 %v7425
    %8271 = vmatpush.bf16.msra.mxu0 %v7418
    %8272 = vmatpush.bf16.msra.mxu0 %v7411
    %8273 = vmatpush.bf16.msra.mxu0 %v7404
    %8274 = vmatpush.bf16.msra.mxu0 %v7397
    %8275 = vmatmul.bf16.gmra.mxu0 %v594
    %v8276 = vpop.f32.mrf.mxu0
    %v8277 = vadd.f32 %v8264, %v8276
    %v8278 = vpop.f32.mrf.mxu0
    %8279 = vdwg.mxu0
    %8280 = vmatpush.bf16.msra.mxu0 %v7502
    %8281 = vmatpush.bf16.msra.mxu0 %v7495
    %8282 = vmatpush.bf16.msra.mxu0 %v7488
    %8283 = vmatpush.bf16.msra.mxu0 %v7481
    %8284 = vmatpush.bf16.msra.mxu0 %v7474
    %8285 = vmatpush.bf16.msra.mxu0 %v7467
    %8286 = vmatpush.bf16.msra.mxu0 %v7460
    %8287 = vmatpush.bf16.msra.mxu0 %v7453
    %8288 = vmatmul.bf16.gmra.mxu0 %v595
    %v8289 = vpop.f32.mrf.mxu0
    %v8290 = vadd.f32 %v8277, %v8289
    %v8291 = vpop.f32.mrf.mxu0
    %8292 = vdwg.mxu0
    %8293 = vmatpush.bf16.msra.mxu0 %v7558
    %8294 = vmatpush.bf16.msra.mxu0 %v7551
    %8295 = vmatpush.bf16.msra.mxu0 %v7544
    %8296 = vmatpush.bf16.msra.mxu0 %v7537
    %8297 = vmatpush.bf16.msra.mxu0 %v7530
    %8298 = vmatpush.bf16.msra.mxu0 %v7523
    %8299 = vmatpush.bf16.msra.mxu0 %v7516
    %8300 = vmatpush.bf16.msra.mxu0 %v7509
    %8301 = vmatmul.bf16.gmra.mxu0 %v596
    %v8302 = vpop.f32.mrf.mxu0
    %v8303 = vadd.f32 %v8290, %v8302
    %v8304 = vpop.f32.mrf.mxu0
    %8305 = vdwg.mxu0
    %8306 = vmatpush.bf16.msra.mxu0 %v7614
    %8307 = vmatpush.bf16.msra.mxu0 %v7607
    %8308 = vmatpush.bf16.msra.mxu0 %v7600
    %8309 = vmatpush.bf16.msra.mxu0 %v7593
    %8310 = vmatpush.bf16.msra.mxu0 %v7586
    %8311 = vmatpush.bf16.msra.mxu0 %v7579
    %8312 = vmatpush.bf16.msra.mxu0 %v7572
    %8313 = vmatpush.bf16.msra.mxu0 %v7565
    %8314 = vmatmul.bf16.gmra.mxu0 %v597
    %v8315 = vpop.f32.mrf.mxu0
    %v8316 = vadd.f32 %v8303, %v8315
    %v8317 = vpop.f32.mrf.mxu0
    %8318 = vdwg.mxu0
    %8319 = vmatpush.bf16.msra.mxu0 0
    %8320 = vmatpush.bf16.msra.mxu0 0
    %8321 = vmatpush.bf16.msra.mxu0 0
    %8322 = vmatpush.bf16.msra.mxu0 0
    %8323 = vmatpush.bf16.msra.mxu0 0
    %8324 = vmatpush.bf16.msra.mxu0 0
    %8325 = vmatpush.bf16.msra.mxu0 0
    %8326 = vmatpush.bf16.msra.mxu0 %v7621
    %8327 = vmatmul.bf16.gmra.mxu0 %v2371
    %v8328 = vpop.f32.mrf.mxu0
    %v8329 = vadd.f32 %v8316, %v8328
    %v8330 = vpop.f32.mrf.mxu0
    %8331 = vdwg.mxu0
    %8332 = vmatpush.bf16.msra.mxu0 %v7335
    %8333 = vmatpush.bf16.msra.mxu0 %v7328
    %8334 = vmatpush.bf16.msra.mxu0 %v7321
    %8335 = vmatpush.bf16.msra.mxu0 %v7314
    %8336 = vmatpush.bf16.msra.mxu0 %v7307
    %8337 = vmatpush.bf16.msra.mxu0 %v7300
    %8338 = vmatpush.bf16.msra.mxu0 %v7293
    %8339 = vmatpush.bf16.msra.mxu0 %v7286
    %8340 = vmatmul.bf16.gmra.mxu0 %v592
    %v8341 = vpop.f32.mrf.mxu0
    %v8342 = vadd.f32 0.0, %v8341
    %v8343 = vpop.f32.mrf.mxu0
    %8344 = vdwg.mxu0
    %8345 = vmatpush.bf16.msra.mxu0 %v7391
    %8346 = vmatpush.bf16.msra.mxu0 %v7384
    %8347 = vmatpush.bf16.msra.mxu0 %v7377
    %8348 = vmatpush.bf16.msra.mxu0 %v7370
    %8349 = vmatpush.bf16.msra.mxu0 %v7363
    %8350 = vmatpush.bf16.msra.mxu0 %v7356
    %8351 = vmatpush.bf16.msra.mxu0 %v7349
    %8352 = vmatpush.bf16.msra.mxu0 %v7342
    %8353 = vmatmul.bf16.gmra.mxu0 %v593
    %v8354 = vpop.f32.mrf.mxu0
    %v8355 = vadd.f32 %v8342, %v8354
    %v8356 = vpop.f32.mrf.mxu0
    %8357 = vdwg.mxu0
    %8358 = vmatpush.bf16.msra.mxu0 %v7447
    %8359 = vmatpush.bf16.msra.mxu0 %v7440
    %8360 = vmatpush.bf16.msra.mxu0 %v7433
    %8361 = vmatpush.bf16.msra.mxu0 %v7426
    %8362 = vmatpush.bf16.msra.mxu0 %v7419
    %8363 = vmatpush.bf16.msra.mxu0 %v7412
    %8364 = vmatpush.bf16.msra.mxu0 %v7405
    %8365 = vmatpush.bf16.msra.mxu0 %v7398
    %8366 = vmatmul.bf16.gmra.mxu0 %v594
    %v8367 = vpop.f32.mrf.mxu0
    %v8368 = vadd.f32 %v8355, %v8367
    %v8369 = vpop.f32.mrf.mxu0
    %8370 = vdwg.mxu0
    %8371 = vmatpush.bf16.msra.mxu0 %v7503
    %8372 = vmatpush.bf16.msra.mxu0 %v7496
    %8373 = vmatpush.bf16.msra.mxu0 %v7489
    %8374 = vmatpush.bf16.msra.mxu0 %v7482
    %8375 = vmatpush.bf16.msra.mxu0 %v7475
    %8376 = vmatpush.bf16.msra.mxu0 %v7468
    %8377 = vmatpush.bf16.msra.mxu0 %v7461
    %8378 = vmatpush.bf16.msra.mxu0 %v7454
    %8379 = vmatmul.bf16.gmra.mxu0 %v595
    %v8380 = vpop.f32.mrf.mxu0
    %v8381 = vadd.f32 %v8368, %v8380
    %v8382 = vpop.f32.mrf.mxu0
    %8383 = vdwg.mxu0
    %8384 = vmatpush.bf16.msra.mxu0 %v7559
    %8385 = vmatpush.bf16.msra.mxu0 %v7552
    %8386 = vmatpush.bf16.msra.mxu0 %v7545
    %8387 = vmatpush.bf16.msra.mxu0 %v7538
    %8388 = vmatpush.bf16.msra.mxu0 %v7531
    %8389 = vmatpush.bf16.msra.mxu0 %v7524
    %8390 = vmatpush.bf16.msra.mxu0 %v7517
    %8391 = vmatpush.bf16.msra.mxu0 %v7510
    %8392 = vmatmul.bf16.gmra.mxu0 %v596
    %v8393 = vpop.f32.mrf.mxu0
    %v8394 = vadd.f32 %v8381, %v8393
    %v8395 = vpop.f32.mrf.mxu0
    %8396 = vdwg.mxu0
    %8397 = vmatpush.bf16.msra.mxu0 %v7615
    %8398 = vmatpush.bf16.msra.mxu0 %v7608
    %8399 = vmatpush.bf16.msra.mxu0 %v7601
    %8400 = vmatpush.bf16.msra.mxu0 %v7594
    %8401 = vmatpush.bf16.msra.mxu0 %v7587
    %8402 = vmatpush.bf16.msra.mxu0 %v7580
    %8403 = vmatpush.bf16.msra.mxu0 %v7573
    %8404 = vmatpush.bf16.msra.mxu0 %v7566
    %8405 = vmatmul.bf16.gmra.mxu0 %v597
    %v8406 = vpop.f32.mrf.mxu0
    %v8407 = vadd.f32 %v8394, %v8406
    %v8408 = vpop.f32.mrf.mxu0
    %8409 = vdwg.mxu0
    %8410 = vmatpush.bf16.msra.mxu0 0
    %8411 = vmatpush.bf16.msra.mxu0 0
    %8412 = vmatpush.bf16.msra.mxu0 0
    %8413 = vmatpush.bf16.msra.mxu0 0
    %8414 = vmatpush.bf16.msra.mxu0 0
    %8415 = vmatpush.bf16.msra.mxu0 0
    %8416 = vmatpush.bf16.msra.mxu0 0
    %8417 = vmatpush.bf16.msra.mxu0 %v7622
    %8418 = vmatmul.bf16.gmra.mxu0 %v2371
    %v8419 = vpop.f32.mrf.mxu0
    %v8420 = vadd.f32 %v8407, %v8419
    %v8421 = vpop.f32.mrf.mxu0
    %8422 = vdwg.mxu0
    %8423 = vmatpush.bf16.msra.mxu0 %v7336
    %8424 = vmatpush.bf16.msra.mxu0 %v7329
    %8425 = vmatpush.bf16.msra.mxu0 %v7322
    %8426 = vmatpush.bf16.msra.mxu0 %v7315
    %8427 = vmatpush.bf16.msra.mxu0 %v7308
    %8428 = vmatpush.bf16.msra.mxu0 %v7301
    %8429 = vmatpush.bf16.msra.mxu0 %v7294
    %8430 = vmatpush.bf16.msra.mxu0 %v7287
    %8431 = vmatmul.bf16.gmra.mxu0 %v592
    %v8432 = vpop.f32.mrf.mxu0
    %v8433 = vadd.f32 0.0, %v8432
    %v8434 = vpop.f32.mrf.mxu0
    %8435 = vdwg.mxu0
    %8436 = vmatpush.bf16.msra.mxu0 %v7392
    %8437 = vmatpush.bf16.msra.mxu0 %v7385
    %8438 = vmatpush.bf16.msra.mxu0 %v7378
    %8439 = vmatpush.bf16.msra.mxu0 %v7371
    %8440 = vmatpush.bf16.msra.mxu0 %v7364
    %8441 = vmatpush.bf16.msra.mxu0 %v7357
    %8442 = vmatpush.bf16.msra.mxu0 %v7350
    %8443 = vmatpush.bf16.msra.mxu0 %v7343
    %8444 = vmatmul.bf16.gmra.mxu0 %v593
    %v8445 = vpop.f32.mrf.mxu0
    %v8446 = vadd.f32 %v8433, %v8445
    %v8447 = vpop.f32.mrf.mxu0
    %8448 = vdwg.mxu0
    %8449 = vmatpush.bf16.msra.mxu0 %v7448
    %8450 = vmatpush.bf16.msra.mxu0 %v7441
    %8451 = vmatpush.bf16.msra.mxu0 %v7434
    %8452 = vmatpush.bf16.msra.mxu0 %v7427
    %8453 = vmatpush.bf16.msra.mxu0 %v7420
    %8454 = vmatpush.bf16.msra.mxu0 %v7413
    %8455 = vmatpush.bf16.msra.mxu0 %v7406
    %8456 = vmatpush.bf16.msra.mxu0 %v7399
    %8457 = vmatmul.bf16.gmra.mxu0 %v594
    %v8458 = vpop.f32.mrf.mxu0
    %v8459 = vadd.f32 %v8446, %v8458
    %v8460 = vpop.f32.mrf.mxu0
    %8461 = vdwg.mxu0
    %8462 = vmatpush.bf16.msra.mxu0 %v7504
    %8463 = vmatpush.bf16.msra.mxu0 %v7497
    %8464 = vmatpush.bf16.msra.mxu0 %v7490
    %8465 = vmatpush.bf16.msra.mxu0 %v7483
    %8466 = vmatpush.bf16.msra.mxu0 %v7476
    %8467 = vmatpush.bf16.msra.mxu0 %v7469
    %8468 = vmatpush.bf16.msra.mxu0 %v7462
    %8469 = vmatpush.bf16.msra.mxu0 %v7455
    %8470 = vmatmul.bf16.gmra.mxu0 %v595
    %v8471 = vpop.f32.mrf.mxu0
    %v8472 = vadd.f32 %v8459, %v8471
    %v8473 = vpop.f32.mrf.mxu0
    %8474 = vdwg.mxu0
    %8475 = vmatpush.bf16.msra.mxu0 %v7560
    %8476 = vmatpush.bf16.msra.mxu0 %v7553
    %8477 = vmatpush.bf16.msra.mxu0 %v7546
    %8478 = vmatpush.bf16.msra.mxu0 %v7539
    %8479 = vmatpush.bf16.msra.mxu0 %v7532
    %8480 = vmatpush.bf16.msra.mxu0 %v7525
    %8481 = vmatpush.bf16.msra.mxu0 %v7518
    %8482 = vmatpush.bf16.msra.mxu0 %v7511
    %8483 = vmatmul.bf16.gmra.mxu0 %v596
    %v8484 = vpop.f32.mrf.mxu0
    %v8485 = vadd.f32 %v8472, %v8484
    %v8486 = vpop.f32.mrf.mxu0
    %8487 = vdwg.mxu0
    %8488 = vmatpush.bf16.msra.mxu0 %v7616
    %8489 = vmatpush.bf16.msra.mxu0 %v7609
    %8490 = vmatpush.bf16.msra.mxu0 %v7602
    %8491 = vmatpush.bf16.msra.mxu0 %v7595
    %8492 = vmatpush.bf16.msra.mxu0 %v7588
    %8493 = vmatpush.bf16.msra.mxu0 %v7581
    %8494 = vmatpush.bf16.msra.mxu0 %v7574
    %8495 = vmatpush.bf16.msra.mxu0 %v7567
    %8496 = vmatmul.bf16.gmra.mxu0 %v597
    %v8497 = vpop.f32.mrf.mxu0
    %v8498 = vadd.f32 %v8485, %v8497
    %v8499 = vpop.f32.mrf.mxu0
    %8500 = vdwg.mxu0
    %8501 = vmatpush.bf16.msra.mxu0 0
    %8502 = vmatpush.bf16.msra.mxu0 0
    %8503 = vmatpush.bf16.msra.mxu0 0
    %8504 = vmatpush.bf16.msra.mxu0 0
    %8505 = vmatpush.bf16.msra.mxu0 0
    %8506 = vmatpush.bf16.msra.mxu0 0
    %8507 = vmatpush.bf16.msra.mxu0 0
    %8508 = vmatpush.bf16.msra.mxu0 %v7623
    %8509 = vmatmul.bf16.gmra.mxu0 %v2371
    %v8510 = vpop.f32.mrf.mxu0
    %v8511 = vadd.f32 %v8498, %v8510
    %v8512 = vpop.f32.mrf.mxu0
    %8513 = vdwg.mxu0
    %8514 = vmatpush.bf16.msra.mxu0 %v7337
    %8515 = vmatpush.bf16.msra.mxu0 %v7330
    %8516 = vmatpush.bf16.msra.mxu0 %v7323
    %8517 = vmatpush.bf16.msra.mxu0 %v7316
    %8518 = vmatpush.bf16.msra.mxu0 %v7309
    %8519 = vmatpush.bf16.msra.mxu0 %v7302
    %8520 = vmatpush.bf16.msra.mxu0 %v7295
    %8521 = vmatpush.bf16.msra.mxu0 %v7288
    %8522 = vmatmul.bf16.gmra.mxu0 %v592
    %v8523 = vpop.f32.mrf.mxu0
    %v8524 = vadd.f32 0.0, %v8523
    %v8525 = vpop.f32.mrf.mxu0
    %8526 = vdwg.mxu0
    %8527 = vmatpush.bf16.msra.mxu0 %v7393
    %8528 = vmatpush.bf16.msra.mxu0 %v7386
    %8529 = vmatpush.bf16.msra.mxu0 %v7379
    %8530 = vmatpush.bf16.msra.mxu0 %v7372
    %8531 = vmatpush.bf16.msra.mxu0 %v7365
    %8532 = vmatpush.bf16.msra.mxu0 %v7358
    %8533 = vmatpush.bf16.msra.mxu0 %v7351
    %8534 = vmatpush.bf16.msra.mxu0 %v7344
    %8535 = vmatmul.bf16.gmra.mxu0 %v593
    %v8536 = vpop.f32.mrf.mxu0
    %v8537 = vadd.f32 %v8524, %v8536
    %v8538 = vpop.f32.mrf.mxu0
    %8539 = vdwg.mxu0
    %8540 = vmatpush.bf16.msra.mxu0 %v7449
    %8541 = vmatpush.bf16.msra.mxu0 %v7442
    %8542 = vmatpush.bf16.msra.mxu0 %v7435
    %8543 = vmatpush.bf16.msra.mxu0 %v7428
    %8544 = vmatpush.bf16.msra.mxu0 %v7421
    %8545 = vmatpush.bf16.msra.mxu0 %v7414
    %8546 = vmatpush.bf16.msra.mxu0 %v7407
    %8547 = vmatpush.bf16.msra.mxu0 %v7400
    %8548 = vmatmul.bf16.gmra.mxu0 %v594
    %v8549 = vpop.f32.mrf.mxu0
    %v8550 = vadd.f32 %v8537, %v8549
    %v8551 = vpop.f32.mrf.mxu0
    %8552 = vdwg.mxu0
    %8553 = vmatpush.bf16.msra.mxu0 %v7505
    %8554 = vmatpush.bf16.msra.mxu0 %v7498
    %8555 = vmatpush.bf16.msra.mxu0 %v7491
    %8556 = vmatpush.bf16.msra.mxu0 %v7484
    %8557 = vmatpush.bf16.msra.mxu0 %v7477
    %8558 = vmatpush.bf16.msra.mxu0 %v7470
    %8559 = vmatpush.bf16.msra.mxu0 %v7463
    %8560 = vmatpush.bf16.msra.mxu0 %v7456
    %8561 = vmatmul.bf16.gmra.mxu0 %v595
    %v8562 = vpop.f32.mrf.mxu0
    %v8563 = vadd.f32 %v8550, %v8562
    %v8564 = vpop.f32.mrf.mxu0
    %8565 = vdwg.mxu0
    %8566 = vmatpush.bf16.msra.mxu0 %v7561
    %8567 = vmatpush.bf16.msra.mxu0 %v7554
    %8568 = vmatpush.bf16.msra.mxu0 %v7547
    %8569 = vmatpush.bf16.msra.mxu0 %v7540
    %8570 = vmatpush.bf16.msra.mxu0 %v7533
    %8571 = vmatpush.bf16.msra.mxu0 %v7526
    %8572 = vmatpush.bf16.msra.mxu0 %v7519
    %8573 = vmatpush.bf16.msra.mxu0 %v7512
    %8574 = vmatmul.bf16.gmra.mxu0 %v596
    %v8575 = vpop.f32.mrf.mxu0
    %v8576 = vadd.f32 %v8563, %v8575
    %v8577 = vpop.f32.mrf.mxu0
    %8578 = vdwg.mxu0
    %8579 = vmatpush.bf16.msra.mxu0 %v7617
    %8580 = vmatpush.bf16.msra.mxu0 %v7610
    %8581 = vmatpush.bf16.msra.mxu0 %v7603
    %8582 = vmatpush.bf16.msra.mxu0 %v7596
    %8583 = vmatpush.bf16.msra.mxu0 %v7589
    %8584 = vmatpush.bf16.msra.mxu0 %v7582
    %8585 = vmatpush.bf16.msra.mxu0 %v7575
    %8586 = vmatpush.bf16.msra.mxu0 %v7568
    %8587 = vmatmul.bf16.gmra.mxu0 %v597
    %v8588 = vpop.f32.mrf.mxu0
    %v8589 = vadd.f32 %v8576, %v8588
    %v8590 = vpop.f32.mrf.mxu0
    %8591 = vdwg.mxu0
    %8592 = vmatpush.bf16.msra.mxu0 0
    %8593 = vmatpush.bf16.msra.mxu0 0
    %8594 = vmatpush.bf16.msra.mxu0 0
    %8595 = vmatpush.bf16.msra.mxu0 0
    %8596 = vmatpush.bf16.msra.mxu0 0
    %8597 = vmatpush.bf16.msra.mxu0 0
    %8598 = vmatpush.bf16.msra.mxu0 0
    %8599 = vmatpush.bf16.msra.mxu0 %v7624
    %8600 = vmatmul.bf16.gmra.mxu0 %v2371
    %v8601 = vpop.f32.mrf.mxu0
    %v8602 = vadd.f32 %v8589, %v8601
    %v8603 = vpop.f32.mrf.mxu0
    %8604 = vdwg.mxu0
    %v8605 = vmax.f32 %v5804, %v8056
    %v8606 = vmax.f32 %v5805, %v8147
    %v8607 = vmax.f32 %v5806, %v8238
    %v8608 = vmax.f32 %v5807, %v8329
    %v8609 = vmax.f32 %v5808, %v8420
    %v8610 = vmax.f32 %v5809, %v8511
    %v8611 = vmax.f32 %v5810, %v8602
    %s8612 = scalar_lea.vmem [#allocation2], 8232
    %v8613 = vld [vmem:[%s8612] sm:$0xff]
    %v8614 = vld [vmem:[%s8612 + $0x8] sm:$0xff]
    %v8615 = vld [vmem:[%s8612 + $0x10] sm:$0xff]
    %v8616 = vld [vmem:[%s8612 + $0x18] sm:$0xf]
    %v8617 = vld [vmem:[%s8612 + $0x1c] sm:$0xff]
    %v8618 = vld [vmem:[%s8612 + $0x24] sm:$0xff]
    %v8619 = vld [vmem:[%s8612 + $0x2c] sm:$0xff]
    %v8620 = vld [vmem:[%s8612 + $0x34] sm:$0xf]
    %v8621 = vld [vmem:[%s8612 + $0x38] sm:$0xff]
    %v8622 = vld [vmem:[%s8612 + $0x40] sm:$0xff]
    %v8623 = vld [vmem:[%s8612 + $0x48] sm:$0xff]
    %v8624 = vld [vmem:[%s8612 + $0x50] sm:$0xf]
    %v8625 = vld [vmem:[%s8612 + $0x54] sm:$0xff]
    %v8626 = vld [vmem:[%s8612 + $0x5c] sm:$0xff]
    %v8627 = vld [vmem:[%s8612 + $0x64] sm:$0xff]
    %v8628 = vld [vmem:[%s8612 + $0x6c] sm:$0xf]
    %v8629 = vld [vmem:[%s8612 + $0x70] sm:$0xff]
    %v8630 = vld [vmem:[%s8612 + $0x78] sm:$0xff]
    %v8631 = vld [vmem:[%s8612 + $0x80] sm:$0xff]
    %v8632 = vld [vmem:[%s8612 + $0x88] sm:$0xf]
    %v8633 = vld [vmem:[%s8612 + $0x8c] sm:$0xff]
    %v8634 = vld [vmem:[%s8612 + $0x94] sm:$0xff]
    %v8635 = vld [vmem:[%s8612 + $0x9c] sm:$0xff]
    %v8636 = vld [vmem:[%s8612 + $0xa4] sm:$0xf]
    %v8637 = vld [vmem:[%s8612 + $0xa8] sm:$0xff]
    %v8638 = vld [vmem:[%s8612 + $0xb0] sm:$0xff]
    %v8639 = vld [vmem:[%s8612 + $0xb8] sm:$0xff]
    %v8640 = vld [vmem:[%s8612 + $0xc0] sm:$0xf]
    %v8641 = vld [vmem:[%s8612 + $0xc4] sm:$0xff]
    %v8642 = vld [vmem:[%s8612 + $0xcc] sm:$0xff]
    %v8643 = vld [vmem:[%s8612 + $0xd4] sm:$0xff]
    %v8644 = vld [vmem:[%s8612 + $0xdc] sm:$0xf]
    %v8645 = vld [vmem:[%s8612 + $0xe0] sm:$0xff]
    %v8646 = vld [vmem:[%s8612 + $0xe8] sm:$0xff]
    %v8647 = vld [vmem:[%s8612 + $0xf0] sm:$0xff]
    %v8648 = vld [vmem:[%s8612 + $0xf8] sm:$0xf]
    %v8649 = vld [vmem:[%s8612 + $0xfc] sm:$0xff]
    %v8650 = vld [vmem:[%s8612 + $0x104] sm:$0xff]
    %v8651 = vld [vmem:[%s8612 + $0x10c] sm:$0xff]
    %v8652 = vld [vmem:[%s8612 + $0x114] sm:$0xf]
    %v8653 = vld [vmem:[%s8612 + $0x118] sm:$0xff]
    %v8654 = vld [vmem:[%s8612 + $0x120] sm:$0xff]
    %v8655 = vld [vmem:[%s8612 + $0x128] sm:$0xff]
    %v8656 = vld [vmem:[%s8612 + $0x130] sm:$0xf]
    %v8657 = vld [vmem:[%s8612 + $0x134] sm:$0xff]
    %v8658 = vld [vmem:[%s8612 + $0x13c] sm:$0xff]
    %v8659 = vld [vmem:[%s8612 + $0x144] sm:$0xff]
    %v8660 = vld [vmem:[%s8612 + $0x14c] sm:$0xf]
    %v8661 = vld [vmem:[%s8612 + $0x150] sm:$0xff]
    %v8662 = vld [vmem:[%s8612 + $0x158] sm:$0xff]
    %v8663 = vld [vmem:[%s8612 + $0x160] sm:$0xff]
    %v8664 = vld [vmem:[%s8612 + $0x168] sm:$0xf]
    %v8665 = vld [vmem:[%s8612 + $0x16c] sm:$0xff]
    %v8666 = vld [vmem:[%s8612 + $0x174] sm:$0xff]
    %v8667 = vld [vmem:[%s8612 + $0x17c] sm:$0xff]
    %v8668 = vld [vmem:[%s8612 + $0x184] sm:$0xf]
    %v8669 = vld [vmem:[%s8612 + $0x188] sm:$0xff]
    %v8670 = vld [vmem:[%s8612 + $0x190] sm:$0xff]
    %v8671 = vld [vmem:[%s8612 + $0x198] sm:$0xff]
    %v8672 = vld [vmem:[%s8612 + $0x1a0] sm:$0xf]
    %v8673 = vld [vmem:[%s8612 + $0x1a4] sm:$0xff]
    %v8674 = vld [vmem:[%s8612 + $0x1ac] sm:$0xff]
    %v8675 = vld [vmem:[%s8612 + $0x1b4] sm:$0xff]
    %v8676 = vld [vmem:[%s8612 + $0x1bc] sm:$0xf]
    %v8677 = vld [vmem:[%s8612 + $0x1c0] sm:$0xff]
    %v8678 = vld [vmem:[%s8612 + $0x1c8] sm:$0xff]
    %v8679 = vld [vmem:[%s8612 + $0x1d0] sm:$0xff]
    %v8680 = vld [vmem:[%s8612 + $0x1d8] sm:$0xf]
    %v8681 = vld [vmem:[%s8612 + $0x1dc] sm:$0xff]
    %v8682 = vld [vmem:[%s8612 + $0x1e4] sm:$0xff]
    %v8683 = vld [vmem:[%s8612 + $0x1ec] sm:$0xff]
    %v8684 = vld [vmem:[%s8612 + $0x1f4] sm:$0xf]
    %v8685 = vld [vmem:[%s8612 + $0x1f8] sm:$0xff]
    %v8686 = vld [vmem:[%s8612 + $0x200] sm:$0xff]
    %v8687 = vld [vmem:[%s8612 + $0x208] sm:$0xff]
    %v8688 = vld [vmem:[%s8612 + $0x210] sm:$0xf]
    %v8689 = vld [vmem:[%s8612 + $0x214] sm:$0xff]
    %v8690 = vld [vmem:[%s8612 + $0x21c] sm:$0xff]
    %v8691 = vld [vmem:[%s8612 + $0x224] sm:$0xff]
    %v8692 = vld [vmem:[%s8612 + $0x22c] sm:$0xf]
    %v8693 = vld [vmem:[%s8612 + $0x230] sm:$0xff]
    %v8694 = vld [vmem:[%s8612 + $0x238] sm:$0xff]
    %v8695 = vld [vmem:[%s8612 + $0x240] sm:$0xff]
    %v8696 = vld [vmem:[%s8612 + $0x248] sm:$0xf]
    %v8697 = vld [vmem:[%s8612 + $0x24c] sm:$0xff]
    %v8698 = vld [vmem:[%s8612 + $0x254] sm:$0xff]
    %v8699 = vld [vmem:[%s8612 + $0x25c] sm:$0xff]
    %v8700 = vld [vmem:[%s8612 + $0x264] sm:$0xf]
    %v8701 = vld [vmem:[%s8612 + $0x268] sm:$0xff]
    %v8702 = vld [vmem:[%s8612 + $0x270] sm:$0xff]
    %v8703 = vld [vmem:[%s8612 + $0x278] sm:$0xff]
    %v8704 = vld [vmem:[%s8612 + $0x280] sm:$0xf]
    %v8705 = vld [vmem:[%s8612 + $0x284] sm:$0xff]
    %v8706 = vld [vmem:[%s8612 + $0x28c] sm:$0xff]
    %v8707 = vld [vmem:[%s8612 + $0x294] sm:$0xff]
    %v8708 = vld [vmem:[%s8612 + $0x29c] sm:$0xf]
    %v8709 = vld [vmem:[%s8612 + $0x2a0] sm:$0xff]
    %v8710 = vld [vmem:[%s8612 + $0x2a8] sm:$0xff]
    %v8711 = vld [vmem:[%s8612 + $0x2b0] sm:$0xff]
    %v8712 = vld [vmem:[%s8612 + $0x2b8] sm:$0xf]
    %v8713 = vld [vmem:[%s8612 + $0x2bc] sm:$0xff]
    %v8714 = vld [vmem:[%s8612 + $0x2c4] sm:$0xff]
    %v8715 = vld [vmem:[%s8612 + $0x2cc] sm:$0xff]
    %v8716 = vld [vmem:[%s8612 + $0x2d4] sm:$0xf]
    %v8717 = vld [vmem:[%s8612 + $0x2d8] sm:$0xff]
    %v8718 = vld [vmem:[%s8612 + $0x2e0] sm:$0xff]
    %v8719 = vld [vmem:[%s8612 + $0x2e8] sm:$0xff]
    %v8720 = vld [vmem:[%s8612 + $0x2f0] sm:$0xf]
    %v8721 = vld [vmem:[%s8612 + $0x2f4] sm:$0xff]
    %v8722 = vld [vmem:[%s8612 + $0x2fc] sm:$0xff]
    %v8723 = vld [vmem:[%s8612 + $0x304] sm:$0xff]
    %v8724 = vld [vmem:[%s8612 + $0x30c] sm:$0xf]
    %v8725 = vld [vmem:[%s8612 + $0x310] sm:$0xff]
    %v8726 = vld [vmem:[%s8612 + $0x318] sm:$0xff]
    %v8727 = vld [vmem:[%s8612 + $0x320] sm:$0xff]
    %v8728 = vld [vmem:[%s8612 + $0x328] sm:$0xf]
    %v8729 = vld [vmem:[%s8612 + $0x32c] sm:$0xff]
    %v8730 = vld [vmem:[%s8612 + $0x334] sm:$0xff]
    %v8731 = vld [vmem:[%s8612 + $0x33c] sm:$0xff]
    %v8732 = vld [vmem:[%s8612 + $0x344] sm:$0xf]
    %v8733 = vld [vmem:[%s8612 + $0x348] sm:$0xff]
    %v8734 = vld [vmem:[%s8612 + $0x350] sm:$0xff]
    %v8735 = vld [vmem:[%s8612 + $0x358] sm:$0xff]
    %v8736 = vld [vmem:[%s8612 + $0x360] sm:$0xf]
    %v8737 = vld [vmem:[%s8612 + $0x364] sm:$0xff]
    %v8738 = vld [vmem:[%s8612 + $0x36c] sm:$0xff]
    %v8739 = vld [vmem:[%s8612 + $0x374] sm:$0xff]
    %v8740 = vld [vmem:[%s8612 + $0x37c] sm:$0xf]
    %v8741 = vld [vmem:[%s8612 + $0x380] sm:$0xff]
    %v8742 = vld [vmem:[%s8612 + $0x388] sm:$0xff]
    %v8743 = vld [vmem:[%s8612 + $0x390] sm:$0xff]
    %v8744 = vld [vmem:[%s8612 + $0x398] sm:$0xf]
    %v8745 = vld [vmem:[%s8612 + $0x39c] sm:$0xff]
    %v8746 = vld [vmem:[%s8612 + $0x3a4] sm:$0xff]
    %v8747 = vld [vmem:[%s8612 + $0x3ac] sm:$0xff]
    %v8748 = vld [vmem:[%s8612 + $0x3b4] sm:$0xf]
    %v8749 = vld [vmem:[%s8612 + $0x3b8] sm:$0xff]
    %v8750 = vld [vmem:[%s8612 + $0x3c0] sm:$0xff]
    %v8751 = vld [vmem:[%s8612 + $0x3c8] sm:$0xff]
    %v8752 = vld [vmem:[%s8612 + $0x3d0] sm:$0xf]
    %v8753 = vld [vmem:[%s8612 + $0x3d4] sm:$0xff]
    %v8754 = vld [vmem:[%s8612 + $0x3dc] sm:$0xff]
    %v8755 = vld [vmem:[%s8612 + $0x3e4] sm:$0xff]
    %v8756 = vld [vmem:[%s8612 + $0x3ec] sm:$0xf]
    %v8757 = vld [vmem:[%s8612 + $0x3f0] sm:$0xff]
    %v8758 = vld [vmem:[%s8612 + $0x3f8] sm:$0xff]
    %v8759 = vld [vmem:[%s8612 + $0x400] sm:$0xff]
    %v8760 = vld [vmem:[%s8612 + $0x408] sm:$0xf]
    %v8761 = vld [vmem:[%s8612 + $0x40c] sm:$0xff]
    %v8762 = vld [vmem:[%s8612 + $0x414] sm:$0xff]
    %v8763 = vld [vmem:[%s8612 + $0x41c] sm:$0xff]
    %v8764 = vld [vmem:[%s8612 + $0x424] sm:$0xf]
    %v8765 = vld [vmem:[%s8612 + $0x428] sm:$0xff]
    %v8766 = vld [vmem:[%s8612 + $0x430] sm:$0xff]
    %v8767 = vld [vmem:[%s8612 + $0x438] sm:$0xff]
    %v8768 = vld [vmem:[%s8612 + $0x440] sm:$0xf]
    %v8769 = vld [vmem:[%s8612 + $0x444] sm:$0xff]
    %v8770 = vld [vmem:[%s8612 + $0x44c] sm:$0xff]
    %v8771 = vld [vmem:[%s8612 + $0x454] sm:$0xff]
    %v8772 = vld [vmem:[%s8612 + $0x45c] sm:$0xf]
    %v8773 = vld [vmem:[%s8612 + $0x460] sm:$0xff]
    %v8774 = vld [vmem:[%s8612 + $0x468] sm:$0xff]
    %v8775 = vld [vmem:[%s8612 + $0x470] sm:$0xff]
    %v8776 = vld [vmem:[%s8612 + $0x478] sm:$0xf]
    %v8777 = vld [vmem:[%s8612 + $0x47c] sm:$0xff]
    %v8778 = vld [vmem:[%s8612 + $0x484] sm:$0xff]
    %v8779 = vld [vmem:[%s8612 + $0x48c] sm:$0xff]
    %v8780 = vld [vmem:[%s8612 + $0x494] sm:$0xf]
    %v8781 = vld [vmem:[%s8612 + $0x498] sm:$0xff]
    %v8782 = vld [vmem:[%s8612 + $0x4a0] sm:$0xff]
    %v8783 = vld [vmem:[%s8612 + $0x4a8] sm:$0xff]
    %v8784 = vld [vmem:[%s8612 + $0x4b0] sm:$0xf]
    %v8785 = vld [vmem:[%s8612 + $0x4b4] sm:$0xff]
    %v8786 = vld [vmem:[%s8612 + $0x4bc] sm:$0xff]
    %v8787 = vld [vmem:[%s8612 + $0x4c4] sm:$0xff]
    %v8788 = vld [vmem:[%s8612 + $0x4cc] sm:$0xf]
    %v8789 = vld [vmem:[%s8612 + $0x4d0] sm:$0xff]
    %v8790 = vld [vmem:[%s8612 + $0x4d8] sm:$0xff]
    %v8791 = vld [vmem:[%s8612 + $0x4e0] sm:$0xff]
    %v8792 = vld [vmem:[%s8612 + $0x4e8] sm:$0xf]
    %v8793 = vld [vmem:[%s8612 + $0x4ec] sm:$0xff]
    %v8794 = vld [vmem:[%s8612 + $0x4f4] sm:$0xff]
    %v8795 = vld [vmem:[%s8612 + $0x4fc] sm:$0xff]
    %v8796 = vld [vmem:[%s8612 + $0x504] sm:$0xf]
    %v8797 = vld [vmem:[%s8612 + $0x508] sm:$0xff]
    %v8798 = vld [vmem:[%s8612 + $0x510] sm:$0xff]
    %v8799 = vld [vmem:[%s8612 + $0x518] sm:$0xff]
    %v8800 = vld [vmem:[%s8612 + $0x520] sm:$0xf]
    %v8801 = vld [vmem:[%s8612 + $0x524] sm:$0xff]
    %v8802 = vld [vmem:[%s8612 + $0x52c] sm:$0xff]
    %v8803 = vld [vmem:[%s8612 + $0x534] sm:$0xff]
    %v8804 = vld [vmem:[%s8612 + $0x53c] sm:$0xf]
    %v8805 = vld [vmem:[%s8612 + $0x540] sm:$0xff]
    %v8806 = vld [vmem:[%s8612 + $0x548] sm:$0xff]
    %v8807 = vld [vmem:[%s8612 + $0x550] sm:$0xff]
    %v8808 = vld [vmem:[%s8612 + $0x558] sm:$0xf]
    %v8809 = vld [vmem:[%s8612 + $0x55c] sm:$0xff]
    %v8810 = vld [vmem:[%s8612 + $0x564] sm:$0xff]
    %v8811 = vld [vmem:[%s8612 + $0x56c] sm:$0xff]
    %v8812 = vld [vmem:[%s8612 + $0x574] sm:$0xf]
    %v8813 = vld [vmem:[%s8612 + $0x578] sm:$0xff]
    %v8814 = vld [vmem:[%s8612 + $0x580] sm:$0xff]
    %v8815 = vld [vmem:[%s8612 + $0x588] sm:$0xff]
    %v8816 = vld [vmem:[%s8612 + $0x590] sm:$0xf]
    %v8817 = vld [vmem:[%s8612 + $0x594] sm:$0xff]
    %v8818 = vld [vmem:[%s8612 + $0x59c] sm:$0xff]
    %v8819 = vld [vmem:[%s8612 + $0x5a4] sm:$0xff]
    %v8820 = vld [vmem:[%s8612 + $0x5ac] sm:$0xf]
    %v8821 = vld [vmem:[%s8612 + $0x5b0] sm:$0xff]
    %v8822 = vld [vmem:[%s8612 + $0x5b8] sm:$0xff]
    %v8823 = vld [vmem:[%s8612 + $0x5c0] sm:$0xff]
    %v8824 = vld [vmem:[%s8612 + $0x5c8] sm:$0xf]
    %v8825 = vld [vmem:[%s8612 + $0x5cc] sm:$0xff]
    %v8826 = vld [vmem:[%s8612 + $0x5d4] sm:$0xff]
    %v8827 = vld [vmem:[%s8612 + $0x5dc] sm:$0xff]
    %v8828 = vld [vmem:[%s8612 + $0x5e4] sm:$0xf]
    %v8829 = vld [vmem:[%s8612 + $0x5e8] sm:$0xff]
    %v8830 = vld [vmem:[%s8612 + $0x5f0] sm:$0xff]
    %v8831 = vld [vmem:[%s8612 + $0x5f8] sm:$0xff]
    %v8832 = vld [vmem:[%s8612 + $0x600] sm:$0xf]
    %v8833 = vld [vmem:[%s8612 + $0x604] sm:$0xff]
    %v8834 = vld [vmem:[%s8612 + $0x60c] sm:$0xff]
    %v8835 = vld [vmem:[%s8612 + $0x614] sm:$0xff]
    %v8836 = vld [vmem:[%s8612 + $0x61c] sm:$0xf]
    %v8837 = vld [vmem:[%s8612 + $0x620] sm:$0xff]
    %v8838 = vld [vmem:[%s8612 + $0x628] sm:$0xff]
    %v8839 = vld [vmem:[%s8612 + $0x630] sm:$0xff]
    %v8840 = vld [vmem:[%s8612 + $0x638] sm:$0xf]
    %v8841 = vld [vmem:[%s8612 + $0x63c] sm:$0xff]
    %v8842 = vld [vmem:[%s8612 + $0x644] sm:$0xff]
    %v8843 = vld [vmem:[%s8612 + $0x64c] sm:$0xff]
    %v8844 = vld [vmem:[%s8612 + $0x654] sm:$0xf]
    %v8845 = vld [vmem:[%s8612 + $0x658] sm:$0xff]
    %v8846 = vld [vmem:[%s8612 + $0x660] sm:$0xff]
    %v8847 = vld [vmem:[%s8612 + $0x668] sm:$0xff]
    %v8848 = vld [vmem:[%s8612 + $0x670] sm:$0xf]
    %v8849 = vld [vmem:[%s8612 + $0x674] sm:$0xff]
    %v8850 = vld [vmem:[%s8612 + $0x67c] sm:$0xff]
    %v8851 = vld [vmem:[%s8612 + $0x684] sm:$0xff]
    %v8852 = vld [vmem:[%s8612 + $0x68c] sm:$0xf]
    %v8853 = vld [vmem:[%s8612 + $0x690] sm:$0xff]
    %v8854 = vld [vmem:[%s8612 + $0x698] sm:$0xff]
    %v8855 = vld [vmem:[%s8612 + $0x6a0] sm:$0xff]
    %v8856 = vld [vmem:[%s8612 + $0x6a8] sm:$0xf]
    %v8857 = vld [vmem:[%s8612 + $0x6ac] sm:$0xff]
    %v8858 = vld [vmem:[%s8612 + $0x6b4] sm:$0xff]
    %v8859 = vld [vmem:[%s8612 + $0x6bc] sm:$0xff]
    %v8860 = vld [vmem:[%s8612 + $0x6c4] sm:$0xf]
    %v8861 = vld [vmem:[%s8612 + $0x6c8] sm:$0xff]
    %v8862 = vld [vmem:[%s8612 + $0x6d0] sm:$0xff]
    %v8863 = vld [vmem:[%s8612 + $0x6d8] sm:$0xff]
    %v8864 = vld [vmem:[%s8612 + $0x6e0] sm:$0xf]
    %v8865 = vld [vmem:[%s8612 + $0x6e4] sm:$0xff]
    %v8866 = vld [vmem:[%s8612 + $0x6ec] sm:$0xff]
    %v8867 = vld [vmem:[%s8612 + $0x6f4] sm:$0xff]
    %v8868 = vld [vmem:[%s8612 + $0x6fc] sm:$0xf]
    %v8869 = vld [vmem:[%s8612 + $0x700] sm:$0xff]
    %v8870 = vld [vmem:[%s8612 + $0x708] sm:$0xff]
    %v8871 = vld [vmem:[%s8612 + $0x710] sm:$0xff]
    %v8872 = vld [vmem:[%s8612 + $0x718] sm:$0xf]
    %v8873 = vld [vmem:[%s8612 + $0x71c] sm:$0xff]
    %v8874 = vld [vmem:[%s8612 + $0x724] sm:$0xff]
    %v8875 = vld [vmem:[%s8612 + $0x72c] sm:$0xff]
    %v8876 = vld [vmem:[%s8612 + $0x734] sm:$0xf]
    %v8877 = vld [vmem:[%s8612 + $0x738] sm:$0xff]
    %v8878 = vld [vmem:[%s8612 + $0x740] sm:$0xff]
    %v8879 = vld [vmem:[%s8612 + $0x748] sm:$0xff]
    %v8880 = vld [vmem:[%s8612 + $0x750] sm:$0xf]
    %v8881 = vld [vmem:[%s8612 + $0x754] sm:$0xff]
    %v8882 = vld [vmem:[%s8612 + $0x75c] sm:$0xff]
    %v8883 = vld [vmem:[%s8612 + $0x764] sm:$0xff]
    %v8884 = vld [vmem:[%s8612 + $0x76c] sm:$0xf]
    %v8885 = vld [vmem:[%s8612 + $0x770] sm:$0xff]
    %v8886 = vld [vmem:[%s8612 + $0x778] sm:$0xff]
    %v8887 = vld [vmem:[%s8612 + $0x780] sm:$0xff]
    %v8888 = vld [vmem:[%s8612 + $0x788] sm:$0xf]
    %v8889 = vld [vmem:[%s8612 + $0x78c] sm:$0xff]
    %v8890 = vld [vmem:[%s8612 + $0x794] sm:$0xff]
    %v8891 = vld [vmem:[%s8612 + $0x79c] sm:$0xff]
    %v8892 = vld [vmem:[%s8612 + $0x7a4] sm:$0xf]
    %v8893 = vld [vmem:[%s8612 + $0x7a8] sm:$0xff]
    %v8894 = vld [vmem:[%s8612 + $0x7b0] sm:$0xff]
    %v8895 = vld [vmem:[%s8612 + $0x7b8] sm:$0xff]
    %v8896 = vld [vmem:[%s8612 + $0x7c0] sm:$0xf]
    %v8897 = vld [vmem:[%s8612 + $0x7c4] sm:$0xff]
    %v8898 = vld [vmem:[%s8612 + $0x7cc] sm:$0xff]
    %v8899 = vld [vmem:[%s8612 + $0x7d4] sm:$0xff]
    %v8900 = vld [vmem:[%s8612 + $0x7dc] sm:$0xf]
    %v8901 = vld [vmem:[%s8612 + $0x7e0] sm:$0xff]
    %v8902 = vld [vmem:[%s8612 + $0x7e8] sm:$0xff]
    %v8903 = vld [vmem:[%s8612 + $0x7f0] sm:$0xff]
    %v8904 = vld [vmem:[%s8612 + $0x7f8] sm:$0xf]
    %v8905 = vld [vmem:[%s8612 + $0x7fc] sm:$0xff]
    %v8906 = vld [vmem:[%s8612 + $0x804] sm:$0xff]
    %v8907 = vld [vmem:[%s8612 + $0x80c] sm:$0xff]
    %v8908 = vld [vmem:[%s8612 + $0x814] sm:$0xf]
    %v8909 = vld [vmem:[%s8612 + $0x818] sm:$0xff]
    %v8910 = vld [vmem:[%s8612 + $0x820] sm:$0xff]
    %v8911 = vld [vmem:[%s8612 + $0x828] sm:$0xff]
    %v8912 = vld [vmem:[%s8612 + $0x830] sm:$0xf]
    %v8913 = vld [vmem:[%s8612 + $0x834] sm:$0xff]
    %v8914 = vld [vmem:[%s8612 + $0x83c] sm:$0xff]
    %v8915 = vld [vmem:[%s8612 + $0x844] sm:$0xff]
    %v8916 = vld [vmem:[%s8612 + $0x84c] sm:$0xf]
    %v8917 = vld [vmem:[%s8612 + $0x850] sm:$0xff]
    %v8918 = vld [vmem:[%s8612 + $0x858] sm:$0xff]
    %v8919 = vld [vmem:[%s8612 + $0x860] sm:$0xff]
    %v8920 = vld [vmem:[%s8612 + $0x868] sm:$0xf]
    %v8921 = vld [vmem:[%s8612 + $0x86c] sm:$0xff]
    %v8922 = vld [vmem:[%s8612 + $0x874] sm:$0xff]
    %v8923 = vld [vmem:[%s8612 + $0x87c] sm:$0xff]
    %v8924 = vld [vmem:[%s8612 + $0x884] sm:$0xf]
    %v8925 = vld [vmem:[%s8612 + $0x888] sm:$0xff]
    %v8926 = vld [vmem:[%s8612 + $0x890] sm:$0xff]
    %v8927 = vld [vmem:[%s8612 + $0x898] sm:$0xff]
    %v8928 = vld [vmem:[%s8612 + $0x8a0] sm:$0xf]
    %v8929 = vld [vmem:[%s8612 + $0x8a4] sm:$0xff]
    %v8930 = vld [vmem:[%s8612 + $0x8ac] sm:$0xff]
    %v8931 = vld [vmem:[%s8612 + $0x8b4] sm:$0xff]
    %v8932 = vld [vmem:[%s8612 + $0x8bc] sm:$0xf]
    %v8933 = vld [vmem:[%s8612 + $0x8c0] sm:$0xff]
    %v8934 = vld [vmem:[%s8612 + $0x8c8] sm:$0xff]
    %v8935 = vld [vmem:[%s8612 + $0x8d0] sm:$0xff]
    %v8936 = vld [vmem:[%s8612 + $0x8d8] sm:$0xf]
    %v8937 = vld [vmem:[%s8612 + $0x8dc] sm:$0xff]
    %v8938 = vld [vmem:[%s8612 + $0x8e4] sm:$0xff]
    %v8939 = vld [vmem:[%s8612 + $0x8ec] sm:$0xff]
    %v8940 = vld [vmem:[%s8612 + $0x8f4] sm:$0xf]
    %v8941 = vld [vmem:[%s8612 + $0x8f8] sm:$0xff]
    %v8942 = vld [vmem:[%s8612 + $0x900] sm:$0xff]
    %v8943 = vld [vmem:[%s8612 + $0x908] sm:$0xff]
    %v8944 = vld [vmem:[%s8612 + $0x910] sm:$0xf]
    %v8945 = vld [vmem:[%s8612 + $0x914] sm:$0xff]
    %v8946 = vld [vmem:[%s8612 + $0x91c] sm:$0xff]
    %v8947 = vld [vmem:[%s8612 + $0x924] sm:$0xff]
    %v8948 = vld [vmem:[%s8612 + $0x92c] sm:$0xf]
    %v8949 = vld [vmem:[%s8612 + $0x930] sm:$0xff]
    %v8950 = vld [vmem:[%s8612 + $0x938] sm:$0xff]
    %v8951 = vld [vmem:[%s8612 + $0x940] sm:$0xff]
    %v8952 = vld [vmem:[%s8612 + $0x948] sm:$0xf]
    %v8953 = vld [vmem:[%s8612 + $0x94c] sm:$0xff]
    %v8954 = vld [vmem:[%s8612 + $0x954] sm:$0xff]
    %v8955 = vld [vmem:[%s8612 + $0x95c] sm:$0xff]
    %v8956 = vld [vmem:[%s8612 + $0x964] sm:$0xf]
    %v8957 = vld [vmem:[%s8612 + $0x968] sm:$0xff]
    %v8958 = vld [vmem:[%s8612 + $0x970] sm:$0xff]
    %v8959 = vld [vmem:[%s8612 + $0x978] sm:$0xff]
    %v8960 = vld [vmem:[%s8612 + $0x980] sm:$0xf]
    %v8961 = vld [vmem:[%s8612 + $0x984] sm:$0xff]
    %v8962 = vld [vmem:[%s8612 + $0x98c] sm:$0xff]
    %v8963 = vld [vmem:[%s8612 + $0x994] sm:$0xff]
    %v8964 = vld [vmem:[%s8612 + $0x99c] sm:$0xf]
    %v8965 = vld [vmem:[%s8612 + $0x9a0] sm:$0xff]
    %v8966 = vld [vmem:[%s8612 + $0x9a8] sm:$0xff]
    %v8967 = vld [vmem:[%s8612 + $0x9b0] sm:$0xff]
    %v8968 = vld [vmem:[%s8612 + $0x9b8] sm:$0xf]
    %v8969 = vld [vmem:[%s8612 + $0x9bc] sm:$0xff]
    %v8970 = vld [vmem:[%s8612 + $0x9c4] sm:$0xff]
    %v8971 = vld [vmem:[%s8612 + $0x9cc] sm:$0xff]
    %v8972 = vld [vmem:[%s8612 + $0x9d4] sm:$0xf]
    %v8973 = vld [vmem:[%s8612 + $0x9d8] sm:$0xff]
    %v8974 = vld [vmem:[%s8612 + $0x9e0] sm:$0xff]
    %v8975 = vld [vmem:[%s8612 + $0x9e8] sm:$0xff]
    %v8976 = vld [vmem:[%s8612 + $0x9f0] sm:$0xf]
    %v8977 = vld [vmem:[%s8612 + $0x9f4] sm:$0xff]
    %v8978 = vld [vmem:[%s8612 + $0x9fc] sm:$0xff]
    %v8979 = vld [vmem:[%s8612 + $0xa04] sm:$0xff]
    %v8980 = vld [vmem:[%s8612 + $0xa0c] sm:$0xf]
    %v8981 = vld [vmem:[%s8612 + $0xa10] sm:$0xff]
    %v8982 = vld [vmem:[%s8612 + $0xa18] sm:$0xff]
    %v8983 = vld [vmem:[%s8612 + $0xa20] sm:$0xff]
    %v8984 = vld [vmem:[%s8612 + $0xa28] sm:$0xf]
    %v8985 = vld [vmem:[%s8612 + $0xa2c] sm:$0xff]
    %v8986 = vld [vmem:[%s8612 + $0xa34] sm:$0xff]
    %v8987 = vld [vmem:[%s8612 + $0xa3c] sm:$0xff]
    %v8988 = vld [vmem:[%s8612 + $0xa44] sm:$0xf]
    %v8989 = vld [vmem:[%s8612 + $0xa48] sm:$0xff]
    %v8990 = vld [vmem:[%s8612 + $0xa50] sm:$0xff]
    %v8991 = vld [vmem:[%s8612 + $0xa58] sm:$0xff]
    %v8992 = vld [vmem:[%s8612 + $0xa60] sm:$0xf]
    %v8993 = vld [vmem:[%s8612 + $0xa64] sm:$0xff]
    %v8994 = vld [vmem:[%s8612 + $0xa6c] sm:$0xff]
    %v8995 = vld [vmem:[%s8612 + $0xa74] sm:$0xff]
    %v8996 = vld [vmem:[%s8612 + $0xa7c] sm:$0xf]
    %v8997 = vld [vmem:[%s8612 + $0xa80] sm:$0xff]
    %v8998 = vld [vmem:[%s8612 + $0xa88] sm:$0xff]
    %v8999 = vld [vmem:[%s8612 + $0xa90] sm:$0xff]
    %v9000 = vld [vmem:[%s8612 + $0xa98] sm:$0xf]
    %v9001 = vld [vmem:[%s8612 + $0xa9c] sm:$0xff]
    %v9002 = vld [vmem:[%s8612 + $0xaa4] sm:$0xff]
    %v9003 = vld [vmem:[%s8612 + $0xaac] sm:$0xff]
    %v9004 = vld [vmem:[%s8612 + $0xab4] sm:$0xf]
    %v9397 = vunpack.c.l.b16 %v8613
    %v9398 = vunpack.c.h.b16 %v8613
    %v9399 = vunpack.c.l.b16 %v8614
    %v9400 = vunpack.c.h.b16 %v8614
    %v9401 = vunpack.c.l.b16 %v8615
    %v9402 = vunpack.c.h.b16 %v8615
    %v9403 = vunpack.c.l.b16 %v8616
    %v9404 = vunpack.c.l.b16 %v8617
    %v9405 = vunpack.c.h.b16 %v8617
    %v9406 = vunpack.c.l.b16 %v8618
    %v9407 = vunpack.c.h.b16 %v8618
    %v9408 = vunpack.c.l.b16 %v8619
    %v9409 = vunpack.c.h.b16 %v8619
    %v9410 = vunpack.c.l.b16 %v8620
    %v9411 = vunpack.c.l.b16 %v8621
    %v9412 = vunpack.c.h.b16 %v8621
    %v9413 = vunpack.c.l.b16 %v8622
    %v9414 = vunpack.c.h.b16 %v8622
    %v9415 = vunpack.c.l.b16 %v8623
    %v9416 = vunpack.c.h.b16 %v8623
    %v9417 = vunpack.c.l.b16 %v8624
    %v9418 = vunpack.c.l.b16 %v8625
    %v9419 = vunpack.c.h.b16 %v8625
    %v9420 = vunpack.c.l.b16 %v8626
    %v9421 = vunpack.c.h.b16 %v8626
    %v9422 = vunpack.c.l.b16 %v8627
    %v9423 = vunpack.c.h.b16 %v8627
    %v9424 = vunpack.c.l.b16 %v8628
    %v9425 = vunpack.c.l.b16 %v8629
    %v9426 = vunpack.c.h.b16 %v8629
    %v9427 = vunpack.c.l.b16 %v8630
    %v9428 = vunpack.c.h.b16 %v8630
    %v9429 = vunpack.c.l.b16 %v8631
    %v9430 = vunpack.c.h.b16 %v8631
    %v9431 = vunpack.c.l.b16 %v8632
    %v9432 = vunpack.c.l.b16 %v8633
    %v9433 = vunpack.c.h.b16 %v8633
    %v9434 = vunpack.c.l.b16 %v8634
    %v9435 = vunpack.c.h.b16 %v8634
    %v9436 = vunpack.c.l.b16 %v8635
    %v9437 = vunpack.c.h.b16 %v8635
    %v9438 = vunpack.c.l.b16 %v8636
    %v9439 = vunpack.c.l.b16 %v8637
    %v9440 = vunpack.c.h.b16 %v8637
    %v9441 = vunpack.c.l.b16 %v8638
    %v9442 = vunpack.c.h.b16 %v8638
    %v9443 = vunpack.c.l.b16 %v8639
    %v9444 = vunpack.c.h.b16 %v8639
    %v9445 = vunpack.c.l.b16 %v8640
    %v9446 = vunpack.c.l.b16 %v8641
    %v9447 = vunpack.c.h.b16 %v8641
    %v9448 = vunpack.c.l.b16 %v8642
    %v9449 = vunpack.c.h.b16 %v8642
    %v9450 = vunpack.c.l.b16 %v8643
    %v9451 = vunpack.c.h.b16 %v8643
    %v9452 = vunpack.c.l.b16 %v8644
    %v9453 = vunpack.c.l.b16 %v8645
    %v9454 = vunpack.c.h.b16 %v8645
    %v9455 = vunpack.c.l.b16 %v8646
    %v9456 = vunpack.c.h.b16 %v8646
    %v9457 = vunpack.c.l.b16 %v8647
    %v9458 = vunpack.c.h.b16 %v8647
    %v9459 = vunpack.c.l.b16 %v8648
    %v9460 = vunpack.c.l.b16 %v8649
    %v9461 = vunpack.c.h.b16 %v8649
    %v9462 = vunpack.c.l.b16 %v8650
    %v9463 = vunpack.c.h.b16 %v8650
    %v9464 = vunpack.c.l.b16 %v8651
    %v9465 = vunpack.c.h.b16 %v8651
    %v9466 = vunpack.c.l.b16 %v8652
    %v9467 = vunpack.c.l.b16 %v8653
    %v9468 = vunpack.c.h.b16 %v8653
    %v9469 = vunpack.c.l.b16 %v8654
    %v9470 = vunpack.c.h.b16 %v8654
    %v9471 = vunpack.c.l.b16 %v8655
    %v9472 = vunpack.c.h.b16 %v8655
    %v9473 = vunpack.c.l.b16 %v8656
    %v9474 = vunpack.c.l.b16 %v8657
    %v9475 = vunpack.c.h.b16 %v8657
    %v9476 = vunpack.c.l.b16 %v8658
    %v9477 = vunpack.c.h.b16 %v8658
    %v9478 = vunpack.c.l.b16 %v8659
    %v9479 = vunpack.c.h.b16 %v8659
    %v9480 = vunpack.c.l.b16 %v8660
    %v9481 = vunpack.c.l.b16 %v8661
    %v9482 = vunpack.c.h.b16 %v8661
    %v9483 = vunpack.c.l.b16 %v8662
    %v9484 = vunpack.c.h.b16 %v8662
    %v9485 = vunpack.c.l.b16 %v8663
    %v9486 = vunpack.c.h.b16 %v8663
    %v9487 = vunpack.c.l.b16 %v8664
    %v9488 = vunpack.c.l.b16 %v8665
    %v9489 = vunpack.c.h.b16 %v8665
    %v9490 = vunpack.c.l.b16 %v8666
    %v9491 = vunpack.c.h.b16 %v8666
    %v9492 = vunpack.c.l.b16 %v8667
    %v9493 = vunpack.c.h.b16 %v8667
    %v9494 = vunpack.c.l.b16 %v8668
    %v9495 = vunpack.c.l.b16 %v8669
    %v9496 = vunpack.c.h.b16 %v8669
    %v9497 = vunpack.c.l.b16 %v8670
    %v9498 = vunpack.c.h.b16 %v8670
    %v9499 = vunpack.c.l.b16 %v8671
    %v9500 = vunpack.c.h.b16 %v8671
    %v9501 = vunpack.c.l.b16 %v8672
    %v9502 = vunpack.c.l.b16 %v8673
    %v9503 = vunpack.c.h.b16 %v8673
    %v9504 = vunpack.c.l.b16 %v8674
    %v9505 = vunpack.c.h.b16 %v8674
    %v9506 = vunpack.c.l.b16 %v8675
    %v9507 = vunpack.c.h.b16 %v8675
    %v9508 = vunpack.c.l.b16 %v8676
    %v9509 = vunpack.c.l.b16 %v8677
    %v9510 = vunpack.c.h.b16 %v8677
    %v9511 = vunpack.c.l.b16 %v8678
    %v9512 = vunpack.c.h.b16 %v8678
    %v9513 = vunpack.c.l.b16 %v8679
    %v9514 = vunpack.c.h.b16 %v8679
    %v9515 = vunpack.c.l.b16 %v8680
    %v9516 = vunpack.c.l.b16 %v8681
    %v9517 = vunpack.c.h.b16 %v8681
    %v9518 = vunpack.c.l.b16 %v8682
    %v9519 = vunpack.c.h.b16 %v8682
    %v9520 = vunpack.c.l.b16 %v8683
    %v9521 = vunpack.c.h.b16 %v8683
    %v9522 = vunpack.c.l.b16 %v8684
    %v9523 = vunpack.c.l.b16 %v8685
    %v9524 = vunpack.c.h.b16 %v8685
    %v9525 = vunpack.c.l.b16 %v8686
    %v9526 = vunpack.c.h.b16 %v8686
    %v9527 = vunpack.c.l.b16 %v8687
    %v9528 = vunpack.c.h.b16 %v8687
    %v9529 = vunpack.c.l.b16 %v8688
    %v9530 = vunpack.c.l.b16 %v8689
    %v9531 = vunpack.c.h.b16 %v8689
    %v9532 = vunpack.c.l.b16 %v8690
    %v9533 = vunpack.c.h.b16 %v8690
    %v9534 = vunpack.c.l.b16 %v8691
    %v9535 = vunpack.c.h.b16 %v8691
    %v9536 = vunpack.c.l.b16 %v8692
    %v9537 = vunpack.c.l.b16 %v8693
    %v9538 = vunpack.c.h.b16 %v8693
    %v9539 = vunpack.c.l.b16 %v8694
    %v9540 = vunpack.c.h.b16 %v8694
    %v9541 = vunpack.c.l.b16 %v8695
    %v9542 = vunpack.c.h.b16 %v8695
    %v9543 = vunpack.c.l.b16 %v8696
    %v9544 = vunpack.c.l.b16 %v8697
    %v9545 = vunpack.c.h.b16 %v8697
    %v9546 = vunpack.c.l.b16 %v8698
    %v9547 = vunpack.c.h.b16 %v8698
    %v9548 = vunpack.c.l.b16 %v8699
    %v9549 = vunpack.c.h.b16 %v8699
    %v9550 = vunpack.c.l.b16 %v8700
    %v9551 = vunpack.c.l.b16 %v8701
    %v9552 = vunpack.c.h.b16 %v8701
    %v9553 = vunpack.c.l.b16 %v8702
    %v9554 = vunpack.c.h.b16 %v8702
    %v9555 = vunpack.c.l.b16 %v8703
    %v9556 = vunpack.c.h.b16 %v8703
    %v9557 = vunpack.c.l.b16 %v8704
    %v9558 = vunpack.c.l.b16 %v8705
    %v9559 = vunpack.c.h.b16 %v8705
    %v9560 = vunpack.c.l.b16 %v8706
    %v9561 = vunpack.c.h.b16 %v8706
    %v9562 = vunpack.c.l.b16 %v8707
    %v9563 = vunpack.c.h.b16 %v8707
    %v9564 = vunpack.c.l.b16 %v8708
    %v9565 = vunpack.c.l.b16 %v8709
    %v9566 = vunpack.c.h.b16 %v8709
    %v9567 = vunpack.c.l.b16 %v8710
    %v9568 = vunpack.c.h.b16 %v8710
    %v9569 = vunpack.c.l.b16 %v8711
    %v9570 = vunpack.c.h.b16 %v8711
    %v9571 = vunpack.c.l.b16 %v8712
    %v9572 = vunpack.c.l.b16 %v8713
    %v9573 = vunpack.c.h.b16 %v8713
    %v9574 = vunpack.c.l.b16 %v8714
    %v9575 = vunpack.c.h.b16 %v8714
    %v9576 = vunpack.c.l.b16 %v8715
    %v9577 = vunpack.c.h.b16 %v8715
    %v9578 = vunpack.c.l.b16 %v8716
    %v9579 = vunpack.c.l.b16 %v8717
    %v9580 = vunpack.c.h.b16 %v8717
    %v9581 = vunpack.c.l.b16 %v8718
    %v9582 = vunpack.c.h.b16 %v8718
    %v9583 = vunpack.c.l.b16 %v8719
    %v9584 = vunpack.c.h.b16 %v8719
    %v9585 = vunpack.c.l.b16 %v8720
    %v9586 = vunpack.c.l.b16 %v8721
    %v9587 = vunpack.c.h.b16 %v8721
    %v9588 = vunpack.c.l.b16 %v8722
    %v9589 = vunpack.c.h.b16 %v8722
    %v9590 = vunpack.c.l.b16 %v8723
    %v9591 = vunpack.c.h.b16 %v8723
    %v9592 = vunpack.c.l.b16 %v8724
    %v9593 = vunpack.c.l.b16 %v8725
    %v9594 = vunpack.c.h.b16 %v8725
    %v9595 = vunpack.c.l.b16 %v8726
    %v9596 = vunpack.c.h.b16 %v8726
    %v9597 = vunpack.c.l.b16 %v8727
    %v9598 = vunpack.c.h.b16 %v8727
    %v9599 = vunpack.c.l.b16 %v8728
    %v9600 = vunpack.c.l.b16 %v8729
    %v9601 = vunpack.c.h.b16 %v8729
    %v9602 = vunpack.c.l.b16 %v8730
    %v9603 = vunpack.c.h.b16 %v8730
    %v9604 = vunpack.c.l.b16 %v8731
    %v9605 = vunpack.c.h.b16 %v8731
    %v9606 = vunpack.c.l.b16 %v8732
    %v9607 = vunpack.c.l.b16 %v8733
    %v9608 = vunpack.c.h.b16 %v8733
    %v9609 = vunpack.c.l.b16 %v8734
    %v9610 = vunpack.c.h.b16 %v8734
    %v9611 = vunpack.c.l.b16 %v8735
    %v9612 = vunpack.c.h.b16 %v8735
    %v9613 = vunpack.c.l.b16 %v8736
    %v9614 = vunpack.c.l.b16 %v8737
    %v9615 = vunpack.c.h.b16 %v8737
    %v9616 = vunpack.c.l.b16 %v8738
    %v9617 = vunpack.c.h.b16 %v8738
    %v9618 = vunpack.c.l.b16 %v8739
    %v9619 = vunpack.c.h.b16 %v8739
    %v9620 = vunpack.c.l.b16 %v8740
    %v9621 = vunpack.c.l.b16 %v8741
    %v9622 = vunpack.c.h.b16 %v8741
    %v9623 = vunpack.c.l.b16 %v8742
    %v9624 = vunpack.c.h.b16 %v8742
    %v9625 = vunpack.c.l.b16 %v8743
    %v9626 = vunpack.c.h.b16 %v8743
    %v9627 = vunpack.c.l.b16 %v8744
    %v9628 = vunpack.c.l.b16 %v8745
    %v9629 = vunpack.c.h.b16 %v8745
    %v9630 = vunpack.c.l.b16 %v8746
    %v9631 = vunpack.c.h.b16 %v8746
    %v9632 = vunpack.c.l.b16 %v8747
    %v9633 = vunpack.c.h.b16 %v8747
    %v9634 = vunpack.c.l.b16 %v8748
    %v9635 = vunpack.c.l.b16 %v8749
    %v9636 = vunpack.c.h.b16 %v8749
    %v9637 = vunpack.c.l.b16 %v8750
    %v9638 = vunpack.c.h.b16 %v8750
    %v9639 = vunpack.c.l.b16 %v8751
    %v9640 = vunpack.c.h.b16 %v8751
    %v9641 = vunpack.c.l.b16 %v8752
    %v9642 = vunpack.c.l.b16 %v8753
    %v9643 = vunpack.c.h.b16 %v8753
    %v9644 = vunpack.c.l.b16 %v8754
    %v9645 = vunpack.c.h.b16 %v8754
    %v9646 = vunpack.c.l.b16 %v8755
    %v9647 = vunpack.c.h.b16 %v8755
    %v9648 = vunpack.c.l.b16 %v8756
    %v9649 = vunpack.c.l.b16 %v8757
    %v9650 = vunpack.c.h.b16 %v8757
    %v9651 = vunpack.c.l.b16 %v8758
    %v9652 = vunpack.c.h.b16 %v8758
    %v9653 = vunpack.c.l.b16 %v8759
    %v9654 = vunpack.c.h.b16 %v8759
    %v9655 = vunpack.c.l.b16 %v8760
    %v9656 = vunpack.c.l.b16 %v8761
    %v9657 = vunpack.c.h.b16 %v8761
    %v9658 = vunpack.c.l.b16 %v8762
    %v9659 = vunpack.c.h.b16 %v8762
    %v9660 = vunpack.c.l.b16 %v8763
    %v9661 = vunpack.c.h.b16 %v8763
    %v9662 = vunpack.c.l.b16 %v8764
    %v9663 = vunpack.c.l.b16 %v8765
    %v9664 = vunpack.c.h.b16 %v8765
    %v9665 = vunpack.c.l.b16 %v8766
    %v9666 = vunpack.c.h.b16 %v8766
    %v9667 = vunpack.c.l.b16 %v8767
    %v9668 = vunpack.c.h.b16 %v8767
    %v9669 = vunpack.c.l.b16 %v8768
    %v9670 = vunpack.c.l.b16 %v8769
    %v9671 = vunpack.c.h.b16 %v8769
    %v9672 = vunpack.c.l.b16 %v8770
    %v9673 = vunpack.c.h.b16 %v8770
    %v9674 = vunpack.c.l.b16 %v8771
    %v9675 = vunpack.c.h.b16 %v8771
    %v9676 = vunpack.c.l.b16 %v8772
    %v9677 = vunpack.c.l.b16 %v8773
    %v9678 = vunpack.c.h.b16 %v8773
    %v9679 = vunpack.c.l.b16 %v8774
    %v9680 = vunpack.c.h.b16 %v8774
    %v9681 = vunpack.c.l.b16 %v8775
    %v9682 = vunpack.c.h.b16 %v8775
    %v9683 = vunpack.c.l.b16 %v8776
    %v9684 = vunpack.c.l.b16 %v8777
    %v9685 = vunpack.c.h.b16 %v8777
    %v9686 = vunpack.c.l.b16 %v8778
    %v9687 = vunpack.c.h.b16 %v8778
    %v9688 = vunpack.c.l.b16 %v8779
    %v9689 = vunpack.c.h.b16 %v8779
    %v9690 = vunpack.c.l.b16 %v8780
    %v9691 = vunpack.c.l.b16 %v8781
    %v9692 = vunpack.c.h.b16 %v8781
    %v9693 = vunpack.c.l.b16 %v8782
    %v9694 = vunpack.c.h.b16 %v8782
    %v9695 = vunpack.c.l.b16 %v8783
    %v9696 = vunpack.c.h.b16 %v8783
    %v9697 = vunpack.c.l.b16 %v8784
    %v9698 = vunpack.c.l.b16 %v8785
    %v9699 = vunpack.c.h.b16 %v8785
    %v9700 = vunpack.c.l.b16 %v8786
    %v9701 = vunpack.c.h.b16 %v8786
    %v9702 = vunpack.c.l.b16 %v8787
    %v9703 = vunpack.c.h.b16 %v8787
    %v9704 = vunpack.c.l.b16 %v8788
    %v9705 = vunpack.c.l.b16 %v8789
    %v9706 = vunpack.c.h.b16 %v8789
    %v9707 = vunpack.c.l.b16 %v8790
    %v9708 = vunpack.c.h.b16 %v8790
    %v9709 = vunpack.c.l.b16 %v8791
    %v9710 = vunpack.c.h.b16 %v8791
    %v9711 = vunpack.c.l.b16 %v8792
    %v9712 = vunpack.c.l.b16 %v8793
    %v9713 = vunpack.c.h.b16 %v8793
    %v9714 = vunpack.c.l.b16 %v8794
    %v9715 = vunpack.c.h.b16 %v8794
    %v9716 = vunpack.c.l.b16 %v8795
    %v9717 = vunpack.c.h.b16 %v8795
    %v9718 = vunpack.c.l.b16 %v8796
    %v9719 = vunpack.c.l.b16 %v8797
    %v9720 = vunpack.c.h.b16 %v8797
    %v9721 = vunpack.c.l.b16 %v8798
    %v9722 = vunpack.c.h.b16 %v8798
    %v9723 = vunpack.c.l.b16 %v8799
    %v9724 = vunpack.c.h.b16 %v8799
    %v9725 = vunpack.c.l.b16 %v8800
    %v9726 = vunpack.c.l.b16 %v8801
    %v9727 = vunpack.c.h.b16 %v8801
    %v9728 = vunpack.c.l.b16 %v8802
    %v9729 = vunpack.c.h.b16 %v8802
    %v9730 = vunpack.c.l.b16 %v8803
    %v9731 = vunpack.c.h.b16 %v8803
    %v9732 = vunpack.c.l.b16 %v8804
    %v9733 = vunpack.c.l.b16 %v8805
    %v9734 = vunpack.c.h.b16 %v8805
    %v9735 = vunpack.c.l.b16 %v8806
    %v9736 = vunpack.c.h.b16 %v8806
    %v9737 = vunpack.c.l.b16 %v8807
    %v9738 = vunpack.c.h.b16 %v8807
    %v9739 = vunpack.c.l.b16 %v8808
    %v9740 = vunpack.c.l.b16 %v8809
    %v9741 = vunpack.c.h.b16 %v8809
    %v9742 = vunpack.c.l.b16 %v8810
    %v9743 = vunpack.c.h.b16 %v8810
    %v9744 = vunpack.c.l.b16 %v8811
    %v9745 = vunpack.c.h.b16 %v8811
    %v9746 = vunpack.c.l.b16 %v8812
    %v9747 = vunpack.c.l.b16 %v8813
    %v9748 = vunpack.c.h.b16 %v8813
    %v9749 = vunpack.c.l.b16 %v8814
    %v9750 = vunpack.c.h.b16 %v8814
    %v9751 = vunpack.c.l.b16 %v8815
    %v9752 = vunpack.c.h.b16 %v8815
    %v9753 = vunpack.c.l.b16 %v8816
    %v9754 = vunpack.c.l.b16 %v8817
    %v9755 = vunpack.c.h.b16 %v8817
    %v9756 = vunpack.c.l.b16 %v8818
    %v9757 = vunpack.c.h.b16 %v8818
    %v9758 = vunpack.c.l.b16 %v8819
    %v9759 = vunpack.c.h.b16 %v8819
    %v9760 = vunpack.c.l.b16 %v8820
    %v9761 = vunpack.c.l.b16 %v8821
    %v9762 = vunpack.c.h.b16 %v8821
    %v9763 = vunpack.c.l.b16 %v8822
    %v9764 = vunpack.c.h.b16 %v8822
    %v9765 = vunpack.c.l.b16 %v8823
    %v9766 = vunpack.c.h.b16 %v8823
    %v9767 = vunpack.c.l.b16 %v8824
    %v9768 = vunpack.c.l.b16 %v8825
    %v9769 = vunpack.c.h.b16 %v8825
    %v9770 = vunpack.c.l.b16 %v8826
    %v9771 = vunpack.c.h.b16 %v8826
    %v9772 = vunpack.c.l.b16 %v8827
    %v9773 = vunpack.c.h.b16 %v8827
    %v9774 = vunpack.c.l.b16 %v8828
    %v9775 = vunpack.c.l.b16 %v8829
    %v9776 = vunpack.c.h.b16 %v8829
    %v9777 = vunpack.c.l.b16 %v8830
    %v9778 = vunpack.c.h.b16 %v8830
    %v9779 = vunpack.c.l.b16 %v8831
    %v9780 = vunpack.c.h.b16 %v8831
    %v9781 = vunpack.c.l.b16 %v8832
    %v9782 = vunpack.c.l.b16 %v8833
    %v9783 = vunpack.c.h.b16 %v8833
    %v9784 = vunpack.c.l.b16 %v8834
    %v9785 = vunpack.c.h.b16 %v8834
    %v9786 = vunpack.c.l.b16 %v8835
    %v9787 = vunpack.c.h.b16 %v8835
    %v9788 = vunpack.c.l.b16 %v8836
    %v9789 = vunpack.c.l.b16 %v8837
    %v9790 = vunpack.c.h.b16 %v8837
    %v9791 = vunpack.c.l.b16 %v8838
    %v9792 = vunpack.c.h.b16 %v8838
    %v9793 = vunpack.c.l.b16 %v8839
    %v9794 = vunpack.c.h.b16 %v8839
    %v9795 = vunpack.c.l.b16 %v8840
    %v9796 = vunpack.c.l.b16 %v8841
    %v9797 = vunpack.c.h.b16 %v8841
    %v9798 = vunpack.c.l.b16 %v8842
    %v9799 = vunpack.c.h.b16 %v8842
    %v9800 = vunpack.c.l.b16 %v8843
    %v9801 = vunpack.c.h.b16 %v8843
    %v9802 = vunpack.c.l.b16 %v8844
    %v9803 = vunpack.c.l.b16 %v8845
    %v9804 = vunpack.c.h.b16 %v8845
    %v9805 = vunpack.c.l.b16 %v8846
    %v9806 = vunpack.c.h.b16 %v8846
    %v9807 = vunpack.c.l.b16 %v8847
    %v9808 = vunpack.c.h.b16 %v8847
    %v9809 = vunpack.c.l.b16 %v8848
    %v9810 = vunpack.c.l.b16 %v8849
    %v9811 = vunpack.c.h.b16 %v8849
    %v9812 = vunpack.c.l.b16 %v8850
    %v9813 = vunpack.c.h.b16 %v8850
    %v9814 = vunpack.c.l.b16 %v8851
    %v9815 = vunpack.c.h.b16 %v8851
    %v9816 = vunpack.c.l.b16 %v8852
    %v9817 = vunpack.c.l.b16 %v8853
    %v9818 = vunpack.c.h.b16 %v8853
    %v9819 = vunpack.c.l.b16 %v8854
    %v9820 = vunpack.c.h.b16 %v8854
    %v9821 = vunpack.c.l.b16 %v8855
    %v9822 = vunpack.c.h.b16 %v8855
    %v9823 = vunpack.c.l.b16 %v8856
    %v9824 = vunpack.c.l.b16 %v8857
    %v9825 = vunpack.c.h.b16 %v8857
    %v9826 = vunpack.c.l.b16 %v8858
    %v9827 = vunpack.c.h.b16 %v8858
    %v9828 = vunpack.c.l.b16 %v8859
    %v9829 = vunpack.c.h.b16 %v8859
    %v9830 = vunpack.c.l.b16 %v8860
    %v9831 = vunpack.c.l.b16 %v8861
    %v9832 = vunpack.c.h.b16 %v8861
    %v9833 = vunpack.c.l.b16 %v8862
    %v9834 = vunpack.c.h.b16 %v8862
    %v9835 = vunpack.c.l.b16 %v8863
    %v9836 = vunpack.c.h.b16 %v8863
    %v9837 = vunpack.c.l.b16 %v8864
    %v9838 = vunpack.c.l.b16 %v8865
    %v9839 = vunpack.c.h.b16 %v8865
    %v9840 = vunpack.c.l.b16 %v8866
    %v9841 = vunpack.c.h.b16 %v8866
    %v9842 = vunpack.c.l.b16 %v8867
    %v9843 = vunpack.c.h.b16 %v8867
    %v9844 = vunpack.c.l.b16 %v8868
    %v9845 = vunpack.c.l.b16 %v8869
    %v9846 = vunpack.c.h.b16 %v8869
    %v9847 = vunpack.c.l.b16 %v8870
    %v9848 = vunpack.c.h.b16 %v8870
    %v9849 = vunpack.c.l.b16 %v8871
    %v9850 = vunpack.c.h.b16 %v8871
    %v9851 = vunpack.c.l.b16 %v8872
    %v9852 = vunpack.c.l.b16 %v8873
    %v9853 = vunpack.c.h.b16 %v8873
    %v9854 = vunpack.c.l.b16 %v8874
    %v9855 = vunpack.c.h.b16 %v8874
    %v9856 = vunpack.c.l.b16 %v8875
    %v9857 = vunpack.c.h.b16 %v8875
    %v9858 = vunpack.c.l.b16 %v8876
    %v9859 = vunpack.c.l.b16 %v8877
    %v9860 = vunpack.c.h.b16 %v8877
    %v9861 = vunpack.c.l.b16 %v8878
    %v9862 = vunpack.c.h.b16 %v8878
    %v9863 = vunpack.c.l.b16 %v8879
    %v9864 = vunpack.c.h.b16 %v8879
    %v9865 = vunpack.c.l.b16 %v8880
    %v9866 = vunpack.c.l.b16 %v8881
    %v9867 = vunpack.c.h.b16 %v8881
    %v9868 = vunpack.c.l.b16 %v8882
    %v9869 = vunpack.c.h.b16 %v8882
    %v9870 = vunpack.c.l.b16 %v8883
    %v9871 = vunpack.c.h.b16 %v8883
    %v9872 = vunpack.c.l.b16 %v8884
    %v9873 = vunpack.c.l.b16 %v8885
    %v9874 = vunpack.c.h.b16 %v8885
    %v9875 = vunpack.c.l.b16 %v8886
    %v9876 = vunpack.c.h.b16 %v8886
    %v9877 = vunpack.c.l.b16 %v8887
    %v9878 = vunpack.c.h.b16 %v8887
    %v9879 = vunpack.c.l.b16 %v8888
    %v9880 = vunpack.c.l.b16 %v8889
    %v9881 = vunpack.c.h.b16 %v8889
    %v9882 = vunpack.c.l.b16 %v8890
    %v9883 = vunpack.c.h.b16 %v8890
    %v9884 = vunpack.c.l.b16 %v8891
    %v9885 = vunpack.c.h.b16 %v8891
    %v9886 = vunpack.c.l.b16 %v8892
    %v9887 = vunpack.c.l.b16 %v8893
    %v9888 = vunpack.c.h.b16 %v8893
    %v9889 = vunpack.c.l.b16 %v8894
    %v9890 = vunpack.c.h.b16 %v8894
    %v9891 = vunpack.c.l.b16 %v8895
    %v9892 = vunpack.c.h.b16 %v8895
    %v9893 = vunpack.c.l.b16 %v8896
    %v9894 = vunpack.c.l.b16 %v8897
    %v9895 = vunpack.c.h.b16 %v8897
    %v9896 = vunpack.c.l.b16 %v8898
    %v9897 = vunpack.c.h.b16 %v8898
    %v9898 = vunpack.c.l.b16 %v8899
    %v9899 = vunpack.c.h.b16 %v8899
    %v9900 = vunpack.c.l.b16 %v8900
    %v9901 = vunpack.c.l.b16 %v8901
    %v9902 = vunpack.c.h.b16 %v8901
    %v9903 = vunpack.c.l.b16 %v8902
    %v9904 = vunpack.c.h.b16 %v8902
    %v9905 = vunpack.c.l.b16 %v8903
    %v9906 = vunpack.c.h.b16 %v8903
    %v9907 = vunpack.c.l.b16 %v8904
    %v9908 = vunpack.c.l.b16 %v8905
    %v9909 = vunpack.c.h.b16 %v8905
    %v9910 = vunpack.c.l.b16 %v8906
    %v9911 = vunpack.c.h.b16 %v8906
    %v9912 = vunpack.c.l.b16 %v8907
    %v9913 = vunpack.c.h.b16 %v8907
    %v9914 = vunpack.c.l.b16 %v8908
    %v9915 = vunpack.c.l.b16 %v8909
    %v9916 = vunpack.c.h.b16 %v8909
    %v9917 = vunpack.c.l.b16 %v8910
    %v9918 = vunpack.c.h.b16 %v8910
    %v9919 = vunpack.c.l.b16 %v8911
    %v9920 = vunpack.c.h.b16 %v8911
    %v9921 = vunpack.c.l.b16 %v8912
    %v9922 = vunpack.c.l.b16 %v8913
    %v9923 = vunpack.c.h.b16 %v8913
    %v9924 = vunpack.c.l.b16 %v8914
    %v9925 = vunpack.c.h.b16 %v8914
    %v9926 = vunpack.c.l.b16 %v8915
    %v9927 = vunpack.c.h.b16 %v8915
    %v9928 = vunpack.c.l.b16 %v8916
    %v9929 = vunpack.c.l.b16 %v8917
    %v9930 = vunpack.c.h.b16 %v8917
    %v9931 = vunpack.c.l.b16 %v8918
    %v9932 = vunpack.c.h.b16 %v8918
    %v9933 = vunpack.c.l.b16 %v8919
    %v9934 = vunpack.c.h.b16 %v8919
    %v9935 = vunpack.c.l.b16 %v8920
    %v9936 = vunpack.c.l.b16 %v8921
    %v9937 = vunpack.c.h.b16 %v8921
    %v9938 = vunpack.c.l.b16 %v8922
    %v9939 = vunpack.c.h.b16 %v8922
    %v9940 = vunpack.c.l.b16 %v8923
    %v9941 = vunpack.c.h.b16 %v8923
    %v9942 = vunpack.c.l.b16 %v8924
    %v9943 = vunpack.c.l.b16 %v8925
    %v9944 = vunpack.c.h.b16 %v8925
    %v9945 = vunpack.c.l.b16 %v8926
    %v9946 = vunpack.c.h.b16 %v8926
    %v9947 = vunpack.c.l.b16 %v8927
    %v9948 = vunpack.c.h.b16 %v8927
    %v9949 = vunpack.c.l.b16 %v8928
    %v9950 = vunpack.c.l.b16 %v8929
    %v9951 = vunpack.c.h.b16 %v8929
    %v9952 = vunpack.c.l.b16 %v8930
    %v9953 = vunpack.c.h.b16 %v8930
    %v9954 = vunpack.c.l.b16 %v8931
    %v9955 = vunpack.c.h.b16 %v8931
    %v9956 = vunpack.c.l.b16 %v8932
    %v9957 = vunpack.c.l.b16 %v8933
    %v9958 = vunpack.c.h.b16 %v8933
    %v9959 = vunpack.c.l.b16 %v8934
    %v9960 = vunpack.c.h.b16 %v8934
    %v9961 = vunpack.c.l.b16 %v8935
    %v9962 = vunpack.c.h.b16 %v8935
    %v9963 = vunpack.c.l.b16 %v8936
    %v9964 = vunpack.c.l.b16 %v8937
    %v9965 = vunpack.c.h.b16 %v8937
    %v9966 = vunpack.c.l.b16 %v8938
    %v9967 = vunpack.c.h.b16 %v8938
    %v9968 = vunpack.c.l.b16 %v8939
    %v9969 = vunpack.c.h.b16 %v8939
    %v9970 = vunpack.c.l.b16 %v8940
    %v9971 = vunpack.c.l.b16 %v8941
    %v9972 = vunpack.c.h.b16 %v8941
    %v9973 = vunpack.c.l.b16 %v8942
    %v9974 = vunpack.c.h.b16 %v8942
    %v9975 = vunpack.c.l.b16 %v8943
    %v9976 = vunpack.c.h.b16 %v8943
    %v9977 = vunpack.c.l.b16 %v8944
    %v9978 = vunpack.c.l.b16 %v8945
    %v9979 = vunpack.c.h.b16 %v8945
    %v9980 = vunpack.c.l.b16 %v8946
    %v9981 = vunpack.c.h.b16 %v8946
    %v9982 = vunpack.c.l.b16 %v8947
    %v9983 = vunpack.c.h.b16 %v8947
    %v9984 = vunpack.c.l.b16 %v8948
    %v9985 = vunpack.c.l.b16 %v8949
    %v9986 = vunpack.c.h.b16 %v8949
    %v9987 = vunpack.c.l.b16 %v8950
    %v9988 = vunpack.c.h.b16 %v8950
    %v9989 = vunpack.c.l.b16 %v8951
    %v9990 = vunpack.c.h.b16 %v8951
    %v9991 = vunpack.c.l.b16 %v8952
    %v9992 = vunpack.c.l.b16 %v8953
    %v9993 = vunpack.c.h.b16 %v8953
    %v9994 = vunpack.c.l.b16 %v8954
    %v9995 = vunpack.c.h.b16 %v8954
    %v9996 = vunpack.c.l.b16 %v8955
    %v9997 = vunpack.c.h.b16 %v8955
    %v9998 = vunpack.c.l.b16 %v8956
    %v9999 = vunpack.c.l.b16 %v8957
    %v10000 = vunpack.c.h.b16 %v8957
    %v10001 = vunpack.c.l.b16 %v8958
    %v10002 = vunpack.c.h.b16 %v8958
    %v10003 = vunpack.c.l.b16 %v8959
    %v10004 = vunpack.c.h.b16 %v8959
    %v10005 = vunpack.c.l.b16 %v8960
    %v10006 = vunpack.c.l.b16 %v8961
    %v10007 = vunpack.c.h.b16 %v8961
    %v10008 = vunpack.c.l.b16 %v8962
    %v10009 = vunpack.c.h.b16 %v8962
    %v10010 = vunpack.c.l.b16 %v8963
    %v10011 = vunpack.c.h.b16 %v8963
    %v10012 = vunpack.c.l.b16 %v8964
    %v10013 = vunpack.c.l.b16 %v8965
    %v10014 = vunpack.c.h.b16 %v8965
    %v10015 = vunpack.c.l.b16 %v8966
    %v10016 = vunpack.c.h.b16 %v8966
    %v10017 = vunpack.c.l.b16 %v8967
    %v10018 = vunpack.c.h.b16 %v8967
    %v10019 = vunpack.c.l.b16 %v8968
    %v10020 = vunpack.c.l.b16 %v8969
    %v10021 = vunpack.c.h.b16 %v8969
    %v10022 = vunpack.c.l.b16 %v8970
    %v10023 = vunpack.c.h.b16 %v8970
    %v10024 = vunpack.c.l.b16 %v8971
    %v10025 = vunpack.c.h.b16 %v8971
    %v10026 = vunpack.c.l.b16 %v8972
    %v10027 = vunpack.c.l.b16 %v8973
    %v10028 = vunpack.c.h.b16 %v8973
    %v10029 = vunpack.c.l.b16 %v8974
    %v10030 = vunpack.c.h.b16 %v8974
    %v10031 = vunpack.c.l.b16 %v8975
    %v10032 = vunpack.c.h.b16 %v8975
    %v10033 = vunpack.c.l.b16 %v8976
    %v10034 = vunpack.c.l.b16 %v8977
    %v10035 = vunpack.c.h.b16 %v8977
    %v10036 = vunpack.c.l.b16 %v8978
    %v10037 = vunpack.c.h.b16 %v8978
    %v10038 = vunpack.c.l.b16 %v8979
    %v10039 = vunpack.c.h.b16 %v8979
    %v10040 = vunpack.c.l.b16 %v8980
    %v10041 = vunpack.c.l.b16 %v8981
    %v10042 = vunpack.c.h.b16 %v8981
    %v10043 = vunpack.c.l.b16 %v8982
    %v10044 = vunpack.c.h.b16 %v8982
    %v10045 = vunpack.c.l.b16 %v8983
    %v10046 = vunpack.c.h.b16 %v8983
    %v10047 = vunpack.c.l.b16 %v8984
    %v10048 = vunpack.c.l.b16 %v8985
    %v10049 = vunpack.c.h.b16 %v8985
    %v10050 = vunpack.c.l.b16 %v8986
    %v10051 = vunpack.c.h.b16 %v8986
    %v10052 = vunpack.c.l.b16 %v8987
    %v10053 = vunpack.c.h.b16 %v8987
    %v10054 = vunpack.c.l.b16 %v8988
    %v10055 = vunpack.c.l.b16 %v8989
    %v10056 = vunpack.c.h.b16 %v8989
    %v10057 = vunpack.c.l.b16 %v8990
    %v10058 = vunpack.c.h.b16 %v8990
    %v10059 = vunpack.c.l.b16 %v8991
    %v10060 = vunpack.c.h.b16 %v8991
    %v10061 = vunpack.c.l.b16 %v8992
    %v10062 = vunpack.c.l.b16 %v8993
    %v10063 = vunpack.c.h.b16 %v8993
    %v10064 = vunpack.c.l.b16 %v8994
    %v10065 = vunpack.c.h.b16 %v8994
    %v10066 = vunpack.c.l.b16 %v8995
    %v10067 = vunpack.c.h.b16 %v8995
    %v10068 = vunpack.c.l.b16 %v8996
    %v10069 = vunpack.c.l.b16 %v8997
    %v10070 = vunpack.c.h.b16 %v8997
    %v10071 = vunpack.c.l.b16 %v8998
    %v10072 = vunpack.c.h.b16 %v8998
    %v10073 = vunpack.c.l.b16 %v8999
    %v10074 = vunpack.c.h.b16 %v8999
    %v10075 = vunpack.c.l.b16 %v9000
    %v10076 = vunpack.c.l.b16 %v9001
    %v10077 = vunpack.c.h.b16 %v9001
    %v10078 = vunpack.c.l.b16 %v9002
    %v10079 = vunpack.c.h.b16 %v9002
    %v10080 = vunpack.c.l.b16 %v9003
    %v10081 = vunpack.c.h.b16 %v9003
    %v10082 = vunpack.c.l.b16 %v9004
    %v10083 = vpack.c.b16 %v9404, %v9397
    %v10084 = vpack.c.b16 %v9405, %v9398
    %v10085 = vpack.c.b16 %v9406, %v9399
    %v10086 = vpack.c.b16 %v9407, %v9400
    %v10087 = vpack.c.b16 %v9408, %v9401
    %v10088 = vpack.c.b16 %v9409, %v9402
    %v10089 = vpack.c.b16 %v9410, %v9403
    %v10090 = vpack.c.b16 %v9418, %v9411
    %v10091 = vpack.c.b16 %v9419, %v9412
    %v10092 = vpack.c.b16 %v9420, %v9413
    %v10093 = vpack.c.b16 %v9421, %v9414
    %v10094 = vpack.c.b16 %v9422, %v9415
    %v10095 = vpack.c.b16 %v9423, %v9416
    %v10096 = vpack.c.b16 %v9424, %v9417
    %v10097 = vpack.c.b16 %v9432, %v9425
    %v10098 = vpack.c.b16 %v9433, %v9426
    %v10099 = vpack.c.b16 %v9434, %v9427
    %v10100 = vpack.c.b16 %v9435, %v9428
    %v10101 = vpack.c.b16 %v9436, %v9429
    %v10102 = vpack.c.b16 %v9437, %v9430
    %v10103 = vpack.c.b16 %v9438, %v9431
    %v10104 = vpack.c.b16 %v9446, %v9439
    %v10105 = vpack.c.b16 %v9447, %v9440
    %v10106 = vpack.c.b16 %v9448, %v9441
    %v10107 = vpack.c.b16 %v9449, %v9442
    %v10108 = vpack.c.b16 %v9450, %v9443
    %v10109 = vpack.c.b16 %v9451, %v9444
    %v10110 = vpack.c.b16 %v9452, %v9445
    %v10111 = vpack.c.b16 %v9460, %v9453
    %v10112 = vpack.c.b16 %v9461, %v9454
    %v10113 = vpack.c.b16 %v9462, %v9455
    %v10114 = vpack.c.b16 %v9463, %v9456
    %v10115 = vpack.c.b16 %v9464, %v9457
    %v10116 = vpack.c.b16 %v9465, %v9458
    %v10117 = vpack.c.b16 %v9466, %v9459
    %v10118 = vpack.c.b16 %v9474, %v9467
    %v10119 = vpack.c.b16 %v9475, %v9468
    %v10120 = vpack.c.b16 %v9476, %v9469
    %v10121 = vpack.c.b16 %v9477, %v9470
    %v10122 = vpack.c.b16 %v9478, %v9471
    %v10123 = vpack.c.b16 %v9479, %v9472
    %v10124 = vpack.c.b16 %v9480, %v9473
    %v10125 = vpack.c.b16 %v9488, %v9481
    %v10126 = vpack.c.b16 %v9489, %v9482
    %v10127 = vpack.c.b16 %v9490, %v9483
    %v10128 = vpack.c.b16 %v9491, %v9484
    %v10129 = vpack.c.b16 %v9492, %v9485
    %v10130 = vpack.c.b16 %v9493, %v9486
    %v10131 = vpack.c.b16 %v9494, %v9487
    %v10132 = vpack.c.b16 %v9502, %v9495
    %v10133 = vpack.c.b16 %v9503, %v9496
    %v10134 = vpack.c.b16 %v9504, %v9497
    %v10135 = vpack.c.b16 %v9505, %v9498
    %v10136 = vpack.c.b16 %v9506, %v9499
    %v10137 = vpack.c.b16 %v9507, %v9500
    %v10138 = vpack.c.b16 %v9508, %v9501
    %v10139 = vpack.c.b16 %v9516, %v9509
    %v10140 = vpack.c.b16 %v9517, %v9510
    %v10141 = vpack.c.b16 %v9518, %v9511
    %v10142 = vpack.c.b16 %v9519, %v9512
    %v10143 = vpack.c.b16 %v9520, %v9513
    %v10144 = vpack.c.b16 %v9521, %v9514
    %v10145 = vpack.c.b16 %v9522, %v9515
    %v10146 = vpack.c.b16 %v9530, %v9523
    %v10147 = vpack.c.b16 %v9531, %v9524
    %v10148 = vpack.c.b16 %v9532, %v9525
    %v10149 = vpack.c.b16 %v9533, %v9526
    %v10150 = vpack.c.b16 %v9534, %v9527
    %v10151 = vpack.c.b16 %v9535, %v9528
    %v10152 = vpack.c.b16 %v9536, %v9529
    %v10153 = vpack.c.b16 %v9544, %v9537
    %v10154 = vpack.c.b16 %v9545, %v9538
    %v10155 = vpack.c.b16 %v9546, %v9539
    %v10156 = vpack.c.b16 %v9547, %v9540
    %v10157 = vpack.c.b16 %v9548, %v9541
    %v10158 = vpack.c.b16 %v9549, %v9542
    %v10159 = vpack.c.b16 %v9550, %v9543
    %v10160 = vpack.c.b16 %v9558, %v9551
    %v10161 = vpack.c.b16 %v9559, %v9552
    %v10162 = vpack.c.b16 %v9560, %v9553
    %v10163 = vpack.c.b16 %v9561, %v9554
    %v10164 = vpack.c.b16 %v9562, %v9555
    %v10165 = vpack.c.b16 %v9563, %v9556
    %v10166 = vpack.c.b16 %v9564, %v9557
    %v10167 = vpack.c.b16 %v9572, %v9565
    %v10168 = vpack.c.b16 %v9573, %v9566
    %v10169 = vpack.c.b16 %v9574, %v9567
    %v10170 = vpack.c.b16 %v9575, %v9568
    %v10171 = vpack.c.b16 %v9576, %v9569
    %v10172 = vpack.c.b16 %v9577, %v9570
    %v10173 = vpack.c.b16 %v9578, %v9571
    %v10174 = vpack.c.b16 %v9586, %v9579
    %v10175 = vpack.c.b16 %v9587, %v9580
    %v10176 = vpack.c.b16 %v9588, %v9581
    %v10177 = vpack.c.b16 %v9589, %v9582
    %v10178 = vpack.c.b16 %v9590, %v9583
    %v10179 = vpack.c.b16 %v9591, %v9584
    %v10180 = vpack.c.b16 %v9592, %v9585
    %v10181 = vpack.c.b16 %v9600, %v9593
    %v10182 = vpack.c.b16 %v9601, %v9594
    %v10183 = vpack.c.b16 %v9602, %v9595
    %v10184 = vpack.c.b16 %v9603, %v9596
    %v10185 = vpack.c.b16 %v9604, %v9597
    %v10186 = vpack.c.b16 %v9605, %v9598
    %v10187 = vpack.c.b16 %v9606, %v9599
    %v10188 = vpack.c.b16 %v9614, %v9607
    %v10189 = vpack.c.b16 %v9615, %v9608
    %v10190 = vpack.c.b16 %v9616, %v9609
    %v10191 = vpack.c.b16 %v9617, %v9610
    %v10192 = vpack.c.b16 %v9618, %v9611
    %v10193 = vpack.c.b16 %v9619, %v9612
    %v10194 = vpack.c.b16 %v9620, %v9613
    %v10195 = vpack.c.b16 %v9628, %v9621
    %v10196 = vpack.c.b16 %v9629, %v9622
    %v10197 = vpack.c.b16 %v9630, %v9623
    %v10198 = vpack.c.b16 %v9631, %v9624
    %v10199 = vpack.c.b16 %v9632, %v9625
    %v10200 = vpack.c.b16 %v9633, %v9626
    %v10201 = vpack.c.b16 %v9634, %v9627
    %v10202 = vpack.c.b16 %v9642, %v9635
    %v10203 = vpack.c.b16 %v9643, %v9636
    %v10204 = vpack.c.b16 %v9644, %v9637
    %v10205 = vpack.c.b16 %v9645, %v9638
    %v10206 = vpack.c.b16 %v9646, %v9639
    %v10207 = vpack.c.b16 %v9647, %v9640
    %v10208 = vpack.c.b16 %v9648, %v9641
    %v10209 = vpack.c.b16 %v9656, %v9649
    %v10210 = vpack.c.b16 %v9657, %v9650
    %v10211 = vpack.c.b16 %v9658, %v9651
    %v10212 = vpack.c.b16 %v9659, %v9652
    %v10213 = vpack.c.b16 %v9660, %v9653
    %v10214 = vpack.c.b16 %v9661, %v9654
    %v10215 = vpack.c.b16 %v9662, %v9655
    %v10216 = vpack.c.b16 %v9670, %v9663
    %v10217 = vpack.c.b16 %v9671, %v9664
    %v10218 = vpack.c.b16 %v9672, %v9665
    %v10219 = vpack.c.b16 %v9673, %v9666
    %v10220 = vpack.c.b16 %v9674, %v9667
    %v10221 = vpack.c.b16 %v9675, %v9668
    %v10222 = vpack.c.b16 %v9676, %v9669
    %v10223 = vpack.c.b16 %v9684, %v9677
    %v10224 = vpack.c.b16 %v9685, %v9678
    %v10225 = vpack.c.b16 %v9686, %v9679
    %v10226 = vpack.c.b16 %v9687, %v9680
    %v10227 = vpack.c.b16 %v9688, %v9681
    %v10228 = vpack.c.b16 %v9689, %v9682
    %v10229 = vpack.c.b16 %v9690, %v9683
    %v10230 = vpack.c.b16 %v9698, %v9691
    %v10231 = vpack.c.b16 %v9699, %v9692
    %v10232 = vpack.c.b16 %v9700, %v9693
    %v10233 = vpack.c.b16 %v9701, %v9694
    %v10234 = vpack.c.b16 %v9702, %v9695
    %v10235 = vpack.c.b16 %v9703, %v9696
    %v10236 = vpack.c.b16 %v9704, %v9697
    %v10237 = vpack.c.b16 %v9712, %v9705
    %v10238 = vpack.c.b16 %v9713, %v9706
    %v10239 = vpack.c.b16 %v9714, %v9707
    %v10240 = vpack.c.b16 %v9715, %v9708
    %v10241 = vpack.c.b16 %v9716, %v9709
    %v10242 = vpack.c.b16 %v9717, %v9710
    %v10243 = vpack.c.b16 %v9718, %v9711
    %v10244 = vpack.c.b16 %v9726, %v9719
    %v10245 = vpack.c.b16 %v9727, %v9720
    %v10246 = vpack.c.b16 %v9728, %v9721
    %v10247 = vpack.c.b16 %v9729, %v9722
    %v10248 = vpack.c.b16 %v9730, %v9723
    %v10249 = vpack.c.b16 %v9731, %v9724
    %v10250 = vpack.c.b16 %v9732, %v9725
    %v10251 = vpack.c.b16 %v9740, %v9733
    %v10252 = vpack.c.b16 %v9741, %v9734
    %v10253 = vpack.c.b16 %v9742, %v9735
    %v10254 = vpack.c.b16 %v9743, %v9736
    %v10255 = vpack.c.b16 %v9744, %v9737
    %v10256 = vpack.c.b16 %v9745, %v9738
    %v10257 = vpack.c.b16 %v9746, %v9739
    %v10258 = vpack.c.b16 %v9754, %v9747
    %v10259 = vpack.c.b16 %v9755, %v9748
    %v10260 = vpack.c.b16 %v9756, %v9749
    %v10261 = vpack.c.b16 %v9757, %v9750
    %v10262 = vpack.c.b16 %v9758, %v9751
    %v10263 = vpack.c.b16 %v9759, %v9752
    %v10264 = vpack.c.b16 %v9760, %v9753
    %v10265 = vpack.c.b16 %v9768, %v9761
    %v10266 = vpack.c.b16 %v9769, %v9762
    %v10267 = vpack.c.b16 %v9770, %v9763
    %v10268 = vpack.c.b16 %v9771, %v9764
    %v10269 = vpack.c.b16 %v9772, %v9765
    %v10270 = vpack.c.b16 %v9773, %v9766
    %v10271 = vpack.c.b16 %v9774, %v9767
    %v10272 = vpack.c.b16 %v9782, %v9775
    %v10273 = vpack.c.b16 %v9783, %v9776
    %v10274 = vpack.c.b16 %v9784, %v9777
    %v10275 = vpack.c.b16 %v9785, %v9778
    %v10276 = vpack.c.b16 %v9786, %v9779
    %v10277 = vpack.c.b16 %v9787, %v9780
    %v10278 = vpack.c.b16 %v9788, %v9781
    %v10279 = vpack.c.b16 %v9796, %v9789
    %v10280 = vpack.c.b16 %v9797, %v9790
    %v10281 = vpack.c.b16 %v9798, %v9791
    %v10282 = vpack.c.b16 %v9799, %v9792
    %v10283 = vpack.c.b16 %v9800, %v9793
    %v10284 = vpack.c.b16 %v9801, %v9794
    %v10285 = vpack.c.b16 %v9802, %v9795
    %v10286 = vpack.c.b16 %v9810, %v9803
    %v10287 = vpack.c.b16 %v9811, %v9804
    %v10288 = vpack.c.b16 %v9812, %v9805
    %v10289 = vpack.c.b16 %v9813, %v9806
    %v10290 = vpack.c.b16 %v9814, %v9807
    %v10291 = vpack.c.b16 %v9815, %v9808
    %v10292 = vpack.c.b16 %v9816, %v9809
    %v10293 = vpack.c.b16 %v9824, %v9817
    %v10294 = vpack.c.b16 %v9825, %v9818
    %v10295 = vpack.c.b16 %v9826, %v9819
    %v10296 = vpack.c.b16 %v9827, %v9820
    %v10297 = vpack.c.b16 %v9828, %v9821
    %v10298 = vpack.c.b16 %v9829, %v9822
    %v10299 = vpack.c.b16 %v9830, %v9823
    %v10300 = vpack.c.b16 %v9838, %v9831
    %v10301 = vpack.c.b16 %v9839, %v9832
    %v10302 = vpack.c.b16 %v9840, %v9833
    %v10303 = vpack.c.b16 %v9841, %v9834
    %v10304 = vpack.c.b16 %v9842, %v9835
    %v10305 = vpack.c.b16 %v9843, %v9836
    %v10306 = vpack.c.b16 %v9844, %v9837
    %v10307 = vpack.c.b16 %v9852, %v9845
    %v10308 = vpack.c.b16 %v9853, %v9846
    %v10309 = vpack.c.b16 %v9854, %v9847
    %v10310 = vpack.c.b16 %v9855, %v9848
    %v10311 = vpack.c.b16 %v9856, %v9849
    %v10312 = vpack.c.b16 %v9857, %v9850
    %v10313 = vpack.c.b16 %v9858, %v9851
    %v10314 = vpack.c.b16 %v9866, %v9859
    %v10315 = vpack.c.b16 %v9867, %v9860
    %v10316 = vpack.c.b16 %v9868, %v9861
    %v10317 = vpack.c.b16 %v9869, %v9862
    %v10318 = vpack.c.b16 %v9870, %v9863
    %v10319 = vpack.c.b16 %v9871, %v9864
    %v10320 = vpack.c.b16 %v9872, %v9865
    %v10321 = vpack.c.b16 %v9880, %v9873
    %v10322 = vpack.c.b16 %v9881, %v9874
    %v10323 = vpack.c.b16 %v9882, %v9875
    %v10324 = vpack.c.b16 %v9883, %v9876
    %v10325 = vpack.c.b16 %v9884, %v9877
    %v10326 = vpack.c.b16 %v9885, %v9878
    %v10327 = vpack.c.b16 %v9886, %v9879
    %v10328 = vpack.c.b16 %v9894, %v9887
    %v10329 = vpack.c.b16 %v9895, %v9888
    %v10330 = vpack.c.b16 %v9896, %v9889
    %v10331 = vpack.c.b16 %v9897, %v9890
    %v10332 = vpack.c.b16 %v9898, %v9891
    %v10333 = vpack.c.b16 %v9899, %v9892
    %v10334 = vpack.c.b16 %v9900, %v9893
    %v10335 = vpack.c.b16 %v9908, %v9901
    %v10336 = vpack.c.b16 %v9909, %v9902
    %v10337 = vpack.c.b16 %v9910, %v9903
    %v10338 = vpack.c.b16 %v9911, %v9904
    %v10339 = vpack.c.b16 %v9912, %v9905
    %v10340 = vpack.c.b16 %v9913, %v9906
    %v10341 = vpack.c.b16 %v9914, %v9907
    %v10342 = vpack.c.b16 %v9922, %v9915
    %v10343 = vpack.c.b16 %v9923, %v9916
    %v10344 = vpack.c.b16 %v9924, %v9917
    %v10345 = vpack.c.b16 %v9925, %v9918
    %v10346 = vpack.c.b16 %v9926, %v9919
    %v10347 = vpack.c.b16 %v9927, %v9920
    %v10348 = vpack.c.b16 %v9928, %v9921
    %v10349 = vpack.c.b16 %v9936, %v9929
    %v10350 = vpack.c.b16 %v9937, %v9930
    %v10351 = vpack.c.b16 %v9938, %v9931
    %v10352 = vpack.c.b16 %v9939, %v9932
    %v10353 = vpack.c.b16 %v9940, %v9933
    %v10354 = vpack.c.b16 %v9941, %v9934
    %v10355 = vpack.c.b16 %v9942, %v9935
    %v10356 = vpack.c.b16 %v9950, %v9943
    %v10357 = vpack.c.b16 %v9951, %v9944
    %v10358 = vpack.c.b16 %v9952, %v9945
    %v10359 = vpack.c.b16 %v9953, %v9946
    %v10360 = vpack.c.b16 %v9954, %v9947
    %v10361 = vpack.c.b16 %v9955, %v9948
    %v10362 = vpack.c.b16 %v9956, %v9949
    %v10363 = vpack.c.b16 %v9964, %v9957
    %v10364 = vpack.c.b16 %v9965, %v9958
    %v10365 = vpack.c.b16 %v9966, %v9959
    %v10366 = vpack.c.b16 %v9967, %v9960
    %v10367 = vpack.c.b16 %v9968, %v9961
    %v10368 = vpack.c.b16 %v9969, %v9962
    %v10369 = vpack.c.b16 %v9970, %v9963
    %v10370 = vpack.c.b16 %v9978, %v9971
    %v10371 = vpack.c.b16 %v9979, %v9972
    %v10372 = vpack.c.b16 %v9980, %v9973
    %v10373 = vpack.c.b16 %v9981, %v9974
    %v10374 = vpack.c.b16 %v9982, %v9975
    %v10375 = vpack.c.b16 %v9983, %v9976
    %v10376 = vpack.c.b16 %v9984, %v9977
    %v10377 = vpack.c.b16 %v9992, %v9985
    %v10378 = vpack.c.b16 %v9993, %v9986
    %v10379 = vpack.c.b16 %v9994, %v9987
    %v10380 = vpack.c.b16 %v9995, %v9988
    %v10381 = vpack.c.b16 %v9996, %v9989
    %v10382 = vpack.c.b16 %v9997, %v9990
    %v10383 = vpack.c.b16 %v9998, %v9991
    %v10384 = vpack.c.b16 %v10006, %v9999
    %v10385 = vpack.c.b16 %v10007, %v10000
    %v10386 = vpack.c.b16 %v10008, %v10001
    %v10387 = vpack.c.b16 %v10009, %v10002
    %v10388 = vpack.c.b16 %v10010, %v10003
    %v10389 = vpack.c.b16 %v10011, %v10004
    %v10390 = vpack.c.b16 %v10012, %v10005
    %v10391 = vpack.c.b16 %v10020, %v10013
    %v10392 = vpack.c.b16 %v10021, %v10014
    %v10393 = vpack.c.b16 %v10022, %v10015
    %v10394 = vpack.c.b16 %v10023, %v10016
    %v10395 = vpack.c.b16 %v10024, %v10017
    %v10396 = vpack.c.b16 %v10025, %v10018
    %v10397 = vpack.c.b16 %v10026, %v10019
    %v10398 = vpack.c.b16 %v10034, %v10027
    %v10399 = vpack.c.b16 %v10035, %v10028
    %v10400 = vpack.c.b16 %v10036, %v10029
    %v10401 = vpack.c.b16 %v10037, %v10030
    %v10402 = vpack.c.b16 %v10038, %v10031
    %v10403 = vpack.c.b16 %v10039, %v10032
    %v10404 = vpack.c.b16 %v10040, %v10033
    %v10405 = vpack.c.b16 %v10048, %v10041
    %v10406 = vpack.c.b16 %v10049, %v10042
    %v10407 = vpack.c.b16 %v10050, %v10043
    %v10408 = vpack.c.b16 %v10051, %v10044
    %v10409 = vpack.c.b16 %v10052, %v10045
    %v10410 = vpack.c.b16 %v10053, %v10046
    %v10411 = vpack.c.b16 %v10054, %v10047
    %v10412 = vpack.c.b16 %v10062, %v10055
    %v10413 = vpack.c.b16 %v10063, %v10056
    %v10414 = vpack.c.b16 %v10064, %v10057
    %v10415 = vpack.c.b16 %v10065, %v10058
    %v10416 = vpack.c.b16 %v10066, %v10059
    %v10417 = vpack.c.b16 %v10067, %v10060
    %v10418 = vpack.c.b16 %v10068, %v10061
    %v10419 = vpack.c.b16 %v10076, %v10069
    %v10420 = vpack.c.b16 %v10077, %v10070
    %v10421 = vpack.c.b16 %v10078, %v10071
    %v10422 = vpack.c.b16 %v10079, %v10072
    %v10423 = vpack.c.b16 %v10080, %v10073
    %v10424 = vpack.c.b16 %v10081, %v10074
    %v10425 = vpack.c.b16 %v10082, %v10075
    %10769 = vmatpush.bf16.msra.mxu0 %v10132
    %10770 = vmatpush.bf16.msra.mxu0 %v10125
    %10771 = vmatpush.bf16.msra.mxu0 %v10118
    %10772 = vmatpush.bf16.msra.mxu0 %v10111
    %10773 = vmatpush.bf16.msra.mxu0 %v10104
    %10774 = vmatpush.bf16.msra.mxu0 %v10097
    %10775 = vmatpush.bf16.msra.mxu0 %v10090
    %10776 = vmatpush.bf16.msra.mxu0 %v10083
    %10777 = vmatmul.bf16.gmra.mxu0 %v592
    %v10778 = vpop.f32.mrf.mxu0
    %v10779 = vadd.f32 0.0, %v10778
    %v10780 = vpop.f32.mrf.mxu0
    %10781 = vdwg.mxu0
    %10782 = vmatpush.bf16.msra.mxu0 %v10188
    %10783 = vmatpush.bf16.msra.mxu0 %v10181
    %10784 = vmatpush.bf16.msra.mxu0 %v10174
    %10785 = vmatpush.bf16.msra.mxu0 %v10167
    %10786 = vmatpush.bf16.msra.mxu0 %v10160
    %10787 = vmatpush.bf16.msra.mxu0 %v10153
    %10788 = vmatpush.bf16.msra.mxu0 %v10146
    %10789 = vmatpush.bf16.msra.mxu0 %v10139
    %10790 = vmatmul.bf16.gmra.mxu0 %v593
    %v10791 = vpop.f32.mrf.mxu0
    %v10792 = vadd.f32 %v10779, %v10791
    %v10793 = vpop.f32.mrf.mxu0
    %10794 = vdwg.mxu0
    %10795 = vmatpush.bf16.msra.mxu0 %v10244
    %10796 = vmatpush.bf16.msra.mxu0 %v10237
    %10797 = vmatpush.bf16.msra.mxu0 %v10230
    %10798 = vmatpush.bf16.msra.mxu0 %v10223
    %10799 = vmatpush.bf16.msra.mxu0 %v10216
    %10800 = vmatpush.bf16.msra.mxu0 %v10209
    %10801 = vmatpush.bf16.msra.mxu0 %v10202
    %10802 = vmatpush.bf16.msra.mxu0 %v10195
    %10803 = vmatmul.bf16.gmra.mxu0 %v594
    %v10804 = vpop.f32.mrf.mxu0
    %v10805 = vadd.f32 %v10792, %v10804
    %v10806 = vpop.f32.mrf.mxu0
    %10807 = vdwg.mxu0
    %10808 = vmatpush.bf16.msra.mxu0 %v10300
    %10809 = vmatpush.bf16.msra.mxu0 %v10293
    %10810 = vmatpush.bf16.msra.mxu0 %v10286
    %10811 = vmatpush.bf16.msra.mxu0 %v10279
    %10812 = vmatpush.bf16.msra.mxu0 %v10272
    %10813 = vmatpush.bf16.msra.mxu0 %v10265
    %10814 = vmatpush.bf16.msra.mxu0 %v10258
    %10815 = vmatpush.bf16.msra.mxu0 %v10251
    %10816 = vmatmul.bf16.gmra.mxu0 %v595
    %v10817 = vpop.f32.mrf.mxu0
    %v10818 = vadd.f32 %v10805, %v10817
    %v10819 = vpop.f32.mrf.mxu0
    %10820 = vdwg.mxu0
    %10821 = vmatpush.bf16.msra.mxu0 %v10356
    %10822 = vmatpush.bf16.msra.mxu0 %v10349
    %10823 = vmatpush.bf16.msra.mxu0 %v10342
    %10824 = vmatpush.bf16.msra.mxu0 %v10335
    %10825 = vmatpush.bf16.msra.mxu0 %v10328
    %10826 = vmatpush.bf16.msra.mxu0 %v10321
    %10827 = vmatpush.bf16.msra.mxu0 %v10314
    %10828 = vmatpush.bf16.msra.mxu0 %v10307
    %10829 = vmatmul.bf16.gmra.mxu0 %v596
    %v10830 = vpop.f32.mrf.mxu0
    %v10831 = vadd.f32 %v10818, %v10830
    %v10832 = vpop.f32.mrf.mxu0
    %10833 = vdwg.mxu0
    %10834 = vmatpush.bf16.msra.mxu0 %v10412
    %10835 = vmatpush.bf16.msra.mxu0 %v10405
    %10836 = vmatpush.bf16.msra.mxu0 %v10398
    %10837 = vmatpush.bf16.msra.mxu0 %v10391
    %10838 = vmatpush.bf16.msra.mxu0 %v10384
    %10839 = vmatpush.bf16.msra.mxu0 %v10377
    %10840 = vmatpush.bf16.msra.mxu0 %v10370
    %10841 = vmatpush.bf16.msra.mxu0 %v10363
    %10842 = vmatmul.bf16.gmra.mxu0 %v597
    %v10843 = vpop.f32.mrf.mxu0
    %v10844 = vadd.f32 %v10831, %v10843
    %v10845 = vpop.f32.mrf.mxu0
    %10846 = vdwg.mxu0
    %10847 = vmatpush.bf16.msra.mxu0 0
    %10848 = vmatpush.bf16.msra.mxu0 0
    %10849 = vmatpush.bf16.msra.mxu0 0
    %10850 = vmatpush.bf16.msra.mxu0 0
    %10851 = vmatpush.bf16.msra.mxu0 0
    %10852 = vmatpush.bf16.msra.mxu0 0
    %10853 = vmatpush.bf16.msra.mxu0 0
    %10854 = vmatpush.bf16.msra.mxu0 %v10419
    %10855 = vmatmul.bf16.gmra.mxu0 %v2371
    %v10856 = vpop.f32.mrf.mxu0
    %v10857 = vadd.f32 %v10844, %v10856
    %v10858 = vpop.f32.mrf.mxu0
    %10859 = vdwg.mxu0
    %10860 = vmatpush.bf16.msra.mxu0 %v10133
    %10861 = vmatpush.bf16.msra.mxu0 %v10126
    %10862 = vmatpush.bf16.msra.mxu0 %v10119
    %10863 = vmatpush.bf16.msra.mxu0 %v10112
    %10864 = vmatpush.bf16.msra.mxu0 %v10105
    %10865 = vmatpush.bf16.msra.mxu0 %v10098
    %10866 = vmatpush.bf16.msra.mxu0 %v10091
    %10867 = vmatpush.bf16.msra.mxu0 %v10084
    %10868 = vmatmul.bf16.gmra.mxu0 %v592
    %v10869 = vpop.f32.mrf.mxu0
    %v10870 = vadd.f32 0.0, %v10869
    %v10871 = vpop.f32.mrf.mxu0
    %10872 = vdwg.mxu0
    %10873 = vmatpush.bf16.msra.mxu0 %v10189
    %10874 = vmatpush.bf16.msra.mxu0 %v10182
    %10875 = vmatpush.bf16.msra.mxu0 %v10175
    %10876 = vmatpush.bf16.msra.mxu0 %v10168
    %10877 = vmatpush.bf16.msra.mxu0 %v10161
    %10878 = vmatpush.bf16.msra.mxu0 %v10154
    %10879 = vmatpush.bf16.msra.mxu0 %v10147
    %10880 = vmatpush.bf16.msra.mxu0 %v10140
    %10881 = vmatmul.bf16.gmra.mxu0 %v593
    %v10882 = vpop.f32.mrf.mxu0
    %v10883 = vadd.f32 %v10870, %v10882
    %v10884 = vpop.f32.mrf.mxu0
    %10885 = vdwg.mxu0
    %10886 = vmatpush.bf16.msra.mxu0 %v10245
    %10887 = vmatpush.bf16.msra.mxu0 %v10238
    %10888 = vmatpush.bf16.msra.mxu0 %v10231
    %10889 = vmatpush.bf16.msra.mxu0 %v10224
    %10890 = vmatpush.bf16.msra.mxu0 %v10217
    %10891 = vmatpush.bf16.msra.mxu0 %v10210
    %10892 = vmatpush.bf16.msra.mxu0 %v10203
    %10893 = vmatpush.bf16.msra.mxu0 %v10196
    %10894 = vmatmul.bf16.gmra.mxu0 %v594
    %v10895 = vpop.f32.mrf.mxu0
    %v10896 = vadd.f32 %v10883, %v10895
    %v10897 = vpop.f32.mrf.mxu0
    %10898 = vdwg.mxu0
    %10899 = vmatpush.bf16.msra.mxu0 %v10301
    %10900 = vmatpush.bf16.msra.mxu0 %v10294
    %10901 = vmatpush.bf16.msra.mxu0 %v10287
    %10902 = vmatpush.bf16.msra.mxu0 %v10280
    %10903 = vmatpush.bf16.msra.mxu0 %v10273
    %10904 = vmatpush.bf16.msra.mxu0 %v10266
    %10905 = vmatpush.bf16.msra.mxu0 %v10259
    %10906 = vmatpush.bf16.msra.mxu0 %v10252
    %10907 = vmatmul.bf16.gmra.mxu0 %v595
    %v10908 = vpop.f32.mrf.mxu0
    %v10909 = vadd.f32 %v10896, %v10908
    %v10910 = vpop.f32.mrf.mxu0
    %10911 = vdwg.mxu0
    %10912 = vmatpush.bf16.msra.mxu0 %v10357
    %10913 = vmatpush.bf16.msra.mxu0 %v10350
    %10914 = vmatpush.bf16.msra.mxu0 %v10343
    %10915 = vmatpush.bf16.msra.mxu0 %v10336
    %10916 = vmatpush.bf16.msra.mxu0 %v10329
    %10917 = vmatpush.bf16.msra.mxu0 %v10322
    %10918 = vmatpush.bf16.msra.mxu0 %v10315
    %10919 = vmatpush.bf16.msra.mxu0 %v10308
    %10920 = vmatmul.bf16.gmra.mxu0 %v596
    %v10921 = vpop.f32.mrf.mxu0
    %v10922 = vadd.f32 %v10909, %v10921
    %v10923 = vpop.f32.mrf.mxu0
    %10924 = vdwg.mxu0
    %10925 = vmatpush.bf16.msra.mxu0 %v10413
    %10926 = vmatpush.bf16.msra.mxu0 %v10406
    %10927 = vmatpush.bf16.msra.mxu0 %v10399
    %10928 = vmatpush.bf16.msra.mxu0 %v10392
    %10929 = vmatpush.bf16.msra.mxu0 %v10385
    %10930 = vmatpush.bf16.msra.mxu0 %v10378
    %10931 = vmatpush.bf16.msra.mxu0 %v10371
    %10932 = vmatpush.bf16.msra.mxu0 %v10364
    %10933 = vmatmul.bf16.gmra.mxu0 %v597
    %v10934 = vpop.f32.mrf.mxu0
    %v10935 = vadd.f32 %v10922, %v10934
    %v10936 = vpop.f32.mrf.mxu0
    %10937 = vdwg.mxu0
    %10938 = vmatpush.bf16.msra.mxu0 0
    %10939 = vmatpush.bf16.msra.mxu0 0
    %10940 = vmatpush.bf16.msra.mxu0 0
    %10941 = vmatpush.bf16.msra.mxu0 0
    %10942 = vmatpush.bf16.msra.mxu0 0
    %10943 = vmatpush.bf16.msra.mxu0 0
    %10944 = vmatpush.bf16.msra.mxu0 0
    %10945 = vmatpush.bf16.msra.mxu0 %v10420
    %10946 = vmatmul.bf16.gmra.mxu0 %v2371
    %v10947 = vpop.f32.mrf.mxu0
    %v10948 = vadd.f32 %v10935, %v10947
    %v10949 = vpop.f32.mrf.mxu0
    %10950 = vdwg.mxu0
    %10951 = vmatpush.bf16.msra.mxu0 %v10134
    %10952 = vmatpush.bf16.msra.mxu0 %v10127
    %10953 = vmatpush.bf16.msra.mxu0 %v10120
    %10954 = vmatpush.bf16.msra.mxu0 %v10113
    %10955 = vmatpush.bf16.msra.mxu0 %v10106
    %10956 = vmatpush.bf16.msra.mxu0 %v10099
    %10957 = vmatpush.bf16.msra.mxu0 %v10092
    %10958 = vmatpush.bf16.msra.mxu0 %v10085
    %10959 = vmatmul.bf16.gmra.mxu0 %v592
    %v10960 = vpop.f32.mrf.mxu0
    %v10961 = vadd.f32 0.0, %v10960
    %v10962 = vpop.f32.mrf.mxu0
    %10963 = vdwg.mxu0
    %10964 = vmatpush.bf16.msra.mxu0 %v10190
    %10965 = vmatpush.bf16.msra.mxu0 %v10183
    %10966 = vmatpush.bf16.msra.mxu0 %v10176
    %10967 = vmatpush.bf16.msra.mxu0 %v10169
    %10968 = vmatpush.bf16.msra.mxu0 %v10162
    %10969 = vmatpush.bf16.msra.mxu0 %v10155
    %10970 = vmatpush.bf16.msra.mxu0 %v10148
    %10971 = vmatpush.bf16.msra.mxu0 %v10141
    %10972 = vmatmul.bf16.gmra.mxu0 %v593
    %v10973 = vpop.f32.mrf.mxu0
    %v10974 = vadd.f32 %v10961, %v10973
    %v10975 = vpop.f32.mrf.mxu0
    %10976 = vdwg.mxu0
    %10977 = vmatpush.bf16.msra.mxu0 %v10246
    %10978 = vmatpush.bf16.msra.mxu0 %v10239
    %10979 = vmatpush.bf16.msra.mxu0 %v10232
    %10980 = vmatpush.bf16.msra.mxu0 %v10225
    %10981 = vmatpush.bf16.msra.mxu0 %v10218
    %10982 = vmatpush.bf16.msra.mxu0 %v10211
    %10983 = vmatpush.bf16.msra.mxu0 %v10204
    %10984 = vmatpush.bf16.msra.mxu0 %v10197
    %10985 = vmatmul.bf16.gmra.mxu0 %v594
    %v10986 = vpop.f32.mrf.mxu0
    %v10987 = vadd.f32 %v10974, %v10986
    %v10988 = vpop.f32.mrf.mxu0
    %10989 = vdwg.mxu0
    %10990 = vmatpush.bf16.msra.mxu0 %v10302
    %10991 = vmatpush.bf16.msra.mxu0 %v10295
    %10992 = vmatpush.bf16.msra.mxu0 %v10288
    %10993 = vmatpush.bf16.msra.mxu0 %v10281
    %10994 = vmatpush.bf16.msra.mxu0 %v10274
    %10995 = vmatpush.bf16.msra.mxu0 %v10267
    %10996 = vmatpush.bf16.msra.mxu0 %v10260
    %10997 = vmatpush.bf16.msra.mxu0 %v10253
    %10998 = vmatmul.bf16.gmra.mxu0 %v595
    %v10999 = vpop.f32.mrf.mxu0
    %v11000 = vadd.f32 %v10987, %v10999
    %v11001 = vpop.f32.mrf.mxu0
    %11002 = vdwg.mxu0
    %11003 = vmatpush.bf16.msra.mxu0 %v10358
    %11004 = vmatpush.bf16.msra.mxu0 %v10351
    %11005 = vmatpush.bf16.msra.mxu0 %v10344
    %11006 = vmatpush.bf16.msra.mxu0 %v10337
    %11007 = vmatpush.bf16.msra.mxu0 %v10330
    %11008 = vmatpush.bf16.msra.mxu0 %v10323
    %11009 = vmatpush.bf16.msra.mxu0 %v10316
    %11010 = vmatpush.bf16.msra.mxu0 %v10309
    %11011 = vmatmul.bf16.gmra.mxu0 %v596
    %v11012 = vpop.f32.mrf.mxu0
    %v11013 = vadd.f32 %v11000, %v11012
    %v11014 = vpop.f32.mrf.mxu0
    %11015 = vdwg.mxu0
    %11016 = vmatpush.bf16.msra.mxu0 %v10414
    %11017 = vmatpush.bf16.msra.mxu0 %v10407
    %11018 = vmatpush.bf16.msra.mxu0 %v10400
    %11019 = vmatpush.bf16.msra.mxu0 %v10393
    %11020 = vmatpush.bf16.msra.mxu0 %v10386
    %11021 = vmatpush.bf16.msra.mxu0 %v10379
    %11022 = vmatpush.bf16.msra.mxu0 %v10372
    %11023 = vmatpush.bf16.msra.mxu0 %v10365
    %11024 = vmatmul.bf16.gmra.mxu0 %v597
    %v11025 = vpop.f32.mrf.mxu0
    %v11026 = vadd.f32 %v11013, %v11025
    %v11027 = vpop.f32.mrf.mxu0
    %11028 = vdwg.mxu0
    %11029 = vmatpush.bf16.msra.mxu0 0
    %11030 = vmatpush.bf16.msra.mxu0 0
    %11031 = vmatpush.bf16.msra.mxu0 0
    %11032 = vmatpush.bf16.msra.mxu0 0
    %11033 = vmatpush.bf16.msra.mxu0 0
    %11034 = vmatpush.bf16.msra.mxu0 0
    %11035 = vmatpush.bf16.msra.mxu0 0
    %11036 = vmatpush.bf16.msra.mxu0 %v10421
    %11037 = vmatmul.bf16.gmra.mxu0 %v2371
    %v11038 = vpop.f32.mrf.mxu0
    %v11039 = vadd.f32 %v11026, %v11038
    %v11040 = vpop.f32.mrf.mxu0
    %11041 = vdwg.mxu0
    %11042 = vmatpush.bf16.msra.mxu0 %v10135
    %11043 = vmatpush.bf16.msra.mxu0 %v10128
    %11044 = vmatpush.bf16.msra.mxu0 %v10121
    %11045 = vmatpush.bf16.msra.mxu0 %v10114
    %11046 = vmatpush.bf16.msra.mxu0 %v10107
    %11047 = vmatpush.bf16.msra.mxu0 %v10100
    %11048 = vmatpush.bf16.msra.mxu0 %v10093
    %11049 = vmatpush.bf16.msra.mxu0 %v10086
    %11050 = vmatmul.bf16.gmra.mxu0 %v592
    %v11051 = vpop.f32.mrf.mxu0
    %v11052 = vadd.f32 0.0, %v11051
    %v11053 = vpop.f32.mrf.mxu0
    %11054 = vdwg.mxu0
    %11055 = vmatpush.bf16.msra.mxu0 %v10191
    %11056 = vmatpush.bf16.msra.mxu0 %v10184
    %11057 = vmatpush.bf16.msra.mxu0 %v10177
    %11058 = vmatpush.bf16.msra.mxu0 %v10170
    %11059 = vmatpush.bf16.msra.mxu0 %v10163
    %11060 = vmatpush.bf16.msra.mxu0 %v10156
    %11061 = vmatpush.bf16.msra.mxu0 %v10149
    %11062 = vmatpush.bf16.msra.mxu0 %v10142
    %11063 = vmatmul.bf16.gmra.mxu0 %v593
    %v11064 = vpop.f32.mrf.mxu0
    %v11065 = vadd.f32 %v11052, %v11064
    %v11066 = vpop.f32.mrf.mxu0
    %11067 = vdwg.mxu0
    %11068 = vmatpush.bf16.msra.mxu0 %v10247
    %11069 = vmatpush.bf16.msra.mxu0 %v10240
    %11070 = vmatpush.bf16.msra.mxu0 %v10233
    %11071 = vmatpush.bf16.msra.mxu0 %v10226
    %11072 = vmatpush.bf16.msra.mxu0 %v10219
    %11073 = vmatpush.bf16.msra.mxu0 %v10212
    %11074 = vmatpush.bf16.msra.mxu0 %v10205
    %11075 = vmatpush.bf16.msra.mxu0 %v10198
    %11076 = vmatmul.bf16.gmra.mxu0 %v594
    %v11077 = vpop.f32.mrf.mxu0
    %v11078 = vadd.f32 %v11065, %v11077
    %v11079 = vpop.f32.mrf.mxu0
    %11080 = vdwg.mxu0
    %11081 = vmatpush.bf16.msra.mxu0 %v10303
    %11082 = vmatpush.bf16.msra.mxu0 %v10296
    %11083 = vmatpush.bf16.msra.mxu0 %v10289
    %11084 = vmatpush.bf16.msra.mxu0 %v10282
    %11085 = vmatpush.bf16.msra.mxu0 %v10275
    %11086 = vmatpush.bf16.msra.mxu0 %v10268
    %11087 = vmatpush.bf16.msra.mxu0 %v10261
    %11088 = vmatpush.bf16.msra.mxu0 %v10254
    %11089 = vmatmul.bf16.gmra.mxu0 %v595
    %v11090 = vpop.f32.mrf.mxu0
    %v11091 = vadd.f32 %v11078, %v11090
    %v11092 = vpop.f32.mrf.mxu0
    %11093 = vdwg.mxu0
    %11094 = vmatpush.bf16.msra.mxu0 %v10359
    %11095 = vmatpush.bf16.msra.mxu0 %v10352
    %11096 = vmatpush.bf16.msra.mxu0 %v10345
    %11097 = vmatpush.bf16.msra.mxu0 %v10338
    %11098 = vmatpush.bf16.msra.mxu0 %v10331
    %11099 = vmatpush.bf16.msra.mxu0 %v10324
    %11100 = vmatpush.bf16.msra.mxu0 %v10317
    %11101 = vmatpush.bf16.msra.mxu0 %v10310
    %11102 = vmatmul.bf16.gmra.mxu0 %v596
    %v11103 = vpop.f32.mrf.mxu0
    %v11104 = vadd.f32 %v11091, %v11103
    %v11105 = vpop.f32.mrf.mxu0
    %11106 = vdwg.mxu0
    %11107 = vmatpush.bf16.msra.mxu0 %v10415
    %11108 = vmatpush.bf16.msra.mxu0 %v10408
    %11109 = vmatpush.bf16.msra.mxu0 %v10401
    %11110 = vmatpush.bf16.msra.mxu0 %v10394
    %11111 = vmatpush.bf16.msra.mxu0 %v10387
    %11112 = vmatpush.bf16.msra.mxu0 %v10380
    %11113 = vmatpush.bf16.msra.mxu0 %v10373
    %11114 = vmatpush.bf16.msra.mxu0 %v10366
    %11115 = vmatmul.bf16.gmra.mxu0 %v597
    %v11116 = vpop.f32.mrf.mxu0
    %v11117 = vadd.f32 %v11104, %v11116
    %v11118 = vpop.f32.mrf.mxu0
    %11119 = vdwg.mxu0
    %11120 = vmatpush.bf16.msra.mxu0 0
    %11121 = vmatpush.bf16.msra.mxu0 0
    %11122 = vmatpush.bf16.msra.mxu0 0
    %11123 = vmatpush.bf16.msra.mxu0 0
    %11124 = vmatpush.bf16.msra.mxu0 0
    %11125 = vmatpush.bf16.msra.mxu0 0
    %11126 = vmatpush.bf16.msra.mxu0 0
    %11127 = vmatpush.bf16.msra.mxu0 %v10422
    %11128 = vmatmul.bf16.gmra.mxu0 %v2371
    %v11129 = vpop.f32.mrf.mxu0
    %v11130 = vadd.f32 %v11117, %v11129
    %v11131 = vpop.f32.mrf.mxu0
    %11132 = vdwg.mxu0
    %11133 = vmatpush.bf16.msra.mxu0 %v10136
    %11134 = vmatpush.bf16.msra.mxu0 %v10129
    %11135 = vmatpush.bf16.msra.mxu0 %v10122
    %11136 = vmatpush.bf16.msra.mxu0 %v10115
    %11137 = vmatpush.bf16.msra.mxu0 %v10108
    %11138 = vmatpush.bf16.msra.mxu0 %v10101
    %11139 = vmatpush.bf16.msra.mxu0 %v10094
    %11140 = vmatpush.bf16.msra.mxu0 %v10087
    %11141 = vmatmul.bf16.gmra.mxu0 %v592
    %v11142 = vpop.f32.mrf.mxu0
    %v11143 = vadd.f32 0.0, %v11142
    %v11144 = vpop.f32.mrf.mxu0
    %11145 = vdwg.mxu0
    %11146 = vmatpush.bf16.msra.mxu0 %v10192
    %11147 = vmatpush.bf16.msra.mxu0 %v10185
    %11148 = vmatpush.bf16.msra.mxu0 %v10178
    %11149 = vmatpush.bf16.msra.mxu0 %v10171
    %11150 = vmatpush.bf16.msra.mxu0 %v10164
    %11151 = vmatpush.bf16.msra.mxu0 %v10157
    %11152 = vmatpush.bf16.msra.mxu0 %v10150
    %11153 = vmatpush.bf16.msra.mxu0 %v10143
    %11154 = vmatmul.bf16.gmra.mxu0 %v593
    %v11155 = vpop.f32.mrf.mxu0
    %v11156 = vadd.f32 %v11143, %v11155
    %v11157 = vpop.f32.mrf.mxu0
    %11158 = vdwg.mxu0
    %11159 = vmatpush.bf16.msra.mxu0 %v10248
    %11160 = vmatpush.bf16.msra.mxu0 %v10241
    %11161 = vmatpush.bf16.msra.mxu0 %v10234
    %11162 = vmatpush.bf16.msra.mxu0 %v10227
    %11163 = vmatpush.bf16.msra.mxu0 %v10220
    %11164 = vmatpush.bf16.msra.mxu0 %v10213
    %11165 = vmatpush.bf16.msra.mxu0 %v10206
    %11166 = vmatpush.bf16.msra.mxu0 %v10199
    %11167 = vmatmul.bf16.gmra.mxu0 %v594
    %v11168 = vpop.f32.mrf.mxu0
    %v11169 = vadd.f32 %v11156, %v11168
    %v11170 = vpop.f32.mrf.mxu0
    %11171 = vdwg.mxu0
    %11172 = vmatpush.bf16.msra.mxu0 %v10304
    %11173 = vmatpush.bf16.msra.mxu0 %v10297
    %11174 = vmatpush.bf16.msra.mxu0 %v10290
    %11175 = vmatpush.bf16.msra.mxu0 %v10283
    %11176 = vmatpush.bf16.msra.mxu0 %v10276
    %11177 = vmatpush.bf16.msra.mxu0 %v10269
    %11178 = vmatpush.bf16.msra.mxu0 %v10262
    %11179 = vmatpush.bf16.msra.mxu0 %v10255
    %11180 = vmatmul.bf16.gmra.mxu0 %v595
    %v11181 = vpop.f32.mrf.mxu0
    %v11182 = vadd.f32 %v11169, %v11181
    %v11183 = vpop.f32.mrf.mxu0
    %11184 = vdwg.mxu0
    %11185 = vmatpush.bf16.msra.mxu0 %v10360
    %11186 = vmatpush.bf16.msra.mxu0 %v10353
    %11187 = vmatpush.bf16.msra.mxu0 %v10346
    %11188 = vmatpush.bf16.msra.mxu0 %v10339
    %11189 = vmatpush.bf16.msra.mxu0 %v10332
    %11190 = vmatpush.bf16.msra.mxu0 %v10325
    %11191 = vmatpush.bf16.msra.mxu0 %v10318
    %11192 = vmatpush.bf16.msra.mxu0 %v10311
    %11193 = vmatmul.bf16.gmra.mxu0 %v596
    %v11194 = vpop.f32.mrf.mxu0
    %v11195 = vadd.f32 %v11182, %v11194
    %v11196 = vpop.f32.mrf.mxu0
    %11197 = vdwg.mxu0
    %11198 = vmatpush.bf16.msra.mxu0 %v10416
    %11199 = vmatpush.bf16.msra.mxu0 %v10409
    %11200 = vmatpush.bf16.msra.mxu0 %v10402
    %11201 = vmatpush.bf16.msra.mxu0 %v10395
    %11202 = vmatpush.bf16.msra.mxu0 %v10388
    %11203 = vmatpush.bf16.msra.mxu0 %v10381
    %11204 = vmatpush.bf16.msra.mxu0 %v10374
    %11205 = vmatpush.bf16.msra.mxu0 %v10367
    %11206 = vmatmul.bf16.gmra.mxu0 %v597
    %v11207 = vpop.f32.mrf.mxu0
    %v11208 = vadd.f32 %v11195, %v11207
    %v11209 = vpop.f32.mrf.mxu0
    %11210 = vdwg.mxu0
    %11211 = vmatpush.bf16.msra.mxu0 0
    %11212 = vmatpush.bf16.msra.mxu0 0
    %11213 = vmatpush.bf16.msra.mxu0 0
    %11214 = vmatpush.bf16.msra.mxu0 0
    %11215 = vmatpush.bf16.msra.mxu0 0
    %11216 = vmatpush.bf16.msra.mxu0 0
    %11217 = vmatpush.bf16.msra.mxu0 0
    %11218 = vmatpush.bf16.msra.mxu0 %v10423
    %11219 = vmatmul.bf16.gmra.mxu0 %v2371
    %v11220 = vpop.f32.mrf.mxu0
    %v11221 = vadd.f32 %v11208, %v11220
    %v11222 = vpop.f32.mrf.mxu0
    %11223 = vdwg.mxu0
    %11224 = vmatpush.bf16.msra.mxu0 %v10137
    %11225 = vmatpush.bf16.msra.mxu0 %v10130
    %11226 = vmatpush.bf16.msra.mxu0 %v10123
    %11227 = vmatpush.bf16.msra.mxu0 %v10116
    %11228 = vmatpush.bf16.msra.mxu0 %v10109
    %11229 = vmatpush.bf16.msra.mxu0 %v10102
    %11230 = vmatpush.bf16.msra.mxu0 %v10095
    %11231 = vmatpush.bf16.msra.mxu0 %v10088
    %11232 = vmatmul.bf16.gmra.mxu0 %v592
    %v11233 = vpop.f32.mrf.mxu0
    %v11234 = vadd.f32 0.0, %v11233
    %v11235 = vpop.f32.mrf.mxu0
    %11236 = vdwg.mxu0
    %11237 = vmatpush.bf16.msra.mxu0 %v10193
    %11238 = vmatpush.bf16.msra.mxu0 %v10186
    %11239 = vmatpush.bf16.msra.mxu0 %v10179
    %11240 = vmatpush.bf16.msra.mxu0 %v10172
    %11241 = vmatpush.bf16.msra.mxu0 %v10165
    %11242 = vmatpush.bf16.msra.mxu0 %v10158
    %11243 = vmatpush.bf16.msra.mxu0 %v10151
    %11244 = vmatpush.bf16.msra.mxu0 %v10144
    %11245 = vmatmul.bf16.gmra.mxu0 %v593
    %v11246 = vpop.f32.mrf.mxu0
    %v11247 = vadd.f32 %v11234, %v11246
    %v11248 = vpop.f32.mrf.mxu0
    %11249 = vdwg.mxu0
    %11250 = vmatpush.bf16.msra.mxu0 %v10249
    %11251 = vmatpush.bf16.msra.mxu0 %v10242
    %11252 = vmatpush.bf16.msra.mxu0 %v10235
    %11253 = vmatpush.bf16.msra.mxu0 %v10228
    %11254 = vmatpush.bf16.msra.mxu0 %v10221
    %11255 = vmatpush.bf16.msra.mxu0 %v10214
    %11256 = vmatpush.bf16.msra.mxu0 %v10207
    %11257 = vmatpush.bf16.msra.mxu0 %v10200
    %11258 = vmatmul.bf16.gmra.mxu0 %v594
    %v11259 = vpop.f32.mrf.mxu0
    %v11260 = vadd.f32 %v11247, %v11259
    %v11261 = vpop.f32.mrf.mxu0
    %11262 = vdwg.mxu0
    %11263 = vmatpush.bf16.msra.mxu0 %v10305
    %11264 = vmatpush.bf16.msra.mxu0 %v10298
    %11265 = vmatpush.bf16.msra.mxu0 %v10291
    %11266 = vmatpush.bf16.msra.mxu0 %v10284
    %11267 = vmatpush.bf16.msra.mxu0 %v10277
    %11268 = vmatpush.bf16.msra.mxu0 %v10270
    %11269 = vmatpush.bf16.msra.mxu0 %v10263
    %11270 = vmatpush.bf16.msra.mxu0 %v10256
    %11271 = vmatmul.bf16.gmra.mxu0 %v595
    %v11272 = vpop.f32.mrf.mxu0
    %v11273 = vadd.f32 %v11260, %v11272
    %v11274 = vpop.f32.mrf.mxu0
    %11275 = vdwg.mxu0
    %11276 = vmatpush.bf16.msra.mxu0 %v10361
    %11277 = vmatpush.bf16.msra.mxu0 %v10354
    %11278 = vmatpush.bf16.msra.mxu0 %v10347
    %11279 = vmatpush.bf16.msra.mxu0 %v10340
    %11280 = vmatpush.bf16.msra.mxu0 %v10333
    %11281 = vmatpush.bf16.msra.mxu0 %v10326
    %11282 = vmatpush.bf16.msra.mxu0 %v10319
    %11283 = vmatpush.bf16.msra.mxu0 %v10312
    %11284 = vmatmul.bf16.gmra.mxu0 %v596
    %v11285 = vpop.f32.mrf.mxu0
    %v11286 = vadd.f32 %v11273, %v11285
    %v11287 = vpop.f32.mrf.mxu0
    %11288 = vdwg.mxu0
    %11289 = vmatpush.bf16.msra.mxu0 %v10417
    %11290 = vmatpush.bf16.msra.mxu0 %v10410
    %11291 = vmatpush.bf16.msra.mxu0 %v10403
    %11292 = vmatpush.bf16.msra.mxu0 %v10396
    %11293 = vmatpush.bf16.msra.mxu0 %v10389
    %11294 = vmatpush.bf16.msra.mxu0 %v10382
    %11295 = vmatpush.bf16.msra.mxu0 %v10375
    %11296 = vmatpush.bf16.msra.mxu0 %v10368
    %11297 = vmatmul.bf16.gmra.mxu0 %v597
    %v11298 = vpop.f32.mrf.mxu0
    %v11299 = vadd.f32 %v11286, %v11298
    %v11300 = vpop.f32.mrf.mxu0
    %11301 = vdwg.mxu0
    %11302 = vmatpush.bf16.msra.mxu0 0
    %11303 = vmatpush.bf16.msra.mxu0 0
    %11304 = vmatpush.bf16.msra.mxu0 0
    %11305 = vmatpush.bf16.msra.mxu0 0
    %11306 = vmatpush.bf16.msra.mxu0 0
    %11307 = vmatpush.bf16.msra.mxu0 0
    %11308 = vmatpush.bf16.msra.mxu0 0
    %11309 = vmatpush.bf16.msra.mxu0 %v10424
    %11310 = vmatmul.bf16.gmra.mxu0 %v2371
    %v11311 = vpop.f32.mrf.mxu0
    %v11312 = vadd.f32 %v11299, %v11311
    %v11313 = vpop.f32.mrf.mxu0
    %11314 = vdwg.mxu0
    %11315 = vmatpush.bf16.msra.mxu0 %v10138
    %11316 = vmatpush.bf16.msra.mxu0 %v10131
    %11317 = vmatpush.bf16.msra.mxu0 %v10124
    %11318 = vmatpush.bf16.msra.mxu0 %v10117
    %11319 = vmatpush.bf16.msra.mxu0 %v10110
    %11320 = vmatpush.bf16.msra.mxu0 %v10103
    %11321 = vmatpush.bf16.msra.mxu0 %v10096
    %11322 = vmatpush.bf16.msra.mxu0 %v10089
    %11323 = vmatmul.bf16.gmra.mxu0 %v592
    %v11324 = vpop.f32.mrf.mxu0
    %v11325 = vadd.f32 0.0, %v11324
    %v11326 = vpop.f32.mrf.mxu0
    %11327 = vdwg.mxu0
    %11328 = vmatpush.bf16.msra.mxu0 %v10194
    %11329 = vmatpush.bf16.msra.mxu0 %v10187
    %11330 = vmatpush.bf16.msra.mxu0 %v10180
    %11331 = vmatpush.bf16.msra.mxu0 %v10173
    %11332 = vmatpush.bf16.msra.mxu0 %v10166
    %11333 = vmatpush.bf16.msra.mxu0 %v10159
    %11334 = vmatpush.bf16.msra.mxu0 %v10152
    %11335 = vmatpush.bf16.msra.mxu0 %v10145
    %11336 = vmatmul.bf16.gmra.mxu0 %v593
    %v11337 = vpop.f32.mrf.mxu0
    %v11338 = vadd.f32 %v11325, %v11337
    %v11339 = vpop.f32.mrf.mxu0
    %11340 = vdwg.mxu0
    %11341 = vmatpush.bf16.msra.mxu0 %v10250
    %11342 = vmatpush.bf16.msra.mxu0 %v10243
    %11343 = vmatpush.bf16.msra.mxu0 %v10236
    %11344 = vmatpush.bf16.msra.mxu0 %v10229
    %11345 = vmatpush.bf16.msra.mxu0 %v10222
    %11346 = vmatpush.bf16.msra.mxu0 %v10215
    %11347 = vmatpush.bf16.msra.mxu0 %v10208
    %11348 = vmatpush.bf16.msra.mxu0 %v10201
    %11349 = vmatmul.bf16.gmra.mxu0 %v594
    %v11350 = vpop.f32.mrf.mxu0
    %v11351 = vadd.f32 %v11338, %v11350
    %v11352 = vpop.f32.mrf.mxu0
    %11353 = vdwg.mxu0
    %11354 = vmatpush.bf16.msra.mxu0 %v10306
    %11355 = vmatpush.bf16.msra.mxu0 %v10299
    %11356 = vmatpush.bf16.msra.mxu0 %v10292
    %11357 = vmatpush.bf16.msra.mxu0 %v10285
    %11358 = vmatpush.bf16.msra.mxu0 %v10278
    %11359 = vmatpush.bf16.msra.mxu0 %v10271
    %11360 = vmatpush.bf16.msra.mxu0 %v10264
    %11361 = vmatpush.bf16.msra.mxu0 %v10257
    %11362 = vmatmul.bf16.gmra.mxu0 %v595
    %v11363 = vpop.f32.mrf.mxu0
    %v11364 = vadd.f32 %v11351, %v11363
    %v11365 = vpop.f32.mrf.mxu0
    %11366 = vdwg.mxu0
    %11367 = vmatpush.bf16.msra.mxu0 %v10362
    %11368 = vmatpush.bf16.msra.mxu0 %v10355
    %11369 = vmatpush.bf16.msra.mxu0 %v10348
    %11370 = vmatpush.bf16.msra.mxu0 %v10341
    %11371 = vmatpush.bf16.msra.mxu0 %v10334
    %11372 = vmatpush.bf16.msra.mxu0 %v10327
    %11373 = vmatpush.bf16.msra.mxu0 %v10320
    %11374 = vmatpush.bf16.msra.mxu0 %v10313
    %11375 = vmatmul.bf16.gmra.mxu0 %v596
    %v11376 = vpop.f32.mrf.mxu0
    %v11377 = vadd.f32 %v11364, %v11376
    %v11378 = vpop.f32.mrf.mxu0
    %11379 = vdwg.mxu0
    %11380 = vmatpush.bf16.msra.mxu0 %v10418
    %11381 = vmatpush.bf16.msra.mxu0 %v10411
    %11382 = vmatpush.bf16.msra.mxu0 %v10404
    %11383 = vmatpush.bf16.msra.mxu0 %v10397
    %11384 = vmatpush.bf16.msra.mxu0 %v10390
    %11385 = vmatpush.bf16.msra.mxu0 %v10383
    %11386 = vmatpush.bf16.msra.mxu0 %v10376
    %11387 = vmatpush.bf16.msra.mxu0 %v10369
    %11388 = vmatmul.bf16.gmra.mxu0 %v597
    %v11389 = vpop.f32.mrf.mxu0
    %v11390 = vadd.f32 %v11377, %v11389
    %v11391 = vpop.f32.mrf.mxu0
    %11392 = vdwg.mxu0
    %11393 = vmatpush.bf16.msra.mxu0 0
    %11394 = vmatpush.bf16.msra.mxu0 0
    %11395 = vmatpush.bf16.msra.mxu0 0
    %11396 = vmatpush.bf16.msra.mxu0 0
    %11397 = vmatpush.bf16.msra.mxu0 0
    %11398 = vmatpush.bf16.msra.mxu0 0
    %11399 = vmatpush.bf16.msra.mxu0 0
    %11400 = vmatpush.bf16.msra.mxu0 %v10425
    %11401 = vmatmul.bf16.gmra.mxu0 %v2371
    %v11402 = vpop.f32.mrf.mxu0
    %v11403 = vadd.f32 %v11390, %v11402
    %v11404 = vpop.f32.mrf.mxu0
    %11405 = vdwg.mxu0
    %v11406 = vmax.f32 %v8605, %v10857
    %v11407 = vmax.f32 %v8606, %v10948
    %v11408 = vmax.f32 %v8607, %v11039
    %v11409 = vmax.f32 %v8608, %v11130
    %v11410 = vmax.f32 %v8609, %v11221
    %v11411 = vmax.f32 %v8610, %v11312
    %v11412 = vmax.f32 %v8611, %v11403
    %v11413 = vld [vmem:[#allocation4] sm:$0x7f]
    %v11415 = vperm.slane %v11413, 0
    %v11416 = vperm.slane %v11413, 1
    %v11417 = vperm.slane %v11413, 2
    %v11418 = vperm.slane %v11413, 3
    %v11419 = vperm.slane %v11413, 4
    %v11420 = vperm.slane %v11413, 5
    %v11421 = vperm.slane %v11413, 6
    %v11429 = vadd.f32 %v11406, %v11415
    %v11430 = vadd.f32 %v11407, %v11416
    %v11431 = vadd.f32 %v11408, %v11417
    %v11432 = vadd.f32 %v11409, %v11418
    %v11433 = vadd.f32 %v11410, %v11419
    %v11434 = vadd.f32 %v11411, %v11420
    %v11435 = vadd.f32 %v11412, %v11421
    %v11436 = vmax.f32 %v11429, 0.0
    %v11437 = vmax.f32 %v11430, 0.0
    %v11438 = vmax.f32 %v11431, 0.0
    %v11439 = vmax.f32 %v11432, 0.0
    %v11440 = vmax.f32 %v11433, 0.0
    %v11441 = vmax.f32 %v11434, 0.0
    %v11442 = vmax.f32 %v11435, 0.0
    %v11443 = vpack.c.bf16 %v11436, %v11436
    %v11444 = vpack.c.bf16 %v11437, %v11437
    %v11445 = vpack.c.bf16 %v11438, %v11438
    %v11446 = vpack.c.bf16 %v11439, %v11439
    %v11447 = vpack.c.bf16 %v11440, %v11440
    %v11448 = vpack.c.bf16 %v11441, %v11441
    %v11449 = vpack.c.bf16 %v11442, %v11442
    %v11450 = vld [vmem:[#allocation6] sm:$0xff]
    %v11451 = vld [vmem:[#allocation6 + $0x8] sm:$0xff]
    %v11452 = vld [vmem:[#allocation6 + $0x10] sm:$0xff]
    %v11453 = vld [vmem:[#allocation6 + $0x18] sm:$0xff]
    %v11454 = vld [vmem:[#allocation6 + $0x20] sm:$0xff]
    %v11455 = vld [vmem:[#allocation6 + $0x28] sm:$0xff]
    %v11456 = vld [vmem:[#allocation6 + $0x30] sm:$0xff]
    %v11457 = vld [vmem:[#allocation6 + $0x38] sm:$0xff]
    %v11458 = vld [vmem:[#allocation6 + $0x40] sm:$0xff]
    %v11459 = vld [vmem:[#allocation6 + $0x48] sm:$0xff]
    %v11460 = vld [vmem:[#allocation6 + $0x50] sm:$0xff]
    %v11461 = vld [vmem:[#allocation6 + $0x58] sm:$0xff]
    %v11462 = vld [vmem:[#allocation6 + $0x60] sm:$0xff]
    %v11463 = vld [vmem:[#allocation6 + $0x68] sm:$0xff]
    %v11464 = vld [vmem:[#allocation6 + $0x70] sm:$0xff]
    %v11465 = vld [vmem:[#allocation6 + $0x78] sm:$0xff]
    %v11466 = vld [vmem:[#allocation6 + $0x80] sm:$0xff]
    %v11467 = vld [vmem:[#allocation6 + $0x88] sm:$0xff]
    %v11468 = vld [vmem:[#allocation6 + $0x90] sm:$0xff]
    %v11469 = vld [vmem:[#allocation6 + $0x98] sm:$0xff]
    %v11470 = vld [vmem:[#allocation6 + $0xa0] sm:$0xff]
    %v11471 = vld [vmem:[#allocation6 + $0xa8] sm:$0xff]
    %v11472 = vld [vmem:[#allocation6 + $0xb0] sm:$0xff]
    %v11473 = vld [vmem:[#allocation6 + $0xb8] sm:$0xff]
    %v11474 = vld [vmem:[#allocation6 + $0xc0] sm:$0xff]
    %v11475 = vld [vmem:[#allocation6 + $0xc8] sm:$0xff]
    %v11476 = vld [vmem:[#allocation6 + $0xd0] sm:$0xff]
    %v11477 = vld [vmem:[#allocation6 + $0xd8] sm:$0xff]
    %v11478 = vld [vmem:[#allocation6 + $0xe0] sm:$0xff]
    %v11479 = vld [vmem:[#allocation6 + $0xe8] sm:$0xff]
    %v11480 = vld [vmem:[#allocation6 + $0xf0] sm:$0xff]
    %v11481 = vld [vmem:[#allocation6 + $0xf8] sm:$0xff]
    %v11482 = vld [vmem:[#allocation6 + $0x100] sm:$0xff]
    %v11483 = vld [vmem:[#allocation6 + $0x108] sm:$0xff]
    %v11484 = vld [vmem:[#allocation6 + $0x110] sm:$0xff]
    %v11485 = vld [vmem:[#allocation6 + $0x118] sm:$0xff]
    %v11486 = vld [vmem:[#allocation6 + $0x120] sm:$0xff]
    %v11487 = vld [vmem:[#allocation6 + $0x128] sm:$0xff]
    %v11488 = vld [vmem:[#allocation6 + $0x130] sm:$0xff]
    %v11489 = vld [vmem:[#allocation6 + $0x138] sm:$0xff]
    %v11490 = vld [vmem:[#allocation6 + $0x140] sm:$0xff]
    %v11491 = vld [vmem:[#allocation6 + $0x148] sm:$0xff]
    %v11492 = vld [vmem:[#allocation6 + $0x150] sm:$0xff]
    %v11493 = vld [vmem:[#allocation6 + $0x158] sm:$0xff]
    %v11494 = vld [vmem:[#allocation6 + $0x160] sm:$0xff]
    %v11495 = vld [vmem:[#allocation6 + $0x168] sm:$0xff]
    %v11496 = vld [vmem:[#allocation6 + $0x170] sm:$0xff]
    %v11497 = vld [vmem:[#allocation6 + $0x178] sm:$0xff]
    %v11498 = vld [vmem:[#allocation6 + $0x180] sm:$0xff]
    %v11499 = vld [vmem:[#allocation6 + $0x188] sm:$0xff]
    %v11500 = vld [vmem:[#allocation6 + $0x190] sm:$0xff]
    %v11501 = vld [vmem:[#allocation6 + $0x198] sm:$0xff]
    %v11502 = vld [vmem:[#allocation6 + $0x1a0] sm:$0xff]
    %v11503 = vld [vmem:[#allocation6 + $0x1a8] sm:$0xff]
    %v11504 = vld [vmem:[#allocation6 + $0x1b0] sm:$0xff]
    %v11505 = vld [vmem:[#allocation6 + $0x1b8] sm:$0xff]
    %v11506 = vld [vmem:[#allocation6 + $0x1c0] sm:$0xff]
    %v11507 = vld [vmem:[#allocation6 + $0x1c8] sm:$0xff]
    %v11508 = vld [vmem:[#allocation6 + $0x1d0] sm:$0xff]
    %v11509 = vld [vmem:[#allocation6 + $0x1d8] sm:$0xff]
    %v11510 = vld [vmem:[#allocation6 + $0x1e0] sm:$0xff]
    %v11511 = vld [vmem:[#allocation6 + $0x1e8] sm:$0xff]
    %v11512 = vld [vmem:[#allocation6 + $0x1f0] sm:$0xff]
    %v11513 = vld [vmem:[#allocation6 + $0x1f8] sm:$0xff]
    %v11514 = vld [vmem:[#allocation6 + $0x200] sm:$0xff]
    %v11515 = vld [vmem:[#allocation6 + $0x208] sm:$0xff]
    %v11516 = vld [vmem:[#allocation6 + $0x210] sm:$0xff]
    %v11517 = vld [vmem:[#allocation6 + $0x218] sm:$0xff]
    %v11518 = vld [vmem:[#allocation6 + $0x220] sm:$0xff]
    %v11519 = vld [vmem:[#allocation6 + $0x228] sm:$0xff]
    %v11520 = vld [vmem:[#allocation6 + $0x230] sm:$0xff]
    %v11521 = vld [vmem:[#allocation6 + $0x238] sm:$0xff]
    %v11522 = vld [vmem:[#allocation6 + $0x240] sm:$0xff]
    %v11523 = vld [vmem:[#allocation6 + $0x248] sm:$0xff]
    %v11524 = vld [vmem:[#allocation6 + $0x250] sm:$0xff]
    %v11525 = vld [vmem:[#allocation6 + $0x258] sm:$0xff]
    %v11526 = vld [vmem:[#allocation6 + $0x260] sm:$0xff]
    %v11527 = vld [vmem:[#allocation6 + $0x268] sm:$0xff]
    %v11528 = vld [vmem:[#allocation6 + $0x270] sm:$0xff]
    %v11529 = vld [vmem:[#allocation6 + $0x278] sm:$0xff]
    %v11530 = vld [vmem:[#allocation6 + $0x280] sm:$0xff]
    %v11531 = vld [vmem:[#allocation6 + $0x288] sm:$0xff]
    %v11532 = vld [vmem:[#allocation6 + $0x290] sm:$0xff]
    %v11533 = vld [vmem:[#allocation6 + $0x298] sm:$0xff]
    %v11534 = vld [vmem:[#allocation6 + $0x2a0] sm:$0xff]
    %v11535 = vld [vmem:[#allocation6 + $0x2a8] sm:$0xff]
    %v11536 = vld [vmem:[#allocation6 + $0x2b0] sm:$0xff]
    %v11537 = vld [vmem:[#allocation6 + $0x2b8] sm:$0xff]
    %v11538 = vld [vmem:[#allocation6 + $0x2c0] sm:$0xff]
    %v11539 = vld [vmem:[#allocation6 + $0x2c8] sm:$0xff]
    %v11540 = vld [vmem:[#allocation6 + $0x2d0] sm:$0xff]
    %v11541 = vld [vmem:[#allocation6 + $0x2d8] sm:$0xff]
    %v11542 = vld [vmem:[#allocation6 + $0x2e0] sm:$0xff]
    %v11543 = vld [vmem:[#allocation6 + $0x2e8] sm:$0xff]
    %v11544 = vld [vmem:[#allocation6 + $0x2f0] sm:$0xff]
    %v11545 = vld [vmem:[#allocation6 + $0x2f8] sm:$0xff]
    %v11546 = vld [vmem:[#allocation6 + $0x300] sm:$0xff]
    %v11547 = vld [vmem:[#allocation6 + $0x308] sm:$0xff]
    %v11548 = vld [vmem:[#allocation6 + $0x310] sm:$0xff]
    %v11549 = vld [vmem:[#allocation6 + $0x318] sm:$0xff]
    %v11550 = vld [vmem:[#allocation6 + $0x320] sm:$0xff]
    %v11551 = vld [vmem:[#allocation6 + $0x328] sm:$0xff]
    %v11552 = vld [vmem:[#allocation6 + $0x330] sm:$0xff]
    %v11553 = vld [vmem:[#allocation6 + $0x338] sm:$0xff]
    %v11554 = vld [vmem:[#allocation6 + $0x340] sm:$0xff]
    %v11555 = vld [vmem:[#allocation6 + $0x348] sm:$0xff]
    %v11556 = vld [vmem:[#allocation6 + $0x350] sm:$0xff]
    %v11557 = vld [vmem:[#allocation6 + $0x358] sm:$0xff]
    %v11666 = vunpack.c.l.b16 %v11450
    %v11667 = vunpack.c.h.b16 %v11450
    %v11668 = vunpack.c.l.b16 %v11451
    %v11669 = vunpack.c.h.b16 %v11451
    %v11670 = vunpack.c.l.b16 %v11452
    %v11671 = vunpack.c.h.b16 %v11452
    %v11672 = vunpack.c.l.b16 %v11453
    %v11673 = vunpack.c.h.b16 %v11453
    %v11674 = vunpack.c.l.b16 %v11454
    %v11675 = vunpack.c.h.b16 %v11454
    %v11676 = vunpack.c.l.b16 %v11455
    %v11677 = vunpack.c.h.b16 %v11455
    %v11678 = vunpack.c.l.b16 %v11456
    %v11679 = vunpack.c.h.b16 %v11456
    %v11680 = vunpack.c.l.b16 %v11457
    %v11681 = vunpack.c.h.b16 %v11457
    %v11682 = vunpack.c.l.b16 %v11458
    %v11683 = vunpack.c.h.b16 %v11458
    %v11684 = vunpack.c.l.b16 %v11459
    %v11685 = vunpack.c.h.b16 %v11459
    %v11686 = vunpack.c.l.b16 %v11460
    %v11687 = vunpack.c.h.b16 %v11460
    %v11688 = vunpack.c.l.b16 %v11461
    %v11689 = vunpack.c.h.b16 %v11461
    %v11690 = vunpack.c.l.b16 %v11462
    %v11691 = vunpack.c.h.b16 %v11462
    %v11692 = vunpack.c.l.b16 %v11463
    %v11693 = vunpack.c.h.b16 %v11463
    %v11694 = vunpack.c.l.b16 %v11464
    %v11695 = vunpack.c.h.b16 %v11464
    %v11696 = vunpack.c.l.b16 %v11465
    %v11697 = vunpack.c.h.b16 %v11465
    %v11698 = vunpack.c.l.b16 %v11466
    %v11699 = vunpack.c.h.b16 %v11466
    %v11700 = vunpack.c.l.b16 %v11467
    %v11701 = vunpack.c.h.b16 %v11467
    %v11702 = vunpack.c.l.b16 %v11468
    %v11703 = vunpack.c.h.b16 %v11468
    %v11704 = vunpack.c.l.b16 %v11469
    %v11705 = vunpack.c.h.b16 %v11469
    %v11706 = vunpack.c.l.b16 %v11470
    %v11707 = vunpack.c.h.b16 %v11470
    %v11708 = vunpack.c.l.b16 %v11471
    %v11709 = vunpack.c.h.b16 %v11471
    %v11710 = vunpack.c.l.b16 %v11472
    %v11711 = vunpack.c.h.b16 %v11472
    %v11712 = vunpack.c.l.b16 %v11473
    %v11713 = vunpack.c.h.b16 %v11473
    %v11714 = vunpack.c.l.b16 %v11474
    %v11715 = vunpack.c.h.b16 %v11474
    %v11716 = vunpack.c.l.b16 %v11475
    %v11717 = vunpack.c.h.b16 %v11475
    %v11718 = vunpack.c.l.b16 %v11476
    %v11719 = vunpack.c.h.b16 %v11476
    %v11720 = vunpack.c.l.b16 %v11477
    %v11721 = vunpack.c.h.b16 %v11477
    %v11722 = vunpack.c.l.b16 %v11478
    %v11723 = vunpack.c.h.b16 %v11478
    %v11724 = vunpack.c.l.b16 %v11479
    %v11725 = vunpack.c.h.b16 %v11479
    %v11726 = vunpack.c.l.b16 %v11480
    %v11727 = vunpack.c.h.b16 %v11480
    %v11728 = vunpack.c.l.b16 %v11481
    %v11729 = vunpack.c.h.b16 %v11481
    %v11730 = vunpack.c.l.b16 %v11482
    %v11731 = vunpack.c.h.b16 %v11482
    %v11732 = vunpack.c.l.b16 %v11483
    %v11733 = vunpack.c.h.b16 %v11483
    %v11734 = vunpack.c.l.b16 %v11484
    %v11735 = vunpack.c.h.b16 %v11484
    %v11736 = vunpack.c.l.b16 %v11485
    %v11737 = vunpack.c.h.b16 %v11485
    %v11738 = vunpack.c.l.b16 %v11486
    %v11739 = vunpack.c.h.b16 %v11486
    %v11740 = vunpack.c.l.b16 %v11487
    %v11741 = vunpack.c.h.b16 %v11487
    %v11742 = vunpack.c.l.b16 %v11488
    %v11743 = vunpack.c.h.b16 %v11488
    %v11744 = vunpack.c.l.b16 %v11489
    %v11745 = vunpack.c.h.b16 %v11489
    %v11746 = vunpack.c.l.b16 %v11490
    %v11747 = vunpack.c.h.b16 %v11490
    %v11748 = vunpack.c.l.b16 %v11491
    %v11749 = vunpack.c.h.b16 %v11491
    %v11750 = vunpack.c.l.b16 %v11492
    %v11751 = vunpack.c.h.b16 %v11492
    %v11752 = vunpack.c.l.b16 %v11493
    %v11753 = vunpack.c.h.b16 %v11493
    %v11754 = vunpack.c.l.b16 %v11494
    %v11755 = vunpack.c.h.b16 %v11494
    %v11756 = vunpack.c.l.b16 %v11495
    %v11757 = vunpack.c.h.b16 %v11495
    %v11758 = vunpack.c.l.b16 %v11496
    %v11759 = vunpack.c.h.b16 %v11496
    %v11760 = vunpack.c.l.b16 %v11497
    %v11761 = vunpack.c.h.b16 %v11497
    %v11762 = vunpack.c.l.b16 %v11498
    %v11763 = vunpack.c.h.b16 %v11498
    %v11764 = vunpack.c.l.b16 %v11499
    %v11765 = vunpack.c.h.b16 %v11499
    %v11766 = vunpack.c.l.b16 %v11500
    %v11767 = vunpack.c.h.b16 %v11500
    %v11768 = vunpack.c.l.b16 %v11501
    %v11769 = vunpack.c.h.b16 %v11501
    %v11770 = vunpack.c.l.b16 %v11502
    %v11771 = vunpack.c.h.b16 %v11502
    %v11772 = vunpack.c.l.b16 %v11503
    %v11773 = vunpack.c.h.b16 %v11503
    %v11774 = vunpack.c.l.b16 %v11504
    %v11775 = vunpack.c.h.b16 %v11504
    %v11776 = vunpack.c.l.b16 %v11505
    %v11777 = vunpack.c.h.b16 %v11505
    %v11778 = vunpack.c.l.b16 %v11506
    %v11779 = vunpack.c.h.b16 %v11506
    %v11780 = vunpack.c.l.b16 %v11507
    %v11781 = vunpack.c.h.b16 %v11507
    %v11782 = vunpack.c.l.b16 %v11508
    %v11783 = vunpack.c.h.b16 %v11508
    %v11784 = vunpack.c.l.b16 %v11509
    %v11785 = vunpack.c.h.b16 %v11509
    %v11786 = vunpack.c.l.b16 %v11510
    %v11787 = vunpack.c.h.b16 %v11510
    %v11788 = vunpack.c.l.b16 %v11511
    %v11789 = vunpack.c.h.b16 %v11511
    %v11790 = vunpack.c.l.b16 %v11512
    %v11791 = vunpack.c.h.b16 %v11512
    %v11792 = vunpack.c.l.b16 %v11513
    %v11793 = vunpack.c.h.b16 %v11513
    %v11794 = vunpack.c.l.b16 %v11514
    %v11795 = vunpack.c.h.b16 %v11514
    %v11796 = vunpack.c.l.b16 %v11515
    %v11797 = vunpack.c.h.b16 %v11515
    %v11798 = vunpack.c.l.b16 %v11516
    %v11799 = vunpack.c.h.b16 %v11516
    %v11800 = vunpack.c.l.b16 %v11517
    %v11801 = vunpack.c.h.b16 %v11517
    %v11802 = vunpack.c.l.b16 %v11518
    %v11803 = vunpack.c.h.b16 %v11518
    %v11804 = vunpack.c.l.b16 %v11519
    %v11805 = vunpack.c.h.b16 %v11519
    %v11806 = vunpack.c.l.b16 %v11520
    %v11807 = vunpack.c.h.b16 %v11520
    %v11808 = vunpack.c.l.b16 %v11521
    %v11809 = vunpack.c.h.b16 %v11521
    %v11810 = vunpack.c.l.b16 %v11522
    %v11811 = vunpack.c.h.b16 %v11522
    %v11812 = vunpack.c.l.b16 %v11523
    %v11813 = vunpack.c.h.b16 %v11523
    %v11814 = vunpack.c.l.b16 %v11524
    %v11815 = vunpack.c.h.b16 %v11524
    %v11816 = vunpack.c.l.b16 %v11525
    %v11817 = vunpack.c.h.b16 %v11525
    %v11818 = vunpack.c.l.b16 %v11526
    %v11819 = vunpack.c.h.b16 %v11526
    %v11820 = vunpack.c.l.b16 %v11527
    %v11821 = vunpack.c.h.b16 %v11527
    %v11822 = vunpack.c.l.b16 %v11528
    %v11823 = vunpack.c.h.b16 %v11528
    %v11824 = vunpack.c.l.b16 %v11529
    %v11825 = vunpack.c.h.b16 %v11529
    %v11826 = vunpack.c.l.b16 %v11530
    %v11827 = vunpack.c.h.b16 %v11530
    %v11828 = vunpack.c.l.b16 %v11531
    %v11829 = vunpack.c.h.b16 %v11531
    %v11830 = vunpack.c.l.b16 %v11532
    %v11831 = vunpack.c.h.b16 %v11532
    %v11832 = vunpack.c.l.b16 %v11533
    %v11833 = vunpack.c.h.b16 %v11533
    %v11834 = vunpack.c.l.b16 %v11534
    %v11835 = vunpack.c.h.b16 %v11534
    %v11836 = vunpack.c.l.b16 %v11535
    %v11837 = vunpack.c.h.b16 %v11535
    %v11838 = vunpack.c.l.b16 %v11536
    %v11839 = vunpack.c.h.b16 %v11536
    %v11840 = vunpack.c.l.b16 %v11537
    %v11841 = vunpack.c.h.b16 %v11537
    %v11842 = vunpack.c.l.b16 %v11538
    %v11843 = vunpack.c.h.b16 %v11538
    %v11844 = vunpack.c.l.b16 %v11539
    %v11845 = vunpack.c.h.b16 %v11539
    %v11846 = vunpack.c.l.b16 %v11540
    %v11847 = vunpack.c.h.b16 %v11540
    %v11848 = vunpack.c.l.b16 %v11541
    %v11849 = vunpack.c.h.b16 %v11541
    %v11850 = vunpack.c.l.b16 %v11542
    %v11851 = vunpack.c.h.b16 %v11542
    %v11852 = vunpack.c.l.b16 %v11543
    %v11853 = vunpack.c.h.b16 %v11543
    %v11854 = vunpack.c.l.b16 %v11544
    %v11855 = vunpack.c.h.b16 %v11544
    %v11856 = vunpack.c.l.b16 %v11545
    %v11857 = vunpack.c.h.b16 %v11545
    %v11858 = vunpack.c.l.b16 %v11546
    %v11859 = vunpack.c.h.b16 %v11546
    %v11860 = vunpack.c.l.b16 %v11547
    %v11861 = vunpack.c.h.b16 %v11547
    %v11862 = vunpack.c.l.b16 %v11548
    %v11863 = vunpack.c.h.b16 %v11548
    %v11864 = vunpack.c.l.b16 %v11549
    %v11865 = vunpack.c.h.b16 %v11549
    %v11866 = vunpack.c.l.b16 %v11550
    %v11867 = vunpack.c.h.b16 %v11550
    %v11868 = vunpack.c.l.b16 %v11551
    %v11869 = vunpack.c.h.b16 %v11551
    %v11870 = vunpack.c.l.b16 %v11552
    %v11871 = vunpack.c.h.b16 %v11552
    %v11872 = vunpack.c.l.b16 %v11553
    %v11873 = vunpack.c.h.b16 %v11553
    %v11874 = vunpack.c.l.b16 %v11554
    %v11875 = vunpack.c.h.b16 %v11554
    %v11876 = vunpack.c.l.b16 %v11555
    %v11877 = vunpack.c.h.b16 %v11555
    %v11878 = vunpack.c.l.b16 %v11556
    %v11879 = vunpack.c.h.b16 %v11556
    %v11880 = vunpack.c.l.b16 %v11557
    %v11881 = vunpack.c.h.b16 %v11557
    %v11882 = vpack.c.b16 %v11668, %v11666
    %v11883 = vpack.c.b16 %v11669, %v11667
    %v11884 = vpack.c.b16 %v11672, %v11670
    %v11885 = vpack.c.b16 %v11673, %v11671
    %v11886 = vpack.c.b16 %v11676, %v11674
    %v11887 = vpack.c.b16 %v11677, %v11675
    %v11888 = vpack.c.b16 %v11680, %v11678
    %v11889 = vpack.c.b16 %v11681, %v11679
    %v11890 = vpack.c.b16 %v11684, %v11682
    %v11891 = vpack.c.b16 %v11685, %v11683
    %v11892 = vpack.c.b16 %v11688, %v11686
    %v11893 = vpack.c.b16 %v11689, %v11687
    %v11894 = vpack.c.b16 %v11692, %v11690
    %v11895 = vpack.c.b16 %v11693, %v11691
    %v11896 = vpack.c.b16 %v11696, %v11694
    %v11897 = vpack.c.b16 %v11697, %v11695
    %v11898 = vpack.c.b16 %v11700, %v11698
    %v11899 = vpack.c.b16 %v11701, %v11699
    %v11900 = vpack.c.b16 %v11704, %v11702
    %v11901 = vpack.c.b16 %v11705, %v11703
    %v11902 = vpack.c.b16 %v11708, %v11706
    %v11903 = vpack.c.b16 %v11709, %v11707
    %v11904 = vpack.c.b16 %v11712, %v11710
    %v11905 = vpack.c.b16 %v11713, %v11711
    %v11906 = vpack.c.b16 %v11716, %v11714
    %v11907 = vpack.c.b16 %v11717, %v11715
    %v11908 = vpack.c.b16 %v11720, %v11718
    %v11909 = vpack.c.b16 %v11721, %v11719
    %v11910 = vpack.c.b16 %v11724, %v11722
    %v11911 = vpack.c.b16 %v11725, %v11723
    %v11912 = vpack.c.b16 %v11728, %v11726
    %v11913 = vpack.c.b16 %v11729, %v11727
    %v11914 = vpack.c.b16 %v11732, %v11730
    %v11915 = vpack.c.b16 %v11733, %v11731
    %v11916 = vpack.c.b16 %v11736, %v11734
    %v11917 = vpack.c.b16 %v11737, %v11735
    %v11918 = vpack.c.b16 %v11740, %v11738
    %v11919 = vpack.c.b16 %v11741, %v11739
    %v11920 = vpack.c.b16 %v11744, %v11742
    %v11921 = vpack.c.b16 %v11745, %v11743
    %v11922 = vpack.c.b16 %v11748, %v11746
    %v11923 = vpack.c.b16 %v11749, %v11747
    %v11924 = vpack.c.b16 %v11752, %v11750
    %v11925 = vpack.c.b16 %v11753, %v11751
    %v11926 = vpack.c.b16 %v11756, %v11754
    %v11927 = vpack.c.b16 %v11757, %v11755
    %v11928 = vpack.c.b16 %v11760, %v11758
    %v11929 = vpack.c.b16 %v11761, %v11759
    %v11930 = vpack.c.b16 %v11764, %v11762
    %v11931 = vpack.c.b16 %v11765, %v11763
    %v11932 = vpack.c.b16 %v11768, %v11766
    %v11933 = vpack.c.b16 %v11769, %v11767
    %v11934 = vpack.c.b16 %v11772, %v11770
    %v11935 = vpack.c.b16 %v11773, %v11771
    %v11936 = vpack.c.b16 %v11776, %v11774
    %v11937 = vpack.c.b16 %v11777, %v11775
    %v11938 = vpack.c.b16 %v11780, %v11778
    %v11939 = vpack.c.b16 %v11781, %v11779
    %v11940 = vpack.c.b16 %v11784, %v11782
    %v11941 = vpack.c.b16 %v11785, %v11783
    %v11942 = vpack.c.b16 %v11788, %v11786
    %v11943 = vpack.c.b16 %v11789, %v11787
    %v11944 = vpack.c.b16 %v11792, %v11790
    %v11945 = vpack.c.b16 %v11793, %v11791
    %v11946 = vpack.c.b16 %v11796, %v11794
    %v11947 = vpack.c.b16 %v11797, %v11795
    %v11948 = vpack.c.b16 %v11800, %v11798
    %v11949 = vpack.c.b16 %v11801, %v11799
    %v11950 = vpack.c.b16 %v11804, %v11802
    %v11951 = vpack.c.b16 %v11805, %v11803
    %v11952 = vpack.c.b16 %v11808, %v11806
    %v11953 = vpack.c.b16 %v11809, %v11807
    %v11954 = vpack.c.b16 %v11812, %v11810
    %v11955 = vpack.c.b16 %v11813, %v11811
    %v11956 = vpack.c.b16 %v11816, %v11814
    %v11957 = vpack.c.b16 %v11817, %v11815
    %v11958 = vpack.c.b16 %v11820, %v11818
    %v11959 = vpack.c.b16 %v11821, %v11819
    %v11960 = vpack.c.b16 %v11824, %v11822
    %v11961 = vpack.c.b16 %v11825, %v11823
    %v11962 = vpack.c.b16 %v11828, %v11826
    %v11963 = vpack.c.b16 %v11829, %v11827
    %v11964 = vpack.c.b16 %v11832, %v11830
    %v11965 = vpack.c.b16 %v11833, %v11831
    %v11966 = vpack.c.b16 %v11836, %v11834
    %v11967 = vpack.c.b16 %v11837, %v11835
    %v11968 = vpack.c.b16 %v11840, %v11838
    %v11969 = vpack.c.b16 %v11841, %v11839
    %v11970 = vpack.c.b16 %v11844, %v11842
    %v11971 = vpack.c.b16 %v11845, %v11843
    %v11972 = vpack.c.b16 %v11848, %v11846
    %v11973 = vpack.c.b16 %v11849, %v11847
    %v11974 = vpack.c.b16 %v11852, %v11850
    %v11975 = vpack.c.b16 %v11853, %v11851
    %v11976 = vpack.c.b16 %v11856, %v11854
    %v11977 = vpack.c.b16 %v11857, %v11855
    %v11978 = vpack.c.b16 %v11860, %v11858
    %v11979 = vpack.c.b16 %v11861, %v11859
    %v11980 = vpack.c.b16 %v11864, %v11862
    %v11981 = vpack.c.b16 %v11865, %v11863
    %v11982 = vpack.c.b16 %v11868, %v11866
    %v11983 = vpack.c.b16 %v11869, %v11867
    %v11984 = vpack.c.b16 %v11872, %v11870
    %v11985 = vpack.c.b16 %v11873, %v11871
    %v11986 = vpack.c.b16 %v11876, %v11874
    %v11987 = vpack.c.b16 %v11877, %v11875
    %v11988 = vpack.c.b16 %v11880, %v11878
    %v11989 = vpack.c.b16 %v11881, %v11879
    %vm12098 = vcmask 785408
    %v12100 = vsel %vm12098, %v11449, 0
    %12102 = vmatpush.bf16.msra.mxu0 %v11896
    %12103 = vmatpush.bf16.msra.mxu0 %v11894
    %12104 = vmatpush.bf16.msra.mxu0 %v11892
    %12105 = vmatpush.bf16.msra.mxu0 %v11890
    %12106 = vmatpush.bf16.msra.mxu0 %v11888
    %12107 = vmatpush.bf16.msra.mxu0 %v11886
    %12108 = vmatpush.bf16.msra.mxu0 %v11884
    %12109 = vmatpush.bf16.msra.mxu0 %v11882
    %12110 = vmatmul.bf16.gmra.mxu0 %v11443
    %v12111 = vpop.f32.mrf.mxu0
    %v12112 = vadd.f32 0.0, %v12111
    %v12113 = vpop.f32.mrf.mxu0
    %12114 = vdwg.mxu0
    %12115 = vmatpush.bf16.msra.mxu0 %v11912
    %12116 = vmatpush.bf16.msra.mxu0 %v11910
    %12117 = vmatpush.bf16.msra.mxu0 %v11908
    %12118 = vmatpush.bf16.msra.mxu0 %v11906
    %12119 = vmatpush.bf16.msra.mxu0 %v11904
    %12120 = vmatpush.bf16.msra.mxu0 %v11902
    %12121 = vmatpush.bf16.msra.mxu0 %v11900
    %12122 = vmatpush.bf16.msra.mxu0 %v11898
    %12123 = vmatmul.bf16.gmra.mxu0 %v11444
    %v12124 = vpop.f32.mrf.mxu0
    %v12125 = vadd.f32 %v12112, %v12124
    %v12126 = vpop.f32.mrf.mxu0
    %12127 = vdwg.mxu0
    %12128 = vmatpush.bf16.msra.mxu0 %v11928
    %12129 = vmatpush.bf16.msra.mxu0 %v11926
    %12130 = vmatpush.bf16.msra.mxu0 %v11924
    %12131 = vmatpush.bf16.msra.mxu0 %v11922
    %12132 = vmatpush.bf16.msra.mxu0 %v11920
    %12133 = vmatpush.bf16.msra.mxu0 %v11918
    %12134 = vmatpush.bf16.msra.mxu0 %v11916
    %12135 = vmatpush.bf16.msra.mxu0 %v11914
    %12136 = vmatmul.bf16.gmra.mxu0 %v11445
    %v12137 = vpop.f32.mrf.mxu0
    %v12138 = vadd.f32 %v12125, %v12137
    %v12139 = vpop.f32.mrf.mxu0
    %12140 = vdwg.mxu0
    %12141 = vmatpush.bf16.msra.mxu0 %v11944
    %12142 = vmatpush.bf16.msra.mxu0 %v11942
    %12143 = vmatpush.bf16.msra.mxu0 %v11940
    %12144 = vmatpush.bf16.msra.mxu0 %v11938
    %12145 = vmatpush.bf16.msra.mxu0 %v11936
    %12146 = vmatpush.bf16.msra.mxu0 %v11934
    %12147 = vmatpush.bf16.msra.mxu0 %v11932
    %12148 = vmatpush.bf16.msra.mxu0 %v11930
    %12149 = vmatmul.bf16.gmra.mxu0 %v11446
    %v12150 = vpop.f32.mrf.mxu0
    %v12151 = vadd.f32 %v12138, %v12150
    %v12152 = vpop.f32.mrf.mxu0
    %12153 = vdwg.mxu0
    %12154 = vmatpush.bf16.msra.mxu0 %v11960
    %12155 = vmatpush.bf16.msra.mxu0 %v11958
    %12156 = vmatpush.bf16.msra.mxu0 %v11956
    %12157 = vmatpush.bf16.msra.mxu0 %v11954
    %12158 = vmatpush.bf16.msra.mxu0 %v11952
    %12159 = vmatpush.bf16.msra.mxu0 %v11950
    %12160 = vmatpush.bf16.msra.mxu0 %v11948
    %12161 = vmatpush.bf16.msra.mxu0 %v11946
    %12162 = vmatmul.bf16.gmra.mxu0 %v11447
    %v12163 = vpop.f32.mrf.mxu0
    %v12164 = vadd.f32 %v12151, %v12163
    %v12165 = vpop.f32.mrf.mxu0
    %12166 = vdwg.mxu0
    %12167 = vmatpush.bf16.msra.mxu0 %v11976
    %12168 = vmatpush.bf16.msra.mxu0 %v11974
    %12169 = vmatpush.bf16.msra.mxu0 %v11972
    %12170 = vmatpush.bf16.msra.mxu0 %v11970
    %12171 = vmatpush.bf16.msra.mxu0 %v11968
    %12172 = vmatpush.bf16.msra.mxu0 %v11966
    %12173 = vmatpush.bf16.msra.mxu0 %v11964
    %12174 = vmatpush.bf16.msra.mxu0 %v11962
    %12175 = vmatmul.bf16.gmra.mxu0 %v11448
    %v12176 = vpop.f32.mrf.mxu0
    %v12177 = vadd.f32 %v12164, %v12176
    %v12178 = vpop.f32.mrf.mxu0
    %12179 = vdwg.mxu0
    %12180 = vmatpush.bf16.msra.mxu0 0
    %12181 = vmatpush.bf16.msra.mxu0 0
    %12182 = vmatpush.bf16.msra.mxu0 %v11988
    %12183 = vmatpush.bf16.msra.mxu0 %v11986
    %12184 = vmatpush.bf16.msra.mxu0 %v11984
    %12185 = vmatpush.bf16.msra.mxu0 %v11982
    %12186 = vmatpush.bf16.msra.mxu0 %v11980
    %12187 = vmatpush.bf16.msra.mxu0 %v11978
    %12188 = vmatmul.bf16.gmra.mxu0 %v12100
    %v12189 = vpop.f32.mrf.mxu0
    %v12190 = vadd.f32 %v12177, %v12189
    %v12191 = vpop.f32.mrf.mxu0
    %12192 = vdwg.mxu0
    %12193 = vmatpush.bf16.msra.mxu0 %v11897
    %12194 = vmatpush.bf16.msra.mxu0 %v11895
    %12195 = vmatpush.bf16.msra.mxu0 %v11893
    %12196 = vmatpush.bf16.msra.mxu0 %v11891
    %12197 = vmatpush.bf16.msra.mxu0 %v11889
    %12198 = vmatpush.bf16.msra.mxu0 %v11887
    %12199 = vmatpush.bf16.msra.mxu0 %v11885
    %12200 = vmatpush.bf16.msra.mxu0 %v11883
    %12201 = vmatmul.bf16.gmra.mxu0 %v11443
    %v12202 = vpop.f32.mrf.mxu0
    %v12203 = vadd.f32 0.0, %v12202
    %v12204 = vpop.f32.mrf.mxu0
    %12205 = vdwg.mxu0
    %12206 = vmatpush.bf16.msra.mxu0 %v11913
    %12207 = vmatpush.bf16.msra.mxu0 %v11911
    %12208 = vmatpush.bf16.msra.mxu0 %v11909
    %12209 = vmatpush.bf16.msra.mxu0 %v11907
    %12210 = vmatpush.bf16.msra.mxu0 %v11905
    %12211 = vmatpush.bf16.msra.mxu0 %v11903
    %12212 = vmatpush.bf16.msra.mxu0 %v11901
    %12213 = vmatpush.bf16.msra.mxu0 %v11899
    %12214 = vmatmul.bf16.gmra.mxu0 %v11444
    %v12215 = vpop.f32.mrf.mxu0
    %v12216 = vadd.f32 %v12203, %v12215
    %v12217 = vpop.f32.mrf.mxu0
    %12218 = vdwg.mxu0
    %12219 = vmatpush.bf16.msra.mxu0 %v11929
    %12220 = vmatpush.bf16.msra.mxu0 %v11927
    %12221 = vmatpush.bf16.msra.mxu0 %v11925
    %12222 = vmatpush.bf16.msra.mxu0 %v11923
    %12223 = vmatpush.bf16.msra.mxu0 %v11921
    %12224 = vmatpush.bf16.msra.mxu0 %v11919
    %12225 = vmatpush.bf16.msra.mxu0 %v11917
    %12226 = vmatpush.bf16.msra.mxu0 %v11915
    %12227 = vmatmul.bf16.gmra.mxu0 %v11445
    %v12228 = vpop.f32.mrf.mxu0
    %v12229 = vadd.f32 %v12216, %v12228
    %v12230 = vpop.f32.mrf.mxu0
    %12231 = vdwg.mxu0
    %12232 = vmatpush.bf16.msra.mxu0 %v11945
    %12233 = vmatpush.bf16.msra.mxu0 %v11943
    %12234 = vmatpush.bf16.msra.mxu0 %v11941
    %12235 = vmatpush.bf16.msra.mxu0 %v11939
    %12236 = vmatpush.bf16.msra.mxu0 %v11937
    %12237 = vmatpush.bf16.msra.mxu0 %v11935
    %12238 = vmatpush.bf16.msra.mxu0 %v11933
    %12239 = vmatpush.bf16.msra.mxu0 %v11931
    %12240 = vmatmul.bf16.gmra.mxu0 %v11446
    %v12241 = vpop.f32.mrf.mxu0
    %v12242 = vadd.f32 %v12229, %v12241
    %v12243 = vpop.f32.mrf.mxu0
    %12244 = vdwg.mxu0
    %12245 = vmatpush.bf16.msra.mxu0 %v11961
    %12246 = vmatpush.bf16.msra.mxu0 %v11959
    %12247 = vmatpush.bf16.msra.mxu0 %v11957
    %12248 = vmatpush.bf16.msra.mxu0 %v11955
    %12249 = vmatpush.bf16.msra.mxu0 %v11953
    %12250 = vmatpush.bf16.msra.mxu0 %v11951
    %12251 = vmatpush.bf16.msra.mxu0 %v11949
    %12252 = vmatpush.bf16.msra.mxu0 %v11947
    %12253 = vmatmul.bf16.gmra.mxu0 %v11447
    %v12254 = vpop.f32.mrf.mxu0
    %v12255 = vadd.f32 %v12242, %v12254
    %v12256 = vpop.f32.mrf.mxu0
    %12257 = vdwg.mxu0
    %12258 = vmatpush.bf16.msra.mxu0 %v11977
    %12259 = vmatpush.bf16.msra.mxu0 %v11975
    %12260 = vmatpush.bf16.msra.mxu0 %v11973
    %12261 = vmatpush.bf16.msra.mxu0 %v11971
    %12262 = vmatpush.bf16.msra.mxu0 %v11969
    %12263 = vmatpush.bf16.msra.mxu0 %v11967
    %12264 = vmatpush.bf16.msra.mxu0 %v11965
    %12265 = vmatpush.bf16.msra.mxu0 %v11963
    %12266 = vmatmul.bf16.gmra.mxu0 %v11448
    %v12267 = vpop.f32.mrf.mxu0
    %v12268 = vadd.f32 %v12255, %v12267
    %v12269 = vpop.f32.mrf.mxu0
    %12270 = vdwg.mxu0
    %12271 = vmatpush.bf16.msra.mxu0 0
    %12272 = vmatpush.bf16.msra.mxu0 0
    %12273 = vmatpush.bf16.msra.mxu0 %v11989
    %12274 = vmatpush.bf16.msra.mxu0 %v11987
    %12275 = vmatpush.bf16.msra.mxu0 %v11985
    %12276 = vmatpush.bf16.msra.mxu0 %v11983
    %12277 = vmatpush.bf16.msra.mxu0 %v11981
    %12278 = vmatpush.bf16.msra.mxu0 %v11979
    %12279 = vmatmul.bf16.gmra.mxu0 %v12100
    %v12280 = vpop.f32.mrf.mxu0
    %v12281 = vadd.f32 %v12268, %v12280
    %v12282 = vpop.f32.mrf.mxu0
    %12283 = vdwg.mxu0
    %s12284 = scalar_lea.vmem [#allocation6], 864
    %v12285 = vld [vmem:[%s12284] sm:$0xff]
    %v12286 = vld [vmem:[%s12284 + $0x8] sm:$0xff]
    %v12287 = vld [vmem:[%s12284 + $0x10] sm:$0xff]
    %v12288 = vld [vmem:[%s12284 + $0x18] sm:$0xff]
    %v12289 = vld [vmem:[%s12284 + $0x20] sm:$0xff]
    %v12290 = vld [vmem:[%s12284 + $0x28] sm:$0xff]
    %v12291 = vld [vmem:[%s12284 + $0x30] sm:$0xff]
    %v12292 = vld [vmem:[%s12284 + $0x38] sm:$0xff]
    %v12293 = vld [vmem:[%s12284 + $0x40] sm:$0xff]
    %v12294 = vld [vmem:[%s12284 + $0x48] sm:$0xff]
    %v12295 = vld [vmem:[%s12284 + $0x50] sm:$0xff]
    %v12296 = vld [vmem:[%s12284 + $0x58] sm:$0xff]
    %v12297 = vld [vmem:[%s12284 + $0x60] sm:$0xff]
    %v12298 = vld [vmem:[%s12284 + $0x68] sm:$0xff]
    %v12299 = vld [vmem:[%s12284 + $0x70] sm:$0xff]
    %v12300 = vld [vmem:[%s12284 + $0x78] sm:$0xff]
    %v12301 = vld [vmem:[%s12284 + $0x80] sm:$0xff]
    %v12302 = vld [vmem:[%s12284 + $0x88] sm:$0xff]
    %v12303 = vld [vmem:[%s12284 + $0x90] sm:$0xff]
    %v12304 = vld [vmem:[%s12284 + $0x98] sm:$0xff]
    %v12305 = vld [vmem:[%s12284 + $0xa0] sm:$0xff]
    %v12306 = vld [vmem:[%s12284 + $0xa8] sm:$0xff]
    %v12307 = vld [vmem:[%s12284 + $0xb0] sm:$0xff]
    %v12308 = vld [vmem:[%s12284 + $0xb8] sm:$0xff]
    %v12309 = vld [vmem:[%s12284 + $0xc0] sm:$0xff]
    %v12310 = vld [vmem:[%s12284 + $0xc8] sm:$0xff]
    %v12311 = vld [vmem:[%s12284 + $0xd0] sm:$0xff]
    %v12312 = vld [vmem:[%s12284 + $0xd8] sm:$0xff]
    %v12313 = vld [vmem:[%s12284 + $0xe0] sm:$0xff]
    %v12314 = vld [vmem:[%s12284 + $0xe8] sm:$0xff]
    %v12315 = vld [vmem:[%s12284 + $0xf0] sm:$0xff]
    %v12316 = vld [vmem:[%s12284 + $0xf8] sm:$0xff]
    %v12317 = vld [vmem:[%s12284 + $0x100] sm:$0xff]
    %v12318 = vld [vmem:[%s12284 + $0x108] sm:$0xff]
    %v12319 = vld [vmem:[%s12284 + $0x110] sm:$0xff]
    %v12320 = vld [vmem:[%s12284 + $0x118] sm:$0xff]
    %v12321 = vld [vmem:[%s12284 + $0x120] sm:$0xff]
    %v12322 = vld [vmem:[%s12284 + $0x128] sm:$0xff]
    %v12323 = vld [vmem:[%s12284 + $0x130] sm:$0xff]
    %v12324 = vld [vmem:[%s12284 + $0x138] sm:$0xff]
    %v12325 = vld [vmem:[%s12284 + $0x140] sm:$0xff]
    %v12326 = vld [vmem:[%s12284 + $0x148] sm:$0xff]
    %v12327 = vld [vmem:[%s12284 + $0x150] sm:$0xff]
    %v12328 = vld [vmem:[%s12284 + $0x158] sm:$0xff]
    %v12329 = vld [vmem:[%s12284 + $0x160] sm:$0xff]
    %v12330 = vld [vmem:[%s12284 + $0x168] sm:$0xff]
    %v12331 = vld [vmem:[%s12284 + $0x170] sm:$0xff]
    %v12332 = vld [vmem:[%s12284 + $0x178] sm:$0xff]
    %v12333 = vld [vmem:[%s12284 + $0x180] sm:$0xff]
    %v12334 = vld [vmem:[%s12284 + $0x188] sm:$0xff]
    %v12335 = vld [vmem:[%s12284 + $0x190] sm:$0xff]
    %v12336 = vld [vmem:[%s12284 + $0x198] sm:$0xff]
    %v12337 = vld [vmem:[%s12284 + $0x1a0] sm:$0xff]
    %v12338 = vld [vmem:[%s12284 + $0x1a8] sm:$0xff]
    %v12339 = vld [vmem:[%s12284 + $0x1b0] sm:$0xff]
    %v12340 = vld [vmem:[%s12284 + $0x1b8] sm:$0xff]
    %v12341 = vld [vmem:[%s12284 + $0x1c0] sm:$0xff]
    %v12342 = vld [vmem:[%s12284 + $0x1c8] sm:$0xff]
    %v12343 = vld [vmem:[%s12284 + $0x1d0] sm:$0xff]
    %v12344 = vld [vmem:[%s12284 + $0x1d8] sm:$0xff]
    %v12345 = vld [vmem:[%s12284 + $0x1e0] sm:$0xff]
    %v12346 = vld [vmem:[%s12284 + $0x1e8] sm:$0xff]
    %v12347 = vld [vmem:[%s12284 + $0x1f0] sm:$0xff]
    %v12348 = vld [vmem:[%s12284 + $0x1f8] sm:$0xff]
    %v12349 = vld [vmem:[%s12284 + $0x200] sm:$0xff]
    %v12350 = vld [vmem:[%s12284 + $0x208] sm:$0xff]
    %v12351 = vld [vmem:[%s12284 + $0x210] sm:$0xff]
    %v12352 = vld [vmem:[%s12284 + $0x218] sm:$0xff]
    %v12353 = vld [vmem:[%s12284 + $0x220] sm:$0xff]
    %v12354 = vld [vmem:[%s12284 + $0x228] sm:$0xff]
    %v12355 = vld [vmem:[%s12284 + $0x230] sm:$0xff]
    %v12356 = vld [vmem:[%s12284 + $0x238] sm:$0xff]
    %v12357 = vld [vmem:[%s12284 + $0x240] sm:$0xff]
    %v12358 = vld [vmem:[%s12284 + $0x248] sm:$0xff]
    %v12359 = vld [vmem:[%s12284 + $0x250] sm:$0xff]
    %v12360 = vld [vmem:[%s12284 + $0x258] sm:$0xff]
    %v12361 = vld [vmem:[%s12284 + $0x260] sm:$0xff]
    %v12362 = vld [vmem:[%s12284 + $0x268] sm:$0xff]
    %v12363 = vld [vmem:[%s12284 + $0x270] sm:$0xff]
    %v12364 = vld [vmem:[%s12284 + $0x278] sm:$0xff]
    %v12365 = vld [vmem:[%s12284 + $0x280] sm:$0xff]
    %v12366 = vld [vmem:[%s12284 + $0x288] sm:$0xff]
    %v12367 = vld [vmem:[%s12284 + $0x290] sm:$0xff]
    %v12368 = vld [vmem:[%s12284 + $0x298] sm:$0xff]
    %v12369 = vld [vmem:[%s12284 + $0x2a0] sm:$0xff]
    %v12370 = vld [vmem:[%s12284 + $0x2a8] sm:$0xff]
    %v12371 = vld [vmem:[%s12284 + $0x2b0] sm:$0xff]
    %v12372 = vld [vmem:[%s12284 + $0x2b8] sm:$0xff]
    %v12373 = vld [vmem:[%s12284 + $0x2c0] sm:$0xff]
    %v12374 = vld [vmem:[%s12284 + $0x2c8] sm:$0xff]
    %v12375 = vld [vmem:[%s12284 + $0x2d0] sm:$0xff]
    %v12376 = vld [vmem:[%s12284 + $0x2d8] sm:$0xff]
    %v12377 = vld [vmem:[%s12284 + $0x2e0] sm:$0xff]
    %v12378 = vld [vmem:[%s12284 + $0x2e8] sm:$0xff]
    %v12379 = vld [vmem:[%s12284 + $0x2f0] sm:$0xff]
    %v12380 = vld [vmem:[%s12284 + $0x2f8] sm:$0xff]
    %v12381 = vld [vmem:[%s12284 + $0x300] sm:$0xff]
    %v12382 = vld [vmem:[%s12284 + $0x308] sm:$0xff]
    %v12383 = vld [vmem:[%s12284 + $0x310] sm:$0xff]
    %v12384 = vld [vmem:[%s12284 + $0x318] sm:$0xff]
    %v12385 = vld [vmem:[%s12284 + $0x320] sm:$0xff]
    %v12386 = vld [vmem:[%s12284 + $0x328] sm:$0xff]
    %v12387 = vld [vmem:[%s12284 + $0x330] sm:$0xff]
    %v12388 = vld [vmem:[%s12284 + $0x338] sm:$0xff]
    %v12389 = vld [vmem:[%s12284 + $0x340] sm:$0xff]
    %v12390 = vld [vmem:[%s12284 + $0x348] sm:$0xff]
    %v12391 = vld [vmem:[%s12284 + $0x350] sm:$0xff]
    %v12392 = vld [vmem:[%s12284 + $0x358] sm:$0xff]
    %v12501 = vunpack.c.l.b16 %v12285
    %v12502 = vunpack.c.h.b16 %v12285
    %v12503 = vunpack.c.l.b16 %v12286
    %v12504 = vunpack.c.h.b16 %v12286
    %v12505 = vunpack.c.l.b16 %v12287
    %v12506 = vunpack.c.h.b16 %v12287
    %v12507 = vunpack.c.l.b16 %v12288
    %v12508 = vunpack.c.h.b16 %v12288
    %v12509 = vunpack.c.l.b16 %v12289
    %v12510 = vunpack.c.h.b16 %v12289
    %v12511 = vunpack.c.l.b16 %v12290
    %v12512 = vunpack.c.h.b16 %v12290
    %v12513 = vunpack.c.l.b16 %v12291
    %v12514 = vunpack.c.h.b16 %v12291
    %v12515 = vunpack.c.l.b16 %v12292
    %v12516 = vunpack.c.h.b16 %v12292
    %v12517 = vunpack.c.l.b16 %v12293
    %v12518 = vunpack.c.h.b16 %v12293
    %v12519 = vunpack.c.l.b16 %v12294
    %v12520 = vunpack.c.h.b16 %v12294
    %v12521 = vunpack.c.l.b16 %v12295
    %v12522 = vunpack.c.h.b16 %v12295
    %v12523 = vunpack.c.l.b16 %v12296
    %v12524 = vunpack.c.h.b16 %v12296
    %v12525 = vunpack.c.l.b16 %v12297
    %v12526 = vunpack.c.h.b16 %v12297
    %v12527 = vunpack.c.l.b16 %v12298
    %v12528 = vunpack.c.h.b16 %v12298
    %v12529 = vunpack.c.l.b16 %v12299
    %v12530 = vunpack.c.h.b16 %v12299
    %v12531 = vunpack.c.l.b16 %v12300
    %v12532 = vunpack.c.h.b16 %v12300
    %v12533 = vunpack.c.l.b16 %v12301
    %v12534 = vunpack.c.h.b16 %v12301
    %v12535 = vunpack.c.l.b16 %v12302
    %v12536 = vunpack.c.h.b16 %v12302
    %v12537 = vunpack.c.l.b16 %v12303
    %v12538 = vunpack.c.h.b16 %v12303
    %v12539 = vunpack.c.l.b16 %v12304
    %v12540 = vunpack.c.h.b16 %v12304
    %v12541 = vunpack.c.l.b16 %v12305
    %v12542 = vunpack.c.h.b16 %v12305
    %v12543 = vunpack.c.l.b16 %v12306
    %v12544 = vunpack.c.h.b16 %v12306
    %v12545 = vunpack.c.l.b16 %v12307
    %v12546 = vunpack.c.h.b16 %v12307
    %v12547 = vunpack.c.l.b16 %v12308
    %v12548 = vunpack.c.h.b16 %v12308
    %v12549 = vunpack.c.l.b16 %v12309
    %v12550 = vunpack.c.h.b16 %v12309
    %v12551 = vunpack.c.l.b16 %v12310
    %v12552 = vunpack.c.h.b16 %v12310
    %v12553 = vunpack.c.l.b16 %v12311
    %v12554 = vunpack.c.h.b16 %v12311
    %v12555 = vunpack.c.l.b16 %v12312
    %v12556 = vunpack.c.h.b16 %v12312
    %v12557 = vunpack.c.l.b16 %v12313
    %v12558 = vunpack.c.h.b16 %v12313
    %v12559 = vunpack.c.l.b16 %v12314
    %v12560 = vunpack.c.h.b16 %v12314
    %v12561 = vunpack.c.l.b16 %v12315
    %v12562 = vunpack.c.h.b16 %v12315
    %v12563 = vunpack.c.l.b16 %v12316
    %v12564 = vunpack.c.h.b16 %v12316
    %v12565 = vunpack.c.l.b16 %v12317
    %v12566 = vunpack.c.h.b16 %v12317
    %v12567 = vunpack.c.l.b16 %v12318
    %v12568 = vunpack.c.h.b16 %v12318
    %v12569 = vunpack.c.l.b16 %v12319
    %v12570 = vunpack.c.h.b16 %v12319
    %v12571 = vunpack.c.l.b16 %v12320
    %v12572 = vunpack.c.h.b16 %v12320
    %v12573 = vunpack.c.l.b16 %v12321
    %v12574 = vunpack.c.h.b16 %v12321
    %v12575 = vunpack.c.l.b16 %v12322
    %v12576 = vunpack.c.h.b16 %v12322
    %v12577 = vunpack.c.l.b16 %v12323
    %v12578 = vunpack.c.h.b16 %v12323
    %v12579 = vunpack.c.l.b16 %v12324
    %v12580 = vunpack.c.h.b16 %v12324
    %v12581 = vunpack.c.l.b16 %v12325
    %v12582 = vunpack.c.h.b16 %v12325
    %v12583 = vunpack.c.l.b16 %v12326
    %v12584 = vunpack.c.h.b16 %v12326
    %v12585 = vunpack.c.l.b16 %v12327
    %v12586 = vunpack.c.h.b16 %v12327
    %v12587 = vunpack.c.l.b16 %v12328
    %v12588 = vunpack.c.h.b16 %v12328
    %v12589 = vunpack.c.l.b16 %v12329
    %v12590 = vunpack.c.h.b16 %v12329
    %v12591 = vunpack.c.l.b16 %v12330
    %v12592 = vunpack.c.h.b16 %v12330
    %v12593 = vunpack.c.l.b16 %v12331
    %v12594 = vunpack.c.h.b16 %v12331
    %v12595 = vunpack.c.l.b16 %v12332
    %v12596 = vunpack.c.h.b16 %v12332
    %v12597 = vunpack.c.l.b16 %v12333
    %v12598 = vunpack.c.h.b16 %v12333
    %v12599 = vunpack.c.l.b16 %v12334
    %v12600 = vunpack.c.h.b16 %v12334
    %v12601 = vunpack.c.l.b16 %v12335
    %v12602 = vunpack.c.h.b16 %v12335
    %v12603 = vunpack.c.l.b16 %v12336
    %v12604 = vunpack.c.h.b16 %v12336
    %v12605 = vunpack.c.l.b16 %v12337
    %v12606 = vunpack.c.h.b16 %v12337
    %v12607 = vunpack.c.l.b16 %v12338
    %v12608 = vunpack.c.h.b16 %v12338
    %v12609 = vunpack.c.l.b16 %v12339
    %v12610 = vunpack.c.h.b16 %v12339
    %v12611 = vunpack.c.l.b16 %v12340
    %v12612 = vunpack.c.h.b16 %v12340
    %v12613 = vunpack.c.l.b16 %v12341
    %v12614 = vunpack.c.h.b16 %v12341
    %v12615 = vunpack.c.l.b16 %v12342
    %v12616 = vunpack.c.h.b16 %v12342
    %v12617 = vunpack.c.l.b16 %v12343
    %v12618 = vunpack.c.h.b16 %v12343
    %v12619 = vunpack.c.l.b16 %v12344
    %v12620 = vunpack.c.h.b16 %v12344
    %v12621 = vunpack.c.l.b16 %v12345
    %v12622 = vunpack.c.h.b16 %v12345
    %v12623 = vunpack.c.l.b16 %v12346
    %v12624 = vunpack.c.h.b16 %v12346
    %v12625 = vunpack.c.l.b16 %v12347
    %v12626 = vunpack.c.h.b16 %v12347
    %v12627 = vunpack.c.l.b16 %v12348
    %v12628 = vunpack.c.h.b16 %v12348
    %v12629 = vunpack.c.l.b16 %v12349
    %v12630 = vunpack.c.h.b16 %v12349
    %v12631 = vunpack.c.l.b16 %v12350
    %v12632 = vunpack.c.h.b16 %v12350
    %v12633 = vunpack.c.l.b16 %v12351
    %v12634 = vunpack.c.h.b16 %v12351
    %v12635 = vunpack.c.l.b16 %v12352
    %v12636 = vunpack.c.h.b16 %v12352
    %v12637 = vunpack.c.l.b16 %v12353
    %v12638 = vunpack.c.h.b16 %v12353
    %v12639 = vunpack.c.l.b16 %v12354
    %v12640 = vunpack.c.h.b16 %v12354
    %v12641 = vunpack.c.l.b16 %v12355
    %v12642 = vunpack.c.h.b16 %v12355
    %v12643 = vunpack.c.l.b16 %v12356
    %v12644 = vunpack.c.h.b16 %v12356
    %v12645 = vunpack.c.l.b16 %v12357
    %v12646 = vunpack.c.h.b16 %v12357
    %v12647 = vunpack.c.l.b16 %v12358
    %v12648 = vunpack.c.h.b16 %v12358
    %v12649 = vunpack.c.l.b16 %v12359
    %v12650 = vunpack.c.h.b16 %v12359
    %v12651 = vunpack.c.l.b16 %v12360
    %v12652 = vunpack.c.h.b16 %v12360
    %v12653 = vunpack.c.l.b16 %v12361
    %v12654 = vunpack.c.h.b16 %v12361
    %v12655 = vunpack.c.l.b16 %v12362
    %v12656 = vunpack.c.h.b16 %v12362
    %v12657 = vunpack.c.l.b16 %v12363
    %v12658 = vunpack.c.h.b16 %v12363
    %v12659 = vunpack.c.l.b16 %v12364
    %v12660 = vunpack.c.h.b16 %v12364
    %v12661 = vunpack.c.l.b16 %v12365
    %v12662 = vunpack.c.h.b16 %v12365
    %v12663 = vunpack.c.l.b16 %v12366
    %v12664 = vunpack.c.h.b16 %v12366
    %v12665 = vunpack.c.l.b16 %v12367
    %v12666 = vunpack.c.h.b16 %v12367
    %v12667 = vunpack.c.l.b16 %v12368
    %v12668 = vunpack.c.h.b16 %v12368
    %v12669 = vunpack.c.l.b16 %v12369
    %v12670 = vunpack.c.h.b16 %v12369
    %v12671 = vunpack.c.l.b16 %v12370
    %v12672 = vunpack.c.h.b16 %v12370
    %v12673 = vunpack.c.l.b16 %v12371
    %v12674 = vunpack.c.h.b16 %v12371
    %v12675 = vunpack.c.l.b16 %v12372
    %v12676 = vunpack.c.h.b16 %v12372
    %v12677 = vunpack.c.l.b16 %v12373
    %v12678 = vunpack.c.h.b16 %v12373
    %v12679 = vunpack.c.l.b16 %v12374
    %v12680 = vunpack.c.h.b16 %v12374
    %v12681 = vunpack.c.l.b16 %v12375
    %v12682 = vunpack.c.h.b16 %v12375
    %v12683 = vunpack.c.l.b16 %v12376
    %v12684 = vunpack.c.h.b16 %v12376
    %v12685 = vunpack.c.l.b16 %v12377
    %v12686 = vunpack.c.h.b16 %v12377
    %v12687 = vunpack.c.l.b16 %v12378
    %v12688 = vunpack.c.h.b16 %v12378
    %v12689 = vunpack.c.l.b16 %v12379
    %v12690 = vunpack.c.h.b16 %v12379
    %v12691 = vunpack.c.l.b16 %v12380
    %v12692 = vunpack.c.h.b16 %v12380
    %v12693 = vunpack.c.l.b16 %v12381
    %v12694 = vunpack.c.h.b16 %v12381
    %v12695 = vunpack.c.l.b16 %v12382
    %v12696 = vunpack.c.h.b16 %v12382
    %v12697 = vunpack.c.l.b16 %v12383
    %v12698 = vunpack.c.h.b16 %v12383
    %v12699 = vunpack.c.l.b16 %v12384
    %v12700 = vunpack.c.h.b16 %v12384
    %v12701 = vunpack.c.l.b16 %v12385
    %v12702 = vunpack.c.h.b16 %v12385
    %v12703 = vunpack.c.l.b16 %v12386
    %v12704 = vunpack.c.h.b16 %v12386
    %v12705 = vunpack.c.l.b16 %v12387
    %v12706 = vunpack.c.h.b16 %v12387
    %v12707 = vunpack.c.l.b16 %v12388
    %v12708 = vunpack.c.h.b16 %v12388
    %v12709 = vunpack.c.l.b16 %v12389
    %v12710 = vunpack.c.h.b16 %v12389
    %v12711 = vunpack.c.l.b16 %v12390
    %v12712 = vunpack.c.h.b16 %v12390
    %v12713 = vunpack.c.l.b16 %v12391
    %v12714 = vunpack.c.h.b16 %v12391
    %v12715 = vunpack.c.l.b16 %v12392
    %v12716 = vunpack.c.h.b16 %v12392
    %v12717 = vpack.c.b16 %v12503, %v12501
    %v12718 = vpack.c.b16 %v12504, %v12502
    %v12719 = vpack.c.b16 %v12507, %v12505
    %v12720 = vpack.c.b16 %v12508, %v12506
    %v12721 = vpack.c.b16 %v12511, %v12509
    %v12722 = vpack.c.b16 %v12512, %v12510
    %v12723 = vpack.c.b16 %v12515, %v12513
    %v12724 = vpack.c.b16 %v12516, %v12514
    %v12725 = vpack.c.b16 %v12519, %v12517
    %v12726 = vpack.c.b16 %v12520, %v12518
    %v12727 = vpack.c.b16 %v12523, %v12521
    %v12728 = vpack.c.b16 %v12524, %v12522
    %v12729 = vpack.c.b16 %v12527, %v12525
    %v12730 = vpack.c.b16 %v12528, %v12526
    %v12731 = vpack.c.b16 %v12531, %v12529
    %v12732 = vpack.c.b16 %v12532, %v12530
    %v12733 = vpack.c.b16 %v12535, %v12533
    %v12734 = vpack.c.b16 %v12536, %v12534
    %v12735 = vpack.c.b16 %v12539, %v12537
    %v12736 = vpack.c.b16 %v12540, %v12538
    %v12737 = vpack.c.b16 %v12543, %v12541
    %v12738 = vpack.c.b16 %v12544, %v12542
    %v12739 = vpack.c.b16 %v12547, %v12545
    %v12740 = vpack.c.b16 %v12548, %v12546
    %v12741 = vpack.c.b16 %v12551, %v12549
    %v12742 = vpack.c.b16 %v12552, %v12550
    %v12743 = vpack.c.b16 %v12555, %v12553
    %v12744 = vpack.c.b16 %v12556, %v12554
    %v12745 = vpack.c.b16 %v12559, %v12557
    %v12746 = vpack.c.b16 %v12560, %v12558
    %v12747 = vpack.c.b16 %v12563, %v12561
    %v12748 = vpack.c.b16 %v12564, %v12562
    %v12749 = vpack.c.b16 %v12567, %v12565
    %v12750 = vpack.c.b16 %v12568, %v12566
    %v12751 = vpack.c.b16 %v12571, %v12569
    %v12752 = vpack.c.b16 %v12572, %v12570
    %v12753 = vpack.c.b16 %v12575, %v12573
    %v12754 = vpack.c.b16 %v12576, %v12574
    %v12755 = vpack.c.b16 %v12579, %v12577
    %v12756 = vpack.c.b16 %v12580, %v12578
    %v12757 = vpack.c.b16 %v12583, %v12581
    %v12758 = vpack.c.b16 %v12584, %v12582
    %v12759 = vpack.c.b16 %v12587, %v12585
    %v12760 = vpack.c.b16 %v12588, %v12586
    %v12761 = vpack.c.b16 %v12591, %v12589
    %v12762 = vpack.c.b16 %v12592, %v12590
    %v12763 = vpack.c.b16 %v12595, %v12593
    %v12764 = vpack.c.b16 %v12596, %v12594
    %v12765 = vpack.c.b16 %v12599, %v12597
    %v12766 = vpack.c.b16 %v12600, %v12598
    %v12767 = vpack.c.b16 %v12603, %v12601
    %v12768 = vpack.c.b16 %v12604, %v12602
    %v12769 = vpack.c.b16 %v12607, %v12605
    %v12770 = vpack.c.b16 %v12608, %v12606
    %v12771 = vpack.c.b16 %v12611, %v12609
    %v12772 = vpack.c.b16 %v12612, %v12610
    %v12773 = vpack.c.b16 %v12615, %v12613
    %v12774 = vpack.c.b16 %v12616, %v12614
    %v12775 = vpack.c.b16 %v12619, %v12617
    %v12776 = vpack.c.b16 %v12620, %v12618
    %v12777 = vpack.c.b16 %v12623, %v12621
    %v12778 = vpack.c.b16 %v12624, %v12622
    %v12779 = vpack.c.b16 %v12627, %v12625
    %v12780 = vpack.c.b16 %v12628, %v12626
    %v12781 = vpack.c.b16 %v12631, %v12629
    %v12782 = vpack.c.b16 %v12632, %v12630
    %v12783 = vpack.c.b16 %v12635, %v12633
    %v12784 = vpack.c.b16 %v12636, %v12634
    %v12785 = vpack.c.b16 %v12639, %v12637
    %v12786 = vpack.c.b16 %v12640, %v12638
    %v12787 = vpack.c.b16 %v12643, %v12641
    %v12788 = vpack.c.b16 %v12644, %v12642
    %v12789 = vpack.c.b16 %v12647, %v12645
    %v12790 = vpack.c.b16 %v12648, %v12646
    %v12791 = vpack.c.b16 %v12651, %v12649
    %v12792 = vpack.c.b16 %v12652, %v12650
    %v12793 = vpack.c.b16 %v12655, %v12653
    %v12794 = vpack.c.b16 %v12656, %v12654
    %v12795 = vpack.c.b16 %v12659, %v12657
    %v12796 = vpack.c.b16 %v12660, %v12658
    %v12797 = vpack.c.b16 %v12663, %v12661
    %v12798 = vpack.c.b16 %v12664, %v12662
    %v12799 = vpack.c.b16 %v12667, %v12665
    %v12800 = vpack.c.b16 %v12668, %v12666
    %v12801 = vpack.c.b16 %v12671, %v12669
    %v12802 = vpack.c.b16 %v12672, %v12670
    %v12803 = vpack.c.b16 %v12675, %v12673
    %v12804 = vpack.c.b16 %v12676, %v12674
    %v12805 = vpack.c.b16 %v12679, %v12677
    %v12806 = vpack.c.b16 %v12680, %v12678
    %v12807 = vpack.c.b16 %v12683, %v12681
    %v12808 = vpack.c.b16 %v12684, %v12682
    %v12809 = vpack.c.b16 %v12687, %v12685
    %v12810 = vpack.c.b16 %v12688, %v12686
    %v12811 = vpack.c.b16 %v12691, %v12689
    %v12812 = vpack.c.b16 %v12692, %v12690
    %v12813 = vpack.c.b16 %v12695, %v12693
    %v12814 = vpack.c.b16 %v12696, %v12694
    %v12815 = vpack.c.b16 %v12699, %v12697
    %v12816 = vpack.c.b16 %v12700, %v12698
    %v12817 = vpack.c.b16 %v12703, %v12701
    %v12818 = vpack.c.b16 %v12704, %v12702
    %v12819 = vpack.c.b16 %v12707, %v12705
    %v12820 = vpack.c.b16 %v12708, %v12706
    %v12821 = vpack.c.b16 %v12711, %v12709
    %v12822 = vpack.c.b16 %v12712, %v12710
    %v12823 = vpack.c.b16 %v12715, %v12713
    %v12824 = vpack.c.b16 %v12716, %v12714
    %12933 = vmatpush.bf16.msra.mxu0 %v12731
    %12934 = vmatpush.bf16.msra.mxu0 %v12729
    %12935 = vmatpush.bf16.msra.mxu0 %v12727
    %12936 = vmatpush.bf16.msra.mxu0 %v12725
    %12937 = vmatpush.bf16.msra.mxu0 %v12723
    %12938 = vmatpush.bf16.msra.mxu0 %v12721
    %12939 = vmatpush.bf16.msra.mxu0 %v12719
    %12940 = vmatpush.bf16.msra.mxu0 %v12717
    %12941 = vmatmul.bf16.gmra.mxu0 %v11443
    %v12942 = vpop.f32.mrf.mxu0
    %v12943 = vadd.f32 0.0, %v12942
    %v12944 = vpop.f32.mrf.mxu0
    %12945 = vdwg.mxu0
    %12946 = vmatpush.bf16.msra.mxu0 %v12747
    %12947 = vmatpush.bf16.msra.mxu0 %v12745
    %12948 = vmatpush.bf16.msra.mxu0 %v12743
    %12949 = vmatpush.bf16.msra.mxu0 %v12741
    %12950 = vmatpush.bf16.msra.mxu0 %v12739
    %12951 = vmatpush.bf16.msra.mxu0 %v12737
    %12952 = vmatpush.bf16.msra.mxu0 %v12735
    %12953 = vmatpush.bf16.msra.mxu0 %v12733
    %12954 = vmatmul.bf16.gmra.mxu0 %v11444
    %v12955 = vpop.f32.mrf.mxu0
    %v12956 = vadd.f32 %v12943, %v12955
    %v12957 = vpop.f32.mrf.mxu0
    %12958 = vdwg.mxu0
    %12959 = vmatpush.bf16.msra.mxu0 %v12763
    %12960 = vmatpush.bf16.msra.mxu0 %v12761
    %12961 = vmatpush.bf16.msra.mxu0 %v12759
    %12962 = vmatpush.bf16.msra.mxu0 %v12757
    %12963 = vmatpush.bf16.msra.mxu0 %v12755
    %12964 = vmatpush.bf16.msra.mxu0 %v12753
    %12965 = vmatpush.bf16.msra.mxu0 %v12751
    %12966 = vmatpush.bf16.msra.mxu0 %v12749
    %12967 = vmatmul.bf16.gmra.mxu0 %v11445
    %v12968 = vpop.f32.mrf.mxu0
    %v12969 = vadd.f32 %v12956, %v12968
    %v12970 = vpop.f32.mrf.mxu0
    %12971 = vdwg.mxu0
    %12972 = vmatpush.bf16.msra.mxu0 %v12779
    %12973 = vmatpush.bf16.msra.mxu0 %v12777
    %12974 = vmatpush.bf16.msra.mxu0 %v12775
    %12975 = vmatpush.bf16.msra.mxu0 %v12773
    %12976 = vmatpush.bf16.msra.mxu0 %v12771
    %12977 = vmatpush.bf16.msra.mxu0 %v12769
    %12978 = vmatpush.bf16.msra.mxu0 %v12767
    %12979 = vmatpush.bf16.msra.mxu0 %v12765
    %12980 = vmatmul.bf16.gmra.mxu0 %v11446
    %v12981 = vpop.f32.mrf.mxu0
    %v12982 = vadd.f32 %v12969, %v12981
    %v12983 = vpop.f32.mrf.mxu0
    %12984 = vdwg.mxu0
    %12985 = vmatpush.bf16.msra.mxu0 %v12795
    %12986 = vmatpush.bf16.msra.mxu0 %v12793
    %12987 = vmatpush.bf16.msra.mxu0 %v12791
    %12988 = vmatpush.bf16.msra.mxu0 %v12789
    %12989 = vmatpush.bf16.msra.mxu0 %v12787
    %12990 = vmatpush.bf16.msra.mxu0 %v12785
    %12991 = vmatpush.bf16.msra.mxu0 %v12783
    %12992 = vmatpush.bf16.msra.mxu0 %v12781
    %12993 = vmatmul.bf16.gmra.mxu0 %v11447
    %v12994 = vpop.f32.mrf.mxu0
    %v12995 = vadd.f32 %v12982, %v12994
    %v12996 = vpop.f32.mrf.mxu0
    %12997 = vdwg.mxu0
    %12998 = vmatpush.bf16.msra.mxu0 %v12811
    %12999 = vmatpush.bf16.msra.mxu0 %v12809
    %13000 = vmatpush.bf16.msra.mxu0 %v12807
    %13001 = vmatpush.bf16.msra.mxu0 %v12805
    %13002 = vmatpush.bf16.msra.mxu0 %v12803
    %13003 = vmatpush.bf16.msra.mxu0 %v12801
    %13004 = vmatpush.bf16.msra.mxu0 %v12799
    %13005 = vmatpush.bf16.msra.mxu0 %v12797
    %13006 = vmatmul.bf16.gmra.mxu0 %v11448
    %v13007 = vpop.f32.mrf.mxu0
    %v13008 = vadd.f32 %v12995, %v13007
    %v13009 = vpop.f32.mrf.mxu0
    %13010 = vdwg.mxu0
    %13011 = vmatpush.bf16.msra.mxu0 0
    %13012 = vmatpush.bf16.msra.mxu0 0
    %13013 = vmatpush.bf16.msra.mxu0 %v12823
    %13014 = vmatpush.bf16.msra.mxu0 %v12821
    %13015 = vmatpush.bf16.msra.mxu0 %v12819
    %13016 = vmatpush.bf16.msra.mxu0 %v12817
    %13017 = vmatpush.bf16.msra.mxu0 %v12815
    %13018 = vmatpush.bf16.msra.mxu0 %v12813
    %13019 = vmatmul.bf16.gmra.mxu0 %v12100
    %v13020 = vpop.f32.mrf.mxu0
    %v13021 = vadd.f32 %v13008, %v13020
    %v13022 = vpop.f32.mrf.mxu0
    %13023 = vdwg.mxu0
    %13024 = vmatpush.bf16.msra.mxu0 %v12732
    %13025 = vmatpush.bf16.msra.mxu0 %v12730
    %13026 = vmatpush.bf16.msra.mxu0 %v12728
    %13027 = vmatpush.bf16.msra.mxu0 %v12726
    %13028 = vmatpush.bf16.msra.mxu0 %v12724
    %13029 = vmatpush.bf16.msra.mxu0 %v12722
    %13030 = vmatpush.bf16.msra.mxu0 %v12720
    %13031 = vmatpush.bf16.msra.mxu0 %v12718
    %13032 = vmatmul.bf16.gmra.mxu0 %v11443
    %v13033 = vpop.f32.mrf.mxu0
    %v13034 = vadd.f32 0.0, %v13033
    %v13035 = vpop.f32.mrf.mxu0
    %13036 = vdwg.mxu0
    %13037 = vmatpush.bf16.msra.mxu0 %v12748
    %13038 = vmatpush.bf16.msra.mxu0 %v12746
    %13039 = vmatpush.bf16.msra.mxu0 %v12744
    %13040 = vmatpush.bf16.msra.mxu0 %v12742
    %13041 = vmatpush.bf16.msra.mxu0 %v12740
    %13042 = vmatpush.bf16.msra.mxu0 %v12738
    %13043 = vmatpush.bf16.msra.mxu0 %v12736
    %13044 = vmatpush.bf16.msra.mxu0 %v12734
    %13045 = vmatmul.bf16.gmra.mxu0 %v11444
    %v13046 = vpop.f32.mrf.mxu0
    %v13047 = vadd.f32 %v13034, %v13046
    %v13048 = vpop.f32.mrf.mxu0
    %13049 = vdwg.mxu0
    %13050 = vmatpush.bf16.msra.mxu0 %v12764
    %13051 = vmatpush.bf16.msra.mxu0 %v12762
    %13052 = vmatpush.bf16.msra.mxu0 %v12760
    %13053 = vmatpush.bf16.msra.mxu0 %v12758
    %13054 = vmatpush.bf16.msra.mxu0 %v12756
    %13055 = vmatpush.bf16.msra.mxu0 %v12754
    %13056 = vmatpush.bf16.msra.mxu0 %v12752
    %13057 = vmatpush.bf16.msra.mxu0 %v12750
    %13058 = vmatmul.bf16.gmra.mxu0 %v11445
    %v13059 = vpop.f32.mrf.mxu0
    %v13060 = vadd.f32 %v13047, %v13059
    %v13061 = vpop.f32.mrf.mxu0
    %13062 = vdwg.mxu0
    %13063 = vmatpush.bf16.msra.mxu0 %v12780
    %13064 = vmatpush.bf16.msra.mxu0 %v12778
    %13065 = vmatpush.bf16.msra.mxu0 %v12776
    %13066 = vmatpush.bf16.msra.mxu0 %v12774
    %13067 = vmatpush.bf16.msra.mxu0 %v12772
    %13068 = vmatpush.bf16.msra.mxu0 %v12770
    %13069 = vmatpush.bf16.msra.mxu0 %v12768
    %13070 = vmatpush.bf16.msra.mxu0 %v12766
    %13071 = vmatmul.bf16.gmra.mxu0 %v11446
    %v13072 = vpop.f32.mrf.mxu0
    %v13073 = vadd.f32 %v13060, %v13072
    %v13074 = vpop.f32.mrf.mxu0
    %13075 = vdwg.mxu0
    %13076 = vmatpush.bf16.msra.mxu0 %v12796
    %13077 = vmatpush.bf16.msra.mxu0 %v12794
    %13078 = vmatpush.bf16.msra.mxu0 %v12792
    %13079 = vmatpush.bf16.msra.mxu0 %v12790
    %13080 = vmatpush.bf16.msra.mxu0 %v12788
    %13081 = vmatpush.bf16.msra.mxu0 %v12786
    %13082 = vmatpush.bf16.msra.mxu0 %v12784
    %13083 = vmatpush.bf16.msra.mxu0 %v12782
    %13084 = vmatmul.bf16.gmra.mxu0 %v11447
    %v13085 = vpop.f32.mrf.mxu0
    %v13086 = vadd.f32 %v13073, %v13085
    %v13087 = vpop.f32.mrf.mxu0
    %13088 = vdwg.mxu0
    %13089 = vmatpush.bf16.msra.mxu0 %v12812
    %13090 = vmatpush.bf16.msra.mxu0 %v12810
    %13091 = vmatpush.bf16.msra.mxu0 %v12808
    %13092 = vmatpush.bf16.msra.mxu0 %v12806
    %13093 = vmatpush.bf16.msra.mxu0 %v12804
    %13094 = vmatpush.bf16.msra.mxu0 %v12802
    %13095 = vmatpush.bf16.msra.mxu0 %v12800
    %13096 = vmatpush.bf16.msra.mxu0 %v12798
    %13097 = vmatmul.bf16.gmra.mxu0 %v11448
    %v13098 = vpop.f32.mrf.mxu0
    %v13099 = vadd.f32 %v13086, %v13098
    %v13100 = vpop.f32.mrf.mxu0
    %13101 = vdwg.mxu0
    %13102 = vmatpush.bf16.msra.mxu0 0
    %13103 = vmatpush.bf16.msra.mxu0 0
    %13104 = vmatpush.bf16.msra.mxu0 %v12824
    %13105 = vmatpush.bf16.msra.mxu0 %v12822
    %13106 = vmatpush.bf16.msra.mxu0 %v12820
    %13107 = vmatpush.bf16.msra.mxu0 %v12818
    %13108 = vmatpush.bf16.msra.mxu0 %v12816
    %13109 = vmatpush.bf16.msra.mxu0 %v12814
    %13110 = vmatmul.bf16.gmra.mxu0 %v12100
    %v13111 = vpop.f32.mrf.mxu0
    %v13112 = vadd.f32 %v13099, %v13111
    %v13113 = vpop.f32.mrf.mxu0
    %13114 = vdwg.mxu0
    %v13115 = vmax.f32 %v12190, %v13021
    %v13116 = vmax.f32 %v12281, %v13112
    %s13117 = scalar_lea.vmem [#allocation6], 1728
    %v13118 = vld [vmem:[%s13117] sm:$0xff]
    %v13119 = vld [vmem:[%s13117 + $0x8] sm:$0xff]
    %v13120 = vld [vmem:[%s13117 + $0x10] sm:$0xff]
    %v13121 = vld [vmem:[%s13117 + $0x18] sm:$0xff]
    %v13122 = vld [vmem:[%s13117 + $0x20] sm:$0xff]
    %v13123 = vld [vmem:[%s13117 + $0x28] sm:$0xff]
    %v13124 = vld [vmem:[%s13117 + $0x30] sm:$0xff]
    %v13125 = vld [vmem:[%s13117 + $0x38] sm:$0xff]
    %v13126 = vld [vmem:[%s13117 + $0x40] sm:$0xff]
    %v13127 = vld [vmem:[%s13117 + $0x48] sm:$0xff]
    %v13128 = vld [vmem:[%s13117 + $0x50] sm:$0xff]
    %v13129 = vld [vmem:[%s13117 + $0x58] sm:$0xff]
    %v13130 = vld [vmem:[%s13117 + $0x60] sm:$0xff]
    %v13131 = vld [vmem:[%s13117 + $0x68] sm:$0xff]
    %v13132 = vld [vmem:[%s13117 + $0x70] sm:$0xff]
    %v13133 = vld [vmem:[%s13117 + $0x78] sm:$0xff]
    %v13134 = vld [vmem:[%s13117 + $0x80] sm:$0xff]
    %v13135 = vld [vmem:[%s13117 + $0x88] sm:$0xff]
    %v13136 = vld [vmem:[%s13117 + $0x90] sm:$0xff]
    %v13137 = vld [vmem:[%s13117 + $0x98] sm:$0xff]
    %v13138 = vld [vmem:[%s13117 + $0xa0] sm:$0xff]
    %v13139 = vld [vmem:[%s13117 + $0xa8] sm:$0xff]
    %v13140 = vld [vmem:[%s13117 + $0xb0] sm:$0xff]
    %v13141 = vld [vmem:[%s13117 + $0xb8] sm:$0xff]
    %v13142 = vld [vmem:[%s13117 + $0xc0] sm:$0xff]
    %v13143 = vld [vmem:[%s13117 + $0xc8] sm:$0xff]
    %v13144 = vld [vmem:[%s13117 + $0xd0] sm:$0xff]
    %v13145 = vld [vmem:[%s13117 + $0xd8] sm:$0xff]
    %v13146 = vld [vmem:[%s13117 + $0xe0] sm:$0xff]
    %v13147 = vld [vmem:[%s13117 + $0xe8] sm:$0xff]
    %v13148 = vld [vmem:[%s13117 + $0xf0] sm:$0xff]
    %v13149 = vld [vmem:[%s13117 + $0xf8] sm:$0xff]
    %v13150 = vld [vmem:[%s13117 + $0x100] sm:$0xff]
    %v13151 = vld [vmem:[%s13117 + $0x108] sm:$0xff]
    %v13152 = vld [vmem:[%s13117 + $0x110] sm:$0xff]
    %v13153 = vld [vmem:[%s13117 + $0x118] sm:$0xff]
    %v13154 = vld [vmem:[%s13117 + $0x120] sm:$0xff]
    %v13155 = vld [vmem:[%s13117 + $0x128] sm:$0xff]
    %v13156 = vld [vmem:[%s13117 + $0x130] sm:$0xff]
    %v13157 = vld [vmem:[%s13117 + $0x138] sm:$0xff]
    %v13158 = vld [vmem:[%s13117 + $0x140] sm:$0xff]
    %v13159 = vld [vmem:[%s13117 + $0x148] sm:$0xff]
    %v13160 = vld [vmem:[%s13117 + $0x150] sm:$0xff]
    %v13161 = vld [vmem:[%s13117 + $0x158] sm:$0xff]
    %v13162 = vld [vmem:[%s13117 + $0x160] sm:$0xff]
    %v13163 = vld [vmem:[%s13117 + $0x168] sm:$0xff]
    %v13164 = vld [vmem:[%s13117 + $0x170] sm:$0xff]
    %v13165 = vld [vmem:[%s13117 + $0x178] sm:$0xff]
    %v13166 = vld [vmem:[%s13117 + $0x180] sm:$0xff]
    %v13167 = vld [vmem:[%s13117 + $0x188] sm:$0xff]
    %v13168 = vld [vmem:[%s13117 + $0x190] sm:$0xff]
    %v13169 = vld [vmem:[%s13117 + $0x198] sm:$0xff]
    %v13170 = vld [vmem:[%s13117 + $0x1a0] sm:$0xff]
    %v13171 = vld [vmem:[%s13117 + $0x1a8] sm:$0xff]
    %v13172 = vld [vmem:[%s13117 + $0x1b0] sm:$0xff]
    %v13173 = vld [vmem:[%s13117 + $0x1b8] sm:$0xff]
    %v13174 = vld [vmem:[%s13117 + $0x1c0] sm:$0xff]
    %v13175 = vld [vmem:[%s13117 + $0x1c8] sm:$0xff]
    %v13176 = vld [vmem:[%s13117 + $0x1d0] sm:$0xff]
    %v13177 = vld [vmem:[%s13117 + $0x1d8] sm:$0xff]
    %v13178 = vld [vmem:[%s13117 + $0x1e0] sm:$0xff]
    %v13179 = vld [vmem:[%s13117 + $0x1e8] sm:$0xff]
    %v13180 = vld [vmem:[%s13117 + $0x1f0] sm:$0xff]
    %v13181 = vld [vmem:[%s13117 + $0x1f8] sm:$0xff]
    %v13182 = vld [vmem:[%s13117 + $0x200] sm:$0xff]
    %v13183 = vld [vmem:[%s13117 + $0x208] sm:$0xff]
    %v13184 = vld [vmem:[%s13117 + $0x210] sm:$0xff]
    %v13185 = vld [vmem:[%s13117 + $0x218] sm:$0xff]
    %v13186 = vld [vmem:[%s13117 + $0x220] sm:$0xff]
    %v13187 = vld [vmem:[%s13117 + $0x228] sm:$0xff]
    %v13188 = vld [vmem:[%s13117 + $0x230] sm:$0xff]
    %v13189 = vld [vmem:[%s13117 + $0x238] sm:$0xff]
    %v13190 = vld [vmem:[%s13117 + $0x240] sm:$0xff]
    %v13191 = vld [vmem:[%s13117 + $0x248] sm:$0xff]
    %v13192 = vld [vmem:[%s13117 + $0x250] sm:$0xff]
    %v13193 = vld [vmem:[%s13117 + $0x258] sm:$0xff]
    %v13194 = vld [vmem:[%s13117 + $0x260] sm:$0xff]
    %v13195 = vld [vmem:[%s13117 + $0x268] sm:$0xff]
    %v13196 = vld [vmem:[%s13117 + $0x270] sm:$0xff]
    %v13197 = vld [vmem:[%s13117 + $0x278] sm:$0xff]
    %v13198 = vld [vmem:[%s13117 + $0x280] sm:$0xff]
    %v13199 = vld [vmem:[%s13117 + $0x288] sm:$0xff]
    %v13200 = vld [vmem:[%s13117 + $0x290] sm:$0xff]
    %v13201 = vld [vmem:[%s13117 + $0x298] sm:$0xff]
    %v13202 = vld [vmem:[%s13117 + $0x2a0] sm:$0xff]
    %v13203 = vld [vmem:[%s13117 + $0x2a8] sm:$0xff]
    %v13204 = vld [vmem:[%s13117 + $0x2b0] sm:$0xff]
    %v13205 = vld [vmem:[%s13117 + $0x2b8] sm:$0xff]
    %v13206 = vld [vmem:[%s13117 + $0x2c0] sm:$0xff]
    %v13207 = vld [vmem:[%s13117 + $0x2c8] sm:$0xff]
    %v13208 = vld [vmem:[%s13117 + $0x2d0] sm:$0xff]
    %v13209 = vld [vmem:[%s13117 + $0x2d8] sm:$0xff]
    %v13210 = vld [vmem:[%s13117 + $0x2e0] sm:$0xff]
    %v13211 = vld [vmem:[%s13117 + $0x2e8] sm:$0xff]
    %v13212 = vld [vmem:[%s13117 + $0x2f0] sm:$0xff]
    %v13213 = vld [vmem:[%s13117 + $0x2f8] sm:$0xff]
    %v13214 = vld [vmem:[%s13117 + $0x300] sm:$0xff]
    %v13215 = vld [vmem:[%s13117 + $0x308] sm:$0xff]
    %v13216 = vld [vmem:[%s13117 + $0x310] sm:$0xff]
    %v13217 = vld [vmem:[%s13117 + $0x318] sm:$0xff]
    %v13218 = vld [vmem:[%s13117 + $0x320] sm:$0xff]
    %v13219 = vld [vmem:[%s13117 + $0x328] sm:$0xff]
    %v13220 = vld [vmem:[%s13117 + $0x330] sm:$0xff]
    %v13221 = vld [vmem:[%s13117 + $0x338] sm:$0xff]
    %v13222 = vld [vmem:[%s13117 + $0x340] sm:$0xff]
    %v13223 = vld [vmem:[%s13117 + $0x348] sm:$0xff]
    %v13224 = vld [vmem:[%s13117 + $0x350] sm:$0xff]
    %v13225 = vld [vmem:[%s13117 + $0x358] sm:$0xff]
    %v13334 = vunpack.c.l.b16 %v13118
    %v13335 = vunpack.c.h.b16 %v13118
    %v13336 = vunpack.c.l.b16 %v13119
    %v13337 = vunpack.c.h.b16 %v13119
    %v13338 = vunpack.c.l.b16 %v13120
    %v13339 = vunpack.c.h.b16 %v13120
    %v13340 = vunpack.c.l.b16 %v13121
    %v13341 = vunpack.c.h.b16 %v13121
    %v13342 = vunpack.c.l.b16 %v13122
    %v13343 = vunpack.c.h.b16 %v13122
    %v13344 = vunpack.c.l.b16 %v13123
    %v13345 = vunpack.c.h.b16 %v13123
    %v13346 = vunpack.c.l.b16 %v13124
    %v13347 = vunpack.c.h.b16 %v13124
    %v13348 = vunpack.c.l.b16 %v13125
    %v13349 = vunpack.c.h.b16 %v13125
    %v13350 = vunpack.c.l.b16 %v13126
    %v13351 = vunpack.c.h.b16 %v13126
    %v13352 = vunpack.c.l.b16 %v13127
    %v13353 = vunpack.c.h.b16 %v13127
    %v13354 = vunpack.c.l.b16 %v13128
    %v13355 = vunpack.c.h.b16 %v13128
    %v13356 = vunpack.c.l.b16 %v13129
    %v13357 = vunpack.c.h.b16 %v13129
    %v13358 = vunpack.c.l.b16 %v13130
    %v13359 = vunpack.c.h.b16 %v13130
    %v13360 = vunpack.c.l.b16 %v13131
    %v13361 = vunpack.c.h.b16 %v13131
    %v13362 = vunpack.c.l.b16 %v13132
    %v13363 = vunpack.c.h.b16 %v13132
    %v13364 = vunpack.c.l.b16 %v13133
    %v13365 = vunpack.c.h.b16 %v13133
    %v13366 = vunpack.c.l.b16 %v13134
    %v13367 = vunpack.c.h.b16 %v13134
    %v13368 = vunpack.c.l.b16 %v13135
    %v13369 = vunpack.c.h.b16 %v13135
    %v13370 = vunpack.c.l.b16 %v13136
    %v13371 = vunpack.c.h.b16 %v13136
    %v13372 = vunpack.c.l.b16 %v13137
    %v13373 = vunpack.c.h.b16 %v13137
    %v13374 = vunpack.c.l.b16 %v13138
    %v13375 = vunpack.c.h.b16 %v13138
    %v13376 = vunpack.c.l.b16 %v13139
    %v13377 = vunpack.c.h.b16 %v13139
    %v13378 = vunpack.c.l.b16 %v13140
    %v13379 = vunpack.c.h.b16 %v13140
    %v13380 = vunpack.c.l.b16 %v13141
    %v13381 = vunpack.c.h.b16 %v13141
    %v13382 = vunpack.c.l.b16 %v13142
    %v13383 = vunpack.c.h.b16 %v13142
    %v13384 = vunpack.c.l.b16 %v13143
    %v13385 = vunpack.c.h.b16 %v13143
    %v13386 = vunpack.c.l.b16 %v13144
    %v13387 = vunpack.c.h.b16 %v13144
    %v13388 = vunpack.c.l.b16 %v13145
    %v13389 = vunpack.c.h.b16 %v13145
    %v13390 = vunpack.c.l.b16 %v13146
    %v13391 = vunpack.c.h.b16 %v13146
    %v13392 = vunpack.c.l.b16 %v13147
    %v13393 = vunpack.c.h.b16 %v13147
    %v13394 = vunpack.c.l.b16 %v13148
    %v13395 = vunpack.c.h.b16 %v13148
    %v13396 = vunpack.c.l.b16 %v13149
    %v13397 = vunpack.c.h.b16 %v13149
    %v13398 = vunpack.c.l.b16 %v13150
    %v13399 = vunpack.c.h.b16 %v13150
    %v13400 = vunpack.c.l.b16 %v13151
    %v13401 = vunpack.c.h.b16 %v13151
    %v13402 = vunpack.c.l.b16 %v13152
    %v13403 = vunpack.c.h.b16 %v13152
    %v13404 = vunpack.c.l.b16 %v13153
    %v13405 = vunpack.c.h.b16 %v13153
    %v13406 = vunpack.c.l.b16 %v13154
    %v13407 = vunpack.c.h.b16 %v13154
    %v13408 = vunpack.c.l.b16 %v13155
    %v13409 = vunpack.c.h.b16 %v13155
    %v13410 = vunpack.c.l.b16 %v13156
    %v13411 = vunpack.c.h.b16 %v13156
    %v13412 = vunpack.c.l.b16 %v13157
    %v13413 = vunpack.c.h.b16 %v13157
    %v13414 = vunpack.c.l.b16 %v13158
    %v13415 = vunpack.c.h.b16 %v13158
    %v13416 = vunpack.c.l.b16 %v13159
    %v13417 = vunpack.c.h.b16 %v13159
    %v13418 = vunpack.c.l.b16 %v13160
    %v13419 = vunpack.c.h.b16 %v13160
    %v13420 = vunpack.c.l.b16 %v13161
    %v13421 = vunpack.c.h.b16 %v13161
    %v13422 = vunpack.c.l.b16 %v13162
    %v13423 = vunpack.c.h.b16 %v13162
    %v13424 = vunpack.c.l.b16 %v13163
    %v13425 = vunpack.c.h.b16 %v13163
    %v13426 = vunpack.c.l.b16 %v13164
    %v13427 = vunpack.c.h.b16 %v13164
    %v13428 = vunpack.c.l.b16 %v13165
    %v13429 = vunpack.c.h.b16 %v13165
    %v13430 = vunpack.c.l.b16 %v13166
    %v13431 = vunpack.c.h.b16 %v13166
    %v13432 = vunpack.c.l.b16 %v13167
    %v13433 = vunpack.c.h.b16 %v13167
    %v13434 = vunpack.c.l.b16 %v13168
    %v13435 = vunpack.c.h.b16 %v13168
    %v13436 = vunpack.c.l.b16 %v13169
    %v13437 = vunpack.c.h.b16 %v13169
    %v13438 = vunpack.c.l.b16 %v13170
    %v13439 = vunpack.c.h.b16 %v13170
    %v13440 = vunpack.c.l.b16 %v13171
    %v13441 = vunpack.c.h.b16 %v13171
    %v13442 = vunpack.c.l.b16 %v13172
    %v13443 = vunpack.c.h.b16 %v13172
    %v13444 = vunpack.c.l.b16 %v13173
    %v13445 = vunpack.c.h.b16 %v13173
    %v13446 = vunpack.c.l.b16 %v13174
    %v13447 = vunpack.c.h.b16 %v13174
    %v13448 = vunpack.c.l.b16 %v13175
    %v13449 = vunpack.c.h.b16 %v13175
    %v13450 = vunpack.c.l.b16 %v13176
    %v13451 = vunpack.c.h.b16 %v13176
    %v13452 = vunpack.c.l.b16 %v13177
    %v13453 = vunpack.c.h.b16 %v13177
    %v13454 = vunpack.c.l.b16 %v13178
    %v13455 = vunpack.c.h.b16 %v13178
    %v13456 = vunpack.c.l.b16 %v13179
    %v13457 = vunpack.c.h.b16 %v13179
    %v13458 = vunpack.c.l.b16 %v13180
    %v13459 = vunpack.c.h.b16 %v13180
    %v13460 = vunpack.c.l.b16 %v13181
    %v13461 = vunpack.c.h.b16 %v13181
    %v13462 = vunpack.c.l.b16 %v13182
    %v13463 = vunpack.c.h.b16 %v13182
    %v13464 = vunpack.c.l.b16 %v13183
    %v13465 = vunpack.c.h.b16 %v13183
    %v13466 = vunpack.c.l.b16 %v13184
    %v13467 = vunpack.c.h.b16 %v13184
    %v13468 = vunpack.c.l.b16 %v13185
    %v13469 = vunpack.c.h.b16 %v13185
    %v13470 = vunpack.c.l.b16 %v13186
    %v13471 = vunpack.c.h.b16 %v13186
    %v13472 = vunpack.c.l.b16 %v13187
    %v13473 = vunpack.c.h.b16 %v13187
    %v13474 = vunpack.c.l.b16 %v13188
    %v13475 = vunpack.c.h.b16 %v13188
    %v13476 = vunpack.c.l.b16 %v13189
    %v13477 = vunpack.c.h.b16 %v13189
    %v13478 = vunpack.c.l.b16 %v13190
    %v13479 = vunpack.c.h.b16 %v13190
    %v13480 = vunpack.c.l.b16 %v13191
    %v13481 = vunpack.c.h.b16 %v13191
    %v13482 = vunpack.c.l.b16 %v13192
    %v13483 = vunpack.c.h.b16 %v13192
    %v13484 = vunpack.c.l.b16 %v13193
    %v13485 = vunpack.c.h.b16 %v13193
    %v13486 = vunpack.c.l.b16 %v13194
    %v13487 = vunpack.c.h.b16 %v13194
    %v13488 = vunpack.c.l.b16 %v13195
    %v13489 = vunpack.c.h.b16 %v13195
    %v13490 = vunpack.c.l.b16 %v13196
    %v13491 = vunpack.c.h.b16 %v13196
    %v13492 = vunpack.c.l.b16 %v13197
    %v13493 = vunpack.c.h.b16 %v13197
    %v13494 = vunpack.c.l.b16 %v13198
    %v13495 = vunpack.c.h.b16 %v13198
    %v13496 = vunpack.c.l.b16 %v13199
    %v13497 = vunpack.c.h.b16 %v13199
    %v13498 = vunpack.c.l.b16 %v13200
    %v13499 = vunpack.c.h.b16 %v13200
    %v13500 = vunpack.c.l.b16 %v13201
    %v13501 = vunpack.c.h.b16 %v13201
    %v13502 = vunpack.c.l.b16 %v13202
    %v13503 = vunpack.c.h.b16 %v13202
    %v13504 = vunpack.c.l.b16 %v13203
    %v13505 = vunpack.c.h.b16 %v13203
    %v13506 = vunpack.c.l.b16 %v13204
    %v13507 = vunpack.c.h.b16 %v13204
    %v13508 = vunpack.c.l.b16 %v13205
    %v13509 = vunpack.c.h.b16 %v13205
    %v13510 = vunpack.c.l.b16 %v13206
    %v13511 = vunpack.c.h.b16 %v13206
    %v13512 = vunpack.c.l.b16 %v13207
    %v13513 = vunpack.c.h.b16 %v13207
    %v13514 = vunpack.c.l.b16 %v13208
    %v13515 = vunpack.c.h.b16 %v13208
    %v13516 = vunpack.c.l.b16 %v13209
    %v13517 = vunpack.c.h.b16 %v13209
    %v13518 = vunpack.c.l.b16 %v13210
    %v13519 = vunpack.c.h.b16 %v13210
    %v13520 = vunpack.c.l.b16 %v13211
    %v13521 = vunpack.c.h.b16 %v13211
    %v13522 = vunpack.c.l.b16 %v13212
    %v13523 = vunpack.c.h.b16 %v13212
    %v13524 = vunpack.c.l.b16 %v13213
    %v13525 = vunpack.c.h.b16 %v13213
    %v13526 = vunpack.c.l.b16 %v13214
    %v13527 = vunpack.c.h.b16 %v13214
    %v13528 = vunpack.c.l.b16 %v13215
    %v13529 = vunpack.c.h.b16 %v13215
    %v13530 = vunpack.c.l.b16 %v13216
    %v13531 = vunpack.c.h.b16 %v13216
    %v13532 = vunpack.c.l.b16 %v13217
    %v13533 = vunpack.c.h.b16 %v13217
    %v13534 = vunpack.c.l.b16 %v13218
    %v13535 = vunpack.c.h.b16 %v13218
    %v13536 = vunpack.c.l.b16 %v13219
    %v13537 = vunpack.c.h.b16 %v13219
    %v13538 = vunpack.c.l.b16 %v13220
    %v13539 = vunpack.c.h.b16 %v13220
    %v13540 = vunpack.c.l.b16 %v13221
    %v13541 = vunpack.c.h.b16 %v13221
    %v13542 = vunpack.c.l.b16 %v13222
    %v13543 = vunpack.c.h.b16 %v13222
    %v13544 = vunpack.c.l.b16 %v13223
    %v13545 = vunpack.c.h.b16 %v13223
    %v13546 = vunpack.c.l.b16 %v13224
    %v13547 = vunpack.c.h.b16 %v13224
    %v13548 = vunpack.c.l.b16 %v13225
    %v13549 = vunpack.c.h.b16 %v13225
    %v13550 = vpack.c.b16 %v13336, %v13334
    %v13551 = vpack.c.b16 %v13337, %v13335
    %v13552 = vpack.c.b16 %v13340, %v13338
    %v13553 = vpack.c.b16 %v13341, %v13339
    %v13554 = vpack.c.b16 %v13344, %v13342
    %v13555 = vpack.c.b16 %v13345, %v13343
    %v13556 = vpack.c.b16 %v13348, %v13346
    %v13557 = vpack.c.b16 %v13349, %v13347
    %v13558 = vpack.c.b16 %v13352, %v13350
    %v13559 = vpack.c.b16 %v13353, %v13351
    %v13560 = vpack.c.b16 %v13356, %v13354
    %v13561 = vpack.c.b16 %v13357, %v13355
    %v13562 = vpack.c.b16 %v13360, %v13358
    %v13563 = vpack.c.b16 %v13361, %v13359
    %v13564 = vpack.c.b16 %v13364, %v13362
    %v13565 = vpack.c.b16 %v13365, %v13363
    %v13566 = vpack.c.b16 %v13368, %v13366
    %v13567 = vpack.c.b16 %v13369, %v13367
    %v13568 = vpack.c.b16 %v13372, %v13370
    %v13569 = vpack.c.b16 %v13373, %v13371
    %v13570 = vpack.c.b16 %v13376, %v13374
    %v13571 = vpack.c.b16 %v13377, %v13375
    %v13572 = vpack.c.b16 %v13380, %v13378
    %v13573 = vpack.c.b16 %v13381, %v13379
    %v13574 = vpack.c.b16 %v13384, %v13382
    %v13575 = vpack.c.b16 %v13385, %v13383
    %v13576 = vpack.c.b16 %v13388, %v13386
    %v13577 = vpack.c.b16 %v13389, %v13387
    %v13578 = vpack.c.b16 %v13392, %v13390
    %v13579 = vpack.c.b16 %v13393, %v13391
    %v13580 = vpack.c.b16 %v13396, %v13394
    %v13581 = vpack.c.b16 %v13397, %v13395
    %v13582 = vpack.c.b16 %v13400, %v13398
    %v13583 = vpack.c.b16 %v13401, %v13399
    %v13584 = vpack.c.b16 %v13404, %v13402
    %v13585 = vpack.c.b16 %v13405, %v13403
    %v13586 = vpack.c.b16 %v13408, %v13406
    %v13587 = vpack.c.b16 %v13409, %v13407
    %v13588 = vpack.c.b16 %v13412, %v13410
    %v13589 = vpack.c.b16 %v13413, %v13411
    %v13590 = vpack.c.b16 %v13416, %v13414
    %v13591 = vpack.c.b16 %v13417, %v13415
    %v13592 = vpack.c.b16 %v13420, %v13418
    %v13593 = vpack.c.b16 %v13421, %v13419
    %v13594 = vpack.c.b16 %v13424, %v13422
    %v13595 = vpack.c.b16 %v13425, %v13423
    %v13596 = vpack.c.b16 %v13428, %v13426
    %v13597 = vpack.c.b16 %v13429, %v13427
    %v13598 = vpack.c.b16 %v13432, %v13430
    %v13599 = vpack.c.b16 %v13433, %v13431
    %v13600 = vpack.c.b16 %v13436, %v13434
    %v13601 = vpack.c.b16 %v13437, %v13435
    %v13602 = vpack.c.b16 %v13440, %v13438
    %v13603 = vpack.c.b16 %v13441, %v13439
    %v13604 = vpack.c.b16 %v13444, %v13442
    %v13605 = vpack.c.b16 %v13445, %v13443
    %v13606 = vpack.c.b16 %v13448, %v13446
    %v13607 = vpack.c.b16 %v13449, %v13447
    %v13608 = vpack.c.b16 %v13452, %v13450
    %v13609 = vpack.c.b16 %v13453, %v13451
    %v13610 = vpack.c.b16 %v13456, %v13454
    %v13611 = vpack.c.b16 %v13457, %v13455
    %v13612 = vpack.c.b16 %v13460, %v13458
    %v13613 = vpack.c.b16 %v13461, %v13459
    %v13614 = vpack.c.b16 %v13464, %v13462
    %v13615 = vpack.c.b16 %v13465, %v13463
    %v13616 = vpack.c.b16 %v13468, %v13466
    %v13617 = vpack.c.b16 %v13469, %v13467
    %v13618 = vpack.c.b16 %v13472, %v13470
    %v13619 = vpack.c.b16 %v13473, %v13471
    %v13620 = vpack.c.b16 %v13476, %v13474
    %v13621 = vpack.c.b16 %v13477, %v13475
    %v13622 = vpack.c.b16 %v13480, %v13478
    %v13623 = vpack.c.b16 %v13481, %v13479
    %v13624 = vpack.c.b16 %v13484, %v13482
    %v13625 = vpack.c.b16 %v13485, %v13483
    %v13626 = vpack.c.b16 %v13488, %v13486
    %v13627 = vpack.c.b16 %v13489, %v13487
    %v13628 = vpack.c.b16 %v13492, %v13490
    %v13629 = vpack.c.b16 %v13493, %v13491
    %v13630 = vpack.c.b16 %v13496, %v13494
    %v13631 = vpack.c.b16 %v13497, %v13495
    %v13632 = vpack.c.b16 %v13500, %v13498
    %v13633 = vpack.c.b16 %v13501, %v13499
    %v13634 = vpack.c.b16 %v13504, %v13502
    %v13635 = vpack.c.b16 %v13505, %v13503
    %v13636 = vpack.c.b16 %v13508, %v13506
    %v13637 = vpack.c.b16 %v13509, %v13507
    %v13638 = vpack.c.b16 %v13512, %v13510
    %v13639 = vpack.c.b16 %v13513, %v13511
    %v13640 = vpack.c.b16 %v13516, %v13514
    %v13641 = vpack.c.b16 %v13517, %v13515
    %v13642 = vpack.c.b16 %v13520, %v13518
    %v13643 = vpack.c.b16 %v13521, %v13519
    %v13644 = vpack.c.b16 %v13524, %v13522
    %v13645 = vpack.c.b16 %v13525, %v13523
    %v13646 = vpack.c.b16 %v13528, %v13526
    %v13647 = vpack.c.b16 %v13529, %v13527
    %v13648 = vpack.c.b16 %v13532, %v13530
    %v13649 = vpack.c.b16 %v13533, %v13531
    %v13650 = vpack.c.b16 %v13536, %v13534
    %v13651 = vpack.c.b16 %v13537, %v13535
    %v13652 = vpack.c.b16 %v13540, %v13538
    %v13653 = vpack.c.b16 %v13541, %v13539
    %v13654 = vpack.c.b16 %v13544, %v13542
    %v13655 = vpack.c.b16 %v13545, %v13543
    %v13656 = vpack.c.b16 %v13548, %v13546
    %v13657 = vpack.c.b16 %v13549, %v13547
    %13766 = vmatpush.bf16.msra.mxu0 %v13564
    %13767 = vmatpush.bf16.msra.mxu0 %v13562
    %13768 = vmatpush.bf16.msra.mxu0 %v13560
    %13769 = vmatpush.bf16.msra.mxu0 %v13558
    %13770 = vmatpush.bf16.msra.mxu0 %v13556
    %13771 = vmatpush.bf16.msra.mxu0 %v13554
    %13772 = vmatpush.bf16.msra.mxu0 %v13552
    %13773 = vmatpush.bf16.msra.mxu0 %v13550
    %13774 = vmatmul.bf16.gmra.mxu0 %v11443
    %v13775 = vpop.f32.mrf.mxu0
    %v13776 = vadd.f32 0.0, %v13775
    %v13777 = vpop.f32.mrf.mxu0
    %13778 = vdwg.mxu0
    %13779 = vmatpush.bf16.msra.mxu0 %v13580
    %13780 = vmatpush.bf16.msra.mxu0 %v13578
    %13781 = vmatpush.bf16.msra.mxu0 %v13576
    %13782 = vmatpush.bf16.msra.mxu0 %v13574
    %13783 = vmatpush.bf16.msra.mxu0 %v13572
    %13784 = vmatpush.bf16.msra.mxu0 %v13570
    %13785 = vmatpush.bf16.msra.mxu0 %v13568
    %13786 = vmatpush.bf16.msra.mxu0 %v13566
    %13787 = vmatmul.bf16.gmra.mxu0 %v11444
    %v13788 = vpop.f32.mrf.mxu0
    %v13789 = vadd.f32 %v13776, %v13788
    %v13790 = vpop.f32.mrf.mxu0
    %13791 = vdwg.mxu0
    %13792 = vmatpush.bf16.msra.mxu0 %v13596
    %13793 = vmatpush.bf16.msra.mxu0 %v13594
    %13794 = vmatpush.bf16.msra.mxu0 %v13592
    %13795 = vmatpush.bf16.msra.mxu0 %v13590
    %13796 = vmatpush.bf16.msra.mxu0 %v13588
    %13797 = vmatpush.bf16.msra.mxu0 %v13586
    %13798 = vmatpush.bf16.msra.mxu0 %v13584
    %13799 = vmatpush.bf16.msra.mxu0 %v13582
    %13800 = vmatmul.bf16.gmra.mxu0 %v11445
    %v13801 = vpop.f32.mrf.mxu0
    %v13802 = vadd.f32 %v13789, %v13801
    %v13803 = vpop.f32.mrf.mxu0
    %13804 = vdwg.mxu0
    %13805 = vmatpush.bf16.msra.mxu0 %v13612
    %13806 = vmatpush.bf16.msra.mxu0 %v13610
    %13807 = vmatpush.bf16.msra.mxu0 %v13608
    %13808 = vmatpush.bf16.msra.mxu0 %v13606
    %13809 = vmatpush.bf16.msra.mxu0 %v13604
    %13810 = vmatpush.bf16.msra.mxu0 %v13602
    %13811 = vmatpush.bf16.msra.mxu0 %v13600
    %13812 = vmatpush.bf16.msra.mxu0 %v13598
    %13813 = vmatmul.bf16.gmra.mxu0 %v11446
    %v13814 = vpop.f32.mrf.mxu0
    %v13815 = vadd.f32 %v13802, %v13814
    %v13816 = vpop.f32.mrf.mxu0
    %13817 = vdwg.mxu0
    %13818 = vmatpush.bf16.msra.mxu0 %v13628
    %13819 = vmatpush.bf16.msra.mxu0 %v13626
    %13820 = vmatpush.bf16.msra.mxu0 %v13624
    %13821 = vmatpush.bf16.msra.mxu0 %v13622
    %13822 = vmatpush.bf16.msra.mxu0 %v13620
    %13823 = vmatpush.bf16.msra.mxu0 %v13618
    %13824 = vmatpush.bf16.msra.mxu0 %v13616
    %13825 = vmatpush.bf16.msra.mxu0 %v13614
    %13826 = vmatmul.bf16.gmra.mxu0 %v11447
    %v13827 = vpop.f32.mrf.mxu0
    %v13828 = vadd.f32 %v13815, %v13827
    %v13829 = vpop.f32.mrf.mxu0
    %13830 = vdwg.mxu0
    %13831 = vmatpush.bf16.msra.mxu0 %v13644
    %13832 = vmatpush.bf16.msra.mxu0 %v13642
    %13833 = vmatpush.bf16.msra.mxu0 %v13640
    %13834 = vmatpush.bf16.msra.mxu0 %v13638
    %13835 = vmatpush.bf16.msra.mxu0 %v13636
    %13836 = vmatpush.bf16.msra.mxu0 %v13634
    %13837 = vmatpush.bf16.msra.mxu0 %v13632
    %13838 = vmatpush.bf16.msra.mxu0 %v13630
    %13839 = vmatmul.bf16.gmra.mxu0 %v11448
    %v13840 = vpop.f32.mrf.mxu0
    %v13841 = vadd.f32 %v13828, %v13840
    %v13842 = vpop.f32.mrf.mxu0
    %13843 = vdwg.mxu0
    %13844 = vmatpush.bf16.msra.mxu0 0
    %13845 = vmatpush.bf16.msra.mxu0 0
    %13846 = vmatpush.bf16.msra.mxu0 %v13656
    %13847 = vmatpush.bf16.msra.mxu0 %v13654
    %13848 = vmatpush.bf16.msra.mxu0 %v13652
    %13849 = vmatpush.bf16.msra.mxu0 %v13650
    %13850 = vmatpush.bf16.msra.mxu0 %v13648
    %13851 = vmatpush.bf16.msra.mxu0 %v13646
    %13852 = vmatmul.bf16.gmra.mxu0 %v12100
    %v13853 = vpop.f32.mrf.mxu0
    %v13854 = vadd.f32 %v13841, %v13853
    %v13855 = vpop.f32.mrf.mxu0
    %13856 = vdwg.mxu0
    %13857 = vmatpush.bf16.msra.mxu0 %v13565
    %13858 = vmatpush.bf16.msra.mxu0 %v13563
    %13859 = vmatpush.bf16.msra.mxu0 %v13561
    %13860 = vmatpush.bf16.msra.mxu0 %v13559
    %13861 = vmatpush.bf16.msra.mxu0 %v13557
    %13862 = vmatpush.bf16.msra.mxu0 %v13555
    %13863 = vmatpush.bf16.msra.mxu0 %v13553
    %13864 = vmatpush.bf16.msra.mxu0 %v13551
    %13865 = vmatmul.bf16.gmra.mxu0 %v11443
    %v13866 = vpop.f32.mrf.mxu0
    %v13867 = vadd.f32 0.0, %v13866
    %v13868 = vpop.f32.mrf.mxu0
    %13869 = vdwg.mxu0
    %13870 = vmatpush.bf16.msra.mxu0 %v13581
    %13871 = vmatpush.bf16.msra.mxu0 %v13579
    %13872 = vmatpush.bf16.msra.mxu0 %v13577
    %13873 = vmatpush.bf16.msra.mxu0 %v13575
    %13874 = vmatpush.bf16.msra.mxu0 %v13573
    %13875 = vmatpush.bf16.msra.mxu0 %v13571
    %13876 = vmatpush.bf16.msra.mxu0 %v13569
    %13877 = vmatpush.bf16.msra.mxu0 %v13567
    %13878 = vmatmul.bf16.gmra.mxu0 %v11444
    %v13879 = vpop.f32.mrf.mxu0
    %v13880 = vadd.f32 %v13867, %v13879
    %v13881 = vpop.f32.mrf.mxu0
    %13882 = vdwg.mxu0
    %13883 = vmatpush.bf16.msra.mxu0 %v13597
    %13884 = vmatpush.bf16.msra.mxu0 %v13595
    %13885 = vmatpush.bf16.msra.mxu0 %v13593
    %13886 = vmatpush.bf16.msra.mxu0 %v13591
    %13887 = vmatpush.bf16.msra.mxu0 %v13589
    %13888 = vmatpush.bf16.msra.mxu0 %v13587
    %13889 = vmatpush.bf16.msra.mxu0 %v13585
    %13890 = vmatpush.bf16.msra.mxu0 %v13583
    %13891 = vmatmul.bf16.gmra.mxu0 %v11445
    %v13892 = vpop.f32.mrf.mxu0
    %v13893 = vadd.f32 %v13880, %v13892
    %v13894 = vpop.f32.mrf.mxu0
    %13895 = vdwg.mxu0
    %13896 = vmatpush.bf16.msra.mxu0 %v13613
    %13897 = vmatpush.bf16.msra.mxu0 %v13611
    %13898 = vmatpush.bf16.msra.mxu0 %v13609
    %13899 = vmatpush.bf16.msra.mxu0 %v13607
    %13900 = vmatpush.bf16.msra.mxu0 %v13605
    %13901 = vmatpush.bf16.msra.mxu0 %v13603
    %13902 = vmatpush.bf16.msra.mxu0 %v13601
    %13903 = vmatpush.bf16.msra.mxu0 %v13599
    %13904 = vmatmul.bf16.gmra.mxu0 %v11446
    %v13905 = vpop.f32.mrf.mxu0
    %v13906 = vadd.f32 %v13893, %v13905
    %v13907 = vpop.f32.mrf.mxu0
    %13908 = vdwg.mxu0
    %13909 = vmatpush.bf16.msra.mxu0 %v13629
    %13910 = vmatpush.bf16.msra.mxu0 %v13627
    %13911 = vmatpush.bf16.msra.mxu0 %v13625
    %13912 = vmatpush.bf16.msra.mxu0 %v13623
    %13913 = vmatpush.bf16.msra.mxu0 %v13621
    %13914 = vmatpush.bf16.msra.mxu0 %v13619
    %13915 = vmatpush.bf16.msra.mxu0 %v13617
    %13916 = vmatpush.bf16.msra.mxu0 %v13615
    %13917 = vmatmul.bf16.gmra.mxu0 %v11447
    %v13918 = vpop.f32.mrf.mxu0
    %v13919 = vadd.f32 %v13906, %v13918
    %v13920 = vpop.f32.mrf.mxu0
    %13921 = vdwg.mxu0
    %13922 = vmatpush.bf16.msra.mxu0 %v13645
    %13923 = vmatpush.bf16.msra.mxu0 %v13643
    %13924 = vmatpush.bf16.msra.mxu0 %v13641
    %13925 = vmatpush.bf16.msra.mxu0 %v13639
    %13926 = vmatpush.bf16.msra.mxu0 %v13637
    %13927 = vmatpush.bf16.msra.mxu0 %v13635
    %13928 = vmatpush.bf16.msra.mxu0 %v13633
    %13929 = vmatpush.bf16.msra.mxu0 %v13631
    %13930 = vmatmul.bf16.gmra.mxu0 %v11448
    %v13931 = vpop.f32.mrf.mxu0
    %v13932 = vadd.f32 %v13919, %v13931
    %v13933 = vpop.f32.mrf.mxu0
    %13934 = vdwg.mxu0
    %13935 = vmatpush.bf16.msra.mxu0 0
    %13936 = vmatpush.bf16.msra.mxu0 0
    %13937 = vmatpush.bf16.msra.mxu0 %v13657
    %13938 = vmatpush.bf16.msra.mxu0 %v13655
    %13939 = vmatpush.bf16.msra.mxu0 %v13653
    %13940 = vmatpush.bf16.msra.mxu0 %v13651
    %13941 = vmatpush.bf16.msra.mxu0 %v13649
    %13942 = vmatpush.bf16.msra.mxu0 %v13647
    %13943 = vmatmul.bf16.gmra.mxu0 %v12100
    %v13944 = vpop.f32.mrf.mxu0
    %v13945 = vadd.f32 %v13932, %v13944
    %v13946 = vpop.f32.mrf.mxu0
    %13947 = vdwg.mxu0
    %v13948 = vmax.f32 %v13115, %v13854
    %v13949 = vmax.f32 %v13116, %v13945
    %s13950 = scalar_lea.vmem [#allocation6], 2592
    %v13951 = vld [vmem:[%s13950] sm:$0xff]
    %v13952 = vld [vmem:[%s13950 + $0x8] sm:$0xff]
    %v13953 = vld [vmem:[%s13950 + $0x10] sm:$0xff]
    %v13954 = vld [vmem:[%s13950 + $0x18] sm:$0xff]
    %v13955 = vld [vmem:[%s13950 + $0x20] sm:$0xff]
    %v13956 = vld [vmem:[%s13950 + $0x28] sm:$0xff]
    %v13957 = vld [vmem:[%s13950 + $0x30] sm:$0xff]
    %v13958 = vld [vmem:[%s13950 + $0x38] sm:$0xff]
    %v13959 = vld [vmem:[%s13950 + $0x40] sm:$0xff]
    %v13960 = vld [vmem:[%s13950 + $0x48] sm:$0xff]
    %v13961 = vld [vmem:[%s13950 + $0x50] sm:$0xff]
    %v13962 = vld [vmem:[%s13950 + $0x58] sm:$0xff]
    %v13963 = vld [vmem:[%s13950 + $0x60] sm:$0xff]
    %v13964 = vld [vmem:[%s13950 + $0x68] sm:$0xff]
    %v13965 = vld [vmem:[%s13950 + $0x70] sm:$0xff]
    %v13966 = vld [vmem:[%s13950 + $0x78] sm:$0xff]
    %v13967 = vld [vmem:[%s13950 + $0x80] sm:$0xff]
    %v13968 = vld [vmem:[%s13950 + $0x88] sm:$0xff]
    %v13969 = vld [vmem:[%s13950 + $0x90] sm:$0xff]
    %v13970 = vld [vmem:[%s13950 + $0x98] sm:$0xff]
    %v13971 = vld [vmem:[%s13950 + $0xa0] sm:$0xff]
    %v13972 = vld [vmem:[%s13950 + $0xa8] sm:$0xff]
    %v13973 = vld [vmem:[%s13950 + $0xb0] sm:$0xff]
    %v13974 = vld [vmem:[%s13950 + $0xb8] sm:$0xff]
    %v13975 = vld [vmem:[%s13950 + $0xc0] sm:$0xff]
    %v13976 = vld [vmem:[%s13950 + $0xc8] sm:$0xff]
    %v13977 = vld [vmem:[%s13950 + $0xd0] sm:$0xff]
    %v13978 = vld [vmem:[%s13950 + $0xd8] sm:$0xff]
    %v13979 = vld [vmem:[%s13950 + $0xe0] sm:$0xff]
    %v13980 = vld [vmem:[%s13950 + $0xe8] sm:$0xff]
    %v13981 = vld [vmem:[%s13950 + $0xf0] sm:$0xff]
    %v13982 = vld [vmem:[%s13950 + $0xf8] sm:$0xff]
    %v13983 = vld [vmem:[%s13950 + $0x100] sm:$0xff]
    %v13984 = vld [vmem:[%s13950 + $0x108] sm:$0xff]
    %v13985 = vld [vmem:[%s13950 + $0x110] sm:$0xff]
    %v13986 = vld [vmem:[%s13950 + $0x118] sm:$0xff]
    %v13987 = vld [vmem:[%s13950 + $0x120] sm:$0xff]
    %v13988 = vld [vmem:[%s13950 + $0x128] sm:$0xff]
    %v13989 = vld [vmem:[%s13950 + $0x130] sm:$0xff]
    %v13990 = vld [vmem:[%s13950 + $0x138] sm:$0xff]
    %v13991 = vld [vmem:[%s13950 + $0x140] sm:$0xff]
    %v13992 = vld [vmem:[%s13950 + $0x148] sm:$0xff]
    %v13993 = vld [vmem:[%s13950 + $0x150] sm:$0xff]
    %v13994 = vld [vmem:[%s13950 + $0x158] sm:$0xff]
    %v13995 = vld [vmem:[%s13950 + $0x160] sm:$0xff]
    %v13996 = vld [vmem:[%s13950 + $0x168] sm:$0xff]
    %v13997 = vld [vmem:[%s13950 + $0x170] sm:$0xff]
    %v13998 = vld [vmem:[%s13950 + $0x178] sm:$0xff]
    %v13999 = vld [vmem:[%s13950 + $0x180] sm:$0xff]
    %v14000 = vld [vmem:[%s13950 + $0x188] sm:$0xff]
    %v14001 = vld [vmem:[%s13950 + $0x190] sm:$0xff]
    %v14002 = vld [vmem:[%s13950 + $0x198] sm:$0xff]
    %v14003 = vld [vmem:[%s13950 + $0x1a0] sm:$0xff]
    %v14004 = vld [vmem:[%s13950 + $0x1a8] sm:$0xff]
    %v14005 = vld [vmem:[%s13950 + $0x1b0] sm:$0xff]
    %v14006 = vld [vmem:[%s13950 + $0x1b8] sm:$0xff]
    %v14007 = vld [vmem:[%s13950 + $0x1c0] sm:$0xff]
    %v14008 = vld [vmem:[%s13950 + $0x1c8] sm:$0xff]
    %v14009 = vld [vmem:[%s13950 + $0x1d0] sm:$0xff]
    %v14010 = vld [vmem:[%s13950 + $0x1d8] sm:$0xff]
    %v14011 = vld [vmem:[%s13950 + $0x1e0] sm:$0xff]
    %v14012 = vld [vmem:[%s13950 + $0x1e8] sm:$0xff]
    %v14013 = vld [vmem:[%s13950 + $0x1f0] sm:$0xff]
    %v14014 = vld [vmem:[%s13950 + $0x1f8] sm:$0xff]
    %v14015 = vld [vmem:[%s13950 + $0x200] sm:$0xff]
    %v14016 = vld [vmem:[%s13950 + $0x208] sm:$0xff]
    %v14017 = vld [vmem:[%s13950 + $0x210] sm:$0xff]
    %v14018 = vld [vmem:[%s13950 + $0x218] sm:$0xff]
    %v14019 = vld [vmem:[%s13950 + $0x220] sm:$0xff]
    %v14020 = vld [vmem:[%s13950 + $0x228] sm:$0xff]
    %v14021 = vld [vmem:[%s13950 + $0x230] sm:$0xff]
    %v14022 = vld [vmem:[%s13950 + $0x238] sm:$0xff]
    %v14023 = vld [vmem:[%s13950 + $0x240] sm:$0xff]
    %v14024 = vld [vmem:[%s13950 + $0x248] sm:$0xff]
    %v14025 = vld [vmem:[%s13950 + $0x250] sm:$0xff]
    %v14026 = vld [vmem:[%s13950 + $0x258] sm:$0xff]
    %v14027 = vld [vmem:[%s13950 + $0x260] sm:$0xff]
    %v14028 = vld [vmem:[%s13950 + $0x268] sm:$0xff]
    %v14029 = vld [vmem:[%s13950 + $0x270] sm:$0xff]
    %v14030 = vld [vmem:[%s13950 + $0x278] sm:$0xff]
    %v14031 = vld [vmem:[%s13950 + $0x280] sm:$0xff]
    %v14032 = vld [vmem:[%s13950 + $0x288] sm:$0xff]
    %v14033 = vld [vmem:[%s13950 + $0x290] sm:$0xff]
    %v14034 = vld [vmem:[%s13950 + $0x298] sm:$0xff]
    %v14035 = vld [vmem:[%s13950 + $0x2a0] sm:$0xff]
    %v14036 = vld [vmem:[%s13950 + $0x2a8] sm:$0xff]
    %v14037 = vld [vmem:[%s13950 + $0x2b0] sm:$0xff]
    %v14038 = vld [vmem:[%s13950 + $0x2b8] sm:$0xff]
    %v14039 = vld [vmem:[%s13950 + $0x2c0] sm:$0xff]
    %v14040 = vld [vmem:[%s13950 + $0x2c8] sm:$0xff]
    %v14041 = vld [vmem:[%s13950 + $0x2d0] sm:$0xff]
    %v14042 = vld [vmem:[%s13950 + $0x2d8] sm:$0xff]
    %v14043 = vld [vmem:[%s13950 + $0x2e0] sm:$0xff]
    %v14044 = vld [vmem:[%s13950 + $0x2e8] sm:$0xff]
    %v14045 = vld [vmem:[%s13950 + $0x2f0] sm:$0xff]
    %v14046 = vld [vmem:[%s13950 + $0x2f8] sm:$0xff]
    %v14047 = vld [vmem:[%s13950 + $0x300] sm:$0xff]
    %v14048 = vld [vmem:[%s13950 + $0x308] sm:$0xff]
    %v14049 = vld [vmem:[%s13950 + $0x310] sm:$0xff]
    %v14050 = vld [vmem:[%s13950 + $0x318] sm:$0xff]
    %v14051 = vld [vmem:[%s13950 + $0x320] sm:$0xff]
    %v14052 = vld [vmem:[%s13950 + $0x328] sm:$0xff]
    %v14053 = vld [vmem:[%s13950 + $0x330] sm:$0xff]
    %v14054 = vld [vmem:[%s13950 + $0x338] sm:$0xff]
    %v14055 = vld [vmem:[%s13950 + $0x340] sm:$0xff]
    %v14056 = vld [vmem:[%s13950 + $0x348] sm:$0xff]
    %v14057 = vld [vmem:[%s13950 + $0x350] sm:$0xff]
    %v14058 = vld [vmem:[%s13950 + $0x358] sm:$0xff]
    %v14167 = vunpack.c.l.b16 %v13951
    %v14168 = vunpack.c.h.b16 %v13951
    %v14169 = vunpack.c.l.b16 %v13952
    %v14170 = vunpack.c.h.b16 %v13952
    %v14171 = vunpack.c.l.b16 %v13953
    %v14172 = vunpack.c.h.b16 %v13953
    %v14173 = vunpack.c.l.b16 %v13954
    %v14174 = vunpack.c.h.b16 %v13954
    %v14175 = vunpack.c.l.b16 %v13955
    %v14176 = vunpack.c.h.b16 %v13955
    %v14177 = vunpack.c.l.b16 %v13956
    %v14178 = vunpack.c.h.b16 %v13956
    %v14179 = vunpack.c.l.b16 %v13957
    %v14180 = vunpack.c.h.b16 %v13957
    %v14181 = vunpack.c.l.b16 %v13958
    %v14182 = vunpack.c.h.b16 %v13958
    %v14183 = vunpack.c.l.b16 %v13959
    %v14184 = vunpack.c.h.b16 %v13959
    %v14185 = vunpack.c.l.b16 %v13960
    %v14186 = vunpack.c.h.b16 %v13960
    %v14187 = vunpack.c.l.b16 %v13961
    %v14188 = vunpack.c.h.b16 %v13961
    %v14189 = vunpack.c.l.b16 %v13962
    %v14190 = vunpack.c.h.b16 %v13962
    %v14191 = vunpack.c.l.b16 %v13963
    %v14192 = vunpack.c.h.b16 %v13963
    %v14193 = vunpack.c.l.b16 %v13964
    %v14194 = vunpack.c.h.b16 %v13964
    %v14195 = vunpack.c.l.b16 %v13965
    %v14196 = vunpack.c.h.b16 %v13965
    %v14197 = vunpack.c.l.b16 %v13966
    %v14198 = vunpack.c.h.b16 %v13966
    %v14199 = vunpack.c.l.b16 %v13967
    %v14200 = vunpack.c.h.b16 %v13967
    %v14201 = vunpack.c.l.b16 %v13968
    %v14202 = vunpack.c.h.b16 %v13968
    %v14203 = vunpack.c.l.b16 %v13969
    %v14204 = vunpack.c.h.b16 %v13969
    %v14205 = vunpack.c.l.b16 %v13970
    %v14206 = vunpack.c.h.b16 %v13970
    %v14207 = vunpack.c.l.b16 %v13971
    %v14208 = vunpack.c.h.b16 %v13971
    %v14209 = vunpack.c.l.b16 %v13972
    %v14210 = vunpack.c.h.b16 %v13972
    %v14211 = vunpack.c.l.b16 %v13973
    %v14212 = vunpack.c.h.b16 %v13973
    %v14213 = vunpack.c.l.b16 %v13974
    %v14214 = vunpack.c.h.b16 %v13974
    %v14215 = vunpack.c.l.b16 %v13975
    %v14216 = vunpack.c.h.b16 %v13975
    %v14217 = vunpack.c.l.b16 %v13976
    %v14218 = vunpack.c.h.b16 %v13976
    %v14219 = vunpack.c.l.b16 %v13977
    %v14220 = vunpack.c.h.b16 %v13977
    %v14221 = vunpack.c.l.b16 %v13978
    %v14222 = vunpack.c.h.b16 %v13978
    %v14223 = vunpack.c.l.b16 %v13979
    %v14224 = vunpack.c.h.b16 %v13979
    %v14225 = vunpack.c.l.b16 %v13980
    %v14226 = vunpack.c.h.b16 %v13980
    %v14227 = vunpack.c.l.b16 %v13981
    %v14228 = vunpack.c.h.b16 %v13981
    %v14229 = vunpack.c.l.b16 %v13982
    %v14230 = vunpack.c.h.b16 %v13982
    %v14231 = vunpack.c.l.b16 %v13983
    %v14232 = vunpack.c.h.b16 %v13983
    %v14233 = vunpack.c.l.b16 %v13984
    %v14234 = vunpack.c.h.b16 %v13984
    %v14235 = vunpack.c.l.b16 %v13985
    %v14236 = vunpack.c.h.b16 %v13985
    %v14237 = vunpack.c.l.b16 %v13986
    %v14238 = vunpack.c.h.b16 %v13986
    %v14239 = vunpack.c.l.b16 %v13987
    %v14240 = vunpack.c.h.b16 %v13987
    %v14241 = vunpack.c.l.b16 %v13988
    %v14242 = vunpack.c.h.b16 %v13988
    %v14243 = vunpack.c.l.b16 %v13989
    %v14244 = vunpack.c.h.b16 %v13989
    %v14245 = vunpack.c.l.b16 %v13990
    %v14246 = vunpack.c.h.b16 %v13990
    %v14247 = vunpack.c.l.b16 %v13991
    %v14248 = vunpack.c.h.b16 %v13991
    %v14249 = vunpack.c.l.b16 %v13992
    %v14250 = vunpack.c.h.b16 %v13992
    %v14251 = vunpack.c.l.b16 %v13993
    %v14252 = vunpack.c.h.b16 %v13993
    %v14253 = vunpack.c.l.b16 %v13994
    %v14254 = vunpack.c.h.b16 %v13994
    %v14255 = vunpack.c.l.b16 %v13995
    %v14256 = vunpack.c.h.b16 %v13995
    %v14257 = vunpack.c.l.b16 %v13996
    %v14258 = vunpack.c.h.b16 %v13996
    %v14259 = vunpack.c.l.b16 %v13997
    %v14260 = vunpack.c.h.b16 %v13997
    %v14261 = vunpack.c.l.b16 %v13998
    %v14262 = vunpack.c.h.b16 %v13998
    %v14263 = vunpack.c.l.b16 %v13999
    %v14264 = vunpack.c.h.b16 %v13999
    %v14265 = vunpack.c.l.b16 %v14000
    %v14266 = vunpack.c.h.b16 %v14000
    %v14267 = vunpack.c.l.b16 %v14001
    %v14268 = vunpack.c.h.b16 %v14001
    %v14269 = vunpack.c.l.b16 %v14002
    %v14270 = vunpack.c.h.b16 %v14002
    %v14271 = vunpack.c.l.b16 %v14003
    %v14272 = vunpack.c.h.b16 %v14003
    %v14273 = vunpack.c.l.b16 %v14004
    %v14274 = vunpack.c.h.b16 %v14004
    %v14275 = vunpack.c.l.b16 %v14005
    %v14276 = vunpack.c.h.b16 %v14005
    %v14277 = vunpack.c.l.b16 %v14006
    %v14278 = vunpack.c.h.b16 %v14006
    %v14279 = vunpack.c.l.b16 %v14007
    %v14280 = vunpack.c.h.b16 %v14007
    %v14281 = vunpack.c.l.b16 %v14008
    %v14282 = vunpack.c.h.b16 %v14008
    %v14283 = vunpack.c.l.b16 %v14009
    %v14284 = vunpack.c.h.b16 %v14009
    %v14285 = vunpack.c.l.b16 %v14010
    %v14286 = vunpack.c.h.b16 %v14010
    %v14287 = vunpack.c.l.b16 %v14011
    %v14288 = vunpack.c.h.b16 %v14011
    %v14289 = vunpack.c.l.b16 %v14012
    %v14290 = vunpack.c.h.b16 %v14012
    %v14291 = vunpack.c.l.b16 %v14013
    %v14292 = vunpack.c.h.b16 %v14013
    %v14293 = vunpack.c.l.b16 %v14014
    %v14294 = vunpack.c.h.b16 %v14014
    %v14295 = vunpack.c.l.b16 %v14015
    %v14296 = vunpack.c.h.b16 %v14015
    %v14297 = vunpack.c.l.b16 %v14016
    %v14298 = vunpack.c.h.b16 %v14016
    %v14299 = vunpack.c.l.b16 %v14017
    %v14300 = vunpack.c.h.b16 %v14017
    %v14301 = vunpack.c.l.b16 %v14018
    %v14302 = vunpack.c.h.b16 %v14018
    %v14303 = vunpack.c.l.b16 %v14019
    %v14304 = vunpack.c.h.b16 %v14019
    %v14305 = vunpack.c.l.b16 %v14020
    %v14306 = vunpack.c.h.b16 %v14020
    %v14307 = vunpack.c.l.b16 %v14021
    %v14308 = vunpack.c.h.b16 %v14021
    %v14309 = vunpack.c.l.b16 %v14022
    %v14310 = vunpack.c.h.b16 %v14022
    %v14311 = vunpack.c.l.b16 %v14023
    %v14312 = vunpack.c.h.b16 %v14023
    %v14313 = vunpack.c.l.b16 %v14024
    %v14314 = vunpack.c.h.b16 %v14024
    %v14315 = vunpack.c.l.b16 %v14025
    %v14316 = vunpack.c.h.b16 %v14025
    %v14317 = vunpack.c.l.b16 %v14026
    %v14318 = vunpack.c.h.b16 %v14026
    %v14319 = vunpack.c.l.b16 %v14027
    %v14320 = vunpack.c.h.b16 %v14027
    %v14321 = vunpack.c.l.b16 %v14028
    %v14322 = vunpack.c.h.b16 %v14028
    %v14323 = vunpack.c.l.b16 %v14029
    %v14324 = vunpack.c.h.b16 %v14029
    %v14325 = vunpack.c.l.b16 %v14030
    %v14326 = vunpack.c.h.b16 %v14030
    %v14327 = vunpack.c.l.b16 %v14031
    %v14328 = vunpack.c.h.b16 %v14031
    %v14329 = vunpack.c.l.b16 %v14032
    %v14330 = vunpack.c.h.b16 %v14032
    %v14331 = vunpack.c.l.b16 %v14033
    %v14332 = vunpack.c.h.b16 %v14033
    %v14333 = vunpack.c.l.b16 %v14034
    %v14334 = vunpack.c.h.b16 %v14034
    %v14335 = vunpack.c.l.b16 %v14035
    %v14336 = vunpack.c.h.b16 %v14035
    %v14337 = vunpack.c.l.b16 %v14036
    %v14338 = vunpack.c.h.b16 %v14036
    %v14339 = vunpack.c.l.b16 %v14037
    %v14340 = vunpack.c.h.b16 %v14037
    %v14341 = vunpack.c.l.b16 %v14038
    %v14342 = vunpack.c.h.b16 %v14038
    %v14343 = vunpack.c.l.b16 %v14039
    %v14344 = vunpack.c.h.b16 %v14039
    %v14345 = vunpack.c.l.b16 %v14040
    %v14346 = vunpack.c.h.b16 %v14040
    %v14347 = vunpack.c.l.b16 %v14041
    %v14348 = vunpack.c.h.b16 %v14041
    %v14349 = vunpack.c.l.b16 %v14042
    %v14350 = vunpack.c.h.b16 %v14042
    %v14351 = vunpack.c.l.b16 %v14043
    %v14352 = vunpack.c.h.b16 %v14043
    %v14353 = vunpack.c.l.b16 %v14044
    %v14354 = vunpack.c.h.b16 %v14044
    %v14355 = vunpack.c.l.b16 %v14045
    %v14356 = vunpack.c.h.b16 %v14045
    %v14357 = vunpack.c.l.b16 %v14046
    %v14358 = vunpack.c.h.b16 %v14046
    %v14359 = vunpack.c.l.b16 %v14047
    %v14360 = vunpack.c.h.b16 %v14047
    %v14361 = vunpack.c.l.b16 %v14048
    %v14362 = vunpack.c.h.b16 %v14048
    %v14363 = vunpack.c.l.b16 %v14049
    %v14364 = vunpack.c.h.b16 %v14049
    %v14365 = vunpack.c.l.b16 %v14050
    %v14366 = vunpack.c.h.b16 %v14050
    %v14367 = vunpack.c.l.b16 %v14051
    %v14368 = vunpack.c.h.b16 %v14051
    %v14369 = vunpack.c.l.b16 %v14052
    %v14370 = vunpack.c.h.b16 %v14052
    %v14371 = vunpack.c.l.b16 %v14053
    %v14372 = vunpack.c.h.b16 %v14053
    %v14373 = vunpack.c.l.b16 %v14054
    %v14374 = vunpack.c.h.b16 %v14054
    %v14375 = vunpack.c.l.b16 %v14055
    %v14376 = vunpack.c.h.b16 %v14055
    %v14377 = vunpack.c.l.b16 %v14056
    %v14378 = vunpack.c.h.b16 %v14056
    %v14379 = vunpack.c.l.b16 %v14057
    %v14380 = vunpack.c.h.b16 %v14057
    %v14381 = vunpack.c.l.b16 %v14058
    %v14382 = vunpack.c.h.b16 %v14058
    %v14383 = vpack.c.b16 %v14169, %v14167
    %v14384 = vpack.c.b16 %v14170, %v14168
    %v14385 = vpack.c.b16 %v14173, %v14171
    %v14386 = vpack.c.b16 %v14174, %v14172
    %v14387 = vpack.c.b16 %v14177, %v14175
    %v14388 = vpack.c.b16 %v14178, %v14176
    %v14389 = vpack.c.b16 %v14181, %v14179
    %v14390 = vpack.c.b16 %v14182, %v14180
    %v14391 = vpack.c.b16 %v14185, %v14183
    %v14392 = vpack.c.b16 %v14186, %v14184
    %v14393 = vpack.c.b16 %v14189, %v14187
    %v14394 = vpack.c.b16 %v14190, %v14188
    %v14395 = vpack.c.b16 %v14193, %v14191
    %v14396 = vpack.c.b16 %v14194, %v14192
    %v14397 = vpack.c.b16 %v14197, %v14195
    %v14398 = vpack.c.b16 %v14198, %v14196
    %v14399 = vpack.c.b16 %v14201, %v14199
    %v14400 = vpack.c.b16 %v14202, %v14200
    %v14401 = vpack.c.b16 %v14205, %v14203
    %v14402 = vpack.c.b16 %v14206, %v14204
    %v14403 = vpack.c.b16 %v14209, %v14207
    %v14404 = vpack.c.b16 %v14210, %v14208
    %v14405 = vpack.c.b16 %v14213, %v14211
    %v14406 = vpack.c.b16 %v14214, %v14212
    %v14407 = vpack.c.b16 %v14217, %v14215
    %v14408 = vpack.c.b16 %v14218, %v14216
    %v14409 = vpack.c.b16 %v14221, %v14219
    %v14410 = vpack.c.b16 %v14222, %v14220
    %v14411 = vpack.c.b16 %v14225, %v14223
    %v14412 = vpack.c.b16 %v14226, %v14224
    %v14413 = vpack.c.b16 %v14229, %v14227
    %v14414 = vpack.c.b16 %v14230, %v14228
    %v14415 = vpack.c.b16 %v14233, %v14231
    %v14416 = vpack.c.b16 %v14234, %v14232
    %v14417 = vpack.c.b16 %v14237, %v14235
    %v14418 = vpack.c.b16 %v14238, %v14236
    %v14419 = vpack.c.b16 %v14241, %v14239
    %v14420 = vpack.c.b16 %v14242, %v14240
    %v14421 = vpack.c.b16 %v14245, %v14243
    %v14422 = vpack.c.b16 %v14246, %v14244
    %v14423 = vpack.c.b16 %v14249, %v14247
    %v14424 = vpack.c.b16 %v14250, %v14248
    %v14425 = vpack.c.b16 %v14253, %v14251
    %v14426 = vpack.c.b16 %v14254, %v14252
    %v14427 = vpack.c.b16 %v14257, %v14255
    %v14428 = vpack.c.b16 %v14258, %v14256
    %v14429 = vpack.c.b16 %v14261, %v14259
    %v14430 = vpack.c.b16 %v14262, %v14260
    %v14431 = vpack.c.b16 %v14265, %v14263
    %v14432 = vpack.c.b16 %v14266, %v14264
    %v14433 = vpack.c.b16 %v14269, %v14267
    %v14434 = vpack.c.b16 %v14270, %v14268
    %v14435 = vpack.c.b16 %v14273, %v14271
    %v14436 = vpack.c.b16 %v14274, %v14272
    %v14437 = vpack.c.b16 %v14277, %v14275
    %v14438 = vpack.c.b16 %v14278, %v14276
    %v14439 = vpack.c.b16 %v14281, %v14279
    %v14440 = vpack.c.b16 %v14282, %v14280
    %v14441 = vpack.c.b16 %v14285, %v14283
    %v14442 = vpack.c.b16 %v14286, %v14284
    %v14443 = vpack.c.b16 %v14289, %v14287
    %v14444 = vpack.c.b16 %v14290, %v14288
    %v14445 = vpack.c.b16 %v14293, %v14291
    %v14446 = vpack.c.b16 %v14294, %v14292
    %v14447 = vpack.c.b16 %v14297, %v14295
    %v14448 = vpack.c.b16 %v14298, %v14296
    %v14449 = vpack.c.b16 %v14301, %v14299
    %v14450 = vpack.c.b16 %v14302, %v14300
    %v14451 = vpack.c.b16 %v14305, %v14303
    %v14452 = vpack.c.b16 %v14306, %v14304
    %v14453 = vpack.c.b16 %v14309, %v14307
    %v14454 = vpack.c.b16 %v14310, %v14308
    %v14455 = vpack.c.b16 %v14313, %v14311
    %v14456 = vpack.c.b16 %v14314, %v14312
    %v14457 = vpack.c.b16 %v14317, %v14315
    %v14458 = vpack.c.b16 %v14318, %v14316
    %v14459 = vpack.c.b16 %v14321, %v14319
    %v14460 = vpack.c.b16 %v14322, %v14320
    %v14461 = vpack.c.b16 %v14325, %v14323
    %v14462 = vpack.c.b16 %v14326, %v14324
    %v14463 = vpack.c.b16 %v14329, %v14327
    %v14464 = vpack.c.b16 %v14330, %v14328
    %v14465 = vpack.c.b16 %v14333, %v14331
    %v14466 = vpack.c.b16 %v14334, %v14332
    %v14467 = vpack.c.b16 %v14337, %v14335
    %v14468 = vpack.c.b16 %v14338, %v14336
    %v14469 = vpack.c.b16 %v14341, %v14339
    %v14470 = vpack.c.b16 %v14342, %v14340
    %v14471 = vpack.c.b16 %v14345, %v14343
    %v14472 = vpack.c.b16 %v14346, %v14344
    %v14473 = vpack.c.b16 %v14349, %v14347
    %v14474 = vpack.c.b16 %v14350, %v14348
    %v14475 = vpack.c.b16 %v14353, %v14351
    %v14476 = vpack.c.b16 %v14354, %v14352
    %v14477 = vpack.c.b16 %v14357, %v14355
    %v14478 = vpack.c.b16 %v14358, %v14356
    %v14479 = vpack.c.b16 %v14361, %v14359
    %v14480 = vpack.c.b16 %v14362, %v14360
    %v14481 = vpack.c.b16 %v14365, %v14363
    %v14482 = vpack.c.b16 %v14366, %v14364
    %v14483 = vpack.c.b16 %v14369, %v14367
    %v14484 = vpack.c.b16 %v14370, %v14368
    %v14485 = vpack.c.b16 %v14373, %v14371
    %v14486 = vpack.c.b16 %v14374, %v14372
    %v14487 = vpack.c.b16 %v14377, %v14375
    %v14488 = vpack.c.b16 %v14378, %v14376
    %v14489 = vpack.c.b16 %v14381, %v14379
    %v14490 = vpack.c.b16 %v14382, %v14380
    %14599 = vmatpush.bf16.msra.mxu0 %v14397
    %14600 = vmatpush.bf16.msra.mxu0 %v14395
    %14601 = vmatpush.bf16.msra.mxu0 %v14393
    %14602 = vmatpush.bf16.msra.mxu0 %v14391
    %14603 = vmatpush.bf16.msra.mxu0 %v14389
    %14604 = vmatpush.bf16.msra.mxu0 %v14387
    %14605 = vmatpush.bf16.msra.mxu0 %v14385
    %14606 = vmatpush.bf16.msra.mxu0 %v14383
    %14607 = vmatmul.bf16.gmra.mxu0 %v11443
    %v14608 = vpop.f32.mrf.mxu0
    %v14609 = vadd.f32 0.0, %v14608
    %v14610 = vpop.f32.mrf.mxu0
    %14611 = vdwg.mxu0
    %14612 = vmatpush.bf16.msra.mxu0 %v14413
    %14613 = vmatpush.bf16.msra.mxu0 %v14411
    %14614 = vmatpush.bf16.msra.mxu0 %v14409
    %14615 = vmatpush.bf16.msra.mxu0 %v14407
    %14616 = vmatpush.bf16.msra.mxu0 %v14405
    %14617 = vmatpush.bf16.msra.mxu0 %v14403
    %14618 = vmatpush.bf16.msra.mxu0 %v14401
    %14619 = vmatpush.bf16.msra.mxu0 %v14399
    %14620 = vmatmul.bf16.gmra.mxu0 %v11444
    %v14621 = vpop.f32.mrf.mxu0
    %v14622 = vadd.f32 %v14609, %v14621
    %v14623 = vpop.f32.mrf.mxu0
    %14624 = vdwg.mxu0
    %14625 = vmatpush.bf16.msra.mxu0 %v14429
    %14626 = vmatpush.bf16.msra.mxu0 %v14427
    %14627 = vmatpush.bf16.msra.mxu0 %v14425
    %14628 = vmatpush.bf16.msra.mxu0 %v14423
    %14629 = vmatpush.bf16.msra.mxu0 %v14421
    %14630 = vmatpush.bf16.msra.mxu0 %v14419
    %14631 = vmatpush.bf16.msra.mxu0 %v14417
    %14632 = vmatpush.bf16.msra.mxu0 %v14415
    %14633 = vmatmul.bf16.gmra.mxu0 %v11445
    %v14634 = vpop.f32.mrf.mxu0
    %v14635 = vadd.f32 %v14622, %v14634
    %v14636 = vpop.f32.mrf.mxu0
    %14637 = vdwg.mxu0
    %14638 = vmatpush.bf16.msra.mxu0 %v14445
    %14639 = vmatpush.bf16.msra.mxu0 %v14443
    %14640 = vmatpush.bf16.msra.mxu0 %v14441
    %14641 = vmatpush.bf16.msra.mxu0 %v14439
    %14642 = vmatpush.bf16.msra.mxu0 %v14437
    %14643 = vmatpush.bf16.msra.mxu0 %v14435
    %14644 = vmatpush.bf16.msra.mxu0 %v14433
    %14645 = vmatpush.bf16.msra.mxu0 %v14431
    %14646 = vmatmul.bf16.gmra.mxu0 %v11446
    %v14647 = vpop.f32.mrf.mxu0
    %v14648 = vadd.f32 %v14635, %v14647
    %v14649 = vpop.f32.mrf.mxu0
    %14650 = vdwg.mxu0
    %14651 = vmatpush.bf16.msra.mxu0 %v14461
    %14652 = vmatpush.bf16.msra.mxu0 %v14459
    %14653 = vmatpush.bf16.msra.mxu0 %v14457
    %14654 = vmatpush.bf16.msra.mxu0 %v14455
    %14655 = vmatpush.bf16.msra.mxu0 %v14453
    %14656 = vmatpush.bf16.msra.mxu0 %v14451
    %14657 = vmatpush.bf16.msra.mxu0 %v14449
    %14658 = vmatpush.bf16.msra.mxu0 %v14447
    %14659 = vmatmul.bf16.gmra.mxu0 %v11447
    %v14660 = vpop.f32.mrf.mxu0
    %v14661 = vadd.f32 %v14648, %v14660
    %v14662 = vpop.f32.mrf.mxu0
    %14663 = vdwg.mxu0
    %14664 = vmatpush.bf16.msra.mxu0 %v14477
    %14665 = vmatpush.bf16.msra.mxu0 %v14475
    %14666 = vmatpush.bf16.msra.mxu0 %v14473
    %14667 = vmatpush.bf16.msra.mxu0 %v14471
    %14668 = vmatpush.bf16.msra.mxu0 %v14469
    %14669 = vmatpush.bf16.msra.mxu0 %v14467
    %14670 = vmatpush.bf16.msra.mxu0 %v14465
    %14671 = vmatpush.bf16.msra.mxu0 %v14463
    %14672 = vmatmul.bf16.gmra.mxu0 %v11448
    %v14673 = vpop.f32.mrf.mxu0
    %v14674 = vadd.f32 %v14661, %v14673
    %v14675 = vpop.f32.mrf.mxu0
    %14676 = vdwg.mxu0
    %14677 = vmatpush.bf16.msra.mxu0 0
    %14678 = vmatpush.bf16.msra.mxu0 0
    %14679 = vmatpush.bf16.msra.mxu0 %v14489
    %14680 = vmatpush.bf16.msra.mxu0 %v14487
    %14681 = vmatpush.bf16.msra.mxu0 %v14485
    %14682 = vmatpush.bf16.msra.mxu0 %v14483
    %14683 = vmatpush.bf16.msra.mxu0 %v14481
    %14684 = vmatpush.bf16.msra.mxu0 %v14479
    %14685 = vmatmul.bf16.gmra.mxu0 %v12100
    %v14686 = vpop.f32.mrf.mxu0
    %v14687 = vadd.f32 %v14674, %v14686
    %v14688 = vpop.f32.mrf.mxu0
    %14689 = vdwg.mxu0
    %14690 = vmatpush.bf16.msra.mxu0 %v14398
    %14691 = vmatpush.bf16.msra.mxu0 %v14396
    %14692 = vmatpush.bf16.msra.mxu0 %v14394
    %14693 = vmatpush.bf16.msra.mxu0 %v14392
    %14694 = vmatpush.bf16.msra.mxu0 %v14390
    %14695 = vmatpush.bf16.msra.mxu0 %v14388
    %14696 = vmatpush.bf16.msra.mxu0 %v14386
    %14697 = vmatpush.bf16.msra.mxu0 %v14384
    %14698 = vmatmul.bf16.gmra.mxu0 %v11443
    %v14699 = vpop.f32.mrf.mxu0
    %v14700 = vadd.f32 0.0, %v14699
    %v14701 = vpop.f32.mrf.mxu0
    %14702 = vdwg.mxu0
    %14703 = vmatpush.bf16.msra.mxu0 %v14414
    %14704 = vmatpush.bf16.msra.mxu0 %v14412
    %14705 = vmatpush.bf16.msra.mxu0 %v14410
    %14706 = vmatpush.bf16.msra.mxu0 %v14408
    %14707 = vmatpush.bf16.msra.mxu0 %v14406
    %14708 = vmatpush.bf16.msra.mxu0 %v14404
    %14709 = vmatpush.bf16.msra.mxu0 %v14402
    %14710 = vmatpush.bf16.msra.mxu0 %v14400
    %14711 = vmatmul.bf16.gmra.mxu0 %v11444
    %v14712 = vpop.f32.mrf.mxu0
    %v14713 = vadd.f32 %v14700, %v14712
    %v14714 = vpop.f32.mrf.mxu0
    %14715 = vdwg.mxu0
    %14716 = vmatpush.bf16.msra.mxu0 %v14430
    %14717 = vmatpush.bf16.msra.mxu0 %v14428
    %14718 = vmatpush.bf16.msra.mxu0 %v14426
    %14719 = vmatpush.bf16.msra.mxu0 %v14424
    %14720 = vmatpush.bf16.msra.mxu0 %v14422
    %14721 = vmatpush.bf16.msra.mxu0 %v14420
    %14722 = vmatpush.bf16.msra.mxu0 %v14418
    %14723 = vmatpush.bf16.msra.mxu0 %v14416
    %14724 = vmatmul.bf16.gmra.mxu0 %v11445
    %v14725 = vpop.f32.mrf.mxu0
    %v14726 = vadd.f32 %v14713, %v14725
    %v14727 = vpop.f32.mrf.mxu0
    %14728 = vdwg.mxu0
    %14729 = vmatpush.bf16.msra.mxu0 %v14446
    %14730 = vmatpush.bf16.msra.mxu0 %v14444
    %14731 = vmatpush.bf16.msra.mxu0 %v14442
    %14732 = vmatpush.bf16.msra.mxu0 %v14440
    %14733 = vmatpush.bf16.msra.mxu0 %v14438
    %14734 = vmatpush.bf16.msra.mxu0 %v14436
    %14735 = vmatpush.bf16.msra.mxu0 %v14434
    %14736 = vmatpush.bf16.msra.mxu0 %v14432
    %14737 = vmatmul.bf16.gmra.mxu0 %v11446
    %v14738 = vpop.f32.mrf.mxu0
    %v14739 = vadd.f32 %v14726, %v14738
    %v14740 = vpop.f32.mrf.mxu0
    %14741 = vdwg.mxu0
    %14742 = vmatpush.bf16.msra.mxu0 %v14462
    %14743 = vmatpush.bf16.msra.mxu0 %v14460
    %14744 = vmatpush.bf16.msra.mxu0 %v14458
    %14745 = vmatpush.bf16.msra.mxu0 %v14456
    %14746 = vmatpush.bf16.msra.mxu0 %v14454
    %14747 = vmatpush.bf16.msra.mxu0 %v14452
    %14748 = vmatpush.bf16.msra.mxu0 %v14450
    %14749 = vmatpush.bf16.msra.mxu0 %v14448
    %14750 = vmatmul.bf16.gmra.mxu0 %v11447
    %v14751 = vpop.f32.mrf.mxu0
    %v14752 = vadd.f32 %v14739, %v14751
    %v14753 = vpop.f32.mrf.mxu0
    %14754 = vdwg.mxu0
    %14755 = vmatpush.bf16.msra.mxu0 %v14478
    %14756 = vmatpush.bf16.msra.mxu0 %v14476
    %14757 = vmatpush.bf16.msra.mxu0 %v14474
    %14758 = vmatpush.bf16.msra.mxu0 %v14472
    %14759 = vmatpush.bf16.msra.mxu0 %v14470
    %14760 = vmatpush.bf16.msra.mxu0 %v14468
    %14761 = vmatpush.bf16.msra.mxu0 %v14466
    %14762 = vmatpush.bf16.msra.mxu0 %v14464
    %14763 = vmatmul.bf16.gmra.mxu0 %v11448
    %v14764 = vpop.f32.mrf.mxu0
    %v14765 = vadd.f32 %v14752, %v14764
    %v14766 = vpop.f32.mrf.mxu0
    %14767 = vdwg.mxu0
    %14768 = vmatpush.bf16.msra.mxu0 0
    %14769 = vmatpush.bf16.msra.mxu0 0
    %14770 = vmatpush.bf16.msra.mxu0 %v14490
    %14771 = vmatpush.bf16.msra.mxu0 %v14488
    %14772 = vmatpush.bf16.msra.mxu0 %v14486
    %14773 = vmatpush.bf16.msra.mxu0 %v14484
    %14774 = vmatpush.bf16.msra.mxu0 %v14482
    %14775 = vmatpush.bf16.msra.mxu0 %v14480
    %14776 = vmatmul.bf16.gmra.mxu0 %v12100
    %v14777 = vpop.f32.mrf.mxu0
    %v14778 = vadd.f32 %v14765, %v14777
    %v14779 = vpop.f32.mrf.mxu0
    %14780 = vdwg.mxu0
    %v14781 = vmax.f32 %v13948, %v14687
    %v14782 = vmax.f32 %v13949, %v14778
    %v14783 = vld [vmem:[#allocation7] sm:$0x3]
    %v14785 = vperm.slane %v14783, 0
    %v14786 = vperm.slane %v14783, 1
    %v14789 = vadd.f32 %v14781, %v14785
    %v14790 = vadd.f32 %v14782, %v14786
    %v14791 = vmax.f32 %v14789, 0.0
    %v14792 = vmax.f32 %v14790, 0.0
    %v14793 = vpack.c.bf16 %v14791, %v14791
    %v14794 = vpack.c.bf16 %v14792, %v14792
    %v14795 = vld [vmem:[#allocation9] sm:$0xf]
    %v14796 = vld [vmem:[#allocation9 + $0x4] sm:$0xf]
    %v14797 = vld [vmem:[#allocation9 + $0x8] sm:$0xf]
    %v14798 = vld [vmem:[#allocation9 + $0xc] sm:$0xf]
    %v14799 = vld [vmem:[#allocation9 + $0x10] sm:$0xf]
    %v14800 = vld [vmem:[#allocation9 + $0x14] sm:$0xf]
    %v14801 = vld [vmem:[#allocation9 + $0x18] sm:$0xf]
    %v14802 = vld [vmem:[#allocation9 + $0x1c] sm:$0xf]
    %v14803 = vld [vmem:[#allocation9 + $0x20] sm:$0xf]
    %v14804 = vld [vmem:[#allocation9 + $0x24] sm:$0xf]
    %v14805 = vld [vmem:[#allocation9 + $0x28] sm:$0xf]
    %v14806 = vld [vmem:[#allocation9 + $0x2c] sm:$0xf]
    %v14807 = vld [vmem:[#allocation9 + $0x30] sm:$0xf]
    %v14808 = vld [vmem:[#allocation9 + $0x34] sm:$0xf]
    %v14809 = vld [vmem:[#allocation9 + $0x38] sm:$0xf]
    %v14810 = vld [vmem:[#allocation9 + $0x3c] sm:$0xf]
    %v14811 = vld [vmem:[#allocation9 + $0x40] sm:$0xf]
    %v14812 = vld [vmem:[#allocation9 + $0x44] sm:$0xf]
    %v14813 = vld [vmem:[#allocation9 + $0x48] sm:$0xf]
    %v14814 = vld [vmem:[#allocation9 + $0x4c] sm:$0xf]
    %v14815 = vld [vmem:[#allocation9 + $0x50] sm:$0xf]
    %v14816 = vld [vmem:[#allocation9 + $0x54] sm:$0xf]
    %v14817 = vld [vmem:[#allocation9 + $0x58] sm:$0xf]
    %v14818 = vld [vmem:[#allocation9 + $0x5c] sm:$0xf]
    %v14819 = vld [vmem:[#allocation9 + $0x60] sm:$0xf]
    %v14820 = vld [vmem:[#allocation9 + $0x64] sm:$0xf]
    %v14821 = vld [vmem:[#allocation9 + $0x68] sm:$0xf]
    %v14822 = vld [vmem:[#allocation9 + $0x6c] sm:$0xf]
    %v14823 = vld [vmem:[#allocation9 + $0x70] sm:$0xf]
    %v14824 = vld [vmem:[#allocation9 + $0x74] sm:$0xf]
    %v14825 = vld [vmem:[#allocation9 + $0x78] sm:$0xf]
    %v14826 = vld [vmem:[#allocation9 + $0x7c] sm:$0xf]
    %v14827 = vld [vmem:[#allocation10] sm:$0x1]
    %v14829 = vperm.slane %v14827, 0
    %v14863 = vunpack.c.l.b16 %v14795
    %v14864 = vunpack.c.l.b16 %v14796
    %v14865 = vunpack.c.l.b16 %v14797
    %v14866 = vunpack.c.l.b16 %v14798
    %v14867 = vunpack.c.l.b16 %v14799
    %v14868 = vunpack.c.l.b16 %v14800
    %v14869 = vunpack.c.l.b16 %v14801
    %v14870 = vunpack.c.l.b16 %v14802
    %v14871 = vunpack.c.l.b16 %v14803
    %v14872 = vunpack.c.l.b16 %v14804
    %v14873 = vunpack.c.l.b16 %v14805
    %v14874 = vunpack.c.l.b16 %v14806
    %v14875 = vunpack.c.l.b16 %v14807
    %v14876 = vunpack.c.l.b16 %v14808
    %v14877 = vunpack.c.l.b16 %v14809
    %v14878 = vunpack.c.l.b16 %v14810
    %v14879 = vunpack.c.l.b16 %v14811
    %v14880 = vunpack.c.l.b16 %v14812
    %v14881 = vunpack.c.l.b16 %v14813
    %v14882 = vunpack.c.l.b16 %v14814
    %v14883 = vunpack.c.l.b16 %v14815
    %v14884 = vunpack.c.l.b16 %v14816
    %v14885 = vunpack.c.l.b16 %v14817
    %v14886 = vunpack.c.l.b16 %v14818
    %v14887 = vunpack.c.l.b16 %v14819
    %v14888 = vunpack.c.l.b16 %v14820
    %v14889 = vunpack.c.l.b16 %v14821
    %v14890 = vunpack.c.l.b16 %v14822
    %v14891 = vunpack.c.l.b16 %v14823
    %v14892 = vunpack.c.l.b16 %v14824
    %v14893 = vunpack.c.l.b16 %v14825
    %v14894 = vunpack.c.l.b16 %v14826
    %v14895 = vpack.c.b16 %v14864, %v14863
    %v14896 = vpack.c.b16 %v14866, %v14865
    %v14897 = vpack.c.b16 %v14868, %v14867
    %v14898 = vpack.c.b16 %v14870, %v14869
    %v14899 = vpack.c.b16 %v14872, %v14871
    %v14900 = vpack.c.b16 %v14874, %v14873
    %v14901 = vpack.c.b16 %v14876, %v14875
    %v14902 = vpack.c.b16 %v14878, %v14877
    %v14903 = vpack.c.b16 %v14880, %v14879
    %v14904 = vpack.c.b16 %v14882, %v14881
    %v14905 = vpack.c.b16 %v14884, %v14883
    %v14906 = vpack.c.b16 %v14886, %v14885
    %v14907 = vpack.c.b16 %v14888, %v14887
    %v14908 = vpack.c.b16 %v14890, %v14889
    %v14909 = vpack.c.b16 %v14892, %v14891
    %v14910 = vpack.c.b16 %v14894, %v14893
    %14927 = vmatpush.bf16.msra.mxu0 %v14902
    %14928 = vmatpush.bf16.msra.mxu0 %v14901
    %14929 = vmatpush.bf16.msra.mxu0 %v14900
    %14930 = vmatpush.bf16.msra.mxu0 %v14899
    %14931 = vmatpush.bf16.msra.mxu0 %v14898
    %14932 = vmatpush.bf16.msra.mxu0 %v14897
    %14933 = vmatpush.bf16.msra.mxu0 %v14896
    %14934 = vmatpush.bf16.msra.mxu0 %v14895
    %14935 = vmatmul.bf16.gmra.mxu0 %v14793
    %v14936 = vpop.f32.mrf.mxu0
    %v14937 = vadd.f32 %v14829, %v14936
    %v14938 = vpop.f32.mrf.mxu0
    %14939 = vdwg.mxu0
    %14940 = vmatpush.bf16.msra.mxu0 %v14910
    %14941 = vmatpush.bf16.msra.mxu0 %v14909
    %14942 = vmatpush.bf16.msra.mxu0 %v14908
    %14943 = vmatpush.bf16.msra.mxu0 %v14907
    %14944 = vmatpush.bf16.msra.mxu0 %v14906
    %14945 = vmatpush.bf16.msra.mxu0 %v14905
    %14946 = vmatpush.bf16.msra.mxu0 %v14904
    %14947 = vmatpush.bf16.msra.mxu0 %v14903
    %14948 = vmatmul.bf16.gmra.mxu0 %v14794
    %v14949 = vpop.f32.mrf.mxu0
    %v14950 = vadd.f32 %v14937, %v14949
    %v14951 = vpop.f32.mrf.mxu0
    %14952 = vdwg.mxu0
    %v14953 = vmax.f32 %v14950, 0.0
    %v14954 = vpack.c.bf16 %v14953, %v14953
    %v14955 = vld [vmem:[#allocation12] sm:$0xf]
    %v14956 = vld [vmem:[#allocation12 + $0x4] sm:$0xf]
    %v14957 = vld [vmem:[#allocation12 + $0x8] sm:$0xf]
    %v14958 = vld [vmem:[#allocation12 + $0xc] sm:$0xf]
    %v14959 = vld [vmem:[#allocation12 + $0x10] sm:$0xf]
    %v14960 = vld [vmem:[#allocation12 + $0x14] sm:$0xf]
    %v14961 = vld [vmem:[#allocation12 + $0x18] sm:$0xf]
    %v14962 = vld [vmem:[#allocation12 + $0x1c] sm:$0xf]
    %v14963 = vld [vmem:[#allocation12 + $0x20] sm:$0xf]
    %v14964 = vld [vmem:[#allocation12 + $0x24] sm:$0xf]
    %v14965 = vld [vmem:[#allocation12 + $0x28] sm:$0xf]
    %v14966 = vld [vmem:[#allocation12 + $0x2c] sm:$0xf]
    %v14967 = vld [vmem:[#allocation12 + $0x30] sm:$0xf]
    %v14968 = vld [vmem:[#allocation12 + $0x34] sm:$0xf]
    %v14969 = vld [vmem:[#allocation12 + $0x38] sm:$0xf]
    %v14970 = vld [vmem:[#allocation12 + $0x3c] sm:$0xf]
    %v14971 = vld [vmem:[#allocation13] sm:$0x1]
    %v14973 = vperm.slane %v14971, 0
    %v14991 = vunpack.c.l.b16 %v14955
    %v14992 = vunpack.c.l.b16 %v14956
    %v14993 = vunpack.c.l.b16 %v14957
    %v14994 = vunpack.c.l.b16 %v14958
    %v14995 = vunpack.c.l.b16 %v14959
    %v14996 = vunpack.c.l.b16 %v14960
    %v14997 = vunpack.c.l.b16 %v14961
    %v14998 = vunpack.c.l.b16 %v14962
    %v14999 = vunpack.c.l.b16 %v14963
    %v15000 = vunpack.c.l.b16 %v14964
    %v15001 = vunpack.c.l.b16 %v14965
    %v15002 = vunpack.c.l.b16 %v14966
    %v15003 = vunpack.c.l.b16 %v14967
    %v15004 = vunpack.c.l.b16 %v14968
    %v15005 = vunpack.c.l.b16 %v14969
    %v15006 = vunpack.c.l.b16 %v14970
    %v15007 = vpack.c.b16 %v14992, %v14991
    %v15008 = vpack.c.b16 %v14994, %v14993
    %v15009 = vpack.c.b16 %v14996, %v14995
    %v15010 = vpack.c.b16 %v14998, %v14997
    %v15011 = vpack.c.b16 %v15000, %v14999
    %v15012 = vpack.c.b16 %v15002, %v15001
    %v15013 = vpack.c.b16 %v15004, %v15003
    %v15014 = vpack.c.b16 %v15006, %v15005
    %15023 = vmatpush.bf16.msra.mxu0 %v15014
    %15024 = vmatpush.bf16.msra.mxu0 %v15013
    %15025 = vmatpush.bf16.msra.mxu0 %v15012
    %15026 = vmatpush.bf16.msra.mxu0 %v15011
    %15027 = vmatpush.bf16.msra.mxu0 %v15010
    %15028 = vmatpush.bf16.msra.mxu0 %v15009
    %15029 = vmatpush.bf16.msra.mxu0 %v15008
    %15030 = vmatpush.bf16.msra.mxu0 %v15007
    %15031 = vmatmul.bf16.gmra.mxu0 %v14954
    %v15032 = vpop.f32.mrf.mxu0
    %v15033 = vadd.f32 %v14973, %v15032
    %v15034 = vpop.f32.mrf.mxu0
    %15035 = vdwg.mxu0
    %v15036 = vmax.f32 %v15033, 0.0
    %v15037 = vpack.c.bf16 %v15036, %v15036
    %v15038 = vld [vmem:[#allocation15] sm:$0xf]
    %v15039 = vld [vmem:[#allocation15 + $0x4] sm:$0xf]
    %v15040 = vld [vmem:[#allocation15 + $0x8] sm:$0xf]
    %v15041 = vld [vmem:[#allocation15 + $0xc] sm:$0xf]
    %v15042 = vld [vmem:[#allocation15 + $0x10] sm:$0xf]
    %v15043 = vld [vmem:[#allocation15 + $0x14] sm:$0xf]
    %v15044 = vld [vmem:[#allocation15 + $0x18] sm:$0xf]
    %v15045 = vld [vmem:[#allocation15 + $0x1c] sm:$0xf]
    %v15046 = vld [vmem:[#allocation15 + $0x20] sm:$0xf]
    %v15047 = vld [vmem:[#allocation15 + $0x24] sm:$0xf]
    %v15048 = vld [vmem:[#allocation15 + $0x28] sm:$0xf]
    %v15049 = vld [vmem:[#allocation15 + $0x2c] sm:$0xf]
    %v15050 = vld [vmem:[#allocation15 + $0x30] sm:$0xf]
    %v15051 = vld [vmem:[#allocation15 + $0x34] sm:$0xf]
    %v15052 = vld [vmem:[#allocation15 + $0x38] sm:$0xf]
    %v15053 = vld [vmem:[#allocation15 + $0x3c] sm:$0xf]
    %v15054 = vld [vmem:[#allocation16] sm:$0x1]
    %v15056 = vperm.slane %v15054, 0
    %v15074 = vunpack.c.l.b16 %v15038
    %v15075 = vunpack.c.l.b16 %v15039
    %v15076 = vunpack.c.l.b16 %v15040
    %v15077 = vunpack.c.l.b16 %v15041
    %v15078 = vunpack.c.l.b16 %v15042
    %v15079 = vunpack.c.l.b16 %v15043
    %v15080 = vunpack.c.l.b16 %v15044
    %v15081 = vunpack.c.l.b16 %v15045
    %v15082 = vunpack.c.l.b16 %v15046
    %v15083 = vunpack.c.l.b16 %v15047
    %v15084 = vunpack.c.l.b16 %v15048
    %v15085 = vunpack.c.l.b16 %v15049
    %v15086 = vunpack.c.l.b16 %v15050
    %v15087 = vunpack.c.l.b16 %v15051
    %v15088 = vunpack.c.l.b16 %v15052
    %v15089 = vunpack.c.l.b16 %v15053
    %v15090 = vpack.c.b16 %v15075, %v15074
    %v15091 = vpack.c.b16 %v15077, %v15076
    %v15092 = vpack.c.b16 %v15079, %v15078
    %v15093 = vpack.c.b16 %v15081, %v15080
    %v15094 = vpack.c.b16 %v15083, %v15082
    %v15095 = vpack.c.b16 %v15085, %v15084
    %v15096 = vpack.c.b16 %v15087, %v15086
    %v15097 = vpack.c.b16 %v15089, %v15088
    %15106 = vmatpush.bf16.msra.mxu0 %v15097
    %15107 = vmatpush.bf16.msra.mxu0 %v15096
    %15108 = vmatpush.bf16.msra.mxu0 %v15095
    %15109 = vmatpush.bf16.msra.mxu0 %v15094
    %15110 = vmatpush.bf16.msra.mxu0 %v15093
    %15111 = vmatpush.bf16.msra.mxu0 %v15092
    %15112 = vmatpush.bf16.msra.mxu0 %v15091
    %15113 = vmatpush.bf16.msra.mxu0 %v15090
    %15114 = vmatmul.bf16.gmra.mxu0 %v15037
    %v15115 = vpop.f32.mrf.mxu0
    %v15116 = vadd.f32 %v15056, %v15115
    %v15117 = vpop.f32.mrf.mxu0
    %15118 = vdwg.mxu0
    %15119 = vst [vmem:[%s11] sm:$0xff] %v15116
    // Predicated region
    $region86: #{mnist_cnn_forward.1} parent=1 // pred_check
      _
    $region87: #{mnist_cnn_forward.1} parent=1 // pred_check_branch
      %15121 = sbr.rel (0) target = $region89
    $region88: #{mnist_cnn_forward.1} parent=1 // pred_region
      _
    $region89: #{mnist_cnn_forward.1} parent=1 // pred_fallthru
      _
    // Predicated region
    $region90: #{mnist_cnn_forward.1} parent=1 // pred_check
      _
    $region91: #{mnist_cnn_forward.1} parent=1 // pred_check_branch
      %15123 = sbr.rel (0) target = $region93
    $region92: #{mnist_cnn_forward.1} parent=1 // pred_region
      _
    $region93: #{mnist_cnn_forward.1} parent=1 // pred_fallthru
      _
    %15124 = vsyncpa [#allocation3], 1
    %15125 = vsyncpa [#allocation5], 1
    %15126 = vsyncpa [#allocation8], 1
    %15127 = vsyncpa [#allocation11], 1
    %15128 = vsyncpa [#allocation14], 1
    %15129 = vsyncpa [#allocation17], 1

</llo_original>
